<compile_context>
chip_gen: v5e
topology: v5e:2x2
jax: 0.10.0
libtpu: 0.0.40
codegen_flags: <defaults>
</compile_context>

<pallas_src>
import functools

import jax
import jax.numpy as jnp
from jax.experimental import pallas as pl
from jax.experimental.pallas import tpu as pltpu


def _round_up(a, m):
    return (a + m - 1) // m * m


def _wrap_masks(W, S, p):
    """(2p+1, S) f32 masks, built wrapper-side (no in-kernel iota/mod).

    Row p+dw is 1.0 where a flat shift by dw stays inside the same image row
    and 0.0 where it wraps across the W boundary."""
    col = jnp.arange(S, dtype=jnp.int32) % W
    rows = [((col + dw >= 0) & (col + dw <= W - 1)).astype(jnp.float32)
            for dw in range(-p, p + 1)]
    return jnp.stack(rows, axis=0)


# ----------------------------------------------------------------------------
# In-kernel helpers (operate on VMEM-resident values / refs)
# ----------------------------------------------------------------------------
def _conv_same(x, w_ref, b_ref, wm_ref, wm_c, pad_ref, x9_ref, *, H, W, ksize):
    """'same' k x k conv (stride 1, zero pad) of a VMEM-resident tile.

    x       : (Cin, S=H*W) f32 value, compact row-major spatial.
    w_ref   : (Cout, k*k*Cin) bf16, row layout (kh*k + kw)*Cin + cin.
    b_ref   : (Cout, 1) f32 or None.
    wm_ref  : (2*wm_c+1, S) f32 row-wrap masks (row wm_c+dw == mask for shift dw).
    pad_ref : f32 scratch >= (Cin, PADL + S + PADR); x9_ref: bf16 scratch.

    The H boundary is handled by zero-padding the flat spatial axis, the W
    wrap-around of flat shifts by the precomputed masks.  When Cin is bf16
    sublane aligned the k*k taps are folded into one MXU dot with K=k*k*Cin.
    Returns (Cout, S) f32.
    """
    Cin, S = x.shape
    Cout = w_ref.shape[0]
    p = (ksize - 1) // 2
    if p == 0:                               # 1x1 conv -> plain matmul
        out = jnp.dot(w_ref[...], x.astype(jnp.bfloat16),
                      preferred_element_type=jnp.float32)
        return out + b_ref[...] if b_ref is not None else out

    padl = _round_up(p * (W + 1), 128)       # lane-aligned interior store
    pad_ref[...] = jnp.zeros_like(pad_ref)   # zero halo (and any stale data)
    pad_ref[0:Cin, padl:padl + S] = x

    fold = (Cin % 16 == 0)                   # bf16 packing: aligned rows per tap
    acc = None if fold else jnp.zeros((Cout, S), jnp.float32)
    for kh in range(ksize):
        for kw in range(ksize):
            t = kh * ksize + kw
            s0 = padl + (kh - p) * W + (kw - p)
            win = pad_ref[0:Cin, s0:s0 + S]
            if kw != p:                      # mask row-wrapped columns
                win = win * wm_ref[wm_c + kw - p:wm_c + kw - p + 1, :]
            win = win.astype(jnp.bfloat16)
            if fold:
                x9_ref[t * Cin:(t + 1) * Cin, :] = win
            else:
                acc = acc + jnp.dot(w_ref[:, t * Cin:(t + 1) * Cin], win,
                                    preferred_element_type=jnp.float32)
    if fold:
        acc = jnp.dot(w_ref[...], x9_ref[0:ksize * ksize * Cin, :],
                      preferred_element_type=jnp.float32)
    if b_ref is not None:
        acc = acc + b_ref[...]
    return acc


def _mixer(z, mv_ref, wm_ref, wm_c, pad_ref, *, H, W, ksize):
    """TDSSRGM spatial/spectral mixers:  z + h_mixer(z) * w_mixer(z).

    h_mixer: Conv3d(1,1,(k,k,1)) -> scalar-tap stencil over (C, H).
    w_mixer: Conv3d(1,1,(1,1,k)) -> scalar-tap stencil over W.
    z: (C, S) f32; mv_ref: SMEM f32[k*k + 1 + k + 1] = [h taps, h bias, w taps, w bias].
    Pure VPU shift-MAC; taps come from SMEM; C/H halos are zeros in pad_ref,
    W row-wrap is masked.  Computes h_acc fully, then w_acc, then combines
    (keeps <=2 live (C,S) accumulators)."""
    C, S = z.shape
    p = (ksize - 1) // 2
    padl = _round_up(max(p, 1) * (W + 1), 128)
    pad_ref[...] = jnp.zeros_like(pad_ref)
    pad_ref[p:p + C, padl:padl + S] = z

    h_acc = jnp.zeros((C, S), jnp.float32)
    for dc in range(ksize):                  # channel shift dc-p, row shift dh-p
        for dh in range(ksize):
            s0 = padl + (dh - p) * W
            h_acc = h_acc + mv_ref[dc * ksize + dh] * pad_ref[dc:dc + C, s0:s0 + S]
    h_acc = h_acc + mv_ref[ksize * ksize]

    w_acc = jnp.zeros((C, S), jnp.float32)
    for dw in range(ksize):                  # column shift dw-p (row wrap masked)
        win = pad_ref[p:p + C, padl + dw - p:padl + dw - p + S]
        if dw != p:
            win = win * wm_ref[wm_c + dw - p:wm_c + dw - p + 1, :]
        w_acc = w_acc + mv_ref[ksize * ksize + 1 + dw] * win
    w_acc = w_acc + mv_ref[ksize * ksize + 1 + ksize]
    return z + h_acc * w_acc


def _layernorm_c(x, g_ref, b_ref, *, eps):
    """LayerNorm4D: normalize over channels (sublane axis), H*W on lanes."""
    u = jnp.mean(x, axis=0, keepdims=True)
    d = x - u
    v = jnp.mean(d * d, axis=0, keepdims=True)
    return d * jax.lax.rsqrt(v + eps) * g_ref[...] + b_ref[...]


# ----------------------------------------------------------------------------
# Standalone 3x3 conv kernel (head and upsampler convs)
# ----------------------------------------------------------------------------
def _conv3x3_kernel(x_ref, w_ref, b_ref, wm_ref, o_ref, pad_ref, x9_ref, *, H, W):
    o_ref[0] = _conv_same(x_ref[0], w_ref, b_ref, wm_ref, 1, pad_ref, x9_ref,
                          H=H, W=W, ksize=3)


def conv3x3(x_bcs, w_folded, b_col, H, W):
    """3x3 'same' conv.  x_bcs: (B, Cin, S) f32 (compact, lane-dense);
    w_folded: (Cout, 9*Cin) bf16; b_col: (Cout, 1) f32.  Returns (B, Cout, S)."""
    B, Cin, S = x_bcs.shape
    Cout = w_folded.shape[0]
    wm = _wrap_masks(W, S, 1)
    padl = _round_up(W + 1, 128)
    return pl.pallas_call(
        functools.partial(_conv3x3_kernel, H=H, W=W),
        out_shape=jax.ShapeDtypeStruct((B, Cout, S), jnp.float32),
        grid=(B,),
        in_specs=[
            pl.BlockSpec((1, Cin, S), lambda b: (b, 0, 0)),
            pl.BlockSpec((Cout, 9 * Cin), lambda b: (0, 0)),
            pl.BlockSpec((Cout, 1), lambda b: (0, 0)),
            pl.BlockSpec((3, S), lambda b: (0, 0)),
        ],
        out_specs=pl.BlockSpec((1, Cout, S), lambda b: (b, 0, 0)),
        scratch_shapes=[
            pltpu.VMEM((Cin, padl + S + (W + 1)), jnp.float32),
            pltpu.VMEM((9 * Cin, S), jnp.bfloat16),
        ],
        compiler_params=pltpu.CompilerParams(dimension_semantics=("parallel",)),
    )(x_bcs, w_folded, b_col, wm)


# ----------------------------------------------------------------------------
# Fully fused Totalgroup block (pre conv -> TransLayer2 -> last conv [+ skip])
# ----------------------------------------------------------------------------
def _totalgroup_kernel(*refs, H, W, largeks, pks, nt, wm_c, eps, fuse_skip):
    if fuse_skip:
        (x_ref, skip_ref, mv_ref, wm_ref, pre_w, pre_b, ln_g, ln_b, pconv_w,
         cmix_w, cmix_b, ca_w1t, ca_b1, ca_w2, ca_b2, proj_w, proj_b,
         last_w, last_b, o_ref, pad_ref, x9_ref) = refs
    else:
        (x_ref, mv_ref, wm_ref, pre_w, pre_b, ln_g, ln_b, pconv_w,
         cmix_w, cmix_b, ca_w1t, ca_b1, ca_w2, ca_b2, proj_w, proj_b,
         last_w, last_b, o_ref, pad_ref, x9_ref) = refs
        skip_ref = None

    conv = functools.partial(_conv_same, wm_ref=wm_ref, wm_c=wm_c,
                             pad_ref=pad_ref, x9_ref=x9_ref, H=H, W=W)

    # ---- Totalgroup.pre : 3x3 conv ----
    x = x_ref[0]                                                    # (C, S) f32
    y = conv(x, pre_w, pre_b, ksize=3)
    # ---- TransLayer2.norm1 : LayerNorm over channels ----
    z = _layernorm_c(y, ln_g, ln_b, eps=eps)
    # ---- TDSSRGM: x + h_mixer(x) * w_mixer(x) ----
    hw = _mixer(z, mv_ref, wm_ref, wm_c, pad_ref, H=H, W=W, ksize=largeks)
    # ---- TDSSRGM.pconv : conv over the first nt channels (no bias); exact
    #      f32 pass-through for untouched channels (matches torch split/cat) --
    touched = conv(hw[0:nt], pconv_w, None, ksize=pks)
    hw = jnp.concatenate([touched, hw[nt:]], axis=0)
    # ---- c_mixer (1x1) + CALayer gate + inner residual + proj (1x1) ----
    hw_b = hw.astype(jnp.bfloat16)
    c1 = jnp.dot(cmix_w[...], hw_b, preferred_element_type=jnp.float32) + cmix_b[...]
    pooled = jnp.mean(hw, axis=1, keepdims=True)                    # (C, 1) GAP
    z1 = jnp.maximum(
        jnp.sum(pooled * ca_w1t[...], axis=0, keepdims=True) + ca_b1[...], 0.0)
    att = jax.nn.sigmoid(
        jnp.sum(ca_w2[...] * z1, axis=1, keepdims=True) + ca_b2[...])  # (C, 1)
    chw = hw + c1 * (hw * att)
    sg = jnp.dot(proj_w[...], chw.astype(jnp.bfloat16),
                 preferred_element_type=jnp.float32) + proj_b[...]
    # ---- TransLayer2 residual, Totalgroup.last conv, optional SSPN skip ----
    t2 = y + sg
    out = conv(t2, last_w, last_b, ksize=3)
    if skip_ref is not None:
        out = out + skip_ref[0]
    o_ref[0] = out


def totalgroup(x_bcs, blk, H, W, skip=None):
    """One fused Totalgroup block as a single pallas_call (VMEM-resident chain)."""
    B, C, S = x_bcs.shape
    largeks, pks = blk["largeks"], blk["pks"]
    nt = blk["pconv_w"].shape[0]
    red = blk["ca_w1t"].shape[1]
    p_m, p_p = largeks // 2, pks // 2
    p_msk = max(1, p_m, p_p)
    wm = _wrap_masks(W, S, p_msk)
    padl = _round_up(p_msk * (W + 1), 128)
    padr = p_msk * (W + 1)
    pad_rows = C + 2 * p_m
    x9_rows = max(9 * C, pks * pks * nt)

    in_specs = [pl.BlockSpec((1, C, S), lambda b: (b, 0, 0))]
    args = [x_bcs]
    if skip is not None:
        in_specs.append(pl.BlockSpec((1, C, S), lambda b: (b, 0, 0)))
        args.append(skip)
    in_specs += [
        pl.BlockSpec(memory_space=pltpu.MemorySpace.SMEM),           # mixer taps
        pl.BlockSpec((2 * p_msk + 1, S), lambda b: (0, 0)),          # wrap masks
        pl.BlockSpec((C, 9 * C), lambda b: (0, 0)),                  # pre w
        pl.BlockSpec((C, 1), lambda b: (0, 0)),                      # pre b
        pl.BlockSpec((C, 1), lambda b: (0, 0)),                      # ln gamma
        pl.BlockSpec((C, 1), lambda b: (0, 0)),                      # ln beta
        pl.BlockSpec((nt, pks * pks * nt), lambda b: (0, 0)),        # pconv w
        pl.BlockSpec((C, C), lambda b: (0, 0)),                      # c_mixer w
        pl.BlockSpec((C, 1), lambda b: (0, 0)),                      # c_mixer b
        pl.BlockSpec((C, red), lambda b: (0, 0)),                    # CA fc1 w^T
        pl.BlockSpec((1, red), lambda b: (0, 0)),                    # CA fc1 b
        pl.BlockSpec((C, red), lambda b: (0, 0)),                    # CA fc2 w
        pl.BlockSpec((C, 1), lambda b: (0, 0)),                      # CA fc2 b
        pl.BlockSpec((C, C), lambda b: (0, 0)),                      # proj w
        pl.BlockSpec((C, 1), lambda b: (0, 0)),                      # proj b
        pl.BlockSpec((C, 9 * C), lambda b: (0, 0)),                  # last w
        pl.BlockSpec((C, 1), lambda b: (0, 0)),                      # last b
    ]
    args += [blk["mix_vec"], wm, blk["pre_w"], blk["pre_b"], blk["ln_g"],
             blk["ln_b"], blk["pconv_w"], blk["cmix_w"], blk["cmix_b"],
             blk["ca_w1t"], blk["ca_b1"], blk["ca_w2"], blk["ca_b2"],
             blk["proj_w"], blk["proj_b"], blk["last_w"], blk["last_b"]]

    kernel = functools.partial(
        _totalgroup_kernel, H=H, W=W, largeks=largeks, pks=pks, nt=nt,
        wm_c=p_msk, eps=1e-5, fuse_skip=skip is not None)
    return pl.pallas_call(
        kernel,
        out_shape=jax.ShapeDtypeStruct((B, C, S), jnp.float32),
        grid=(B,),
        in_specs=in_specs,
        out_specs=pl.BlockSpec((1, C, S), lambda b: (b, 0, 0)),
        scratch_shapes=[
            pltpu.VMEM((pad_rows, padl + S + padr), jnp.float32),    # halo buffer
            pltpu.VMEM((x9_rows, S), jnp.bfloat16),                  # folded operand
        ],
        compiler_params=pltpu.CompilerParams(dimension_semantics=("parallel",)),
    )(*args)


# ----------------------------------------------------------------------------
# Model forward
# ----------------------------------------------------------------------------
def pixel_shuffle(x, r):
    # TODO(synk): nn.PixelShuffle is a pure layout op; kept as XLA reshape/transpose
    # (could be folded into the upsampler conv's store pattern at real image sizes).
    B, Cr2, H, W = x.shape
    C = Cr2 // (r * r)
    x = x.reshape(B, C, r, r, H, W).transpose(0, 1, 4, 2, 5, 3)
    return x.reshape(B, C, H * r, W * r)


def spatial_spectral_unit(x, params):
    """head conv3x3 -> SSPN (fused Totalgroup blocks + skip) -> upsampler conv3x3
    -> PixelShuffle(2).  Activations stay in the compact (B, C, H*W) layout."""
    B, Cin, H, W = x.shape
    S = H * W
    C = params["head_w"].shape[0]
    y = conv3x3(x.reshape(B, Cin, S), params["head_w"], params["head_b"], H, W)
    r = y
    n = len(params["blocks"])
    for i, blk in enumerate(params["blocks"]):
        # SSPN skip connection fused into the last conv of the last block
        r = totalgroup(r, blk, H, W, skip=y if i == n - 1 else None)
    u = conv3x3(r, params["up_w"], params["up_b"], H, W)             # (B, 4C, S)
    return pixel_shuffle(u.reshape(B, 4 * C, H, W), 2)


# ----------------------------------------------------------------------------
# Parameter init (PyTorch-layout randoms converted to kernel layouts)
# ----------------------------------------------------------------------------
def _fold_conv_weight(w):
    """(O, I, k, k) -> (O, k*k*I) bf16, row layout (kh*k + kw)*I + i."""
    O, I, k, _ = w.shape
    return jnp.transpose(w, (0, 2, 3, 1)).reshape(O, k * k * I).astype(jnp.bfloat16)


def init_params(key, in_feats, C, largeks, pks, pratio, n_blocks):
    keys = iter(jax.random.split(key, 8 + 24 * n_blocks))

    def nrm(shape, scale=0.1):
        return (scale * jax.random.normal(next(keys), shape)).astype(jnp.float32)

    def col(b):
        return b.reshape(-1, 1).astype(jnp.float32)

    nt = C // pratio
    red = max(C // 16, 1)

    params = {
        "head_w": _fold_conv_weight(nrm((C, in_feats, 3, 3))),
        "head_b": col(nrm((C,))),
        "up_w": _fold_conv_weight(nrm((4 * C, C, 3, 3))),
        "up_b": col(nrm((4 * C,))),
        "blocks": [],
    }
    for _ in range(n_blocks):
        h_w = nrm((largeks, largeks))        # Conv3d (1,1,(k,k,1)) taps over (C, H)
        h_b = nrm((1,))
        w_w = nrm((largeks,))                # Conv3d (1,1,(1,1,k)) taps over W
        w_b = nrm((1,))
        ca_w1 = nrm((red, C))                # CALayer fc1 (C -> C//16)
        ca_w2 = nrm((C, red))                # CALayer fc2 (C//16 -> C)
        params["blocks"].append({
            "largeks": largeks, "pks": pks,
            "pre_w": _fold_conv_weight(nrm((C, C, 3, 3))), "pre_b": col(nrm((C,))),
            "last_w": _fold_conv_weight(nrm((C, C, 3, 3))), "last_b": col(nrm((C,))),
            "ln_g": col(jnp.ones((C,), jnp.float32) + nrm((C,), 0.01)),
            "ln_b": col(nrm((C,), 0.01)),
            "mix_vec": jnp.concatenate([h_w.reshape(-1), h_b, w_w.reshape(-1), w_b]),
            "pconv_w": _fold_conv_weight(nrm((nt, nt, pks, pks))),   # no bias
            "cmix_w": nrm((C, C)).astype(jnp.bfloat16), "cmix_b": col(nrm((C,))),
            "proj_w": nrm((C, C)).astype(jnp.bfloat16), "proj_b": col(nrm((C,))),
            "ca_w1t": ca_w1.T, "ca_b1": nrm((red,)).reshape(1, red),
            "ca_w2": ca_w2, "ca_b2": col(nrm((C,))),
        })
    return params


if __name__ == "__main__":
    key = jax.random.PRNGKey(0)
    kx, kp = jax.random.split(key)

    # in_feats=4, out_feats2=32, largeks2=3, pks2=3, pratio2=4, n_blocks=1, up_scale=2
    x = jax.random.normal(kx, (2, 4, 16, 16), jnp.float32)
    params = init_params(kp, in_feats=4, C=32, largeks=3, pks=3, pratio=4, n_blocks=1)

    fwd = jax.jit(lambda inp: spatial_spectral_unit(inp, params))
    y = fwd(x)
    jax.block_until_ready(y)
    assert y.shape == (2, 32, 32, 32), y.shape
    assert jnp.all(jnp.isfinite(y))
    print("KERNEL_OK")
</pallas_src>

<mosaic_0001>
module attributes {stable_mosaic.version = 11 : i64} {
  func.func @_conv3x3_kernel(%arg0: i32, %arg1: memref<1x32x256xf32, #tpu.memory_space<vmem>>, %arg2: memref<128x288xbf16, #tpu.memory_space<vmem>>, %arg3: memref<128x1xf32, #tpu.memory_space<vmem>>, %arg4: memref<3x256xf32, #tpu.memory_space<vmem>>, %arg5: memref<1x128x256xf32, #tpu.memory_space<vmem>>, %arg6: memref<32x401xf32, #tpu.memory_space<vmem>>, %arg7: memref<288x256xbf16, #tpu.memory_space<vmem>>) attributes {dimension_semantics = [#tpu.dimension_semantics<parallel>], iteration_bounds = array<i64: 2>, scalar_prefetch = 0 : i64, scratch_operands = 2 : i64, tpu.core_type = #tpu.core_type<tc>, window_params = [{transform_indices = @transform_0, window_bounds = array<i64: 1, 32, 256>}, {pipeline_mode = #tpu.pipeline_mode<synchronous>, transform_indices = @transform_1, window_bounds = array<i64: 128, 288>}, {pipeline_mode = #tpu.pipeline_mode<synchronous>, transform_indices = @transform_2, window_bounds = array<i64: 128, 1>}, {pipeline_mode = #tpu.pipeline_mode<synchronous>, transform_indices = @transform_3, window_bounds = array<i64: 3, 256>}, {transform_indices = @transform_4, window_bounds = array<i64: 1, 128, 256>}]} {
    %c0 = arith.constant 0 : index
    %c0_0 = arith.constant 0 : index
    %c0_1 = arith.constant 0 : index
    %0 = vector.load %arg1[%c0, %c0_0, %c0_1] : memref<1x32x256xf32, #tpu.memory_space<vmem>>, vector<1x32x256xf32>
    %1 = vector.shape_cast %0 : vector<1x32x256xf32> to vector<32x256xf32>
    %cst = arith.constant 0.000000e+00 : f32
    %2 = vector.broadcast %cst : f32 to vector<32x401xf32>
    %c0_2 = arith.constant 0 : index
    %c0_3 = arith.constant 0 : index
    %3 = vector.load %arg6[%c0_2, %c0_3] : memref<32x401xf32, #tpu.memory_space<vmem>>, vector<32x401xf32>
    tpu.vector_store %arg6[%c0_2, %c0_3], %2 {strides = array<i32>} : memref<32x401xf32, #tpu.memory_space<vmem>>, vector<32x401xf32>,
    %c0_4 = arith.constant 0 : index
    %c128 = arith.constant 128 : index
    %4 = vector.load %arg6[%c0_4, %c128] : memref<32x401xf32, #tpu.memory_space<vmem>>, vector<32x256xf32>
    tpu.vector_store %arg6[%c0_4, %c128], %1 {strides = array<i32>} : memref<32x401xf32, #tpu.memory_space<vmem>>, vector<32x256xf32>,
    %c0_5 = arith.constant 0 : index
    %c111 = arith.constant 111 : index
    %5 = vector.load %arg6[%c0_5, %c111] : memref<32x401xf32, #tpu.memory_space<vmem>>, vector<32x256xf32>
    %c0_6 = arith.constant 0 : index
    %c0_7 = arith.constant 0 : index
    %6 = vector.load %arg4[%c0_6, %c0_7] : memref<3x256xf32, #tpu.memory_space<vmem>>, vector<1x256xf32>
    %7 = vector.broadcast %6 : vector<1x256xf32> to vector<32x256xf32>
    %8 = arith.mulf %5, %7 : vector<32x256xf32>
    %9 = arith.truncf %8 : vector<32x256xf32> to vector<32x256xbf16>
    %c0_8 = arith.constant 0 : index
    %c0_9 = arith.constant 0 : index
    %10 = vector.load %arg7[%c0_8, %c0_9] : memref<288x256xbf16, #tpu.memory_space<vmem>>, vector<32x256xbf16>
    tpu.vector_store %arg7[%c0_8, %c0_9], %9 {strides = array<i32>} : memref<288x256xbf16, #tpu.memory_space<vmem>>, vector<32x256xbf16>,
    %c0_10 = arith.constant 0 : index
    %c112 = arith.constant 112 : index
    %11 = vector.load %arg6[%c0_10, %c112] : memref<32x401xf32, #tpu.memory_space<vmem>>, vector<32x256xf32>
    %12 = arith.truncf %11 : vector<32x256xf32> to vector<32x256xbf16>
    %c32 = arith.constant 32 : index
    %c0_11 = arith.constant 0 : index
    %13 = vector.load %arg7[%c32, %c0_11] : memref<288x256xbf16, #tpu.memory_space<vmem>>, vector<32x256xbf16>
    tpu.vector_store %arg7[%c32, %c0_11], %12 {strides = array<i32>} : memref<288x256xbf16, #tpu.memory_space<vmem>>, vector<32x256xbf16>,
    %c0_12 = arith.constant 0 : index
    %c113 = arith.constant 113 : index
    %14 = vector.load %arg6[%c0_12, %c113] : memref<32x401xf32, #tpu.memory_space<vmem>>, vector<32x256xf32>
    %c2 = arith.constant 2 : index
    %c0_13 = arith.constant 0 : index
    %15 = vector.load %arg4[%c2, %c0_13] : memref<3x256xf32, #tpu.memory_space<vmem>>, vector<1x256xf32>
    %16 = vector.broadcast %15 : vector<1x256xf32> to vector<32x256xf32>
    %17 = arith.mulf %14, %16 : vector<32x256xf32>
    %18 = arith.truncf %17 : vector<32x256xf32> to vector<32x256xbf16>
    %c64 = arith.constant 64 : index
    %c0_14 = arith.constant 0 : index
    %19 = vector.load %arg7[%c64, %c0_14] : memref<288x256xbf16, #tpu.memory_space<vmem>>, vector<32x256xbf16>
    tpu.vector_store %arg7[%c64, %c0_14], %18 {strides = array<i32>} : memref<288x256xbf16, #tpu.memory_space<vmem>>, vector<32x256xbf16>,
    %c0_15 = arith.constant 0 : index
    %c127 = arith.constant 127 : index
    %20 = vector.load %arg6[%c0_15, %c127] : memref<32x401xf32, #tpu.memory_space<vmem>>, vector<32x256xf32>
    %c0_16 = arith.constant 0 : index
    %c0_17 = arith.constant 0 : index
    %21 = vector.load %arg4[%c0_16, %c0_17] : memref<3x256xf32, #tpu.memory_space<vmem>>, vector<1x256xf32>
    %22 = vector.broadcast %21 : vector<1x256xf32> to vector<32x256xf32>
    %23 = arith.mulf %20, %22 : vector<32x256xf32>
    %24 = arith.truncf %23 : vector<32x256xf32> to vector<32x256xbf16>
    %c96 = arith.constant 96 : index
    %c0_18 = arith.constant 0 : index
    %25 = vector.load %arg7[%c96, %c0_18] : memref<288x256xbf16, #tpu.memory_space<vmem>>, vector<32x256xbf16>
    tpu.vector_store %arg7[%c96, %c0_18], %24 {strides = array<i32>} : memref<288x256xbf16, #tpu.memory_space<vmem>>, vector<32x256xbf16>,
    %c0_19 = arith.constant 0 : index
    %c128_20 = arith.constant 128 : index
    %26 = vector.load %arg6[%c0_19, %c128_20] : memref<32x401xf32, #tpu.memory_space<vmem>>, vector<32x256xf32>
    %27 = arith.truncf %26 : vector<32x256xf32> to vector<32x256xbf16>
    %c128_21 = arith.constant 128 : index
    %c0_22 = arith.constant 0 : index
    %28 = vector.load %arg7[%c128_21, %c0_22] : memref<288x256xbf16, #tpu.memory_space<vmem>>, vector<32x256xbf16>
    tpu.vector_store %arg7[%c128_21, %c0_22], %27 {strides = array<i32>} : memref<288x256xbf16, #tpu.memory_space<vmem>>, vector<32x256xbf16>,
    %c0_23 = arith.constant 0 : index
    %c129 = arith.constant 129 : index
    %29 = vector.load %arg6[%c0_23, %c129] : memref<32x401xf32, #tpu.memory_space<vmem>>, vector<32x256xf32>
    %c2_24 = arith.constant 2 : index
    %c0_25 = arith.constant 0 : index
    %30 = vector.load %arg4[%c2_24, %c0_25] : memref<3x256xf32, #tpu.memory_space<vmem>>, vector<1x256xf32>
    %31 = vector.broadcast %30 : vector<1x256xf32> to vector<32x256xf32>
    %32 = arith.mulf %29, %31 : vector<32x256xf32>
    %33 = arith.truncf %32 : vector<32x256xf32> to vector<32x256xbf16>
    %c160 = arith.constant 160 : index
    %c0_26 = arith.constant 0 : index
    %34 = vector.load %arg7[%c160, %c0_26] : memref<288x256xbf16, #tpu.memory_space<vmem>>, vector<32x256xbf16>
    tpu.vector_store %arg7[%c160, %c0_26], %33 {strides = array<i32>} : memref<288x256xbf16, #tpu.memory_space<vmem>>, vector<32x256xbf16>,
    %c0_27 = arith.constant 0 : index
    %c143 = arith.constant 143 : index
    %35 = vector.load %arg6[%c0_27, %c143] : memref<32x401xf32, #tpu.memory_space<vmem>>, vector<32x256xf32>
    %c0_28 = arith.constant 0 : index
    %c0_29 = arith.constant 0 : index
    %36 = vector.load %arg4[%c0_28, %c0_29] : memref<3x256xf32, #tpu.memory_space<vmem>>, vector<1x256xf32>
    %37 = vector.broadcast %36 : vector<1x256xf32> to vector<32x256xf32>
    %38 = arith.mulf %35, %37 : vector<32x256xf32>
    %39 = arith.truncf %38 : vector<32x256xf32> to vector<32x256xbf16>
    %c192 = arith.constant 192 : index
    %c0_30 = arith.constant 0 : index
    %40 = vector.load %arg7[%c192, %c0_30] : memref<288x256xbf16, #tpu.memory_space<vmem>>, vector<32x256xbf16>
    tpu.vector_store %arg7[%c192, %c0_30], %39 {strides = array<i32>} : memref<288x256xbf16, #tpu.memory_space<vmem>>, vector<32x256xbf16>,
    %c0_31 = arith.constant 0 : index
    %c144 = arith.constant 144 : index
    %41 = vector.load %arg6[%c0_31, %c144] : memref<32x401xf32, #tpu.memory_space<vmem>>, vector<32x256xf32>
    %42 = arith.truncf %41 : vector<32x256xf32> to vector<32x256xbf16>
    %c224 = arith.constant 224 : index
    %c0_32 = arith.constant 0 : index
    %43 = vector.load %arg7[%c224, %c0_32] : memref<288x256xbf16, #tpu.memory_space<vmem>>, vector<32x256xbf16>
    tpu.vector_store %arg7[%c224, %c0_32], %42 {strides = array<i32>} : memref<288x256xbf16, #tpu.memory_space<vmem>>, vector<32x256xbf16>,
    %c0_33 = arith.constant 0 : index
    %c145 = arith.constant 145 : index
    %44 = vector.load %arg6[%c0_33, %c145] : memref<32x401xf32, #tpu.memory_space<vmem>>, vector<32x256xf32>
    %c2_34 = arith.constant 2 : index
    %c0_35 = arith.constant 0 : index
    %45 = vector.load %arg4[%c2_34, %c0_35] : memref<3x256xf32, #tpu.memory_space<vmem>>, vector<1x256xf32>
    %46 = vector.broadcast %45 : vector<1x256xf32> to vector<32x256xf32>
    %47 = arith.mulf %44, %46 : vector<32x256xf32>
    %48 = arith.truncf %47 : vector<32x256xf32> to vector<32x256xbf16>
    %c256 = arith.constant 256 : index
    %c0_36 = arith.constant 0 : index
    %49 = vector.load %arg7[%c256, %c0_36] : memref<288x256xbf16, #tpu.memory_space<vmem>>, vector<32x256xbf16>
    tpu.vector_store %arg7[%c256, %c0_36], %48 {strides = array<i32>} : memref<288x256xbf16, #tpu.memory_space<vmem>>, vector<32x256xbf16>,
    %c0_37 = arith.constant 0 : index
    %c0_38 = arith.constant 0 : index
    %50 = vector.load %arg2[%c0_37, %c0_38] : memref<128x288xbf16, #tpu.memory_space<vmem>>, vector<128x288xbf16>
    %c0_39 = arith.constant 0 : index
    %c0_40 = arith.constant 0 : index
    %51 = vector.load %arg7[%c0_39, %c0_40] : memref<288x256xbf16, #tpu.memory_space<vmem>>, vector<288x256xbf16>
    %cst_41 = arith.constant dense<0.000000e+00> : vector<128x256xf32>
    %52 = tpu.matmul %50, %51, %cst_41 {dimension_numbers = #tpu.dot_dimension_numbers<[1], [0], [0], [1], [0, 0, 1, 1], [], []>} : vector<128x288xbf16>, vector<288x256xbf16>, vector<128x256xf32> -> vector<128x256xf32>
    %c0_42 = arith.constant 0 : index
    %c0_43 = arith.constant 0 : index
    %53 = vector.load %arg3[%c0_42, %c0_43] : memref<128x1xf32, #tpu.memory_space<vmem>>, vector<128x1xf32>
    %54 = vector.broadcast %53 : vector<128x1xf32> to vector<128x256xf32>
    %55 = arith.addf %52, %54 : vector<128x256xf32>
    %c0_44 = arith.constant 0 : index
    %c0_45 = arith.constant 0 : index
    %c0_46 = arith.constant 0 : index
    %56 = vector.load %arg5[%c0_44, %c0_45, %c0_46] : memref<1x128x256xf32, #tpu.memory_space<vmem>>, vector<1x128x256xf32>
    %57 = vector.shape_cast %56 : vector<1x128x256xf32> to vector<128x256xf32>
    %58 = vector.shape_cast %55 : vector<128x256xf32> to vector<1x128x256xf32>
    tpu.vector_store %arg5[%c0_44, %c0_45, %c0_46], %58 {strides = array<i32>} : memref<1x128x256xf32, #tpu.memory_space<vmem>>, vector<1x128x256xf32>,
    return
  }
  func.func @transform_0(%arg0: i32) -> (i32, i32, i32) {
    %c0_i32 = arith.constant 0 : i32
    %c0_i32_0 = arith.constant 0 : i32
    %c0_i32_1 = arith.constant 0 : i32
    return %arg0, %c0_i32, %c0_i32_0 : i32, i32, i32
  }
  func.func @transform_1(%arg0: i32) -> (i32, i32) {
    %c0_i32 = arith.constant 0 : i32
    %c0_i32_0 = arith.constant 0 : i32
    %c0_i32_1 = arith.constant 0 : i32
    return %c0_i32, %c0_i32_0 : i32, i32
  }
  func.func @transform_2(%arg0: i32) -> (i32, i32) {
    %c0_i32 = arith.constant 0 : i32
    %c0_i32_0 = arith.constant 0 : i32
    %c0_i32_1 = arith.constant 0 : i32
    return %c0_i32, %c0_i32_0 : i32, i32
  }
  func.func @transform_3(%arg0: i32) -> (i32, i32) {
    %c0_i32 = arith.constant 0 : i32
    %c0_i32_0 = arith.constant 0 : i32
    %c0_i32_1 = arith.constant 0 : i32
    return %c0_i32, %c0_i32_0 : i32, i32
  }
  func.func @transform_4(%arg0: i32) -> (i32, i32, i32) {
    %c0_i32 = arith.constant 0 : i32
    %c0_i32_0 = arith.constant 0 : i32
    %c0_i32_1 = arith.constant 0 : i32
    return %arg0, %c0_i32, %c0_i32_0 : i32, i32, i32
  }
}

module attributes {stable_mosaic.version = 11 : i64} {
  func.func @_conv3x3_kernel(%arg0: i32, %arg1: memref<1x4x256xf32, #tpu.memory_space<vmem>>, %arg2: memref<32x36xbf16, #tpu.memory_space<vmem>>, %arg3: memref<32x1xf32, #tpu.memory_space<vmem>>, %arg4: memref<3x256xf32, #tpu.memory_space<vmem>>, %arg5: memref<1x32x256xf32, #tpu.memory_space<vmem>>, %arg6: memref<4x401xf32, #tpu.memory_space<vmem>>, %arg7: memref<36x256xbf16, #tpu.memory_space<vmem>>) attributes {dimension_semantics = [#tpu.dimension_semantics<parallel>], iteration_bounds = array<i64: 2>, scalar_prefetch = 0 : i64, scratch_operands = 2 : i64, tpu.core_type = #tpu.core_type<tc>, window_params = [{transform_indices = @transform_0, window_bounds = array<i64: 1, 4, 256>}, {pipeline_mode = #tpu.pipeline_mode<synchronous>, transform_indices = @transform_1, window_bounds = array<i64: 32, 36>}, {pipeline_mode = #tpu.pipeline_mode<synchronous>, transform_indices = @transform_2, window_bounds = array<i64: 32, 1>}, {pipeline_mode = #tpu.pipeline_mode<synchronous>, transform_indices = @transform_3, window_bounds = array<i64: 3, 256>}, {transform_indices = @transform_4, window_bounds = array<i64: 1, 32, 256>}]} {
    %c0 = arith.constant 0 : index
    %c0_0 = arith.constant 0 : index
    %c0_1 = arith.constant 0 : index
    %0 = vector.load %arg1[%c0, %c0_0, %c0_1] : memref<1x4x256xf32, #tpu.memory_space<vmem>>, vector<1x4x256xf32>
    %1 = vector.shape_cast %0 : vector<1x4x256xf32> to vector<4x256xf32>
    %cst = arith.constant 0.000000e+00 : f32
    %2 = vector.broadcast %cst : f32 to vector<4x401xf32>
    %c0_2 = arith.constant 0 : index
    %c0_3 = arith.constant 0 : index
    %3 = vector.load %arg6[%c0_2, %c0_3] : memref<4x401xf32, #tpu.memory_space<vmem>>, vector<4x401xf32>
    tpu.vector_store %arg6[%c0_2, %c0_3], %2 {strides = array<i32>} : memref<4x401xf32, #tpu.memory_space<vmem>>, vector<4x401xf32>,
    %c0_4 = arith.constant 0 : index
    %c128 = arith.constant 128 : index
    %4 = vector.load %arg6[%c0_4, %c128] : memref<4x401xf32, #tpu.memory_space<vmem>>, vector<4x256xf32>
    tpu.vector_store %arg6[%c0_4, %c128], %1 {strides = array<i32>} : memref<4x401xf32, #tpu.memory_space<vmem>>, vector<4x256xf32>,
    %cst_5 = arith.constant 0.000000e+00 : f32
    %5 = vector.broadcast %cst_5 : f32 to vector<32x256xf32>
    %c0_6 = arith.constant 0 : index
    %c111 = arith.constant 111 : index
    %6 = vector.load %arg6[%c0_6, %c111] : memref<4x401xf32, #tpu.memory_space<vmem>>, vector<4x256xf32>
    %c0_7 = arith.constant 0 : index
    %c0_8 = arith.constant 0 : index
    %7 = vector.load %arg4[%c0_7, %c0_8] : memref<3x256xf32, #tpu.memory_space<vmem>>, vector<1x256xf32>
    %8 = vector.broadcast %7 : vector<1x256xf32> to vector<4x256xf32>
    %9 = arith.mulf %6, %8 : vector<4x256xf32>
    %10 = arith.truncf %9 : vector<4x256xf32> to vector<4x256xbf16>
    %c0_9 = arith.constant 0 : index
    %c0_10 = arith.constant 0 : index
    %11 = vector.load %arg2[%c0_9, %c0_10] : memref<32x36xbf16, #tpu.memory_space<vmem>>, vector<32x4xbf16>
    %cst_11 = arith.constant dense<0.000000e+00> : vector<32x256xf32>
    %12 = tpu.matmul %11, %10, %cst_11 {dimension_numbers = #tpu.dot_dimension_numbers<[1], [0], [0], [1], [0, 0, 1, 1], [], []>} : vector<32x4xbf16>, vector<4x256xbf16>, vector<32x256xf32> -> vector<32x256xf32>
    %13 = arith.addf %5, %12 : vector<32x256xf32>
    %c0_12 = arith.constant 0 : index
    %c112 = arith.constant 112 : index
    %14 = vector.load %arg6[%c0_12, %c112] : memref<4x401xf32, #tpu.memory_space<vmem>>, vector<4x256xf32>
    %15 = arith.truncf %14 : vector<4x256xf32> to vector<4x256xbf16>
    %c0_13 = arith.constant 0 : index
    %c4 = arith.constant 4 : index
    %16 = vector.load %arg2[%c0_13, %c4] : memref<32x36xbf16, #tpu.memory_space<vmem>>, vector<32x4xbf16>
    %cst_14 = arith.constant dense<0.000000e+00> : vector<32x256xf32>
    %17 = tpu.matmul %16, %15, %cst_14 {dimension_numbers = #tpu.dot_dimension_numbers<[1], [0], [0], [1], [0, 0, 1, 1], [], []>} : vector<32x4xbf16>, vector<4x256xbf16>, vector<32x256xf32> -> vector<32x256xf32>
    %18 = arith.addf %13, %17 : vector<32x256xf32>
    %c0_15 = arith.constant 0 : index
    %c113 = arith.constant 113 : index
    %19 = vector.load %arg6[%c0_15, %c113] : memref<4x401xf32, #tpu.memory_space<vmem>>, vector<4x256xf32>
    %c2 = arith.constant 2 : index
    %c0_16 = arith.constant 0 : index
    %20 = vector.load %arg4[%c2, %c0_16] : memref<3x256xf32, #tpu.memory_space<vmem>>, vector<1x256xf32>
    %21 = vector.broadcast %20 : vector<1x256xf32> to vector<4x256xf32>
    %22 = arith.mulf %19, %21 : vector<4x256xf32>
    %23 = arith.truncf %22 : vector<4x256xf32> to vector<4x256xbf16>
    %c0_17 = arith.constant 0 : index
    %c8 = arith.constant 8 : index
    %24 = vector.load %arg2[%c0_17, %c8] : memref<32x36xbf16, #tpu.memory_space<vmem>>, vector<32x4xbf16>
    %cst_18 = arith.constant dense<0.000000e+00> : vector<32x256xf32>
    %25 = tpu.matmul %24, %23, %cst_18 {dimension_numbers = #tpu.dot_dimension_numbers<[1], [0], [0], [1], [0, 0, 1, 1], [], []>} : vector<32x4xbf16>, vector<4x256xbf16>, vector<32x256xf32> -> vector<32x256xf32>
    %26 = arith.addf %18, %25 : vector<32x256xf32>
    %c0_19 = arith.constant 0 : index
    %c127 = arith.constant 127 : index
    %27 = vector.load %arg6[%c0_19, %c127] : memref<4x401xf32, #tpu.memory_space<vmem>>, vector<4x256xf32>
    %c0_20 = arith.constant 0 : index
    %c0_21 = arith.constant 0 : index
    %28 = vector.load %arg4[%c0_20, %c0_21] : memref<3x256xf32, #tpu.memory_space<vmem>>, vector<1x256xf32>
    %29 = vector.broadcast %28 : vector<1x256xf32> to vector<4x256xf32>
    %30 = arith.mulf %27, %29 : vector<4x256xf32>
    %31 = arith.truncf %30 : vector<4x256xf32> to vector<4x256xbf16>
    %c0_22 = arith.constant 0 : index
    %c12 = arith.constant 12 : index
    %32 = vector.load %arg2[%c0_22, %c12] : memref<32x36xbf16, #tpu.memory_space<vmem>>, vector<32x4xbf16>
    %cst_23 = arith.constant dense<0.000000e+00> : vector<32x256xf32>
    %33 = tpu.matmul %32, %31, %cst_23 {dimension_numbers = #tpu.dot_dimension_numbers<[1], [0], [0], [1], [0, 0, 1, 1], [], []>} : vector<32x4xbf16>, vector<4x256xbf16>, vector<32x256xf32> -> vector<32x256xf32>
    %34 = arith.addf %26, %33 : vector<32x256xf32>
    %c0_24 = arith.constant 0 : index
    %c128_25 = arith.constant 128 : index
    %35 = vector.load %arg6[%c0_24, %c128_25] : memref<4x401xf32, #tpu.memory_space<vmem>>, vector<4x256xf32>
    %36 = arith.truncf %35 : vector<4x256xf32> to vector<4x256xbf16>
    %c0_26 = arith.constant 0 : index
    %c16 = arith.constant 16 : index
    %37 = vector.load %arg2[%c0_26, %c16] : memref<32x36xbf16, #tpu.memory_space<vmem>>, vector<32x4xbf16>
    %cst_27 = arith.constant dense<0.000000e+00> : vector<32x256xf32>
    %38 = tpu.matmul %37, %36, %cst_27 {dimension_numbers = #tpu.dot_dimension_numbers<[1], [0], [0], [1], [0, 0, 1, 1], [], []>} : vector<32x4xbf16>, vector<4x256xbf16>, vector<32x256xf32> -> vector<32x256xf32>
    %39 = arith.addf %34, %38 : vector<32x256xf32>
    %c0_28 = arith.constant 0 : index
    %c129 = arith.constant 129 : index
    %40 = vector.load %arg6[%c0_28, %c129] : memref<4x401xf32, #tpu.memory_space<vmem>>, vector<4x256xf32>
    %c2_29 = arith.constant 2 : index
    %c0_30 = arith.constant 0 : index
    %41 = vector.load %arg4[%c2_29, %c0_30] : memref<3x256xf32, #tpu.memory_space<vmem>>, vector<1x256xf32>
    %42 = vector.broadcast %41 : vector<1x256xf32> to vector<4x256xf32>
    %43 = arith.mulf %40, %42 : vector<4x256xf32>
    %44 = arith.truncf %43 : vector<4x256xf32> to vector<4x256xbf16>
    %c0_31 = arith.constant 0 : index
    %c20 = arith.constant 20 : index
    %45 = vector.load %arg2[%c0_31, %c20] : memref<32x36xbf16, #tpu.memory_space<vmem>>, vector<32x4xbf16>
    %cst_32 = arith.constant dense<0.000000e+00> : vector<32x256xf32>
    %46 = tpu.matmul %45, %44, %cst_32 {dimension_numbers = #tpu.dot_dimension_numbers<[1], [0], [0], [1], [0, 0, 1, 1], [], []>} : vector<32x4xbf16>, vector<4x256xbf16>, vector<32x256xf32> -> vector<32x256xf32>
    %47 = arith.addf %39, %46 : vector<32x256xf32>
    %c0_33 = arith.constant 0 : index
    %c143 = arith.constant 143 : index
    %48 = vector.load %arg6[%c0_33, %c143] : memref<4x401xf32, #tpu.memory_space<vmem>>, vector<4x256xf32>
    %c0_34 = arith.constant 0 : index
    %c0_35 = arith.constant 0 : index
    %49 = vector.load %arg4[%c0_34, %c0_35] : memref<3x256xf32, #tpu.memory_space<vmem>>, vector<1x256xf32>
    %50 = vector.broadcast %49 : vector<1x256xf32> to vector<4x256xf32>
    %51 = arith.mulf %48, %50 : vector<4x256xf32>
    %52 = arith.truncf %51 : vector<4x256xf32> to vector<4x256xbf16>
    %c0_36 = arith.constant 0 : index
    %c24 = arith.constant 24 : index
    %53 = vector.load %arg2[%c0_36, %c24] : memref<32x36xbf16, #tpu.memory_space<vmem>>, vector<32x4xbf16>
    %cst_37 = arith.constant dense<0.000000e+00> : vector<32x256xf32>
    %54 = tpu.matmul %53, %52, %cst_37 {dimension_numbers = #tpu.dot_dimension_numbers<[1], [0], [0], [1], [0, 0, 1, 1], [], []>} : vector<32x4xbf16>, vector<4x256xbf16>, vector<32x256xf32> -> vector<32x256xf32>
    %55 = arith.addf %47, %54 : vector<32x256xf32>
    %c0_38 = arith.constant 0 : index
    %c144 = arith.constant 144 : index
    %56 = vector.load %arg6[%c0_38, %c144] : memref<4x401xf32, #tpu.memory_space<vmem>>, vector<4x256xf32>
    %57 = arith.truncf %56 : vector<4x256xf32> to vector<4x256xbf16>
    %c0_39 = arith.constant 0 : index
    %c28 = arith.constant 28 : index
    %58 = vector.load %arg2[%c0_39, %c28] : memref<32x36xbf16, #tpu.memory_space<vmem>>, vector<32x4xbf16>
    %cst_40 = arith.constant dense<0.000000e+00> : vector<32x256xf32>
    %59 = tpu.matmul %58, %57, %cst_40 {dimension_numbers = #tpu.dot_dimension_numbers<[1], [0], [0], [1], [0, 0, 1, 1], [], []>} : vector<32x4xbf16>, vector<4x256xbf16>, vector<32x256xf32> -> vector<32x256xf32>
    %60 = arith.addf %55, %59 : vector<32x256xf32>
    %c0_41 = arith.constant 0 : index
    %c145 = arith.constant 145 : index
    %61 = vector.load %arg6[%c0_41, %c145] : memref<4x401xf32, #tpu.memory_space<vmem>>, vector<4x256xf32>
    %c2_42 = arith.constant 2 : index
    %c0_43 = arith.constant 0 : index
    %62 = vector.load %arg4[%c2_42, %c0_43] : memref<3x256xf32, #tpu.memory_space<vmem>>, vector<1x256xf32>
    %63 = vector.broadcast %62 : vector<1x256xf32> to vector<4x256xf32>
    %64 = arith.mulf %61, %63 : vector<4x256xf32>
    %65 = arith.truncf %64 : vector<4x256xf32> to vector<4x256xbf16>
    %c0_44 = arith.constant 0 : index
    %c32 = arith.constant 32 : index
    %66 = vector.load %arg2[%c0_44, %c32] : memref<32x36xbf16, #tpu.memory_space<vmem>>, vector<32x4xbf16>
    %cst_45 = arith.constant dense<0.000000e+00> : vector<32x256xf32>
    %67 = tpu.matmul %66, %65, %cst_45 {dimension_numbers = #tpu.dot_dimension_numbers<[1], [0], [0], [1], [0, 0, 1, 1], [], []>} : vector<32x4xbf16>, vector<4x256xbf16>, vector<32x256xf32> -> vector<32x256xf32>
    %68 = arith.addf %60, %67 : vector<32x256xf32>
    %c0_46 = arith.constant 0 : index
    %c0_47 = arith.constant 0 : index
    %69 = vector.load %arg3[%c0_46, %c0_47] : memref<32x1xf32, #tpu.memory_space<vmem>>, vector<32x1xf32>
    %70 = vector.broadcast %69 : vector<32x1xf32> to vector<32x256xf32>
    %71 = arith.addf %68, %70 : vector<32x256xf32>
    %c0_48 = arith.constant 0 : index
    %c0_49 = arith.constant 0 : index
    %c0_50 = arith.constant 0 : index
    %72 = vector.load %arg5[%c0_48, %c0_49, %c0_50] : memref<1x32x256xf32, #tpu.memory_space<vmem>>, vector<1x32x256xf32>
    %73 = vector.shape_cast %72 : vector<1x32x256xf32> to vector<32x256xf32>
    %74 = vector.shape_cast %71 : vector<32x256xf32> to vector<1x32x256xf32>
    tpu.vector_store %arg5[%c0_48, %c0_49, %c0_50], %74 {strides = array<i32>} : memref<1x32x256xf32, #tpu.memory_space<vmem>>, vector<1x32x256xf32>,
    return
  }
  func.func @transform_0(%arg0: i32) -> (i32, i32, i32) {
    %c0_i32 = arith.constant 0 : i32
    %c0_i32_0 = arith.constant 0 : i32
    %c0_i32_1 = arith.constant 0 : i32
    return %arg0, %c0_i32, %c0_i32_0 : i32, i32, i32
  }
  func.func @transform_1(%arg0: i32) -> (i32, i32) {
    %c0_i32 = arith.constant 0 : i32
    %c0_i32_0 = arith.constant 0 : i32
    %c0_i32_1 = arith.constant 0 : i32
    return %c0_i32, %c0_i32_0 : i32, i32
  }
  func.func @transform_2(%arg0: i32) -> (i32, i32) {
    %c0_i32 = arith.constant 0 : i32
    %c0_i32_0 = arith.constant 0 : i32
    %c0_i32_1 = arith.constant 0 : i32
    return %c0_i32, %c0_i32_0 : i32, i32
  }
  func.func @transform_3(%arg0: i32) -> (i32, i32) {
    %c0_i32 = arith.constant 0 : i32
    %c0_i32_0 = arith.constant 0 : i32
    %c0_i32_1 = arith.constant 0 : i32
    return %c0_i32, %c0_i32_0 : i32, i32
  }
  func.func @transform_4(%arg0: i32) -> (i32, i32, i32) {
    %c0_i32 = arith.constant 0 : i32
    %c0_i32_0 = arith.constant 0 : i32
    %c0_i32_1 = arith.constant 0 : i32
    return %arg0, %c0_i32, %c0_i32_0 : i32, i32, i32
  }
}

module attributes {stable_mosaic.version = 11 : i64} {
  func.func @_totalgroup_kernel(%arg0: i32, %arg1: memref<1x32x256xf32, #tpu.memory_space<vmem>>, %arg2: memref<1x32x256xf32, #tpu.memory_space<vmem>>, %arg3: memref<14xf32, #tpu.memory_space<smem>>, %arg4: memref<3x256xf32, #tpu.memory_space<vmem>>, %arg5: memref<32x288xbf16, #tpu.memory_space<vmem>>, %arg6: memref<32x1xf32, #tpu.memory_space<vmem>>, %arg7: memref<32x1xf32, #tpu.memory_space<vmem>>, %arg8: memref<32x1xf32, #tpu.memory_space<vmem>>, %arg9: memref<8x72xbf16, #tpu.memory_space<vmem>>, %arg10: memref<32x32xbf16, #tpu.memory_space<vmem>>, %arg11: memref<32x1xf32, #tpu.memory_space<vmem>>, %arg12: memref<32x2xf32, #tpu.memory_space<vmem>>, %arg13: memref<1x2xf32, #tpu.memory_space<vmem>>, %arg14: memref<32x2xf32, #tpu.memory_space<vmem>>, %arg15: memref<32x1xf32, #tpu.memory_space<vmem>>, %arg16: memref<32x32xbf16, #tpu.memory_space<vmem>>, %arg17: memref<32x1xf32, #tpu.memory_space<vmem>>, %arg18: memref<32x288xbf16, #tpu.memory_space<vmem>>, %arg19: memref<32x1xf32, #tpu.memory_space<vmem>>, %arg20: memref<1x32x256xf32, #tpu.memory_space<vmem>>, %arg21: memref<34x401xf32, #tpu.memory_space<vmem>>, %arg22: memref<288x256xbf16, #tpu.memory_space<vmem>>) attributes {dimension_semantics = [#tpu.dimension_semantics<parallel>], iteration_bounds = array<i64: 2>, scalar_prefetch = 0 : i64, scratch_operands = 2 : i64, tpu.core_type = #tpu.core_type<tc>, window_params = [{transform_indices = @transform_0, window_bounds = array<i64: 1, 32, 256>}, {transform_indices = @transform_1, window_bounds = array<i64: 1, 32, 256>}, {transform_indices = @transform_2, window_bounds = array<i64: 14>}, {pipeline_mode = #tpu.pipeline_mode<synchronous>, transform_indices = @transform_3, window_bounds = array<i64: 3, 256>}, {pipeline_mode = #tpu.pipeline_mode<synchronous>, transform_indices = @transform_4, window_bounds = array<i64: 32, 288>}, {pipeline_mode = #tpu.pipeline_mode<synchronous>, transform_indices = @transform_5, window_bounds = array<i64: 32, 1>}, {pipeline_mode = #tpu.pipeline_mode<synchronous>, transform_indices = @transform_6, window_bounds = array<i64: 32, 1>}, {pipeline_mode = #tpu.pipeline_mode<synchronous>, transform_indices = @transform_7, window_bounds = array<i64: 32, 1>}, {pipeline_mode = #tpu.pipeline_mode<synchronous>, transform_indices = @transform_8, window_bounds = array<i64: 8, 72>}, {pipeline_mode = #tpu.pipeline_mode<synchronous>, transform_indices = @transform_9, window_bounds = array<i64: 32, 32>}, {pipeline_mode = #tpu.pipeline_mode<synchronous>, transform_indices = @transform_10, window_bounds = array<i64: 32, 1>}, {pipeline_mode = #tpu.pipeline_mode<synchronous>, transform_indices = @transform_11, window_bounds = array<i64: 32, 2>}, {pipeline_mode = #tpu.pipeline_mode<synchronous>, transform_indices = @transform_12, window_bounds = array<i64: 1, 2>}, {pipeline_mode = #tpu.pipeline_mode<synchronous>, transform_indices = @transform_13, window_bounds = array<i64: 32, 2>}, {pipeline_mode = #tpu.pipeline_mode<synchronous>, transform_indices = @transform_14, window_bounds = array<i64: 32, 1>}, {pipeline_mode = #tpu.pipeline_mode<synchronous>, transform_indices = @transform_15, window_bounds = array<i64: 32, 32>}, {pipeline_mode = #tpu.pipeline_mode<synchronous>, transform_indices = @transform_16, window_bounds = array<i64: 32, 1>}, {pipeline_mode = #tpu.pipeline_mode<synchronous>, transform_indices = @transform_17, window_bounds = array<i64: 32, 288>}, {pipeline_mode = #tpu.pipeline_mode<synchronous>, transform_indices = @transform_18, window_bounds = array<i64: 32, 1>}, {transform_indices = @transform_19, window_bounds = array<i64: 1, 32, 256>}]} {
    %c0 = arith.constant 0 : index
    %c0_0 = arith.constant 0 : index
    %c0_1 = arith.constant 0 : index
    %0 = vector.load %arg1[%c0, %c0_0, %c0_1] : memref<1x32x256xf32, #tpu.memory_space<vmem>>, vector<1x32x256xf32>
    %1 = vector.shape_cast %0 : vector<1x32x256xf32> to vector<32x256xf32>
    %cst = arith.constant 0.000000e+00 : f32
    %2 = vector.broadcast %cst : f32 to vector<34x401xf32>
    %c0_2 = arith.constant 0 : index
    %c0_3 = arith.constant 0 : index
    %3 = vector.load %arg21[%c0_2, %c0_3] : memref<34x401xf32, #tpu.memory_space<vmem>>, vector<34x401xf32>
    tpu.vector_store %arg21[%c0_2, %c0_3], %2 {strides = array<i32>} : memref<34x401xf32, #tpu.memory_space<vmem>>, vector<34x401xf32>,
    %c0_4 = arith.constant 0 : index
    %c128 = arith.constant 128 : index
    %4 = vector.load %arg21[%c0_4, %c128] : memref<34x401xf32, #tpu.memory_space<vmem>>, vector<32x256xf32>
    tpu.vector_store %arg21[%c0_4, %c128], %1 {strides = array<i32>} : memref<34x401xf32, #tpu.memory_space<vmem>>, vector<32x256xf32>,
    %c0_5 = arith.constant 0 : index
    %c111 = arith.constant 111 : index
    %5 = vector.load %arg21[%c0_5, %c111] : memref<34x401xf32, #tpu.memory_space<vmem>>, vector<32x256xf32>
    %c0_6 = arith.constant 0 : index
    %c0_7 = arith.constant 0 : index
    %6 = vector.load %arg4[%c0_6, %c0_7] : memref<3x256xf32, #tpu.memory_space<vmem>>, vector<1x256xf32>
    %7 = vector.broadcast %6 : vector<1x256xf32> to vector<32x256xf32>
    %8 = arith.mulf %5, %7 : vector<32x256xf32>
    %9 = arith.truncf %8 : vector<32x256xf32> to vector<32x256xbf16>
    %c0_8 = arith.constant 0 : index
    %c0_9 = arith.constant 0 : index
    %10 = vector.load %arg22[%c0_8, %c0_9] : memref<288x256xbf16, #tpu.memory_space<vmem>>, vector<32x256xbf16>
    tpu.vector_store %arg22[%c0_8, %c0_9], %9 {strides = array<i32>} : memref<288x256xbf16, #tpu.memory_space<vmem>>, vector<32x256xbf16>,
    %c0_10 = arith.constant 0 : index
    %c112 = arith.constant 112 : index
    %11 = vector.load %arg21[%c0_10, %c112] : memref<34x401xf32, #tpu.memory_space<vmem>>, vector<32x256xf32>
    %12 = arith.truncf %11 : vector<32x256xf32> to vector<32x256xbf16>
    %c32 = arith.constant 32 : index
    %c0_11 = arith.constant 0 : index
    %13 = vector.load %arg22[%c32, %c0_11] : memref<288x256xbf16, #tpu.memory_space<vmem>>, vector<32x256xbf16>
    tpu.vector_store %arg22[%c32, %c0_11], %12 {strides = array<i32>} : memref<288x256xbf16, #tpu.memory_space<vmem>>, vector<32x256xbf16>,
    %c0_12 = arith.constant 0 : index
    %c113 = arith.constant 113 : index
    %14 = vector.load %arg21[%c0_12, %c113] : memref<34x401xf32, #tpu.memory_space<vmem>>, vector<32x256xf32>
    %c2 = arith.constant 2 : index
    %c0_13 = arith.constant 0 : index
    %15 = vector.load %arg4[%c2, %c0_13] : memref<3x256xf32, #tpu.memory_space<vmem>>, vector<1x256xf32>
    %16 = vector.broadcast %15 : vector<1x256xf32> to vector<32x256xf32>
    %17 = arith.mulf %14, %16 : vector<32x256xf32>
    %18 = arith.truncf %17 : vector<32x256xf32> to vector<32x256xbf16>
    %c64 = arith.constant 64 : index
    %c0_14 = arith.constant 0 : index
    %19 = vector.load %arg22[%c64, %c0_14] : memref<288x256xbf16, #tpu.memory_space<vmem>>, vector<32x256xbf16>
    tpu.vector_store %arg22[%c64, %c0_14], %18 {strides = array<i32>} : memref<288x256xbf16, #tpu.memory_space<vmem>>, vector<32x256xbf16>,
    %c0_15 = arith.constant 0 : index
    %c127 = arith.constant 127 : index
    %20 = vector.load %arg21[%c0_15, %c127] : memref<34x401xf32, #tpu.memory_space<vmem>>, vector<32x256xf32>
    %c0_16 = arith.constant 0 : index
    %c0_17 = arith.constant 0 : index
    %21 = vector.load %arg4[%c0_16, %c0_17] : memref<3x256xf32, #tpu.memory_space<vmem>>, vector<1x256xf32>
    %22 = vector.broadcast %21 : vector<1x256xf32> to vector<32x256xf32>
    %23 = arith.mulf %20, %22 : vector<32x256xf32>
    %24 = arith.truncf %23 : vector<32x256xf32> to vector<32x256xbf16>
    %c96 = arith.constant 96 : index
    %c0_18 = arith.constant 0 : index
    %25 = vector.load %arg22[%c96, %c0_18] : memref<288x256xbf16, #tpu.memory_space<vmem>>, vector<32x256xbf16>
    tpu.vector_store %arg22[%c96, %c0_18], %24 {strides = array<i32>} : memref<288x256xbf16, #tpu.memory_space<vmem>>, vector<32x256xbf16>,
    %c0_19 = arith.constant 0 : index
    %c128_20 = arith.constant 128 : index
    %26 = vector.load %arg21[%c0_19, %c128_20] : memref<34x401xf32, #tpu.memory_space<vmem>>, vector<32x256xf32>
    %27 = arith.truncf %26 : vector<32x256xf32> to vector<32x256xbf16>
    %c128_21 = arith.constant 128 : index
    %c0_22 = arith.constant 0 : index
    %28 = vector.load %arg22[%c128_21, %c0_22] : memref<288x256xbf16, #tpu.memory_space<vmem>>, vector<32x256xbf16>
    tpu.vector_store %arg22[%c128_21, %c0_22], %27 {strides = array<i32>} : memref<288x256xbf16, #tpu.memory_space<vmem>>, vector<32x256xbf16>,
    %c0_23 = arith.constant 0 : index
    %c129 = arith.constant 129 : index
    %29 = vector.load %arg21[%c0_23, %c129] : memref<34x401xf32, #tpu.memory_space<vmem>>, vector<32x256xf32>
    %c2_24 = arith.constant 2 : index
    %c0_25 = arith.constant 0 : index
    %30 = vector.load %arg4[%c2_24, %c0_25] : memref<3x256xf32, #tpu.memory_space<vmem>>, vector<1x256xf32>
    %31 = vector.broadcast %30 : vector<1x256xf32> to vector<32x256xf32>
    %32 = arith.mulf %29, %31 : vector<32x256xf32>
    %33 = arith.truncf %32 : vector<32x256xf32> to vector<32x256xbf16>
    %c160 = arith.constant 160 : index
    %c0_26 = arith.constant 0 : index
    %34 = vector.load %arg22[%c160, %c0_26] : memref<288x256xbf16, #tpu.memory_space<vmem>>, vector<32x256xbf16>
    tpu.vector_store %arg22[%c160, %c0_26], %33 {strides = array<i32>} : memref<288x256xbf16, #tpu.memory_space<vmem>>, vector<32x256xbf16>,
    %c0_27 = arith.constant 0 : index
    %c143 = arith.constant 143 : index
    %35 = vector.load %arg21[%c0_27, %c143] : memref<34x401xf32, #tpu.memory_space<vmem>>, vector<32x256xf32>
    %c0_28 = arith.constant 0 : index
    %c0_29 = arith.constant 0 : index
    %36 = vector.load %arg4[%c0_28, %c0_29] : memref<3x256xf32, #tpu.memory_space<vmem>>, vector<1x256xf32>
    %37 = vector.broadcast %36 : vector<1x256xf32> to vector<32x256xf32>
    %38 = arith.mulf %35, %37 : vector<32x256xf32>
    %39 = arith.truncf %38 : vector<32x256xf32> to vector<32x256xbf16>
    %c192 = arith.constant 192 : index
    %c0_30 = arith.constant 0 : index
    %40 = vector.load %arg22[%c192, %c0_30] : memref<288x256xbf16, #tpu.memory_space<vmem>>, vector<32x256xbf16>
    tpu.vector_store %arg22[%c192, %c0_30], %39 {strides = array<i32>} : memref<288x256xbf16, #tpu.memory_space<vmem>>, vector<32x256xbf16>,
    %c0_31 = arith.constant 0 : index
    %c144 = arith.constant 144 : index
    %41 = vector.load %arg21[%c0_31, %c144] : memref<34x401xf32, #tpu.memory_space<vmem>>, vector<32x256xf32>
    %42 = arith.truncf %41 : vector<32x256xf32> to vector<32x256xbf16>
    %c224 = arith.constant 224 : index
    %c0_32 = arith.constant 0 : index
    %43 = vector.load %arg22[%c224, %c0_32] : memref<288x256xbf16, #tpu.memory_space<vmem>>, vector<32x256xbf16>
    tpu.vector_store %arg22[%c224, %c0_32], %42 {strides = array<i32>} : memref<288x256xbf16, #tpu.memory_space<vmem>>, vector<32x256xbf16>,
    %c0_33 = arith.constant 0 : index
    %c145 = arith.constant 145 : index
    %44 = vector.load %arg21[%c0_33, %c145] : memref<34x401xf32, #tpu.memory_space<vmem>>, vector<32x256xf32>
    %c2_34 = arith.constant 2 : index
    %c0_35 = arith.constant 0 : index
    %45 = vector.load %arg4[%c2_34, %c0_35] : memref<3x256xf32, #tpu.memory_space<vmem>>, vector<1x256xf32>
    %46 = vector.broadcast %45 : vector<1x256xf32> to vector<32x256xf32>
    %47 = arith.mulf %44, %46 : vector<32x256xf32>
    %48 = arith.truncf %47 : vector<32x256xf32> to vector<32x256xbf16>
    %c256 = arith.constant 256 : index
    %c0_36 = arith.constant 0 : index
    %49 = vector.load %arg22[%c256, %c0_36] : memref<288x256xbf16, #tpu.memory_space<vmem>>, vector<32x256xbf16>
    tpu.vector_store %arg22[%c256, %c0_36], %48 {strides = array<i32>} : memref<288x256xbf16, #tpu.memory_space<vmem>>, vector<32x256xbf16>,
    %c0_37 = arith.constant 0 : index
    %c0_38 = arith.constant 0 : index
    %50 = vector.load %arg5[%c0_37, %c0_38] : memref<32x288xbf16, #tpu.memory_space<vmem>>, vector<32x288xbf16>
    %c0_39 = arith.constant 0 : index
    %c0_40 = arith.constant 0 : index
    %51 = vector.load %arg22[%c0_39, %c0_40] : memref<288x256xbf16, #tpu.memory_space<vmem>>, vector<288x256xbf16>
    %cst_41 = arith.constant dense<0.000000e+00> : vector<32x256xf32>
    %52 = tpu.matmul %50, %51, %cst_41 {dimension_numbers = #tpu.dot_dimension_numbers<[1], [0], [0], [1], [0, 0, 1, 1], [], []>} : vector<32x288xbf16>, vector<288x256xbf16>, vector<32x256xf32> -> vector<32x256xf32>
    %c0_42 = arith.constant 0 : index
    %c0_43 = arith.constant 0 : index
    %53 = vector.load %arg6[%c0_42, %c0_43] : memref<32x1xf32, #tpu.memory_space<vmem>>, vector<32x1xf32>
    %54 = vector.broadcast %53 : vector<32x1xf32> to vector<32x256xf32>
    %55 = arith.addf %52, %54 : vector<32x256xf32>
    %cst_44 = arith.constant dense<0.000000e+00> : vector<256xf32>
    %56 = vector.multi_reduction <add>, %55, %cst_44 [0] : vector<32x256xf32> to vector<256xf32>
    %57 = vector.shape_cast %56 : vector<256xf32> to vector<1x256xf32>
    %cst_45 = arith.constant 3.200000e+01 : f32
    %58 = vector.broadcast %cst_45 : f32 to vector<1x256xf32>
    %59 = arith.divf %57, %58 : vector<1x256xf32>
    %60 = vector.broadcast %59 : vector<1x256xf32> to vector<32x256xf32>
    %61 = arith.subf %55, %60 : vector<32x256xf32>
    %62 = arith.mulf %61, %61 : vector<32x256xf32>
    %cst_46 = arith.constant dense<0.000000e+00> : vector<256xf32>
    %63 = vector.multi_reduction <add>, %62, %cst_46 [0] : vector<32x256xf32> to vector<256xf32>
    %64 = vector.shape_cast %63 : vector<256xf32> to vector<1x256xf32>
    %cst_47 = arith.constant 3.200000e+01 : f32
    %65 = vector.broadcast %cst_47 : f32 to vector<1x256xf32>
    %66 = arith.divf %64, %65 : vector<1x256xf32>
    %cst_48 = arith.constant 9.99999974E-6 : f32
    %67 = vector.broadcast %cst_48 : f32 to vector<1x256xf32>
    %68 = arith.addf %66, %67 : vector<1x256xf32>
    %69 = math.rsqrt %68 : vector<1x256xf32>
    %70 = vector.broadcast %69 : vector<1x256xf32> to vector<32x256xf32>
    %71 = arith.mulf %61, %70 : vector<32x256xf32>
    %c0_49 = arith.constant 0 : index
    %c0_50 = arith.constant 0 : index
    %72 = vector.load %arg7[%c0_49, %c0_50] : memref<32x1xf32, #tpu.memory_space<vmem>>, vector<32x1xf32>
    %73 = vector.broadcast %72 : vector<32x1xf32> to vector<32x256xf32>
    %74 = arith.mulf %71, %73 : vector<32x256xf32>
    %c0_51 = arith.constant 0 : index
    %c0_52 = arith.constant 0 : index
    %75 = vector.load %arg8[%c0_51, %c0_52] : memref<32x1xf32, #tpu.memory_space<vmem>>, vector<32x1xf32>
    %76 = vector.broadcast %75 : vector<32x1xf32> to vector<32x256xf32>
    %77 = arith.addf %74, %76 : vector<32x256xf32>
    %cst_53 = arith.constant 0.000000e+00 : f32
    %78 = vector.broadcast %cst_53 : f32 to vector<34x401xf32>
    %c0_54 = arith.constant 0 : index
    %c0_55 = arith.constant 0 : index
    %79 = vector.load %arg21[%c0_54, %c0_55] : memref<34x401xf32, #tpu.memory_space<vmem>>, vector<34x401xf32>
    tpu.vector_store %arg21[%c0_54, %c0_55], %78 {strides = array<i32>} : memref<34x401xf32, #tpu.memory_space<vmem>>, vector<34x401xf32>,
    %c1 = arith.constant 1 : index
    %c128_56 = arith.constant 128 : index
    %80 = vector.load %arg21[%c1, %c128_56] : memref<34x401xf32, #tpu.memory_space<vmem>>, vector<32x256xf32>
    tpu.vector_store %arg21[%c1, %c128_56], %77 {strides = array<i32>} : memref<34x401xf32, #tpu.memory_space<vmem>>, vector<32x256xf32>,
    %cst_57 = arith.constant 0.000000e+00 : f32
    %81 = vector.broadcast %cst_57 : f32 to vector<32x256xf32>
    %c0_58 = arith.constant 0 : index
    %82 = memref.load %arg3[%c0_58] : memref<14xf32, #tpu.memory_space<smem>>
    %c0_59 = arith.constant 0 : index
    %c112_60 = arith.constant 112 : index
    %83 = vector.load %arg21[%c0_59, %c112_60] : memref<34x401xf32, #tpu.memory_space<vmem>>, vector<32x256xf32>
    %84 = vector.broadcast %82 : f32 to vector<32x256xf32>
    %85 = arith.mulf %84, %83 : vector<32x256xf32>
    %86 = arith.addf %81, %85 : vector<32x256xf32>
    %c1_61 = arith.constant 1 : index
    %87 = memref.load %arg3[%c1_61] : memref<14xf32, #tpu.memory_space<smem>>
    %c0_62 = arith.constant 0 : index
    %c128_63 = arith.constant 128 : index
    %88 = vector.load %arg21[%c0_62, %c128_63] : memref<34x401xf32, #tpu.memory_space<vmem>>, vector<32x256xf32>
    %89 = vector.broadcast %87 : f32 to vector<32x256xf32>
    %90 = arith.mulf %89, %88 : vector<32x256xf32>
    %91 = arith.addf %86, %90 : vector<32x256xf32>
    %c2_64 = arith.constant 2 : index
    %92 = memref.load %arg3[%c2_64] : memref<14xf32, #tpu.memory_space<smem>>
    %c0_65 = arith.constant 0 : index
    %c144_66 = arith.constant 144 : index
    %93 = vector.load %arg21[%c0_65, %c144_66] : memref<34x401xf32, #tpu.memory_space<vmem>>, vector<32x256xf32>
    %94 = vector.broadcast %92 : f32 to vector<32x256xf32>
    %95 = arith.mulf %94, %93 : vector<32x256xf32>
    %96 = arith.addf %91, %95 : vector<32x256xf32>
    %c3 = arith.constant 3 : index
    %97 = memref.load %arg3[%c3] : memref<14xf32, #tpu.memory_space<smem>>
    %c1_67 = arith.constant 1 : index
    %c112_68 = arith.constant 112 : index
    %98 = vector.load %arg21[%c1_67, %c112_68] : memref<34x401xf32, #tpu.memory_space<vmem>>, vector<32x256xf32>
    %99 = vector.broadcast %97 : f32 to vector<32x256xf32>
    %100 = arith.mulf %99, %98 : vector<32x256xf32>
    %101 = arith.addf %96, %100 : vector<32x256xf32>
    %c4 = arith.constant 4 : index
    %102 = memref.load %arg3[%c4] : memref<14xf32, #tpu.memory_space<smem>>
    %c1_69 = arith.constant 1 : index
    %c128_70 = arith.constant 128 : index
    %103 = vector.load %arg21[%c1_69, %c128_70] : memref<34x401xf32, #tpu.memory_space<vmem>>, vector<32x256xf32>
    %104 = vector.broadcast %102 : f32 to vector<32x256xf32>
    %105 = arith.mulf %104, %103 : vector<32x256xf32>
    %106 = arith.addf %101, %105 : vector<32x256xf32>
    %c5 = arith.constant 5 : index
    %107 = memref.load %arg3[%c5] : memref<14xf32, #tpu.memory_space<smem>>
    %c1_71 = arith.constant 1 : index
    %c144_72 = arith.constant 144 : index
    %108 = vector.load %arg21[%c1_71, %c144_72] : memref<34x401xf32, #tpu.memory_space<vmem>>, vector<32x256xf32>
    %109 = vector.broadcast %107 : f32 to vector<32x256xf32>
    %110 = arith.mulf %109, %108 : vector<32x256xf32>
    %111 = arith.addf %106, %110 : vector<32x256xf32>
    %c6 = arith.constant 6 : index
    %112 = memref.load %arg3[%c6] : memref<14xf32, #tpu.memory_space<smem>>
    %c2_73 = arith.constant 2 : index
    %c112_74 = arith.constant 112 : index
    %113 = vector.load %arg21[%c2_73, %c112_74] : memref<34x401xf32, #tpu.memory_space<vmem>>, vector<32x256xf32>
    %114 = vector.broadcast %112 : f32 to vector<32x256xf32>
    %115 = arith.mulf %114, %113 : vector<32x256xf32>
    %116 = arith.addf %111, %115 : vector<32x256xf32>
    %c7 = arith.constant 7 : index
    %117 = memref.load %arg3[%c7] : memref<14xf32, #tpu.memory_space<smem>>
    %c2_75 = arith.constant 2 : index
    %c128_76 = arith.constant 128 : index
    %118 = vector.load %arg21[%c2_75, %c128_76] : memref<34x401xf32, #tpu.memory_space<vmem>>, vector<32x256xf32>
    %119 = vector.broadcast %117 : f32 to vector<32x256xf32>
    %120 = arith.mulf %119, %118 : vector<32x256xf32>
    %121 = arith.addf %116, %120 : vector<32x256xf32>
    %c8 = arith.constant 8 : index
    %122 = memref.load %arg3[%c8] : memref<14xf32, #tpu.memory_space<smem>>
    %c2_77 = arith.constant 2 : index
    %c144_78 = arith.constant 144 : index
    %123 = vector.load %arg21[%c2_77, %c144_78] : memref<34x401xf32, #tpu.memory_space<vmem>>, vector<32x256xf32>
    %124 = vector.broadcast %122 : f32 to vector<32x256xf32>
    %125 = arith.mulf %124, %123 : vector<32x256xf32>
    %126 = arith.addf %121, %125 : vector<32x256xf32>
    %c9 = arith.constant 9 : index
    %127 = memref.load %arg3[%c9] : memref<14xf32, #tpu.memory_space<smem>>
    %128 = vector.broadcast %127 : f32 to vector<32x256xf32>
    %129 = arith.addf %126, %128 : vector<32x256xf32>
    %cst_79 = arith.constant 0.000000e+00 : f32
    %130 = vector.broadcast %cst_79 : f32 to vector<32x256xf32>
    %c1_80 = arith.constant 1 : index
    %c127_81 = arith.constant 127 : index
    %131 = vector.load %arg21[%c1_80, %c127_81] : memref<34x401xf32, #tpu.memory_space<vmem>>, vector<32x256xf32>
    %c0_82 = arith.constant 0 : index
    %c0_83 = arith.constant 0 : index
    %132 = vector.load %arg4[%c0_82, %c0_83] : memref<3x256xf32, #tpu.memory_space<vmem>>, vector<1x256xf32>
    %133 = vector.broadcast %132 : vector<1x256xf32> to vector<32x256xf32>
    %134 = arith.mulf %131, %133 : vector<32x256xf32>
    %c10 = arith.constant 10 : index
    %135 = memref.load %arg3[%c10] : memref<14xf32, #tpu.memory_space<smem>>
    %136 = vector.broadcast %135 : f32 to vector<32x256xf32>
    %137 = arith.mulf %136, %134 : vector<32x256xf32>
    %138 = arith.addf %130, %137 : vector<32x256xf32>
    %c1_84 = arith.constant 1 : index
    %c128_85 = arith.constant 128 : index
    %139 = vector.load %arg21[%c1_84, %c128_85] : memref<34x401xf32, #tpu.memory_space<vmem>>, vector<32x256xf32>
    %c11 = arith.constant 11 : index
    %140 = memref.load %arg3[%c11] : memref<14xf32, #tpu.memory_space<smem>>
    %141 = vector.broadcast %140 : f32 to vector<32x256xf32>
    %142 = arith.mulf %141, %139 : vector<32x256xf32>
    %143 = arith.addf %138, %142 : vector<32x256xf32>
    %c1_86 = arith.constant 1 : index
    %c129_87 = arith.constant 129 : index
    %144 = vector.load %arg21[%c1_86, %c129_87] : memref<34x401xf32, #tpu.memory_space<vmem>>, vector<32x256xf32>
    %c2_88 = arith.constant 2 : index
    %c0_89 = arith.constant 0 : index
    %145 = vector.load %arg4[%c2_88, %c0_89] : memref<3x256xf32, #tpu.memory_space<vmem>>, vector<1x256xf32>
    %146 = vector.broadcast %145 : vector<1x256xf32> to vector<32x256xf32>
    %147 = arith.mulf %144, %146 : vector<32x256xf32>
    %c12 = arith.constant 12 : index
    %148 = memref.load %arg3[%c12] : memref<14xf32, #tpu.memory_space<smem>>
    %149 = vector.broadcast %148 : f32 to vector<32x256xf32>
    %150 = arith.mulf %149, %147 : vector<32x256xf32>
    %151 = arith.addf %143, %150 : vector<32x256xf32>
    %c13 = arith.constant 13 : index
    %152 = memref.load %arg3[%c13] : memref<14xf32, #tpu.memory_space<smem>>
    %153 = vector.broadcast %152 : f32 to vector<32x256xf32>
    %154 = arith.addf %151, %153 : vector<32x256xf32>
    %155 = arith.mulf %129, %154 : vector<32x256xf32>
    %156 = arith.addf %77, %155 : vector<32x256xf32>
    %157 = vector.extract_strided_slice %156 {offsets = [0, 0], sizes = [8, 256], strides = [1, 1]} : vector<32x256xf32> to vector<8x256xf32>
    %cst_90 = arith.constant 0.000000e+00 : f32
    %158 = vector.broadcast %cst_90 : f32 to vector<34x401xf32>
    %c0_91 = arith.constant 0 : index
    %c0_92 = arith.constant 0 : index
    %159 = vector.load %arg21[%c0_91, %c0_92] : memref<34x401xf32, #tpu.memory_space<vmem>>, vector<34x401xf32>
    tpu.vector_store %arg21[%c0_91, %c0_92], %158 {strides = array<i32>} : memref<34x401xf32, #tpu.memory_space<vmem>>, vector<34x401xf32>,
    %c0_93 = arith.constant 0 : index
    %c128_94 = arith.constant 128 : index
    %160 = vector.load %arg21[%c0_93, %c128_94] : memref<34x401xf32, #tpu.memory_space<vmem>>, vector<8x256xf32>
    tpu.vector_store %arg21[%c0_93, %c128_94], %157 {strides = array<i32>} : memref<34x401xf32, #tpu.memory_space<vmem>>, vector<8x256xf32>,
    %cst_95 = arith.constant 0.000000e+00 : f32
    %161 = vector.broadcast %cst_95 : f32 to vector<8x256xf32>
    %c0_96 = arith.constant 0 : index
    %c111_97 = arith.constant 111 : index
    %162 = vector.load %arg21[%c0_96, %c111_97] : memref<34x401xf32, #tpu.memory_space<vmem>>, vector<8x256xf32>
    %c0_98 = arith.constant 0 : index
    %c0_99 = arith.constant 0 : index
    %163 = vector.load %arg4[%c0_98, %c0_99] : memref<3x256xf32, #tpu.memory_space<vmem>>, vector<1x256xf32>
    %164 = vector.broadcast %163 : vector<1x256xf32> to vector<8x256xf32>
    %165 = arith.mulf %162, %164 : vector<8x256xf32>
    %166 = arith.truncf %165 : vector<8x256xf32> to vector<8x256xbf16>
    %c0_100 = arith.constant 0 : index
    %c0_101 = arith.constant 0 : index
    %167 = vector.load %arg9[%c0_100, %c0_101] : memref<8x72xbf16, #tpu.memory_space<vmem>>, vector<8x8xbf16>
    %cst_102 = arith.constant dense<0.000000e+00> : vector<8x256xf32>
    %168 = tpu.matmul %167, %166, %cst_102 {dimension_numbers = #tpu.dot_dimension_numbers<[1], [0], [0], [1], [0, 0, 1, 1], [], []>} : vector<8x8xbf16>, vector<8x256xbf16>, vector<8x256xf32> -> vector<8x256xf32>
    %169 = arith.addf %161, %168 : vector<8x256xf32>
    %c0_103 = arith.constant 0 : index
    %c112_104 = arith.constant 112 : index
    %170 = vector.load %arg21[%c0_103, %c112_104] : memref<34x401xf32, #tpu.memory_space<vmem>>, vector<8x256xf32>
    %171 = arith.truncf %170 : vector<8x256xf32> to vector<8x256xbf16>
    %c0_105 = arith.constant 0 : index
    %c8_106 = arith.constant 8 : index
    %172 = vector.load %arg9[%c0_105, %c8_106] : memref<8x72xbf16, #tpu.memory_space<vmem>>, vector<8x8xbf16>
    %cst_107 = arith.constant dense<0.000000e+00> : vector<8x256xf32>
    %173 = tpu.matmul %172, %171, %cst_107 {dimension_numbers = #tpu.dot_dimension_numbers<[1], [0], [0], [1], [0, 0, 1, 1], [], []>} : vector<8x8xbf16>, vector<8x256xbf16>, vector<8x256xf32> -> vector<8x256xf32>
    %174 = arith.addf %169, %173 : vector<8x256xf32>
    %c0_108 = arith.constant 0 : index
    %c113_109 = arith.constant 113 : index
    %175 = vector.load %arg21[%c0_108, %c113_109] : memref<34x401xf32, #tpu.memory_space<vmem>>, vector<8x256xf32>
    %c2_110 = arith.constant 2 : index
    %c0_111 = arith.constant 0 : index
    %176 = vector.load %arg4[%c2_110, %c0_111] : memref<3x256xf32, #tpu.memory_space<vmem>>, vector<1x256xf32>
    %177 = vector.broadcast %176 : vector<1x256xf32> to vector<8x256xf32>
    %178 = arith.mulf %175, %177 : vector<8x256xf32>
    %179 = arith.truncf %178 : vector<8x256xf32> to vector<8x256xbf16>
    %c0_112 = arith.constant 0 : index
    %c16 = arith.constant 16 : index
    %180 = vector.load %arg9[%c0_112, %c16] : memref<8x72xbf16, #tpu.memory_space<vmem>>, vector<8x8xbf16>
    %cst_113 = arith.constant dense<0.000000e+00> : vector<8x256xf32>
    %181 = tpu.matmul %180, %179, %cst_113 {dimension_numbers = #tpu.dot_dimension_numbers<[1], [0], [0], [1], [0, 0, 1, 1], [], []>} : vector<8x8xbf16>, vector<8x256xbf16>, vector<8x256xf32> -> vector<8x256xf32>
    %182 = arith.addf %174, %181 : vector<8x256xf32>
    %c0_114 = arith.constant 0 : index
    %c127_115 = arith.constant 127 : index
    %183 = vector.load %arg21[%c0_114, %c127_115] : memref<34x401xf32, #tpu.memory_space<vmem>>, vector<8x256xf32>
    %c0_116 = arith.constant 0 : index
    %c0_117 = arith.constant 0 : index
    %184 = vector.load %arg4[%c0_116, %c0_117] : memref<3x256xf32, #tpu.memory_space<vmem>>, vector<1x256xf32>
    %185 = vector.broadcast %184 : vector<1x256xf32> to vector<8x256xf32>
    %186 = arith.mulf %183, %185 : vector<8x256xf32>
    %187 = arith.truncf %186 : vector<8x256xf32> to vector<8x256xbf16>
    %c0_118 = arith.constant 0 : index
    %c24 = arith.constant 24 : index
    %188 = vector.load %arg9[%c0_118, %c24] : memref<8x72xbf16, #tpu.memory_space<vmem>>, vector<8x8xbf16>
    %cst_119 = arith.constant dense<0.000000e+00> : vector<8x256xf32>
    %189 = tpu.matmul %188, %187, %cst_119 {dimension_numbers = #tpu.dot_dimension_numbers<[1], [0], [0], [1], [0, 0, 1, 1], [], []>} : vector<8x8xbf16>, vector<8x256xbf16>, vector<8x256xf32> -> vector<8x256xf32>
    %190 = arith.addf %182, %189 : vector<8x256xf32>
    %c0_120 = arith.constant 0 : index
    %c128_121 = arith.constant 128 : index
    %191 = vector.load %arg21[%c0_120, %c128_121] : memref<34x401xf32, #tpu.memory_space<vmem>>, vector<8x256xf32>
    %192 = arith.truncf %191 : vector<8x256xf32> to vector<8x256xbf16>
    %c0_122 = arith.constant 0 : index
    %c32_123 = arith.constant 32 : index
    %193 = vector.load %arg9[%c0_122, %c32_123] : memref<8x72xbf16, #tpu.memory_space<vmem>>, vector<8x8xbf16>
    %cst_124 = arith.constant dense<0.000000e+00> : vector<8x256xf32>
    %194 = tpu.matmul %193, %192, %cst_124 {dimension_numbers = #tpu.dot_dimension_numbers<[1], [0], [0], [1], [0, 0, 1, 1], [], []>} : vector<8x8xbf16>, vector<8x256xbf16>, vector<8x256xf32> -> vector<8x256xf32>
    %195 = arith.addf %190, %194 : vector<8x256xf32>
    %c0_125 = arith.constant 0 : index
    %c129_126 = arith.constant 129 : index
    %196 = vector.load %arg21[%c0_125, %c129_126] : memref<34x401xf32, #tpu.memory_space<vmem>>, vector<8x256xf32>
    %c2_127 = arith.constant 2 : index
    %c0_128 = arith.constant 0 : index
    %197 = vector.load %arg4[%c2_127, %c0_128] : memref<3x256xf32, #tpu.memory_space<vmem>>, vector<1x256xf32>
    %198 = vector.broadcast %197 : vector<1x256xf32> to vector<8x256xf32>
    %199 = arith.mulf %196, %198 : vector<8x256xf32>
    %200 = arith.truncf %199 : vector<8x256xf32> to vector<8x256xbf16>
    %c0_129 = arith.constant 0 : index
    %c40 = arith.constant 40 : index
    %201 = vector.load %arg9[%c0_129, %c40] : memref<8x72xbf16, #tpu.memory_space<vmem>>, vector<8x8xbf16>
    %cst_130 = arith.constant dense<0.000000e+00> : vector<8x256xf32>
    %202 = tpu.matmul %201, %200, %cst_130 {dimension_numbers = #tpu.dot_dimension_numbers<[1], [0], [0], [1], [0, 0, 1, 1], [], []>} : vector<8x8xbf16>, vector<8x256xbf16>, vector<8x256xf32> -> vector<8x256xf32>
    %203 = arith.addf %195, %202 : vector<8x256xf32>
    %c0_131 = arith.constant 0 : index
    %c143_132 = arith.constant 143 : index
    %204 = vector.load %arg21[%c0_131, %c143_132] : memref<34x401xf32, #tpu.memory_space<vmem>>, vector<8x256xf32>
    %c0_133 = arith.constant 0 : index
    %c0_134 = arith.constant 0 : index
    %205 = vector.load %arg4[%c0_133, %c0_134] : memref<3x256xf32, #tpu.memory_space<vmem>>, vector<1x256xf32>
    %206 = vector.broadcast %205 : vector<1x256xf32> to vector<8x256xf32>
    %207 = arith.mulf %204, %206 : vector<8x256xf32>
    %208 = arith.truncf %207 : vector<8x256xf32> to vector<8x256xbf16>
    %c0_135 = arith.constant 0 : index
    %c48 = arith.constant 48 : index
    %209 = vector.load %arg9[%c0_135, %c48] : memref<8x72xbf16, #tpu.memory_space<vmem>>, vector<8x8xbf16>
    %cst_136 = arith.constant dense<0.000000e+00> : vector<8x256xf32>
    %210 = tpu.matmul %209, %208, %cst_136 {dimension_numbers = #tpu.dot_dimension_numbers<[1], [0], [0], [1], [0, 0, 1, 1], [], []>} : vector<8x8xbf16>, vector<8x256xbf16>, vector<8x256xf32> -> vector<8x256xf32>
    %211 = arith.addf %203, %210 : vector<8x256xf32>
    %c0_137 = arith.constant 0 : index
    %c144_138 = arith.constant 144 : index
    %212 = vector.load %arg21[%c0_137, %c144_138] : memref<34x401xf32, #tpu.memory_space<vmem>>, vector<8x256xf32>
    %213 = arith.truncf %212 : vector<8x256xf32> to vector<8x256xbf16>
    %c0_139 = arith.constant 0 : index
    %c56 = arith.constant 56 : index
    %214 = vector.load %arg9[%c0_139, %c56] : memref<8x72xbf16, #tpu.memory_space<vmem>>, vector<8x8xbf16>
    %cst_140 = arith.constant dense<0.000000e+00> : vector<8x256xf32>
    %215 = tpu.matmul %214, %213, %cst_140 {dimension_numbers = #tpu.dot_dimension_numbers<[1], [0], [0], [1], [0, 0, 1, 1], [], []>} : vector<8x8xbf16>, vector<8x256xbf16>, vector<8x256xf32> -> vector<8x256xf32>
    %216 = arith.addf %211, %215 : vector<8x256xf32>
    %c0_141 = arith.constant 0 : index
    %c145_142 = arith.constant 145 : index
    %217 = vector.load %arg21[%c0_141, %c145_142] : memref<34x401xf32, #tpu.memory_space<vmem>>, vector<8x256xf32>
    %c2_143 = arith.constant 2 : index
    %c0_144 = arith.constant 0 : index
    %218 = vector.load %arg4[%c2_143, %c0_144] : memref<3x256xf32, #tpu.memory_space<vmem>>, vector<1x256xf32>
    %219 = vector.broadcast %218 : vector<1x256xf32> to vector<8x256xf32>
    %220 = arith.mulf %217, %219 : vector<8x256xf32>
    %221 = arith.truncf %220 : vector<8x256xf32> to vector<8x256xbf16>
    %c0_145 = arith.constant 0 : index
    %c64_146 = arith.constant 64 : index
    %222 = vector.load %arg9[%c0_145, %c64_146] : memref<8x72xbf16, #tpu.memory_space<vmem>>, vector<8x8xbf16>
    %cst_147 = arith.constant dense<0.000000e+00> : vector<8x256xf32>
    %223 = tpu.matmul %222, %221, %cst_147 {dimension_numbers = #tpu.dot_dimension_numbers<[1], [0], [0], [1], [0, 0, 1, 1], [], []>} : vector<8x8xbf16>, vector<8x256xbf16>, vector<8x256xf32> -> vector<8x256xf32>
    %224 = arith.addf %216, %223 : vector<8x256xf32>
    %225 = vector.extract_strided_slice %156 {offsets = [8, 0], sizes = [24, 256], strides = [1, 1]} : vector<32x256xf32> to vector<24x256xf32>
    %226 = tpu.concatenate %224, %225 in 0 : vector<8x256xf32>, vector<24x256xf32> -> vector<32x256xf32>
    %227 = arith.truncf %226 : vector<32x256xf32> to vector<32x256xbf16>
    %c0_148 = arith.constant 0 : index
    %c0_149 = arith.constant 0 : index
    %228 = vector.load %arg10[%c0_148, %c0_149] : memref<32x32xbf16, #tpu.memory_space<vmem>>, vector<32x32xbf16>
    %cst_150 = arith.constant dense<0.000000e+00> : vector<32x256xf32>
    %229 = tpu.matmul %228, %227, %cst_150 {dimension_numbers = #tpu.dot_dimension_numbers<[1], [0], [0], [1], [0, 0, 1, 1], [], []>} : vector<32x32xbf16>, vector<32x256xbf16>, vector<32x256xf32> -> vector<32x256xf32>
    %c0_151 = arith.constant 0 : index
    %c0_152 = arith.constant 0 : index
    %230 = vector.load %arg11[%c0_151, %c0_152] : memref<32x1xf32, #tpu.memory_space<vmem>>, vector<32x1xf32>
    %231 = vector.broadcast %230 : vector<32x1xf32> to vector<32x256xf32>
    %232 = arith.addf %229, %231 : vector<32x256xf32>
    %cst_153 = arith.constant dense<0.000000e+00> : vector<32xf32>
    %233 = vector.multi_reduction <add>, %226, %cst_153 [1] : vector<32x256xf32> to vector<32xf32>
    %234 = vector.shape_cast %233 : vector<32xf32> to vector<32x1xf32>
    %cst_154 = arith.constant 2.560000e+02 : f32
    %235 = vector.broadcast %cst_154 : f32 to vector<32x1xf32>
    %236 = arith.divf %234, %235 : vector<32x1xf32>
    %c0_155 = arith.constant 0 : index
    %c0_156 = arith.constant 0 : index
    %237 = vector.load %arg12[%c0_155, %c0_156] : memref<32x2xf32, #tpu.memory_space<vmem>>, vector<32x2xf32>
    %238 = vector.broadcast %236 : vector<32x1xf32> to vector<32x2xf32>
    %239 = arith.mulf %238, %237 : vector<32x2xf32>
    %cst_157 = arith.constant dense<0.000000e+00> : vector<2xf32>
    %240 = vector.multi_reduction <add>, %239, %cst_157 [0] : vector<32x2xf32> to vector<2xf32>
    %241 = vector.shape_cast %240 : vector<2xf32> to vector<1x2xf32>
    %c0_158 = arith.constant 0 : index
    %c0_159 = arith.constant 0 : index
    %242 = vector.load %arg13[%c0_158, %c0_159] : memref<1x2xf32, #tpu.memory_space<vmem>>, vector<1x2xf32>
    %243 = arith.addf %241, %242 : vector<1x2xf32>
    %cst_160 = arith.constant 0.000000e+00 : f32
    %244 = vector.broadcast %cst_160 : f32 to vector<1x2xf32>
    %245 = arith.maximumf %243, %244 : vector<1x2xf32>
    %c0_161 = arith.constant 0 : index
    %c0_162 = arith.constant 0 : index
    %246 = vector.load %arg14[%c0_161, %c0_162] : memref<32x2xf32, #tpu.memory_space<vmem>>, vector<32x2xf32>
    %247 = vector.broadcast %245 : vector<1x2xf32> to vector<32x2xf32>
    %248 = arith.mulf %246, %247 : vector<32x2xf32>
    %cst_163 = arith.constant dense<0.000000e+00> : vector<32xf32>
    %249 = vector.multi_reduction <add>, %248, %cst_163 [1] : vector<32x2xf32> to vector<32xf32>
    %250 = vector.shape_cast %249 : vector<32xf32> to vector<32x1xf32>
    %c0_164 = arith.constant 0 : index
    %c0_165 = arith.constant 0 : index
    %251 = vector.load %arg15[%c0_164, %c0_165] : memref<32x1xf32, #tpu.memory_space<vmem>>, vector<32x1xf32>
    %252 = arith.addf %250, %251 : vector<32x1xf32>
    %253 = arith.negf %252 : vector<32x1xf32>
    %254 = math.exp %253 : vector<32x1xf32>
    %cst_166 = arith.constant 1.000000e+00 : f32
    %255 = vector.broadcast %cst_166 : f32 to vector<32x1xf32>
    %256 = arith.addf %255, %254 : vector<32x1xf32>
    %257 = arith.divf %255, %256 : vector<32x1xf32>
    %258 = vector.broadcast %257 : vector<32x1xf32> to vector<32x256xf32>
    %259 = arith.mulf %226, %258 : vector<32x256xf32>
    %260 = arith.mulf %232, %259 : vector<32x256xf32>
    %261 = arith.addf %226, %260 : vector<32x256xf32>
    %c0_167 = arith.constant 0 : index
    %c0_168 = arith.constant 0 : index
    %262 = vector.load %arg16[%c0_167, %c0_168] : memref<32x32xbf16, #tpu.memory_space<vmem>>, vector<32x32xbf16>
    %263 = arith.truncf %261 : vector<32x256xf32> to vector<32x256xbf16>
    %cst_169 = arith.constant dense<0.000000e+00> : vector<32x256xf32>
    %264 = tpu.matmul %262, %263, %cst_169 {dimension_numbers = #tpu.dot_dimension_numbers<[1], [0], [0], [1], [0, 0, 1, 1], [], []>} : vector<32x32xbf16>, vector<32x256xbf16>, vector<32x256xf32> -> vector<32x256xf32>
    %c0_170 = arith.constant 0 : index
    %c0_171 = arith.constant 0 : index
    %265 = vector.load %arg17[%c0_170, %c0_171] : memref<32x1xf32, #tpu.memory_space<vmem>>, vector<32x1xf32>
    %266 = vector.broadcast %265 : vector<32x1xf32> to vector<32x256xf32>
    %267 = arith.addf %264, %266 : vector<32x256xf32>
    %268 = arith.addf %55, %267 : vector<32x256xf32>
    %cst_172 = arith.constant 0.000000e+00 : f32
    %269 = vector.broadcast %cst_172 : f32 to vector<34x401xf32>
    %c0_173 = arith.constant 0 : index
    %c0_174 = arith.constant 0 : index
    %270 = vector.load %arg21[%c0_173, %c0_174] : memref<34x401xf32, #tpu.memory_space<vmem>>, vector<34x401xf32>
    tpu.vector_store %arg21[%c0_173, %c0_174], %269 {strides = array<i32>} : memref<34x401xf32, #tpu.memory_space<vmem>>, vector<34x401xf32>,
    %c0_175 = arith.constant 0 : index
    %c128_176 = arith.constant 128 : index
    %271 = vector.load %arg21[%c0_175, %c128_176] : memref<34x401xf32, #tpu.memory_space<vmem>>, vector<32x256xf32>
    tpu.vector_store %arg21[%c0_175, %c128_176], %268 {strides = array<i32>} : memref<34x401xf32, #tpu.memory_space<vmem>>, vector<32x256xf32>,
    %c0_177 = arith.constant 0 : index
    %c111_178 = arith.constant 111 : index
    %272 = vector.load %arg21[%c0_177, %c111_178] : memref<34x401xf32, #tpu.memory_space<vmem>>, vector<32x256xf32>
    %c0_179 = arith.constant 0 : index
    %c0_180 = arith.constant 0 : index
    %273 = vector.load %arg4[%c0_179, %c0_180] : memref<3x256xf32, #tpu.memory_space<vmem>>, vector<1x256xf32>
    %274 = vector.broadcast %273 : vector<1x256xf32> to vector<32x256xf32>
    %275 = arith.mulf %272, %274 : vector<32x256xf32>
    %276 = arith.truncf %275 : vector<32x256xf32> to vector<32x256xbf16>
    %c0_181 = arith.constant 0 : index
    %c0_182 = arith.constant 0 : index
    %277 = vector.load %arg22[%c0_181, %c0_182] : memref<288x256xbf16, #tpu.memory_space<vmem>>, vector<32x256xbf16>
    tpu.vector_store %arg22[%c0_181, %c0_182], %276 {strides = array<i32>} : memref<288x256xbf16, #tpu.memory_space<vmem>>, vector<32x256xbf16>,
    %c0_183 = arith.constant 0 : index
    %c112_184 = arith.constant 112 : index
    %278 = vector.load %arg21[%c0_183, %c112_184] : memref<34x401xf32, #tpu.memory_space<vmem>>, vector<32x256xf32>
    %279 = arith.truncf %278 : vector<32x256xf32> to vector<32x256xbf16>
    %c32_185 = arith.constant 32 : index
    %c0_186 = arith.constant 0 : index
    %280 = vector.load %arg22[%c32_185, %c0_186] : memref<288x256xbf16, #tpu.memory_space<vmem>>, vector<32x256xbf16>
    tpu.vector_store %arg22[%c32_185, %c0_186], %279 {strides = array<i32>} : memref<288x256xbf16, #tpu.memory_space<vmem>>, vector<32x256xbf16>,
    %c0_187 = arith.constant 0 : index
    %c113_188 = arith.constant 113 : index
    %281 = vector.load %arg21[%c0_187, %c113_188] : memref<34x401xf32, #tpu.memory_space<vmem>>, vector<32x256xf32>
    %c2_189 = arith.constant 2 : index
    %c0_190 = arith.constant 0 : index
    %282 = vector.load %arg4[%c2_189, %c0_190] : memref<3x256xf32, #tpu.memory_space<vmem>>, vector<1x256xf32>
    %283 = vector.broadcast %282 : vector<1x256xf32> to vector<32x256xf32>
    %284 = arith.mulf %281, %283 : vector<32x256xf32>
    %285 = arith.truncf %284 : vector<32x256xf32> to vector<32x256xbf16>
    %c64_191 = arith.constant 64 : index
    %c0_192 = arith.constant 0 : index
    %286 = vector.load %arg22[%c64_191, %c0_192] : memref<288x256xbf16, #tpu.memory_space<vmem>>, vector<32x256xbf16>
    tpu.vector_store %arg22[%c64_191, %c0_192], %285 {strides = array<i32>} : memref<288x256xbf16, #tpu.memory_space<vmem>>, vector<32x256xbf16>,
    %c0_193 = arith.constant 0 : index
    %c127_194 = arith.constant 127 : index
    %287 = vector.load %arg21[%c0_193, %c127_194] : memref<34x401xf32, #tpu.memory_space<vmem>>, vector<32x256xf32>
    %c0_195 = arith.constant 0 : index
    %c0_196 = arith.constant 0 : index
    %288 = vector.load %arg4[%c0_195, %c0_196] : memref<3x256xf32, #tpu.memory_space<vmem>>, vector<1x256xf32>
    %289 = vector.broadcast %288 : vector<1x256xf32> to vector<32x256xf32>
    %290 = arith.mulf %287, %289 : vector<32x256xf32>
    %291 = arith.truncf %290 : vector<32x256xf32> to vector<32x256xbf16>
    %c96_197 = arith.constant 96 : index
    %c0_198 = arith.constant 0 : index
    %292 = vector.load %arg22[%c96_197, %c0_198] : memref<288x256xbf16, #tpu.memory_space<vmem>>, vector<32x256xbf16>
    tpu.vector_store %arg22[%c96_197, %c0_198], %291 {strides = array<i32>} : memref<288x256xbf16, #tpu.memory_space<vmem>>, vector<32x256xbf16>,
    %c0_199 = arith.constant 0 : index
    %c128_200 = arith.constant 128 : index
    %293 = vector.load %arg21[%c0_199, %c128_200] : memref<34x401xf32, #tpu.memory_space<vmem>>, vector<32x256xf32>
    %294 = arith.truncf %293 : vector<32x256xf32> to vector<32x256xbf16>
    %c128_201 = arith.constant 128 : index
    %c0_202 = arith.constant 0 : index
    %295 = vector.load %arg22[%c128_201, %c0_202] : memref<288x256xbf16, #tpu.memory_space<vmem>>, vector<32x256xbf16>
    tpu.vector_store %arg22[%c128_201, %c0_202], %294 {strides = array<i32>} : memref<288x256xbf16, #tpu.memory_space<vmem>>, vector<32x256xbf16>,
    %c0_203 = arith.constant 0 : index
    %c129_204 = arith.constant 129 : index
    %296 = vector.load %arg21[%c0_203, %c129_204] : memref<34x401xf32, #tpu.memory_space<vmem>>, vector<32x256xf32>
    %c2_205 = arith.constant 2 : index
    %c0_206 = arith.constant 0 : index
    %297 = vector.load %arg4[%c2_205, %c0_206] : memref<3x256xf32, #tpu.memory_space<vmem>>, vector<1x256xf32>
    %298 = vector.broadcast %297 : vector<1x256xf32> to vector<32x256xf32>
    %299 = arith.mulf %296, %298 : vector<32x256xf32>
    %300 = arith.truncf %299 : vector<32x256xf32> to vector<32x256xbf16>
    %c160_207 = arith.constant 160 : index
    %c0_208 = arith.constant 0 : index
    %301 = vector.load %arg22[%c160_207, %c0_208] : memref<288x256xbf16, #tpu.memory_space<vmem>>, vector<32x256xbf16>
    tpu.vector_store %arg22[%c160_207, %c0_208], %300 {strides = array<i32>} : memref<288x256xbf16, #tpu.memory_space<vmem>>, vector<32x256xbf16>,
    %c0_209 = arith.constant 0 : index
    %c143_210 = arith.constant 143 : index
    %302 = vector.load %arg21[%c0_209, %c143_210] : memref<34x401xf32, #tpu.memory_space<vmem>>, vector<32x256xf32>
    %c0_211 = arith.constant 0 : index
    %c0_212 = arith.constant 0 : index
    %303 = vector.load %arg4[%c0_211, %c0_212] : memref<3x256xf32, #tpu.memory_space<vmem>>, vector<1x256xf32>
    %304 = vector.broadcast %303 : vector<1x256xf32> to vector<32x256xf32>
    %305 = arith.mulf %302, %304 : vector<32x256xf32>
    %306 = arith.truncf %305 : vector<32x256xf32> to vector<32x256xbf16>
    %c192_213 = arith.constant 192 : index
    %c0_214 = arith.constant 0 : index
    %307 = vector.load %arg22[%c192_213, %c0_214] : memref<288x256xbf16, #tpu.memory_space<vmem>>, vector<32x256xbf16>
    tpu.vector_store %arg22[%c192_213, %c0_214], %306 {strides = array<i32>} : memref<288x256xbf16, #tpu.memory_space<vmem>>, vector<32x256xbf16>,
    %c0_215 = arith.constant 0 : index
    %c144_216 = arith.constant 144 : index
    %308 = vector.load %arg21[%c0_215, %c144_216] : memref<34x401xf32, #tpu.memory_space<vmem>>, vector<32x256xf32>
    %309 = arith.truncf %308 : vector<32x256xf32> to vector<32x256xbf16>
    %c224_217 = arith.constant 224 : index
    %c0_218 = arith.constant 0 : index
    %310 = vector.load %arg22[%c224_217, %c0_218] : memref<288x256xbf16, #tpu.memory_space<vmem>>, vector<32x256xbf16>
    tpu.vector_store %arg22[%c224_217, %c0_218], %309 {strides = array<i32>} : memref<288x256xbf16, #tpu.memory_space<vmem>>, vector<32x256xbf16>,
    %c0_219 = arith.constant 0 : index
    %c145_220 = arith.constant 145 : index
    %311 = vector.load %arg21[%c0_219, %c145_220] : memref<34x401xf32, #tpu.memory_space<vmem>>, vector<32x256xf32>
    %c2_221 = arith.constant 2 : index
    %c0_222 = arith.constant 0 : index
    %312 = vector.load %arg4[%c2_221, %c0_222] : memref<3x256xf32, #tpu.memory_space<vmem>>, vector<1x256xf32>
    %313 = vector.broadcast %312 : vector<1x256xf32> to vector<32x256xf32>
    %314 = arith.mulf %311, %313 : vector<32x256xf32>
    %315 = arith.truncf %314 : vector<32x256xf32> to vector<32x256xbf16>
    %c256_223 = arith.constant 256 : index
    %c0_224 = arith.constant 0 : index
    %316 = vector.load %arg22[%c256_223, %c0_224] : memref<288x256xbf16, #tpu.memory_space<vmem>>, vector<32x256xbf16>
    tpu.vector_store %arg22[%c256_223, %c0_224], %315 {strides = array<i32>} : memref<288x256xbf16, #tpu.memory_space<vmem>>, vector<32x256xbf16>,
    %c0_225 = arith.constant 0 : index
    %c0_226 = arith.constant 0 : index
    %317 = vector.load %arg18[%c0_225, %c0_226] : memref<32x288xbf16, #tpu.memory_space<vmem>>, vector<32x288xbf16>
    %c0_227 = arith.constant 0 : index
    %c0_228 = arith.constant 0 : index
    %318 = vector.load %arg22[%c0_227, %c0_228] : memref<288x256xbf16, #tpu.memory_space<vmem>>, vector<288x256xbf16>
    %cst_229 = arith.constant dense<0.000000e+00> : vector<32x256xf32>
    %319 = tpu.matmul %317, %318, %cst_229 {dimension_numbers = #tpu.dot_dimension_numbers<[1], [0], [0], [1], [0, 0, 1, 1], [], []>} : vector<32x288xbf16>, vector<288x256xbf16>, vector<32x256xf32> -> vector<32x256xf32>
    %c0_230 = arith.constant 0 : index
    %c0_231 = arith.constant 0 : index
    %320 = vector.load %arg19[%c0_230, %c0_231] : memref<32x1xf32, #tpu.memory_space<vmem>>, vector<32x1xf32>
    %321 = vector.broadcast %320 : vector<32x1xf32> to vector<32x256xf32>
    %322 = arith.addf %319, %321 : vector<32x256xf32>
    %c0_232 = arith.constant 0 : index
    %c0_233 = arith.constant 0 : index
    %c0_234 = arith.constant 0 : index
    %323 = vector.load %arg2[%c0_232, %c0_233, %c0_234] : memref<1x32x256xf32, #tpu.memory_space<vmem>>, vector<1x32x256xf32>
    %324 = vector.shape_cast %323 : vector<1x32x256xf32> to vector<32x256xf32>
    %325 = arith.addf %322, %324 : vector<32x256xf32>
    %c0_235 = arith.constant 0 : index
    %c0_236 = arith.constant 0 : index
    %c0_237 = arith.constant 0 : index
    %326 = vector.load %arg20[%c0_235, %c0_236, %c0_237] : memref<1x32x256xf32, #tpu.memory_space<vmem>>, vector<1x32x256xf32>
    %327 = vector.shape_cast %326 : vector<1x32x256xf32> to vector<32x256xf32>
    %328 = vector.shape_cast %325 : vector<32x256xf32> to vector<1x32x256xf32>
    tpu.vector_store %arg20[%c0_235, %c0_236, %c0_237], %328 {strides = array<i32>} : memref<1x32x256xf32, #tpu.memory_space<vmem>>, vector<1x32x256xf32>,
    return
  }
  func.func @transform_0(%arg0: i32) -> (i32, i32, i32) {
    %c0_i32 = arith.constant 0 : i32
    %c0_i32_0 = arith.constant 0 : i32
    %c0_i32_1 = arith.constant 0 : i32
    return %arg0, %c0_i32, %c0_i32_0 : i32, i32, i32
  }
  func.func @transform_1(%arg0: i32) -> (i32, i32, i32) {
    %c0_i32 = arith.constant 0 : i32
    %c0_i32_0 = arith.constant 0 : i32
    %c0_i32_1 = arith.constant 0 : i32
    return %arg0, %c0_i32, %c0_i32_0 : i32, i32, i32
  }
  func.func @transform_2(%arg0: i32) -> i32 {
    %c0_i32 = arith.constant 0 : i32
    %c0_i32_0 = arith.constant 0 : i32
    return %c0_i32 : i32
  }
  func.func @transform_3(%arg0: i32) -> (i32, i32) {
    %c0_i32 = arith.constant 0 : i32
    %c0_i32_0 = arith.constant 0 : i32
    %c0_i32_1 = arith.constant 0 : i32
    return %c0_i32, %c0_i32_0 : i32, i32
  }
  func.func @transform_4(%arg0: i32) -> (i32, i32) {
    %c0_i32 = arith.constant 0 : i32
    %c0_i32_0 = arith.constant 0 : i32
    %c0_i32_1 = arith.constant 0 : i32
    return %c0_i32, %c0_i32_0 : i32, i32
  }
  func.func @transform_5(%arg0: i32) -> (i32, i32) {
    %c0_i32 = arith.constant 0 : i32
    %c0_i32_0 = arith.constant 0 : i32
    %c0_i32_1 = arith.constant 0 : i32
    return %c0_i32, %c0_i32_0 : i32, i32
  }
  func.func @transform_6(%arg0: i32) -> (i32, i32) {
    %c0_i32 = arith.constant 0 : i32
    %c0_i32_0 = arith.constant 0 : i32
    %c0_i32_1 = arith.constant 0 : i32
    return %c0_i32, %c0_i32_0 : i32, i32
  }
  func.func @transform_7(%arg0: i32) -> (i32, i32) {
    %c0_i32 = arith.constant 0 : i32
    %c0_i32_0 = arith.constant 0 : i32
    %c0_i32_1 = arith.constant 0 : i32
    return %c0_i32, %c0_i32_0 : i32, i32
  }
  func.func @transform_8(%arg0: i32) -> (i32, i32) {
    %c0_i32 = arith.constant 0 : i32
    %c0_i32_0 = arith.constant 0 : i32
    %c0_i32_1 = arith.constant 0 : i32
    return %c0_i32, %c0_i32_0 : i32, i32
  }
  func.func @transform_9(%arg0: i32) -> (i32, i32) {
    %c0_i32 = arith.constant 0 : i32
    %c0_i32_0 = arith.constant 0 : i32
    %c0_i32_1 = arith.constant 0 : i32
    return %c0_i32, %c0_i32_0 : i32, i32
  }
  func.func @transform_10(%arg0: i32) -> (i32, i32) {
    %c0_i32 = arith.constant 0 : i32
    %c0_i32_0 = arith.constant 0 : i32
    %c0_i32_1 = arith.constant 0 : i32
    return %c0_i32, %c0_i32_0 : i32, i32
  }
  func.func @transform_11(%arg0: i32) -> (i32, i32) {
    %c0_i32 = arith.constant 0 : i32
    %c0_i32_0 = arith.constant 0 : i32
    %c0_i32_1 = arith.constant 0 : i32
    return %c0_i32, %c0_i32_0 : i32, i32
  }
  func.func @transform_12(%arg0: i32) -> (i32, i32) {
    %c0_i32 = arith.constant 0 : i32
    %c0_i32_0 = arith.constant 0 : i32
    %c0_i32_1 = arith.constant 0 : i32
    return %c0_i32, %c0_i32_0 : i32, i32
  }
  func.func @transform_13(%arg0: i32) -> (i32, i32) {
    %c0_i32 = arith.constant 0 : i32
    %c0_i32_0 = arith.constant 0 : i32
    %c0_i32_1 = arith.constant 0 : i32
    return %c0_i32, %c0_i32_0 : i32, i32
  }
  func.func @transform_14(%arg0: i32) -> (i32, i32) {
    %c0_i32 = arith.constant 0 : i32
    %c0_i32_0 = arith.constant 0 : i32
    %c0_i32_1 = arith.constant 0 : i32
    return %c0_i32, %c0_i32_0 : i32, i32
  }
  func.func @transform_15(%arg0: i32) -> (i32, i32) {
    %c0_i32 = arith.constant 0 : i32
    %c0_i32_0 = arith.constant 0 : i32
    %c0_i32_1 = arith.constant 0 : i32
    return %c0_i32, %c0_i32_0 : i32, i32
  }
  func.func @transform_16(%arg0: i32) -> (i32, i32) {
    %c0_i32 = arith.constant 0 : i32
    %c0_i32_0 = arith.constant 0 : i32
    %c0_i32_1 = arith.constant 0 : i32
    return %c0_i32, %c0_i32_0 : i32, i32
  }
  func.func @transform_17(%arg0: i32) -> (i32, i32) {
    %c0_i32 = arith.constant 0 : i32
    %c0_i32_0 = arith.constant 0 : i32
    %c0_i32_1 = arith.constant 0 : i32
    return %c0_i32, %c0_i32_0 : i32, i32
  }
  func.func @transform_18(%arg0: i32) -> (i32, i32) {
    %c0_i32 = arith.constant 0 : i32
    %c0_i32_0 = arith.constant 0 : i32
    %c0_i32_1 = arith.constant 0 : i32
    return %c0_i32, %c0_i32_0 : i32, i32
  }
  func.func @transform_19(%arg0: i32) -> (i32, i32, i32) {
    %c0_i32 = arith.constant 0 : i32
    %c0_i32_0 = arith.constant 0 : i32
    %c0_i32_1 = arith.constant 0 : i32
    return %arg0, %c0_i32, %c0_i32_0 : i32, i32, i32
  }
}

</mosaic_0001>

<llo_original>
// kernel: _lambda_.3
$region0: #{_lambda_.3}
  #allocation0 [shape = 'u32[]', space=smem, size = 0x4, offset = 0x4, fixed_abs, tag = 'smem constant byte address 0x4 - core index']
  #allocation1 [shape = 'u32[72,128]{1,0:T(1,128)}', space=vmem, size = 0x9000, scoped, tag = 'internal scratch']
  #allocation2 [shape = 'f32[4,401]{1,0:T(4,128)}', space=vmem, size = 0x2000, scoped, tag = 'scratch operand']
  #allocation3 [shape = 'bf16[36,256]{1,0:T(8,128)(2,1)}', space=vmem, size = 0x5000, scoped, tag = 'scratch operand']
  %s0 = inlined_call_operand.vmem [shape: f32[2,4,256], index: 0, kind: input, shape index: {}]
  %s1 = inlined_call_operand.hbm [shape: bf16[32,36], index: 1, kind: input, shape index: {}]
  %s2 = inlined_call_operand.hbm [shape: f32[32,1], index: 2, kind: input, shape index: {}]
  %s3 = inlined_call_operand.vmem [shape: f32[3,256], index: 3, kind: input, shape index: {}]
  %s4 = inlined_call_operand.vmem [shape: f32[2,32,256], index: 4, kind: output, shape index: {}]
  %s5 = sld [smem:[#allocation0]]
  $region57: #{_lambda_.3} parent=0
    _
  %s7 = ssub.s32 1, %s5
  %s8 = scalar_select 0, %s7, %s5
  $region1: #{_lambda_.3} parent=0
    #allocation4 [shape = 'u8[8192]{0}', space=vmem, size = 0x2000, scoped, tag = 'input window, operand 1, single buffered']
    #allocation5 [shape = 's32[2]{0}', space=sflag, size = 0x8, scoped, tag = 'scoped memory for _lambda_.3']
    #allocation6 [shape = 'u8[16384]{0}', space=vmem, size = 0x4000, scoped, tag = 'input window, operand 2, single buffered']
    #allocation7 [shape = 's32[1]{0}', space=sflag, size = 0x4, scoped, tag = 'scoped memory for _lambda_.3']
    %9 = vsyncpa [#allocation5], 0
    %10 = vsyncpa [#allocation7], 0
    loop: start=0, step=1, limit=4
    $region2: #{_lambda_.3} parent=1 // loop_pre_header
      _
    $region3: #{_lambda_.3} parent=1 // loop_header
      %s12 = sphi 0, %s16
      %p13 = scmp.ge.s32.totalorder %s12, 4
      %s22 = sphi 0, %s24
      %s25 = sphi 0, %s22
      %s26 = sphi 0, %s25
      %s42 = sphi 0, %s26
      %s46 = sphi 0, %s46
      %s48 = sphi 0, %s46
      %s49 = sphi 0, %s48
      %s63 = sphi 0, %s49
      %s67 = sphi 0, %s67
      %s69 = sphi 0, %s67
      %s70 = sphi 0, %s69
      %s84 = sphi 0, %s70
      %s88 = sphi 0, %s88
      %s90 = sphi 0, %s88
      %s91 = sphi 0, %s90
      %s105 = sphi 0, %s91
      %s111 = sphi 0, %s113
      %s114 = sphi 0, %s111
      %s115 = sphi 0, %s114
      %s131 = sphi 0, %s115
    $region4: #{_lambda_.3} parent=1 // loop_header_branch
      %15 = sbr.rel (%p13) target = $region8
    $region5: #{_lambda_.3} parent=1 // loop_body
      %s17 = ssub.s32 %s12, 1
      %s18 = ssub.s32 %s12, 2
      %s19 = sadd.s32 %s12, 1
      %s20 = ssub.s32 %s12, %s19
      %p21 = scmp.eq.s32.totalorder %s20, 0
      %s23 = sadd.s32 %s22, 1
      %s24 = scalar_select %p21, %s22, %s23
      %p27 = pneg %p21
      %p28 = scmp.eq.s32.totalorder %s12, 1
      %p29 = por %p27, %p28
      %p30 = scmp.ne.s32.totalorder %s22, %s25
      %p31 = scmp.eq.s32.totalorder %s12, 0
      %p32 = por %p30, %p31
      %p33 = scmp.ne.s32.totalorder %s22, %s25
      %p34 = scmp.eq.s32.totalorder %s17, 1
      %p35 = por %p33, %p34
      %p36 = scmp.ne.s32.totalorder %s25, %s26
      %p37 = scmp.eq.s32.totalorder %s17, 0
      %p38 = por %p36, %p37
      %p39 = scmp.ne.s32.totalorder %s25, %s26
      %p40 = scmp.eq.s32.totalorder %s18, 1
      %p41 = por %p39, %p40
      %p43 = scmp.ne.s32.totalorder %s26, %s42
      %p44 = scmp.eq.s32.totalorder %s18, 0
      %p45 = por %p43, %p44
      %s47 = sadd.s32 %s46, 1
      %p50 = scmp.eq.s32.totalorder %s12, 1
      %p51 = scmp.ne.s32.totalorder %s46, %s48
      %p52 = scmp.eq.s32.totalorder %s12, 0
      %p53 = por %p51, %p52
      %p54 = scmp.ne.s32.totalorder %s46, %s48
      %p55 = scmp.eq.s32.totalorder %s17, 1
      %p56 = por %p54, %p55
      %p57 = scmp.ne.s32.totalorder %s48, %s49
      %p58 = scmp.eq.s32.totalorder %s17, 0
      %p59 = por %p57, %p58
      %p60 = scmp.ne.s32.totalorder %s48, %s49
      %p61 = scmp.eq.s32.totalorder %s18, 1
      %p62 = por %p60, %p61
      %p64 = scmp.ne.s32.totalorder %s49, %s63
      %p65 = scmp.eq.s32.totalorder %s18, 0
      %p66 = por %p64, %p65
      %s68 = sadd.s32 %s67, 1
      %p71 = scmp.eq.s32.totalorder %s12, 1
      %p72 = scmp.ne.s32.totalorder %s67, %s69
      %p73 = scmp.eq.s32.totalorder %s12, 0
      %p74 = por %p72, %p73
      %p75 = scmp.ne.s32.totalorder %s67, %s69
      %p76 = scmp.eq.s32.totalorder %s17, 1
      %p77 = por %p75, %p76
      %p78 = scmp.ne.s32.totalorder %s69, %s70
      %p79 = scmp.eq.s32.totalorder %s17, 0
      %p80 = por %p78, %p79
      %p81 = scmp.ne.s32.totalorder %s69, %s70
      %p82 = scmp.eq.s32.totalorder %s18, 1
      %p83 = por %p81, %p82
      %p85 = scmp.ne.s32.totalorder %s70, %s84
      %p86 = scmp.eq.s32.totalorder %s18, 0
      %p87 = por %p85, %p86
      %s89 = sadd.s32 %s88, 1
      %p92 = scmp.eq.s32.totalorder %s12, 1
      %p93 = scmp.ne.s32.totalorder %s88, %s90
      %p94 = scmp.eq.s32.totalorder %s12, 0
      %p95 = por %p93, %p94
      %p96 = scmp.ne.s32.totalorder %s88, %s90
      %p97 = scmp.eq.s32.totalorder %s17, 1
      %p98 = por %p96, %p97
      %p99 = scmp.ne.s32.totalorder %s90, %s91
      %p100 = scmp.eq.s32.totalorder %s17, 0
      %p101 = por %p99, %p100
      %p102 = scmp.ne.s32.totalorder %s90, %s91
      %p103 = scmp.eq.s32.totalorder %s18, 1
      %p104 = por %p102, %p103
      %p106 = scmp.ne.s32.totalorder %s91, %s105
      %p107 = scmp.eq.s32.totalorder %s18, 0
      %p108 = por %p106, %p107
      %s109 = ssub.s32 %s12, %s19
      %p110 = scmp.eq.s32.totalorder %s109, 0
      %s112 = sadd.s32 %s111, 1
      %s113 = scalar_select %p110, %s111, %s112
      %p116 = pneg %p110
      %p117 = scmp.eq.s32.totalorder %s12, 1
      %p118 = por %p116, %p117
      %p119 = scmp.ne.s32.totalorder %s111, %s114
      %p120 = scmp.eq.s32.totalorder %s12, 0
      %p121 = por %p119, %p120
      %p122 = scmp.ne.s32.totalorder %s111, %s114
      %p123 = scmp.eq.s32.totalorder %s17, 1
      %p124 = por %p122, %p123
      %p125 = scmp.ne.s32.totalorder %s114, %s115
      %p126 = scmp.eq.s32.totalorder %s17, 0
      %p127 = por %p125, %p126
      %p128 = scmp.ne.s32.totalorder %s114, %s115
      %p129 = scmp.eq.s32.totalorder %s18, 1
      %p130 = por %p128, %p129
      %p132 = scmp.ne.s32.totalorder %s115, %s131
      %p133 = scmp.eq.s32.totalorder %s18, 0
      %p134 = por %p132, %p133
      %p135 = scmp.le.s32.totalorder 1, %s12
      %p136 = scmp.lt.s32.totalorder %s12, 3
      %p137 = pnand %p135, %p136
      %p138 = pneg %p137
      // Predicated region
      $region9: #{_lambda_.3} parent=5 // pred_check
        _
      $region10: #{_lambda_.3} parent=5 // pred_check_branch
        %140 = sbr.rel (%p137) target = $region12
      $region11: #{_lambda_.3} parent=5 // pred_region
        %s141 = ssub.s32 %s12, 1
        // Predicated region
        $region13: #{_lambda_.3} parent=11 // pred_check
          %p142 = pneg %p59
        $region14: #{_lambda_.3} parent=11 // pred_check_branch
          %144 = sbr.rel (%p142) target = $region16
        $region15: #{_lambda_.3} parent=11 // pred_region
          %146 = vsyncadd [#allocation5], 0
          %s147 = sshll.u32 %s1, 4
          %s148 = int_to_ptr.hbm [resolvable:$true] %s147
          %s149 = sshll.u32 [#allocation4], 4
          %s150 = int_to_ptr.vmem [resolvable:$true] %s149
          %155 = dma.hbm_to_vmem [thread:$0]  %s148, 256, %s150, [#allocation5], 64, 64, 4
        $region16: #{_lambda_.3} parent=11 // pred_fallthru
          _
        // Predicated region
        $region17: #{_lambda_.3} parent=11 // pred_check
          %p156 = pneg %p80
        $region18: #{_lambda_.3} parent=11 // pred_check_branch
          %158 = sbr.rel (%p156) target = $region20
        $region19: #{_lambda_.3} parent=11 // pred_region
          %160 = vsyncadd [#allocation7], 0
          %s161 = sshll.u32 %s2, 4
          %s162 = int_to_ptr.hbm [resolvable:$true] %s161
          %s163 = sshll.u32 [#allocation6], 4
          %s164 = int_to_ptr.vmem [resolvable:$true] %s163
          %169 = dma.hbm_to_vmem [thread:$0]  %s162, 512, %s164, [#allocation7], 128, 128, 8
        $region20: #{_lambda_.3} parent=11 // pred_fallthru
          _
        // Predicated region
        $region21: #{_lambda_.3} parent=11 // pred_check
          %p170 = pneg %p101
        $region22: #{_lambda_.3} parent=11 // pred_check_branch
          %172 = sbr.rel (%p170) target = $region24
        $region23: #{_lambda_.3} parent=11 // pred_region
          _
        $region24: #{_lambda_.3} parent=11 // pred_fallthru
          _
      $region12: #{_lambda_.3} parent=5 // pred_fallthru
        _
      %p173 = scmp.lt.s32.totalorder %s12, 2
      // Predicated region
      $region25: #{_lambda_.3} parent=5 // pred_check
        %p174 = pneg %p173
      $region26: #{_lambda_.3} parent=5 // pred_check_branch
        %176 = sbr.rel (%p174) target = $region28
      $region27: #{_lambda_.3} parent=5 // pred_region
        // Predicated region
        $region29: #{_lambda_.3} parent=27 // pred_check
          %p177 = pneg %p32
        $region30: #{_lambda_.3} parent=27 // pred_check_branch
          %179 = sbr.rel (%p177) target = $region32
        $region31: #{_lambda_.3} parent=27 // pred_region
          %p180 = scmp.lt.s32.totalorder %s12, 1
          %s181 = scalar_select %p180, %s12, 1
          %s182 = smul.addr %s181, 2
          %s183 = smul.addr %s182, 4
          %s184 = scalar_lea.vmem %s0, %s183
        $region32: #{_lambda_.3} parent=27 // pred_fallthru
          _
      $region28: #{_lambda_.3} parent=5 // pred_fallthru
        _
      %p185 = scmp.le.s32.totalorder 1, %s12
      %p186 = scmp.lt.s32.totalorder %s12, 3
      %p187 = pnand %p185, %p186
      %p188 = pneg %p187
      // Predicated region
      $region33: #{_lambda_.3} parent=5 // pred_check
        _
      $region34: #{_lambda_.3} parent=5 // pred_check_branch
        %190 = sbr.rel (%p187) target = $region36
      $region35: #{_lambda_.3} parent=5 // pred_region
        %s191 = ssub.s32 %s12, 1
        // Predicated region
        $region37: #{_lambda_.3} parent=35 // pred_check
          %p192 = pneg %p59
        $region38: #{_lambda_.3} parent=35 // pred_check_branch
          %194 = sbr.rel (%p192) target = $region40
        $region39: #{_lambda_.3} parent=35 // pred_region
          %196 = dma.done [#allocation5], 256
        $region40: #{_lambda_.3} parent=35 // pred_fallthru
          _
        // Predicated region
        $region41: #{_lambda_.3} parent=35 // pred_check
          %p197 = pneg %p80
        $region42: #{_lambda_.3} parent=35 // pred_check_branch
          %199 = sbr.rel (%p197) target = $region44
        $region43: #{_lambda_.3} parent=35 // pred_region
          %201 = dma.done [#allocation7], 512
        $region44: #{_lambda_.3} parent=35 // pred_fallthru
          _
        %p202 = scmp.lt.s32.totalorder %s17, 1
        %s203 = scalar_select %p202, %s17, 1
        %s204 = smul.addr %s203, 2
        %s205 = smul.addr %s204, 4
        %s206 = scalar_lea.vmem %s0, %s205
        %p207 = pneg %p38
        %p208 = pneg %p35
        %p209 = pneg %p59
        %p210 = pneg %p56
        %p211 = pneg %p80
        %p212 = pneg %p77
        %p213 = pneg %p101
        %p214 = pneg %p98
        %p215 = pneg %p127
        %p216 = pneg %p124
        %p217 = scmp.lt.s32.totalorder %s17, 1
        %s218 = scalar_select %p217, %s17, 1
        %s219 = smul.addr %s218, 8
        %s220 = smul.addr %s219, 8
        %s221 = scalar_lea.vmem %s4, %s220
        %p222 = scmp.lt.s32.totalorder %s17, 1
        %s223 = scalar_select %p222, %s17, 1
        %s224 = smul.addr %s223, 2
        %s225 = smul.addr %s224, 4
        %s226 = scalar_lea.vmem %s0, %s225
        %p227 = scmp.lt.s32.totalorder %s17, 1
        %s228 = scalar_select %p227, %s17, 1
        %s229 = smul.addr %s228, 8
        %s230 = smul.addr %s229, 8
        %s231 = scalar_lea.vmem %s4, %s230
        %v233 = vld [vmem:[%s226] sm:$0xff]
        %234 = vst [vmem:[#allocation2] sm:$0xff] 0.0
        %vm235 = vcmask 1043456
        %vm236 = vcmask 138244
        %vm237 = vmor %vm236, %vm235
        %238 = vst.msk [vmem:[#allocation2 + $0x8] sm:$0xff] %vm237, 0.0
        %239 = vst [vmem:[#allocation2 + $0x4] sm:$0xff] %v233
        %v240 = vld [vmem:[#allocation2] sm:$0xff]
        %v241 = vld [vmem:[#allocation2 + $0x8] sm:$0xf]
        %v242 = vld [vmem:[%s3] ss:$4 sm:$0x3]
        %v244 = vperm.slane %v242, 0
        %v245 = vperm.slane %v242, 1
        %v246 = vrot.slane %v245, 4
        %v247 = vsel %vm235, %v244, %v246
        %248 = vrot.lane.b32.xlu0 %v247, 111
        %v249 = vpop.permute.xlu0 %248
        %v250 = vrot.slane %v249, 4
        %vm251 = vcmask 908288
        %v252 = vsel %vm251, %v250, %v249
        %v255 = vmul.f32 %v240, %v252
        %v256 = vmul.f32 %v241, %v250
        %259 = vst [vmem:[#allocation1] ss:$2 sm:$0xff] %v255
        %s260 = scalar_lea.vmem [#allocation1], 16
        %261 = vst [vmem:[%s260] ss:$2 sm:$0xff] %v256
        %v262 = vld.sshfl [vmem:[#allocation1] sm:$0xff pattern:$0x75316420]
        %v263 = vld.sshfl [vmem:[#allocation1 + $0x8] sm:$0xff pattern:$0x75316420]
        %v264 = vld.sshfl [vmem:[#allocation1 + $0x10] sm:$0xff pattern:$0x75316420]
        %v268 = vpack.c.bf16 %v262, %v262
        %v269 = vpack.c.bf16 %v263, %v263
        %v270 = vpack.c.bf16 %v264, %v264
        %v271 = vld [vmem:[#allocation4] sm:$0xf]
        %v272 = vld [vmem:[#allocation4 + $0x4] sm:$0xf]
        %v273 = vld [vmem:[#allocation4 + $0x8] sm:$0xf]
        %v274 = vld [vmem:[#allocation4 + $0xc] sm:$0xf]
        %v275 = vld [vmem:[#allocation2] sm:$0xff]
        %v276 = vld [vmem:[#allocation2 + $0x8] sm:$0xf]
        %279 = vst [vmem:[#allocation1] ss:$2 sm:$0xff] %v275
        %s280 = scalar_lea.vmem [#allocation1], 16
        %281 = vst [vmem:[%s280] ss:$2 sm:$0xff] %v276
        %v282 = vld.sshfl [vmem:[#allocation1] sm:$0xff pattern:$0x75316420]
        %v283 = vld.sshfl [vmem:[#allocation1 + $0x8] sm:$0xff pattern:$0x75316420]
        %v284 = vld.sshfl [vmem:[#allocation1 + $0x10] sm:$0xff pattern:$0x75316420]
        %v288 = vpack.c.bf16 %v282, %v282
        %v289 = vpack.c.bf16 %v283, %v283
        %v290 = vpack.c.bf16 %v284, %v284
        %v291 = vld [vmem:[#allocation4] sm:$0xf]
        %v292 = vld [vmem:[#allocation4 + $0x4] sm:$0xf]
        %v293 = vld [vmem:[#allocation4 + $0x8] sm:$0xf]
        %v294 = vld [vmem:[#allocation4 + $0xc] sm:$0xf]
        %v299 = vunpack.c.l.b16 %v291
        %v300 = vunpack.c.l.b16 %v292
        %v301 = vunpack.c.l.b16 %v293
        %v302 = vunpack.c.l.b16 %v294
        %v303 = vpack.c.b16 %v300, %v299
        %v304 = vpack.c.b16 %v302, %v301
        %305 = vrot.lane.b32.xlu0 %v303, 124
        %v306 = vpop.permute.xlu0 %305
        %307 = vrot.lane.b32.xlu0 %v304, 124
        %v308 = vpop.permute.xlu0 %307
        %312 = vrot.lane.b32.xlu0 %v288, 16
        %v313 = vpop.permute.xlu0 %312
        %314 = vrot.lane.b32.xlu0 %v289, 16
        %v315 = vpop.permute.xlu0 %314
        %316 = vrot.lane.b32.xlu0 %v290, 16
        %v317 = vpop.permute.xlu0 %316
        %vm318 = vcmask 130048
        %v319 = vsel %vm318, %v313, %v315
        %v320 = vsel %vm318, %v315, %v317
        %vm321 = vcmask 31744
        %v323 = vsel %vm321, %v306, 0
        %v326 = vsel %vm321, %v308, 0
        %vm328 = vcmask 1041408
        %v330 = vsel %vm328, %v319, 0
        %v333 = vsel %vm328, %v320, 0
        %335 = vmatpush.bf16.msra.mxu0 0
        %336 = vmatpush.bf16.msra.mxu0 0
        %337 = vmatpush.bf16.msra.mxu0 0
        %338 = vmatpush.bf16.msra.mxu0 0
        %339 = vmatpush.bf16.msra.mxu0 0
        %340 = vmatpush.bf16.msra.mxu0 0
        %341 = vmatpush.bf16.msra.mxu0 0
        %342 = vmatpush.bf16.msra.mxu0 %v330
        %343 = vmatmul.bf16.gmra.mxu0 %v323
        %v344 = vpop.f32.mrf.mxu0
        %v345 = vadd.f32 0.0, %v344
        %v346 = vpop.f32.mrf.mxu0
        %v347 = vadd.f32 0.0, %v346
        %348 = vmatmul.bf16.gmra.mxu0 %v326
        %v349 = vpop.f32.mrf.mxu0
        %v350 = vadd.f32 0.0, %v349
        %v351 = vpop.f32.mrf.mxu0
        %v352 = vadd.f32 0.0, %v351
        %353 = vdwg.mxu0
        %354 = vmatpush.bf16.msra.mxu0 0
        %355 = vmatpush.bf16.msra.mxu0 0
        %356 = vmatpush.bf16.msra.mxu0 0
        %357 = vmatpush.bf16.msra.mxu0 0
        %358 = vmatpush.bf16.msra.mxu0 0
        %359 = vmatpush.bf16.msra.mxu0 0
        %360 = vmatpush.bf16.msra.mxu0 0
        %361 = vmatpush.bf16.msra.mxu0 %v333
        %362 = vmatmul.bf16.gmra.mxu0 %v323
        %v363 = vpop.f32.mrf.mxu0
        %v364 = vadd.f32 0.0, %v363
        %v365 = vpop.f32.mrf.mxu0
        %v366 = vadd.f32 0.0, %v365
        %367 = vmatmul.bf16.gmra.mxu0 %v326
        %v368 = vpop.f32.mrf.mxu0
        %v369 = vadd.f32 0.0, %v368
        %v370 = vpop.f32.mrf.mxu0
        %v371 = vadd.f32 0.0, %v370
        %372 = vdwg.mxu0
        %v377 = vunpack.c.l.b16 %v271
        %v378 = vunpack.c.l.b16 %v272
        %v379 = vunpack.c.l.b16 %v273
        %v380 = vunpack.c.l.b16 %v274
        %v381 = vpack.c.b16 %v378, %v377
        %v382 = vpack.c.b16 %v380, %v379
        %386 = vrot.lane.b32.xlu0 %v268, 17
        %v387 = vpop.permute.xlu0 %386
        %388 = vrot.lane.b32.xlu0 %v269, 17
        %v389 = vpop.permute.xlu0 %388
        %390 = vrot.lane.b32.xlu0 %v270, 17
        %v391 = vpop.permute.xlu0 %390
        %vm392 = vcmask 138240
        %v393 = vsel %vm392, %v387, %v389
        %v394 = vsel %vm392, %v389, %v391
        %v396 = vsel %vm321, %v381, 0
        %v399 = vsel %vm321, %v382, 0
        %v402 = vsel %vm328, %v393, 0
        %v405 = vsel %vm328, %v394, 0
        %407 = vmatpush.bf16.msra.mxu0 0
        %408 = vmatpush.bf16.msra.mxu0 0
        %409 = vmatpush.bf16.msra.mxu0 0
        %410 = vmatpush.bf16.msra.mxu0 0
        %411 = vmatpush.bf16.msra.mxu0 0
        %412 = vmatpush.bf16.msra.mxu0 0
        %413 = vmatpush.bf16.msra.mxu0 0
        %414 = vmatpush.bf16.msra.mxu0 %v402
        %415 = vmatmul.bf16.gmra.mxu0 %v396
        %v416 = vpop.f32.mrf.mxu0
        %v417 = vadd.f32 %v345, %v416
        %v418 = vpop.f32.mrf.mxu0
        %v419 = vadd.f32 %v347, %v418
        %420 = vmatmul.bf16.gmra.mxu0 %v399
        %v421 = vpop.f32.mrf.mxu0
        %v422 = vadd.f32 %v350, %v421
        %v423 = vpop.f32.mrf.mxu0
        %v424 = vadd.f32 %v352, %v423
        %425 = vdwg.mxu0
        %426 = vmatpush.bf16.msra.mxu0 0
        %427 = vmatpush.bf16.msra.mxu0 0
        %428 = vmatpush.bf16.msra.mxu0 0
        %429 = vmatpush.bf16.msra.mxu0 0
        %430 = vmatpush.bf16.msra.mxu0 0
        %431 = vmatpush.bf16.msra.mxu0 0
        %432 = vmatpush.bf16.msra.mxu0 0
        %433 = vmatpush.bf16.msra.mxu0 %v405
        %434 = vmatmul.bf16.gmra.mxu0 %v396
        %v435 = vpop.f32.mrf.mxu0
        %v436 = vadd.f32 %v364, %v435
        %v437 = vpop.f32.mrf.mxu0
        %v438 = vadd.f32 %v366, %v437
        %439 = vmatmul.bf16.gmra.mxu0 %v399
        %v440 = vpop.f32.mrf.mxu0
        %v441 = vadd.f32 %v369, %v440
        %v442 = vpop.f32.mrf.mxu0
        %v443 = vadd.f32 %v371, %v442
        %444 = vdwg.mxu0
        %v445 = vld [vmem:[#allocation2] sm:$0xff]
        %v446 = vld [vmem:[#allocation2 + $0x8] sm:$0xf]
        %s447 = scalar_lea.vmem %s3, 2
        %v448 = vld [vmem:[%s447] ss:$4 sm:$0x3]
        %v450 = vperm.slane %v448, 0
        %v451 = vperm.slane %v448, 1
        %v452 = vrot.slane %v451, 4
        %v453 = vsel %vm235, %v450, %v452
        %454 = vrot.lane.b32.xlu0 %v453, 113
        %v455 = vpop.permute.xlu0 %454
        %v456 = vrot.slane %v455, 4
        %vm457 = vcmask 924672
        %v458 = vsel %vm457, %v456, %v455
        %v461 = vmul.f32 %v445, %v458
        %v462 = vmul.f32 %v446, %v456
        %465 = vst [vmem:[#allocation1] ss:$2 sm:$0xff] %v461
        %s466 = scalar_lea.vmem [#allocation1], 16
        %467 = vst [vmem:[%s466] ss:$2 sm:$0xff] %v462
        %v468 = vld.sshfl [vmem:[#allocation1] sm:$0xff pattern:$0x75316420]
        %v469 = vld.sshfl [vmem:[#allocation1 + $0x8] sm:$0xff pattern:$0x75316420]
        %v470 = vld.sshfl [vmem:[#allocation1 + $0x10] sm:$0xff pattern:$0x75316420]
        %v474 = vpack.c.bf16 %v468, %v468
        %v475 = vpack.c.bf16 %v469, %v469
        %v476 = vpack.c.bf16 %v470, %v470
        %v477 = vld [vmem:[#allocation4] sm:$0xf]
        %v478 = vld [vmem:[#allocation4 + $0x4] sm:$0xf]
        %v479 = vld [vmem:[#allocation4 + $0x8] sm:$0xf]
        %v480 = vld [vmem:[#allocation4 + $0xc] sm:$0xf]
        %v485 = vunpack.c.l.b16 %v477
        %v486 = vunpack.c.l.b16 %v478
        %v487 = vunpack.c.l.b16 %v479
        %v488 = vunpack.c.l.b16 %v480
        %v489 = vpack.c.b16 %v486, %v485
        %v490 = vpack.c.b16 %v488, %v487
        %491 = vrot.lane.b32.xlu0 %v489, 120
        %v492 = vpop.permute.xlu0 %491
        %493 = vrot.lane.b32.xlu0 %v490, 120
        %v494 = vpop.permute.xlu0 %493
        %498 = vrot.lane.b32.xlu0 %v474, 15
        %v499 = vpop.permute.xlu0 %498
        %500 = vrot.lane.b32.xlu0 %v475, 15
        %v501 = vpop.permute.xlu0 %500
        %502 = vrot.lane.b32.xlu0 %v476, 15
        %v503 = vpop.permute.xlu0 %502
        %vm504 = vcmask 121856
        %v505 = vsel %vm504, %v499, %v501
        %v506 = vsel %vm504, %v501, %v503
        %v508 = vsel %vm321, %v492, 0
        %v511 = vsel %vm321, %v494, 0
        %v514 = vsel %vm328, %v505, 0
        %v517 = vsel %vm328, %v506, 0
        %519 = vmatpush.bf16.msra.mxu0 0
        %520 = vmatpush.bf16.msra.mxu0 0
        %521 = vmatpush.bf16.msra.mxu0 0
        %522 = vmatpush.bf16.msra.mxu0 0
        %523 = vmatpush.bf16.msra.mxu0 0
        %524 = vmatpush.bf16.msra.mxu0 0
        %525 = vmatpush.bf16.msra.mxu0 0
        %526 = vmatpush.bf16.msra.mxu0 %v514
        %527 = vmatmul.bf16.gmra.mxu0 %v508
        %v528 = vpop.f32.mrf.mxu0
        %v529 = vadd.f32 0.0, %v528
        %v530 = vpop.f32.mrf.mxu0
        %v531 = vadd.f32 0.0, %v530
        %532 = vmatmul.bf16.gmra.mxu0 %v511
        %v533 = vpop.f32.mrf.mxu0
        %v534 = vadd.f32 0.0, %v533
        %v535 = vpop.f32.mrf.mxu0
        %v536 = vadd.f32 0.0, %v535
        %537 = vdwg.mxu0
        %538 = vmatpush.bf16.msra.mxu0 0
        %539 = vmatpush.bf16.msra.mxu0 0
        %540 = vmatpush.bf16.msra.mxu0 0
        %541 = vmatpush.bf16.msra.mxu0 0
        %542 = vmatpush.bf16.msra.mxu0 0
        %543 = vmatpush.bf16.msra.mxu0 0
        %544 = vmatpush.bf16.msra.mxu0 0
        %545 = vmatpush.bf16.msra.mxu0 %v517
        %546 = vmatmul.bf16.gmra.mxu0 %v508
        %v547 = vpop.f32.mrf.mxu0
        %v548 = vadd.f32 0.0, %v547
        %v549 = vpop.f32.mrf.mxu0
        %v550 = vadd.f32 0.0, %v549
        %551 = vmatmul.bf16.gmra.mxu0 %v511
        %v552 = vpop.f32.mrf.mxu0
        %v553 = vadd.f32 0.0, %v552
        %v554 = vpop.f32.mrf.mxu0
        %v555 = vadd.f32 0.0, %v554
        %556 = vdwg.mxu0
        %v557 = vadd.f32 %v417, %v529
        %v558 = vadd.f32 %v436, %v548
        %v559 = vadd.f32 %v419, %v531
        %v560 = vadd.f32 %v438, %v550
        %v561 = vadd.f32 %v422, %v534
        %v562 = vadd.f32 %v441, %v553
        %v563 = vadd.f32 %v424, %v536
        %v564 = vadd.f32 %v443, %v555
        %v565 = vld [vmem:[#allocation2] sm:$0xff]
        %v566 = vld [vmem:[#allocation2 + $0x8] sm:$0xf]
        %567 = vrot.lane.b32.xlu0 %v247, 127
        %v568 = vpop.permute.xlu0 %567
        %v569 = vrot.slane %v568, 4
        %vm570 = vcmask 1039360
        %v571 = vsel %vm570, %v569, %v568
        %v574 = vmul.f32 %v565, %v571
        %v575 = vmul.f32 %v566, %v569
        %578 = vst [vmem:[#allocation1] ss:$2 sm:$0xff] %v574
        %s579 = scalar_lea.vmem [#allocation1], 16
        %580 = vst [vmem:[%s579] ss:$2 sm:$0xff] %v575
        %v581 = vld.sshfl [vmem:[#allocation1] sm:$0xff pattern:$0x75316420]
        %v582 = vld.sshfl [vmem:[#allocation1 + $0x8] sm:$0xff pattern:$0x75316420]
        %v583 = vld.sshfl [vmem:[#allocation1 + $0x10] sm:$0xff pattern:$0x75316420]
        %v587 = vpack.c.bf16 %v581, %v581
        %v588 = vpack.c.bf16 %v582, %v582
        %v589 = vpack.c.bf16 %v583, %v583
        %v590 = vld [vmem:[#allocation4] sm:$0xf]
        %v591 = vld [vmem:[#allocation4 + $0x4] sm:$0xf]
        %v592 = vld [vmem:[#allocation4 + $0x8] sm:$0xf]
        %v593 = vld [vmem:[#allocation4 + $0xc] sm:$0xf]
        %v598 = vunpack.c.l.b16 %v590
        %v599 = vunpack.c.l.b16 %v591
        %v600 = vunpack.c.l.b16 %v592
        %v601 = vunpack.c.l.b16 %v593
        %v602 = vpack.c.b16 %v599, %v598
        %v603 = vpack.c.b16 %v601, %v600
        %604 = vrot.lane.b32.xlu0 %v602, 116
        %v605 = vpop.permute.xlu0 %604
        %606 = vrot.lane.b32.xlu0 %v603, 116
        %v607 = vpop.permute.xlu0 %606
        %611 = vrot.lane.b32.xlu0 %v587, 1
        %v612 = vpop.permute.xlu0 %611
        %613 = vrot.lane.b32.xlu0 %v588, 1
        %v614 = vpop.permute.xlu0 %613
        %615 = vrot.lane.b32.xlu0 %v589, 1
        %v616 = vpop.permute.xlu0 %615
        %vm617 = vcmask 7168
        %v618 = vsel %vm617, %v612, %v614
        %v619 = vsel %vm617, %v614, %v616
        %v621 = vsel %vm321, %v605, 0
        %v624 = vsel %vm321, %v607, 0
        %v627 = vsel %vm328, %v618, 0
        %v630 = vsel %vm328, %v619, 0
        %632 = vmatpush.bf16.msra.mxu0 0
        %633 = vmatpush.bf16.msra.mxu0 0
        %634 = vmatpush.bf16.msra.mxu0 0
        %635 = vmatpush.bf16.msra.mxu0 0
        %636 = vmatpush.bf16.msra.mxu0 0
        %637 = vmatpush.bf16.msra.mxu0 0
        %638 = vmatpush.bf16.msra.mxu0 0
        %639 = vmatpush.bf16.msra.mxu0 %v627
        %640 = vmatmul.bf16.gmra.mxu0 %v621
        %v641 = vpop.f32.mrf.mxu0
        %v642 = vadd.f32 0.0, %v641
        %v643 = vpop.f32.mrf.mxu0
        %v644 = vadd.f32 0.0, %v643
        %645 = vmatmul.bf16.gmra.mxu0 %v624
        %v646 = vpop.f32.mrf.mxu0
        %v647 = vadd.f32 0.0, %v646
        %v648 = vpop.f32.mrf.mxu0
        %v649 = vadd.f32 0.0, %v648
        %650 = vdwg.mxu0
        %651 = vmatpush.bf16.msra.mxu0 0
        %652 = vmatpush.bf16.msra.mxu0 0
        %653 = vmatpush.bf16.msra.mxu0 0
        %654 = vmatpush.bf16.msra.mxu0 0
        %655 = vmatpush.bf16.msra.mxu0 0
        %656 = vmatpush.bf16.msra.mxu0 0
        %657 = vmatpush.bf16.msra.mxu0 0
        %658 = vmatpush.bf16.msra.mxu0 %v630
        %659 = vmatmul.bf16.gmra.mxu0 %v621
        %v660 = vpop.f32.mrf.mxu0
        %v661 = vadd.f32 0.0, %v660
        %v662 = vpop.f32.mrf.mxu0
        %v663 = vadd.f32 0.0, %v662
        %664 = vmatmul.bf16.gmra.mxu0 %v624
        %v665 = vpop.f32.mrf.mxu0
        %v666 = vadd.f32 0.0, %v665
        %v667 = vpop.f32.mrf.mxu0
        %v668 = vadd.f32 0.0, %v667
        %669 = vdwg.mxu0
        %v670 = vadd.f32 %v557, %v642
        %v671 = vadd.f32 %v558, %v661
        %v672 = vadd.f32 %v559, %v644
        %v673 = vadd.f32 %v560, %v663
        %v674 = vadd.f32 %v561, %v647
        %v675 = vadd.f32 %v562, %v666
        %v676 = vadd.f32 %v563, %v649
        %v677 = vadd.f32 %v564, %v668
        %v678 = vld [vmem:[#allocation2 + $0x4] sm:$0xff]
        %680 = vst [vmem:[#allocation1] ss:$2 sm:$0xff] %v678
        %v681 = vld.sshfl [vmem:[#allocation1] sm:$0xff pattern:$0x75316420]
        %v682 = vld.sshfl [vmem:[#allocation1 + $0x8] sm:$0xff pattern:$0x75316420]
        %v685 = vpack.c.bf16 %v681, %v681
        %v686 = vpack.c.bf16 %v682, %v682
        %v687 = vld [vmem:[#allocation4] sm:$0xf]
        %v688 = vld [vmem:[#allocation4 + $0x4] sm:$0xf]
        %v689 = vld [vmem:[#allocation4 + $0x8] sm:$0xf]
        %v690 = vld [vmem:[#allocation4 + $0xc] sm:$0xf]
        %v695 = vunpack.c.l.b16 %v687
        %v696 = vunpack.c.l.b16 %v688
        %v697 = vunpack.c.l.b16 %v689
        %v698 = vunpack.c.l.b16 %v690
        %v699 = vpack.c.b16 %v696, %v695
        %v700 = vpack.c.b16 %v698, %v697
        %701 = vrot.lane.b32.xlu0 %v699, 112
        %v702 = vpop.permute.xlu0 %701
        %703 = vrot.lane.b32.xlu0 %v700, 112
        %v704 = vpop.permute.xlu0 %703
        %v706 = vsel %vm321, %v702, 0
        %v709 = vsel %vm321, %v704, 0
        %v712 = vsel %vm328, %v685, 0
        %v715 = vsel %vm328, %v686, 0
        %717 = vmatpush.bf16.msra.mxu0 0
        %718 = vmatpush.bf16.msra.mxu0 0
        %719 = vmatpush.bf16.msra.mxu0 0
        %720 = vmatpush.bf16.msra.mxu0 0
        %721 = vmatpush.bf16.msra.mxu0 0
        %722 = vmatpush.bf16.msra.mxu0 0
        %723 = vmatpush.bf16.msra.mxu0 0
        %724 = vmatpush.bf16.msra.mxu0 %v712
        %725 = vmatmul.bf16.gmra.mxu0 %v706
        %v726 = vpop.f32.mrf.mxu0
        %v727 = vadd.f32 0.0, %v726
        %v728 = vpop.f32.mrf.mxu0
        %v729 = vadd.f32 0.0, %v728
        %730 = vmatmul.bf16.gmra.mxu0 %v709
        %v731 = vpop.f32.mrf.mxu0
        %v732 = vadd.f32 0.0, %v731
        %v733 = vpop.f32.mrf.mxu0
        %v734 = vadd.f32 0.0, %v733
        %735 = vdwg.mxu0
        %736 = vmatpush.bf16.msra.mxu0 0
        %737 = vmatpush.bf16.msra.mxu0 0
        %738 = vmatpush.bf16.msra.mxu0 0
        %739 = vmatpush.bf16.msra.mxu0 0
        %740 = vmatpush.bf16.msra.mxu0 0
        %741 = vmatpush.bf16.msra.mxu0 0
        %742 = vmatpush.bf16.msra.mxu0 0
        %743 = vmatpush.bf16.msra.mxu0 %v715
        %744 = vmatmul.bf16.gmra.mxu0 %v706
        %v745 = vpop.f32.mrf.mxu0
        %v746 = vadd.f32 0.0, %v745
        %v747 = vpop.f32.mrf.mxu0
        %v748 = vadd.f32 0.0, %v747
        %749 = vmatmul.bf16.gmra.mxu0 %v709
        %v750 = vpop.f32.mrf.mxu0
        %v751 = vadd.f32 0.0, %v750
        %v752 = vpop.f32.mrf.mxu0
        %v753 = vadd.f32 0.0, %v752
        %754 = vdwg.mxu0
        %v755 = vadd.f32 %v670, %v727
        %v756 = vadd.f32 %v671, %v746
        %v757 = vadd.f32 %v672, %v729
        %v758 = vadd.f32 %v673, %v748
        %v759 = vadd.f32 %v674, %v732
        %v760 = vadd.f32 %v675, %v751
        %v761 = vadd.f32 %v676, %v734
        %v762 = vadd.f32 %v677, %v753
        %v763 = vld [vmem:[#allocation2 + $0x4] sm:$0xff]
        %v764 = vld [vmem:[#allocation2 + $0xc] sm:$0xf]
        %765 = vrot.lane.b32.xlu0 %v453, 1
        %v766 = vpop.permute.xlu0 %765
        %v767 = vrot.slane %v766, 4
        %vm768 = vcmask 7168
        %v769 = vsel %vm768, %v767, %v766
        %v772 = vmul.f32 %v763, %v769
        %v773 = vmul.f32 %v764, %v767
        %776 = vst [vmem:[#allocation1] ss:$2 sm:$0xff] %v772
        %s777 = scalar_lea.vmem [#allocation1], 16
        %778 = vst [vmem:[%s777] ss:$2 sm:$0xff] %v773
        %v779 = vld.sshfl [vmem:[#allocation1] sm:$0xff pattern:$0x75316420]
        %v780 = vld.sshfl [vmem:[#allocation1 + $0x8] sm:$0xff pattern:$0x75316420]
        %v781 = vld.sshfl [vmem:[#allocation1 + $0x10] sm:$0xff pattern:$0x75316420]
        %v785 = vpack.c.bf16 %v779, %v779
        %v786 = vpack.c.bf16 %v780, %v780
        %v787 = vpack.c.bf16 %v781, %v781
        %v788 = vld [vmem:[#allocation4] sm:$0xf]
        %v789 = vld [vmem:[#allocation4 + $0x4] sm:$0xf]
        %v790 = vld [vmem:[#allocation4 + $0x8] sm:$0xf]
        %v791 = vld [vmem:[#allocation4 + $0xc] sm:$0xf]
        %v796 = vunpack.c.l.b16 %v788
        %v797 = vunpack.c.l.b16 %v789
        %v798 = vunpack.c.l.b16 %v790
        %v799 = vunpack.c.l.b16 %v791
        %v800 = vpack.c.b16 %v797, %v796
        %v801 = vpack.c.b16 %v799, %v798
        %802 = vrot.lane.b32.xlu0 %v800, 108
        %v803 = vpop.permute.xlu0 %802
        %804 = vrot.lane.b32.xlu0 %v801, 108
        %v805 = vpop.permute.xlu0 %804
        %809 = vrot.lane.b32.xlu0 %v785, 127
        %v810 = vpop.permute.xlu0 %809
        %811 = vrot.lane.b32.xlu0 %v786, 127
        %v812 = vpop.permute.xlu0 %811
        %813 = vrot.lane.b32.xlu0 %v787, 127
        %v814 = vpop.permute.xlu0 %813
        %vm815 = vcmask 1039360
        %v816 = vsel %vm815, %v810, %v812
        %v817 = vsel %vm815, %v812, %v814
        %v819 = vsel %vm321, %v803, 0
        %v822 = vsel %vm321, %v805, 0
        %v825 = vsel %vm328, %v816, 0
        %v828 = vsel %vm328, %v817, 0
        %830 = vmatpush.bf16.msra.mxu0 0
        %831 = vmatpush.bf16.msra.mxu0 0
        %832 = vmatpush.bf16.msra.mxu0 0
        %833 = vmatpush.bf16.msra.mxu0 0
        %834 = vmatpush.bf16.msra.mxu0 0
        %835 = vmatpush.bf16.msra.mxu0 0
        %836 = vmatpush.bf16.msra.mxu0 0
        %837 = vmatpush.bf16.msra.mxu0 %v825
        %838 = vmatmul.bf16.gmra.mxu0 %v819
        %v839 = vpop.f32.mrf.mxu0
        %v840 = vadd.f32 0.0, %v839
        %v841 = vpop.f32.mrf.mxu0
        %v842 = vadd.f32 0.0, %v841
        %843 = vmatmul.bf16.gmra.mxu0 %v822
        %v844 = vpop.f32.mrf.mxu0
        %v845 = vadd.f32 0.0, %v844
        %v846 = vpop.f32.mrf.mxu0
        %v847 = vadd.f32 0.0, %v846
        %848 = vdwg.mxu0
        %849 = vmatpush.bf16.msra.mxu0 0
        %850 = vmatpush.bf16.msra.mxu0 0
        %851 = vmatpush.bf16.msra.mxu0 0
        %852 = vmatpush.bf16.msra.mxu0 0
        %853 = vmatpush.bf16.msra.mxu0 0
        %854 = vmatpush.bf16.msra.mxu0 0
        %855 = vmatpush.bf16.msra.mxu0 0
        %856 = vmatpush.bf16.msra.mxu0 %v828
        %857 = vmatmul.bf16.gmra.mxu0 %v819
        %v858 = vpop.f32.mrf.mxu0
        %v859 = vadd.f32 0.0, %v858
        %v860 = vpop.f32.mrf.mxu0
        %v861 = vadd.f32 0.0, %v860
        %862 = vmatmul.bf16.gmra.mxu0 %v822
        %v863 = vpop.f32.mrf.mxu0
        %v864 = vadd.f32 0.0, %v863
        %v865 = vpop.f32.mrf.mxu0
        %v866 = vadd.f32 0.0, %v865
        %867 = vdwg.mxu0
        %v868 = vadd.f32 %v755, %v840
        %v869 = vadd.f32 %v756, %v859
        %v870 = vadd.f32 %v757, %v842
        %v871 = vadd.f32 %v758, %v861
        %v872 = vadd.f32 %v759, %v845
        %v873 = vadd.f32 %v760, %v864
        %v874 = vadd.f32 %v761, %v847
        %v875 = vadd.f32 %v762, %v866
        %v876 = vld [vmem:[#allocation2 + $0x4] sm:$0xff]
        %v877 = vld [vmem:[#allocation2 + $0xc] sm:$0xf]
        %878 = vrot.lane.b32.xlu0 %v247, 15
        %v879 = vpop.permute.xlu0 %878
        %v880 = vrot.slane %v879, 4
        %vm881 = vcmask 121856
        %v882 = vsel %vm881, %v880, %v879
        %v885 = vmul.f32 %v876, %v882
        %v886 = vmul.f32 %v877, %v880
        %889 = vst [vmem:[#allocation1] ss:$2 sm:$0xff] %v885
        %s890 = scalar_lea.vmem [#allocation1], 16
        %891 = vst [vmem:[%s890] ss:$2 sm:$0xff] %v886
        %v892 = vld.sshfl [vmem:[#allocation1] sm:$0xff pattern:$0x75316420]
        %v893 = vld.sshfl [vmem:[#allocation1 + $0x8] sm:$0xff pattern:$0x75316420]
        %v894 = vld.sshfl [vmem:[#allocation1 + $0x10] sm:$0xff pattern:$0x75316420]
        %v898 = vpack.c.bf16 %v892, %v892
        %v899 = vpack.c.bf16 %v893, %v893
        %v900 = vpack.c.bf16 %v894, %v894
        %v901 = vld [vmem:[#allocation4] sm:$0xf]
        %v902 = vld [vmem:[#allocation4 + $0x4] sm:$0xf]
        %v903 = vld [vmem:[#allocation4 + $0x8] sm:$0xf]
        %v904 = vld [vmem:[#allocation4 + $0xc] sm:$0xf]
        %v909 = vunpack.c.l.b16 %v901
        %v910 = vunpack.c.l.b16 %v902
        %v911 = vunpack.c.l.b16 %v903
        %v912 = vunpack.c.l.b16 %v904
        %v913 = vpack.c.b16 %v910, %v909
        %v914 = vpack.c.b16 %v912, %v911
        %915 = vrot.lane.b32.xlu0 %v913, 104
        %v916 = vpop.permute.xlu0 %915
        %917 = vrot.lane.b32.xlu0 %v914, 104
        %v918 = vpop.permute.xlu0 %917
        %922 = vrot.lane.b32.xlu0 %v898, 113
        %v923 = vpop.permute.xlu0 %922
        %924 = vrot.lane.b32.xlu0 %v899, 113
        %v925 = vpop.permute.xlu0 %924
        %926 = vrot.lane.b32.xlu0 %v900, 113
        %v927 = vpop.permute.xlu0 %926
        %vm928 = vcmask 924672
        %v929 = vsel %vm928, %v923, %v925
        %v930 = vsel %vm928, %v925, %v927
        %v932 = vsel %vm321, %v916, 0
        %v935 = vsel %vm321, %v918, 0
        %v938 = vsel %vm328, %v929, 0
        %v941 = vsel %vm328, %v930, 0
        %943 = vmatpush.bf16.msra.mxu0 0
        %944 = vmatpush.bf16.msra.mxu0 0
        %945 = vmatpush.bf16.msra.mxu0 0
        %946 = vmatpush.bf16.msra.mxu0 0
        %947 = vmatpush.bf16.msra.mxu0 0
        %948 = vmatpush.bf16.msra.mxu0 0
        %949 = vmatpush.bf16.msra.mxu0 0
        %950 = vmatpush.bf16.msra.mxu0 %v938
        %951 = vmatmul.bf16.gmra.mxu0 %v932
        %v952 = vpop.f32.mrf.mxu0
        %v953 = vadd.f32 0.0, %v952
        %v954 = vpop.f32.mrf.mxu0
        %v955 = vadd.f32 0.0, %v954
        %956 = vmatmul.bf16.gmra.mxu0 %v935
        %v957 = vpop.f32.mrf.mxu0
        %v958 = vadd.f32 0.0, %v957
        %v959 = vpop.f32.mrf.mxu0
        %v960 = vadd.f32 0.0, %v959
        %961 = vdwg.mxu0
        %962 = vmatpush.bf16.msra.mxu0 0
        %963 = vmatpush.bf16.msra.mxu0 0
        %964 = vmatpush.bf16.msra.mxu0 0
        %965 = vmatpush.bf16.msra.mxu0 0
        %966 = vmatpush.bf16.msra.mxu0 0
        %967 = vmatpush.bf16.msra.mxu0 0
        %968 = vmatpush.bf16.msra.mxu0 0
        %969 = vmatpush.bf16.msra.mxu0 %v941
        %970 = vmatmul.bf16.gmra.mxu0 %v932
        %v971 = vpop.f32.mrf.mxu0
        %v972 = vadd.f32 0.0, %v971
        %v973 = vpop.f32.mrf.mxu0
        %v974 = vadd.f32 0.0, %v973
        %975 = vmatmul.bf16.gmra.mxu0 %v935
        %v976 = vpop.f32.mrf.mxu0
        %v977 = vadd.f32 0.0, %v976
        %v978 = vpop.f32.mrf.mxu0
        %v979 = vadd.f32 0.0, %v978
        %980 = vdwg.mxu0
        %v981 = vadd.f32 %v868, %v953
        %v982 = vadd.f32 %v869, %v972
        %v983 = vadd.f32 %v870, %v955
        %v984 = vadd.f32 %v871, %v974
        %v985 = vadd.f32 %v872, %v958
        %v986 = vadd.f32 %v873, %v977
        %v987 = vadd.f32 %v874, %v960
        %v988 = vadd.f32 %v875, %v979
        %v989 = vld [vmem:[#allocation2 + $0x4] sm:$0xff]
        %v990 = vld [vmem:[#allocation2 + $0xc] sm:$0xf]
        %993 = vst [vmem:[#allocation1] ss:$2 sm:$0xff] %v989
        %s994 = scalar_lea.vmem [#allocation1], 16
        %995 = vst [vmem:[%s994] ss:$2 sm:$0xff] %v990
        %v996 = vld.sshfl [vmem:[#allocation1] sm:$0xff pattern:$0x75316420]
        %v997 = vld.sshfl [vmem:[#allocation1 + $0x8] sm:$0xff pattern:$0x75316420]
        %v998 = vld.sshfl [vmem:[#allocation1 + $0x10] sm:$0xff pattern:$0x75316420]
        %v1002 = vpack.c.bf16 %v996, %v996
        %v1003 = vpack.c.bf16 %v997, %v997
        %v1004 = vpack.c.bf16 %v998, %v998
        %v1005 = vld [vmem:[#allocation4] sm:$0xf]
        %v1006 = vld [vmem:[#allocation4 + $0x4] sm:$0xf]
        %v1007 = vld [vmem:[#allocation4 + $0x8] sm:$0xf]
        %v1008 = vld [vmem:[#allocation4 + $0xc] sm:$0xf]
        %v1013 = vunpack.c.l.b16 %v1005
        %v1014 = vunpack.c.l.b16 %v1006
        %v1015 = vunpack.c.l.b16 %v1007
        %v1016 = vunpack.c.l.b16 %v1008
        %v1017 = vpack.c.b16 %v1014, %v1013
        %v1018 = vpack.c.b16 %v1016, %v1015
        %1019 = vrot.lane.b32.xlu0 %v1017, 100
        %v1020 = vpop.permute.xlu0 %1019
        %1021 = vrot.lane.b32.xlu0 %v1018, 100
        %v1022 = vpop.permute.xlu0 %1021
        %1026 = vrot.lane.b32.xlu0 %v1002, 112
        %v1027 = vpop.permute.xlu0 %1026
        %1028 = vrot.lane.b32.xlu0 %v1003, 112
        %v1029 = vpop.permute.xlu0 %1028
        %1030 = vrot.lane.b32.xlu0 %v1004, 112
        %v1031 = vpop.permute.xlu0 %1030
        %vm1032 = vcmask 916480
        %v1033 = vsel %vm1032, %v1027, %v1029
        %v1034 = vsel %vm1032, %v1029, %v1031
        %v1036 = vsel %vm321, %v1020, 0
        %v1039 = vsel %vm321, %v1022, 0
        %v1042 = vsel %vm328, %v1033, 0
        %v1045 = vsel %vm328, %v1034, 0
        %1047 = vmatpush.bf16.msra.mxu0 0
        %1048 = vmatpush.bf16.msra.mxu0 0
        %1049 = vmatpush.bf16.msra.mxu0 0
        %1050 = vmatpush.bf16.msra.mxu0 0
        %1051 = vmatpush.bf16.msra.mxu0 0
        %1052 = vmatpush.bf16.msra.mxu0 0
        %1053 = vmatpush.bf16.msra.mxu0 0
        %1054 = vmatpush.bf16.msra.mxu0 %v1042
        %1055 = vmatmul.bf16.gmra.mxu0 %v1036
        %v1056 = vpop.f32.mrf.mxu0
        %v1057 = vadd.f32 0.0, %v1056
        %v1058 = vpop.f32.mrf.mxu0
        %v1059 = vadd.f32 0.0, %v1058
        %1060 = vmatmul.bf16.gmra.mxu0 %v1039
        %v1061 = vpop.f32.mrf.mxu0
        %v1062 = vadd.f32 0.0, %v1061
        %v1063 = vpop.f32.mrf.mxu0
        %v1064 = vadd.f32 0.0, %v1063
        %1065 = vdwg.mxu0
        %1066 = vmatpush.bf16.msra.mxu0 0
        %1067 = vmatpush.bf16.msra.mxu0 0
        %1068 = vmatpush.bf16.msra.mxu0 0
        %1069 = vmatpush.bf16.msra.mxu0 0
        %1070 = vmatpush.bf16.msra.mxu0 0
        %1071 = vmatpush.bf16.msra.mxu0 0
        %1072 = vmatpush.bf16.msra.mxu0 0
        %1073 = vmatpush.bf16.msra.mxu0 %v1045
        %1074 = vmatmul.bf16.gmra.mxu0 %v1036
        %v1075 = vpop.f32.mrf.mxu0
        %v1076 = vadd.f32 0.0, %v1075
        %v1077 = vpop.f32.mrf.mxu0
        %v1078 = vadd.f32 0.0, %v1077
        %1079 = vmatmul.bf16.gmra.mxu0 %v1039
        %v1080 = vpop.f32.mrf.mxu0
        %v1081 = vadd.f32 0.0, %v1080
        %v1082 = vpop.f32.mrf.mxu0
        %v1083 = vadd.f32 0.0, %v1082
        %1084 = vdwg.mxu0
        %v1085 = vadd.f32 %v981, %v1057
        %v1086 = vadd.f32 %v982, %v1076
        %v1087 = vadd.f32 %v983, %v1059
        %v1088 = vadd.f32 %v984, %v1078
        %v1089 = vadd.f32 %v985, %v1062
        %v1090 = vadd.f32 %v986, %v1081
        %v1091 = vadd.f32 %v987, %v1064
        %v1092 = vadd.f32 %v988, %v1083
        %v1093 = vld [vmem:[#allocation2 + $0x4] sm:$0xff]
        %v1094 = vld [vmem:[#allocation2 + $0xc] sm:$0xf]
        %1095 = vrot.lane.b32.xlu0 %v453, 17
        %v1096 = vpop.permute.xlu0 %1095
        %v1097 = vrot.slane %v1096, 4
        %vm1098 = vcmask 138240
        %v1099 = vsel %vm1098, %v1097, %v1096
        %v1102 = vmul.f32 %v1093, %v1099
        %v1103 = vmul.f32 %v1094, %v1097
        %1106 = vst [vmem:[#allocation1] ss:$2 sm:$0xff] %v1102
        %s1107 = scalar_lea.vmem [#allocation1], 16
        %1108 = vst [vmem:[%s1107] ss:$2 sm:$0xff] %v1103
        %v1109 = vld.sshfl [vmem:[#allocation1] sm:$0xff pattern:$0x75316420]
        %v1110 = vld.sshfl [vmem:[#allocation1 + $0x8] sm:$0xff pattern:$0x75316420]
        %v1111 = vld.sshfl [vmem:[#allocation1 + $0x10] sm:$0xff pattern:$0x75316420]
        %v1115 = vpack.c.bf16 %v1109, %v1109
        %v1116 = vpack.c.bf16 %v1110, %v1110
        %v1117 = vpack.c.bf16 %v1111, %v1111
        %v1118 = vld [vmem:[#allocation4] sm:$0xf]
        %v1119 = vld [vmem:[#allocation4 + $0x4] sm:$0xf]
        %v1120 = vld [vmem:[#allocation4 + $0x8] sm:$0xf]
        %v1121 = vld [vmem:[#allocation4 + $0xc] sm:$0xf]
        %v1126 = vunpack.c.l.b16 %v1118
        %v1127 = vunpack.c.l.b16 %v1119
        %v1128 = vunpack.c.l.b16 %v1120
        %v1129 = vunpack.c.l.b16 %v1121
        %v1130 = vpack.c.b16 %v1127, %v1126
        %v1131 = vpack.c.b16 %v1129, %v1128
        %1132 = vrot.lane.b32.xlu0 %v1130, 96
        %v1133 = vpop.permute.xlu0 %1132
        %1134 = vrot.lane.b32.xlu0 %v1131, 96
        %v1135 = vpop.permute.xlu0 %1134
        %1139 = vrot.lane.b32.xlu0 %v1115, 111
        %v1140 = vpop.permute.xlu0 %1139
        %1141 = vrot.lane.b32.xlu0 %v1116, 111
        %v1142 = vpop.permute.xlu0 %1141
        %1143 = vrot.lane.b32.xlu0 %v1117, 111
        %v1144 = vpop.permute.xlu0 %1143
        %vm1145 = vcmask 908288
        %v1146 = vsel %vm1145, %v1140, %v1142
        %v1147 = vsel %vm1145, %v1142, %v1144
        %v1149 = vsel %vm321, %v1133, 0
        %v1152 = vsel %vm321, %v1135, 0
        %v1155 = vsel %vm328, %v1146, 0
        %v1158 = vsel %vm328, %v1147, 0
        %1160 = vmatpush.bf16.msra.mxu0 0
        %1161 = vmatpush.bf16.msra.mxu0 0
        %1162 = vmatpush.bf16.msra.mxu0 0
        %1163 = vmatpush.bf16.msra.mxu0 0
        %1164 = vmatpush.bf16.msra.mxu0 0
        %1165 = vmatpush.bf16.msra.mxu0 0
        %1166 = vmatpush.bf16.msra.mxu0 0
        %1167 = vmatpush.bf16.msra.mxu0 %v1155
        %1168 = vmatmul.bf16.gmra.mxu0 %v1149
        %v1169 = vpop.f32.mrf.mxu0
        %v1170 = vadd.f32 0.0, %v1169
        %v1171 = vpop.f32.mrf.mxu0
        %v1172 = vadd.f32 0.0, %v1171
        %1173 = vmatmul.bf16.gmra.mxu0 %v1152
        %v1174 = vpop.f32.mrf.mxu0
        %v1175 = vadd.f32 0.0, %v1174
        %v1176 = vpop.f32.mrf.mxu0
        %v1177 = vadd.f32 0.0, %v1176
        %1178 = vdwg.mxu0
        %1179 = vmatpush.bf16.msra.mxu0 0
        %1180 = vmatpush.bf16.msra.mxu0 0
        %1181 = vmatpush.bf16.msra.mxu0 0
        %1182 = vmatpush.bf16.msra.mxu0 0
        %1183 = vmatpush.bf16.msra.mxu0 0
        %1184 = vmatpush.bf16.msra.mxu0 0
        %1185 = vmatpush.bf16.msra.mxu0 0
        %1186 = vmatpush.bf16.msra.mxu0 %v1158
        %1187 = vmatmul.bf16.gmra.mxu0 %v1149
        %v1188 = vpop.f32.mrf.mxu0
        %v1189 = vadd.f32 0.0, %v1188
        %v1190 = vpop.f32.mrf.mxu0
        %v1191 = vadd.f32 0.0, %v1190
        %1192 = vmatmul.bf16.gmra.mxu0 %v1152
        %v1193 = vpop.f32.mrf.mxu0
        %v1194 = vadd.f32 0.0, %v1193
        %v1195 = vpop.f32.mrf.mxu0
        %v1196 = vadd.f32 0.0, %v1195
        %1197 = vdwg.mxu0
        %v1198 = vadd.f32 %v1085, %v1170
        %v1199 = vadd.f32 %v1086, %v1189
        %v1200 = vadd.f32 %v1087, %v1172
        %v1201 = vadd.f32 %v1088, %v1191
        %v1202 = vadd.f32 %v1089, %v1175
        %v1203 = vadd.f32 %v1090, %v1194
        %v1204 = vadd.f32 %v1091, %v1177
        %v1205 = vadd.f32 %v1092, %v1196
        %v1206 = vld [vmem:[#allocation6] sm:$0xff]
        %v1207 = vld [vmem:[#allocation6 + $0x8] sm:$0xff]
        %v1208 = vld [vmem:[#allocation6 + $0x10] sm:$0xff]
        %v1209 = vld [vmem:[#allocation6 + $0x18] sm:$0xff]
        %1211 = vset.pattern.permute.xlu0 0
        %1212 = vperm.xlu0 %1211, %v1206
        %v1213 = vpop.permute.xlu0 %1212
        %1216 = vset.pattern.permute.xlu0 0
        %1217 = vperm.xlu0 %1216, %v1207
        %v1218 = vpop.permute.xlu0 %1217
        %1221 = vset.pattern.permute.xlu0 0
        %1222 = vperm.xlu0 %1221, %v1208
        %v1223 = vpop.permute.xlu0 %1222
        %1226 = vset.pattern.permute.xlu0 0
        %1227 = vperm.xlu0 %1226, %v1209
        %v1228 = vpop.permute.xlu0 %1227
        %v1230 = vadd.f32 %v1198, %v1213
        %v1231 = vadd.f32 %v1199, %v1213
        %v1232 = vadd.f32 %v1200, %v1218
        %v1233 = vadd.f32 %v1201, %v1218
        %v1234 = vadd.f32 %v1202, %v1223
        %v1235 = vadd.f32 %v1203, %v1223
        %v1236 = vadd.f32 %v1204, %v1228
        %v1237 = vadd.f32 %v1205, %v1228
        %1238 = vst [vmem:[%s231] sm:$0xff] %v1230
        %1239 = vst [vmem:[%s231 + $0x8] sm:$0xff] %v1231
        %1240 = vst [vmem:[%s231 + $0x10] sm:$0xff] %v1232
        %1241 = vst [vmem:[%s231 + $0x18] sm:$0xff] %v1233
        %1242 = vst [vmem:[%s231 + $0x20] sm:$0xff] %v1234
        %1243 = vst [vmem:[%s231 + $0x28] sm:$0xff] %v1235
        %1244 = vst [vmem:[%s231 + $0x30] sm:$0xff] %v1236
        %1245 = vst [vmem:[%s231 + $0x38] sm:$0xff] %v1237
        %p1246 = scmp.lt.s32.totalorder %s17, 1
        %s1247 = scalar_select %p1246, %s17, 1
        %s1248 = smul.addr %s1247, 8
        %s1249 = smul.addr %s1248, 8
        %s1250 = scalar_lea.vmem %s4, %s1249
        // Predicated region
        $region45: #{_lambda_.3} parent=35 // pred_check
          %p1251 = pneg %p124
        $region46: #{_lambda_.3} parent=35 // pred_check_branch
          %1253 = sbr.rel (%p1251) target = $region48
        $region47: #{_lambda_.3} parent=35 // pred_region
          _
        $region48: #{_lambda_.3} parent=35 // pred_fallthru
          _
      $region36: #{_lambda_.3} parent=5 // pred_fallthru
        _
      %p1254 = scmp.le.s32.totalorder 2, %s12
      // Predicated region
      $region49: #{_lambda_.3} parent=5 // pred_check
        %p1255 = pneg %p1254
      $region50: #{_lambda_.3} parent=5 // pred_check_branch
        %1257 = sbr.rel (%p1255) target = $region52
      $region51: #{_lambda_.3} parent=5 // pred_region
        %s1258 = ssub.s32 %s12, 2
        // Predicated region
        $region53: #{_lambda_.3} parent=51 // pred_check
          %p1259 = pneg %p130
        $region54: #{_lambda_.3} parent=51 // pred_check_branch
          %1261 = sbr.rel (%p1259) target = $region56
        $region55: #{_lambda_.3} parent=51 // pred_region
          %p1262 = scmp.lt.s32.totalorder %s18, 1
          %s1263 = scalar_select %p1262, %s18, 1
          %s1264 = smul.addr %s1263, 8
          %s1265 = smul.addr %s1264, 8
          %s1266 = scalar_lea.vmem %s4, %s1265
        $region56: #{_lambda_.3} parent=51 // pred_fallthru
          _
      $region52: #{_lambda_.3} parent=5 // pred_fallthru
        _
    $region6: #{_lambda_.3} parent=1 // loop_footer
      %s16 = sadd.s32 1, %s12
    $region7: #{_lambda_.3} parent=1 // loop_footer_branch
      %11 = sbr.rel target = $region3
    $region8: #{_lambda_.3} parent=1 // loop_exit
      _
    %1267 = vsyncpa [#allocation5], 1
    %s1268 = scalar_lea.sflag [#allocation5], 1
    %1269 = vsyncpa %s1268, 1
    %1270 = vsyncpa [#allocation7], 1

// kernel: _lambda_.5
$region0: #{_lambda_.5}
  #allocation0 [shape = 'u32[]', space=smem, size = 0x4, offset = 0x4, fixed_abs, tag = 'smem constant byte address 0x4 - core index']
  #allocation1 [shape = 'u32[72,128]{1,0:T(1,128)}', space=vmem, size = 0x9000, scoped, tag = 'internal scratch']
  #allocation2 [shape = 'f32[32,401]{1,0:T(8,128)}', space=vmem, size = 0x10000, scoped, tag = 'scratch operand']
  #allocation3 [shape = 'bf16[288,256]{1,0:T(8,128)(2,1)}', space=vmem, size = 0x24000, scoped, tag = 'scratch operand']
  %s0 = inlined_call_operand.vmem [shape: f32[2,32,256], index: 0, kind: input, shape index: {}]
  %s1 = inlined_call_operand.hbm [shape: bf16[128,288], index: 1, kind: input, shape index: {}]
  %s2 = inlined_call_operand.hbm [shape: f32[128,1], index: 2, kind: input, shape index: {}]
  %s3 = inlined_call_operand.vmem [shape: f32[3,256], index: 3, kind: input, shape index: {}]
  %s4 = inlined_call_operand.vmem [shape: f32[2,128,256], index: 4, kind: output, shape index: {}]
  %s5 = sld [smem:[#allocation0]]
  $region57: #{_lambda_.5} parent=0
    _
  %s7 = ssub.s32 1, %s5
  %s8 = scalar_select 0, %s7, %s5
  $region1: #{_lambda_.5} parent=0
    #allocation4 [shape = 'u8[98304]{0}', space=vmem, size = 0x18000, scoped, tag = 'input window, operand 1, single buffered']
    #allocation5 [shape = 's32[2]{0}', space=sflag, size = 0x8, scoped, tag = 'scoped memory for _lambda_.5']
    #allocation6 [shape = 'u8[65536]{0}', space=vmem, size = 0x10000, scoped, tag = 'input window, operand 2, single buffered']
    #allocation7 [shape = 's32[1]{0}', space=sflag, size = 0x4, scoped, tag = 'scoped memory for _lambda_.5']
    %9 = vsyncpa [#allocation5], 0
    %10 = vsyncpa [#allocation7], 0
    loop: start=0, step=1, limit=4
    $region2: #{_lambda_.5} parent=1 // loop_pre_header
      _
    $region3: #{_lambda_.5} parent=1 // loop_header
      %s12 = sphi 0, %s16
      %p13 = scmp.ge.s32.totalorder %s12, 4
      %s22 = sphi 0, %s24
      %s25 = sphi 0, %s22
      %s26 = sphi 0, %s25
      %s42 = sphi 0, %s26
      %s46 = sphi 0, %s46
      %s48 = sphi 0, %s46
      %s49 = sphi 0, %s48
      %s63 = sphi 0, %s49
      %s67 = sphi 0, %s67
      %s69 = sphi 0, %s67
      %s70 = sphi 0, %s69
      %s84 = sphi 0, %s70
      %s88 = sphi 0, %s88
      %s90 = sphi 0, %s88
      %s91 = sphi 0, %s90
      %s105 = sphi 0, %s91
      %s111 = sphi 0, %s113
      %s114 = sphi 0, %s111
      %s115 = sphi 0, %s114
      %s131 = sphi 0, %s115
    $region4: #{_lambda_.5} parent=1 // loop_header_branch
      %15 = sbr.rel (%p13) target = $region8
    $region5: #{_lambda_.5} parent=1 // loop_body
      %s17 = ssub.s32 %s12, 1
      %s18 = ssub.s32 %s12, 2
      %s19 = sadd.s32 %s12, 1
      %s20 = ssub.s32 %s12, %s19
      %p21 = scmp.eq.s32.totalorder %s20, 0
      %s23 = sadd.s32 %s22, 1
      %s24 = scalar_select %p21, %s22, %s23
      %p27 = pneg %p21
      %p28 = scmp.eq.s32.totalorder %s12, 1
      %p29 = por %p27, %p28
      %p30 = scmp.ne.s32.totalorder %s22, %s25
      %p31 = scmp.eq.s32.totalorder %s12, 0
      %p32 = por %p30, %p31
      %p33 = scmp.ne.s32.totalorder %s22, %s25
      %p34 = scmp.eq.s32.totalorder %s17, 1
      %p35 = por %p33, %p34
      %p36 = scmp.ne.s32.totalorder %s25, %s26
      %p37 = scmp.eq.s32.totalorder %s17, 0
      %p38 = por %p36, %p37
      %p39 = scmp.ne.s32.totalorder %s25, %s26
      %p40 = scmp.eq.s32.totalorder %s18, 1
      %p41 = por %p39, %p40
      %p43 = scmp.ne.s32.totalorder %s26, %s42
      %p44 = scmp.eq.s32.totalorder %s18, 0
      %p45 = por %p43, %p44
      %s47 = sadd.s32 %s46, 1
      %p50 = scmp.eq.s32.totalorder %s12, 1
      %p51 = scmp.ne.s32.totalorder %s46, %s48
      %p52 = scmp.eq.s32.totalorder %s12, 0
      %p53 = por %p51, %p52
      %p54 = scmp.ne.s32.totalorder %s46, %s48
      %p55 = scmp.eq.s32.totalorder %s17, 1
      %p56 = por %p54, %p55
      %p57 = scmp.ne.s32.totalorder %s48, %s49
      %p58 = scmp.eq.s32.totalorder %s17, 0
      %p59 = por %p57, %p58
      %p60 = scmp.ne.s32.totalorder %s48, %s49
      %p61 = scmp.eq.s32.totalorder %s18, 1
      %p62 = por %p60, %p61
      %p64 = scmp.ne.s32.totalorder %s49, %s63
      %p65 = scmp.eq.s32.totalorder %s18, 0
      %p66 = por %p64, %p65
      %s68 = sadd.s32 %s67, 1
      %p71 = scmp.eq.s32.totalorder %s12, 1
      %p72 = scmp.ne.s32.totalorder %s67, %s69
      %p73 = scmp.eq.s32.totalorder %s12, 0
      %p74 = por %p72, %p73
      %p75 = scmp.ne.s32.totalorder %s67, %s69
      %p76 = scmp.eq.s32.totalorder %s17, 1
      %p77 = por %p75, %p76
      %p78 = scmp.ne.s32.totalorder %s69, %s70
      %p79 = scmp.eq.s32.totalorder %s17, 0
      %p80 = por %p78, %p79
      %p81 = scmp.ne.s32.totalorder %s69, %s70
      %p82 = scmp.eq.s32.totalorder %s18, 1
      %p83 = por %p81, %p82
      %p85 = scmp.ne.s32.totalorder %s70, %s84
      %p86 = scmp.eq.s32.totalorder %s18, 0
      %p87 = por %p85, %p86
      %s89 = sadd.s32 %s88, 1
      %p92 = scmp.eq.s32.totalorder %s12, 1
      %p93 = scmp.ne.s32.totalorder %s88, %s90
      %p94 = scmp.eq.s32.totalorder %s12, 0
      %p95 = por %p93, %p94
      %p96 = scmp.ne.s32.totalorder %s88, %s90
      %p97 = scmp.eq.s32.totalorder %s17, 1
      %p98 = por %p96, %p97
      %p99 = scmp.ne.s32.totalorder %s90, %s91
      %p100 = scmp.eq.s32.totalorder %s17, 0
      %p101 = por %p99, %p100
      %p102 = scmp.ne.s32.totalorder %s90, %s91
      %p103 = scmp.eq.s32.totalorder %s18, 1
      %p104 = por %p102, %p103
      %p106 = scmp.ne.s32.totalorder %s91, %s105
      %p107 = scmp.eq.s32.totalorder %s18, 0
      %p108 = por %p106, %p107
      %s109 = ssub.s32 %s12, %s19
      %p110 = scmp.eq.s32.totalorder %s109, 0
      %s112 = sadd.s32 %s111, 1
      %s113 = scalar_select %p110, %s111, %s112
      %p116 = pneg %p110
      %p117 = scmp.eq.s32.totalorder %s12, 1
      %p118 = por %p116, %p117
      %p119 = scmp.ne.s32.totalorder %s111, %s114
      %p120 = scmp.eq.s32.totalorder %s12, 0
      %p121 = por %p119, %p120
      %p122 = scmp.ne.s32.totalorder %s111, %s114
      %p123 = scmp.eq.s32.totalorder %s17, 1
      %p124 = por %p122, %p123
      %p125 = scmp.ne.s32.totalorder %s114, %s115
      %p126 = scmp.eq.s32.totalorder %s17, 0
      %p127 = por %p125, %p126
      %p128 = scmp.ne.s32.totalorder %s114, %s115
      %p129 = scmp.eq.s32.totalorder %s18, 1
      %p130 = por %p128, %p129
      %p132 = scmp.ne.s32.totalorder %s115, %s131
      %p133 = scmp.eq.s32.totalorder %s18, 0
      %p134 = por %p132, %p133
      %p135 = scmp.le.s32.totalorder 1, %s12
      %p136 = scmp.lt.s32.totalorder %s12, 3
      %p137 = pnand %p135, %p136
      %p138 = pneg %p137
      // Predicated region
      $region9: #{_lambda_.5} parent=5 // pred_check
        _
      $region10: #{_lambda_.5} parent=5 // pred_check_branch
        %140 = sbr.rel (%p137) target = $region12
      $region11: #{_lambda_.5} parent=5 // pred_region
        %s141 = ssub.s32 %s12, 1
        // Predicated region
        $region13: #{_lambda_.5} parent=11 // pred_check
          %p142 = pneg %p59
        $region14: #{_lambda_.5} parent=11 // pred_check_branch
          %144 = sbr.rel (%p142) target = $region16
        $region15: #{_lambda_.5} parent=11 // pred_region
          %146 = vsyncadd [#allocation5], 0
          %s147 = sshll.u32 %s1, 4
          %s148 = int_to_ptr.hbm [resolvable:$true] %s147
          %s149 = sshll.u32 [#allocation4], 4
          %s150 = int_to_ptr.vmem [resolvable:$true] %s149
          %155 = dma.hbm_to_vmem [thread:$0]  %s148, 3072, %s150, [#allocation5], 192, 192, 12
        $region16: #{_lambda_.5} parent=11 // pred_fallthru
          _
        // Predicated region
        $region17: #{_lambda_.5} parent=11 // pred_check
          %p156 = pneg %p80
        $region18: #{_lambda_.5} parent=11 // pred_check_branch
          %158 = sbr.rel (%p156) target = $region20
        $region19: #{_lambda_.5} parent=11 // pred_region
          %160 = vsyncadd [#allocation7], 0
          %s161 = sshll.u32 %s2, 4
          %s162 = int_to_ptr.hbm [resolvable:$true] %s161
          %s163 = sshll.u32 [#allocation6], 4
          %s164 = int_to_ptr.vmem [resolvable:$true] %s163
          %169 = dma.hbm_to_vmem [thread:$0]  %s162, 2048, %s164, [#allocation7], 128, 128, 8
        $region20: #{_lambda_.5} parent=11 // pred_fallthru
          _
        // Predicated region
        $region21: #{_lambda_.5} parent=11 // pred_check
          %p170 = pneg %p101
        $region22: #{_lambda_.5} parent=11 // pred_check_branch
          %172 = sbr.rel (%p170) target = $region24
        $region23: #{_lambda_.5} parent=11 // pred_region
          _
        $region24: #{_lambda_.5} parent=11 // pred_fallthru
          _
      $region12: #{_lambda_.5} parent=5 // pred_fallthru
        _
      %p173 = scmp.lt.s32.totalorder %s12, 2
      // Predicated region
      $region25: #{_lambda_.5} parent=5 // pred_check
        %p174 = pneg %p173
      $region26: #{_lambda_.5} parent=5 // pred_check_branch
        %176 = sbr.rel (%p174) target = $region28
      $region27: #{_lambda_.5} parent=5 // pred_region
        // Predicated region
        $region29: #{_lambda_.5} parent=27 // pred_check
          %p177 = pneg %p32
        $region30: #{_lambda_.5} parent=27 // pred_check_branch
          %179 = sbr.rel (%p177) target = $region32
        $region31: #{_lambda_.5} parent=27 // pred_region
          %p180 = scmp.lt.s32.totalorder %s12, 1
          %s181 = scalar_select %p180, %s12, 1
          %s182 = smul.addr %s181, 8
          %s183 = smul.addr %s182, 8
          %s184 = scalar_lea.vmem %s0, %s183
        $region32: #{_lambda_.5} parent=27 // pred_fallthru
          _
      $region28: #{_lambda_.5} parent=5 // pred_fallthru
        _
      %p185 = scmp.le.s32.totalorder 1, %s12
      %p186 = scmp.lt.s32.totalorder %s12, 3
      %p187 = pnand %p185, %p186
      %p188 = pneg %p187
      // Predicated region
      $region33: #{_lambda_.5} parent=5 // pred_check
        _
      $region34: #{_lambda_.5} parent=5 // pred_check_branch
        %190 = sbr.rel (%p187) target = $region36
      $region35: #{_lambda_.5} parent=5 // pred_region
        %s191 = ssub.s32 %s12, 1
        // Predicated region
        $region37: #{_lambda_.5} parent=35 // pred_check
          %p192 = pneg %p59
        $region38: #{_lambda_.5} parent=35 // pred_check_branch
          %194 = sbr.rel (%p192) target = $region40
        $region39: #{_lambda_.5} parent=35 // pred_region
          %196 = dma.done [#allocation5], 3072
        $region40: #{_lambda_.5} parent=35 // pred_fallthru
          _
        // Predicated region
        $region41: #{_lambda_.5} parent=35 // pred_check
          %p197 = pneg %p80
        $region42: #{_lambda_.5} parent=35 // pred_check_branch
          %199 = sbr.rel (%p197) target = $region44
        $region43: #{_lambda_.5} parent=35 // pred_region
          %201 = dma.done [#allocation7], 2048
        $region44: #{_lambda_.5} parent=35 // pred_fallthru
          _
        %p202 = scmp.lt.s32.totalorder %s17, 1
        %s203 = scalar_select %p202, %s17, 1
        %s204 = smul.addr %s203, 8
        %s205 = smul.addr %s204, 8
        %s206 = scalar_lea.vmem %s0, %s205
        %p207 = pneg %p38
        %p208 = pneg %p35
        %p209 = pneg %p59
        %p210 = pneg %p56
        %p211 = pneg %p80
        %p212 = pneg %p77
        %p213 = pneg %p101
        %p214 = pneg %p98
        %p215 = pneg %p127
        %p216 = pneg %p124
        %p217 = scmp.lt.s32.totalorder %s17, 1
        %s218 = scalar_select %p217, %s17, 1
        %s219 = smul.addr %s218, 32
        %s220 = smul.addr %s219, 8
        %s221 = scalar_lea.vmem %s4, %s220
        %p222 = scmp.lt.s32.totalorder %s17, 1
        %s223 = scalar_select %p222, %s17, 1
        %s224 = smul.addr %s223, 8
        %s225 = smul.addr %s224, 8
        %s226 = scalar_lea.vmem %s0, %s225
        %p227 = scmp.lt.s32.totalorder %s17, 1
        %s228 = scalar_select %p227, %s17, 1
        %s229 = smul.addr %s228, 32
        %s230 = smul.addr %s229, 8
        %s231 = scalar_lea.vmem %s4, %s230
        %v233 = vld [vmem:[%s226] sm:$0xff]
        %v234 = vld [vmem:[%s226 + $0x8] sm:$0xff]
        %v235 = vld [vmem:[%s226 + $0x10] sm:$0xff]
        %v236 = vld [vmem:[%s226 + $0x18] sm:$0xff]
        %v237 = vld [vmem:[%s226 + $0x20] sm:$0xff]
        %v238 = vld [vmem:[%s226 + $0x28] sm:$0xff]
        %v239 = vld [vmem:[%s226 + $0x30] sm:$0xff]
        %v240 = vld [vmem:[%s226 + $0x38] sm:$0xff]
        %241 = vst [vmem:[#allocation2] sm:$0xff] 0.0
        %242 = vst [vmem:[#allocation2 + $0x8] sm:$0xff] 0.0
        %243 = vst [vmem:[#allocation2 + $0x10] sm:$0xff] 0.0
        %vm244 = vcmask 138240
        %245 = vst.msk [vmem:[#allocation2 + $0x18] sm:$0xff] %vm244, 0.0
        %246 = vst [vmem:[#allocation2 + $0x20] sm:$0xff] 0.0
        %247 = vst [vmem:[#allocation2 + $0x28] sm:$0xff] 0.0
        %248 = vst [vmem:[#allocation2 + $0x30] sm:$0xff] 0.0
        %249 = vst.msk [vmem:[#allocation2 + $0x38] sm:$0xff] %vm244, 0.0
        %250 = vst [vmem:[#allocation2 + $0x40] sm:$0xff] 0.0
        %251 = vst [vmem:[#allocation2 + $0x48] sm:$0xff] 0.0
        %252 = vst [vmem:[#allocation2 + $0x50] sm:$0xff] 0.0
        %253 = vst.msk [vmem:[#allocation2 + $0x58] sm:$0xff] %vm244, 0.0
        %254 = vst [vmem:[#allocation2 + $0x60] sm:$0xff] 0.0
        %255 = vst [vmem:[#allocation2 + $0x68] sm:$0xff] 0.0
        %256 = vst [vmem:[#allocation2 + $0x70] sm:$0xff] 0.0
        %257 = vst.msk [vmem:[#allocation2 + $0x78] sm:$0xff] %vm244, 0.0
        %258 = vst [vmem:[#allocation2 + $0x8] sm:$0xff] %v233
        %259 = vst [vmem:[#allocation2 + $0x10] sm:$0xff] %v234
        %260 = vst [vmem:[#allocation2 + $0x28] sm:$0xff] %v235
        %261 = vst [vmem:[#allocation2 + $0x30] sm:$0xff] %v236
        %262 = vst [vmem:[#allocation2 + $0x48] sm:$0xff] %v237
        %263 = vst [vmem:[#allocation2 + $0x50] sm:$0xff] %v238
        %264 = vst [vmem:[#allocation2 + $0x68] sm:$0xff] %v239
        %265 = vst [vmem:[#allocation2 + $0x70] sm:$0xff] %v240
        %v266 = vld [vmem:[#allocation2] sm:$0xff]
        %v267 = vld [vmem:[#allocation2 + $0x8] sm:$0xff]
        %v268 = vld [vmem:[#allocation2 + $0x10] sm:$0xff]
        %v269 = vld [vmem:[#allocation2 + $0x20] sm:$0xff]
        %v270 = vld [vmem:[#allocation2 + $0x28] sm:$0xff]
        %v271 = vld [vmem:[#allocation2 + $0x30] sm:$0xff]
        %v272 = vld [vmem:[#allocation2 + $0x40] sm:$0xff]
        %v273 = vld [vmem:[#allocation2 + $0x48] sm:$0xff]
        %v274 = vld [vmem:[#allocation2 + $0x50] sm:$0xff]
        %v275 = vld [vmem:[#allocation2 + $0x60] sm:$0xff]
        %v276 = vld [vmem:[#allocation2 + $0x68] sm:$0xff]
        %v277 = vld [vmem:[#allocation2 + $0x70] sm:$0xff]
        %v278 = vld [vmem:[%s3] ss:$4 sm:$0x3]
        %v280 = vperm.slane %v278, 0
        %v281 = vperm.slane %v278, 1
        %282 = vrot.lane.b32.xlu0 %v280, 111
        %v283 = vpop.permute.xlu0 %282
        %284 = vrot.lane.b32.xlu0 %v281, 111
        %v285 = vpop.permute.xlu0 %284
        %vm286 = vcmask 908288
        %v287 = vsel %vm286, %v283, %v285
        %v291 = vmul.f32 %v266, %v283
        %v292 = vmul.f32 %v267, %v287
        %v293 = vmul.f32 %v268, %v285
        %v294 = vmul.f32 %v269, %v283
        %v295 = vmul.f32 %v270, %v287
        %v296 = vmul.f32 %v271, %v285
        %v297 = vmul.f32 %v272, %v283
        %v298 = vmul.f32 %v273, %v287
        %v299 = vmul.f32 %v274, %v285
        %v300 = vmul.f32 %v275, %v283
        %v301 = vmul.f32 %v276, %v287
        %v302 = vmul.f32 %v277, %v285
        %v303 = vpack.c.bf16 %v292, %v291
        %v304 = vpack.c.bf16 %v293, %v293
        %v305 = vpack.c.bf16 %v295, %v294
        %v306 = vpack.c.bf16 %v296, %v296
        %v307 = vpack.c.bf16 %v298, %v297
        %v308 = vpack.c.bf16 %v299, %v299
        %v309 = vpack.c.bf16 %v301, %v300
        %v310 = vpack.c.bf16 %v302, %v302
        %319 = vrot.lane.b32.xlu0 %v303, 17
        %v320 = vpop.permute.xlu0 %319
        %321 = vrot.lane.b32.xlu0 %v304, 17
        %v322 = vpop.permute.xlu0 %321
        %323 = vrot.lane.b32.xlu0 %v305, 17
        %v324 = vpop.permute.xlu0 %323
        %325 = vrot.lane.b32.xlu0 %v306, 17
        %v326 = vpop.permute.xlu0 %325
        %327 = vrot.lane.b32.xlu0 %v307, 17
        %v328 = vpop.permute.xlu0 %327
        %329 = vrot.lane.b32.xlu0 %v308, 17
        %v330 = vpop.permute.xlu0 %329
        %331 = vrot.lane.b32.xlu0 %v309, 17
        %v332 = vpop.permute.xlu0 %331
        %333 = vrot.lane.b32.xlu0 %v310, 17
        %v334 = vpop.permute.xlu0 %333
        %v335 = vrot.slane %v320, 4
        %v336 = vrot.slane %v322, 4
        %v337 = vrot.slane %v324, 4
        %v338 = vrot.slane %v326, 4
        %v339 = vrot.slane %v328, 4
        %v340 = vrot.slane %v330, 4
        %v341 = vrot.slane %v332, 4
        %v342 = vrot.slane %v334, 4
        %vm343 = vcmask 1043456
        %v344 = vsel %vm343, %v335, %v336
        %vm345 = vcmask 138240
        %v346 = vsel %vm345, %v320, %v344
        %v347 = vsel %vm343, %v337, %v338
        %v348 = vsel %vm345, %v324, %v347
        %v349 = vsel %vm343, %v339, %v340
        %v350 = vsel %vm345, %v328, %v349
        %v351 = vsel %vm343, %v341, %v342
        %v352 = vsel %vm345, %v332, %v351
        %357 = vst [vmem:[#allocation3] sm:$0xff] %v346
        %358 = vst [vmem:[#allocation3 + $0x8] sm:$0xff] %v348
        %359 = vst [vmem:[#allocation3 + $0x10] sm:$0xff] %v350
        %360 = vst [vmem:[#allocation3 + $0x18] sm:$0xff] %v352
        %v361 = vld [vmem:[#allocation2] sm:$0xff]
        %v362 = vld [vmem:[#allocation2 + $0x8] sm:$0xff]
        %v363 = vld [vmem:[#allocation2 + $0x10] sm:$0xff]
        %v364 = vld [vmem:[#allocation2 + $0x20] sm:$0xff]
        %v365 = vld [vmem:[#allocation2 + $0x28] sm:$0xff]
        %v366 = vld [vmem:[#allocation2 + $0x30] sm:$0xff]
        %v367 = vld [vmem:[#allocation2 + $0x40] sm:$0xff]
        %v368 = vld [vmem:[#allocation2 + $0x48] sm:$0xff]
        %v369 = vld [vmem:[#allocation2 + $0x50] sm:$0xff]
        %v370 = vld [vmem:[#allocation2 + $0x60] sm:$0xff]
        %v371 = vld [vmem:[#allocation2 + $0x68] sm:$0xff]
        %v372 = vld [vmem:[#allocation2 + $0x70] sm:$0xff]
        %v373 = vpack.c.bf16 %v362, %v361
        %v374 = vpack.c.bf16 %v363, %v363
        %v375 = vpack.c.bf16 %v365, %v364
        %v376 = vpack.c.bf16 %v366, %v366
        %v377 = vpack.c.bf16 %v368, %v367
        %v378 = vpack.c.bf16 %v369, %v369
        %v379 = vpack.c.bf16 %v371, %v370
        %v380 = vpack.c.bf16 %v372, %v372
        %389 = vrot.lane.b32.xlu0 %v373, 16
        %v390 = vpop.permute.xlu0 %389
        %391 = vrot.lane.b32.xlu0 %v374, 16
        %v392 = vpop.permute.xlu0 %391
        %393 = vrot.lane.b32.xlu0 %v375, 16
        %v394 = vpop.permute.xlu0 %393
        %395 = vrot.lane.b32.xlu0 %v376, 16
        %v396 = vpop.permute.xlu0 %395
        %397 = vrot.lane.b32.xlu0 %v377, 16
        %v398 = vpop.permute.xlu0 %397
        %399 = vrot.lane.b32.xlu0 %v378, 16
        %v400 = vpop.permute.xlu0 %399
        %401 = vrot.lane.b32.xlu0 %v379, 16
        %v402 = vpop.permute.xlu0 %401
        %403 = vrot.lane.b32.xlu0 %v380, 16
        %v404 = vpop.permute.xlu0 %403
        %v405 = vrot.slane %v390, 4
        %v406 = vrot.slane %v392, 4
        %v407 = vrot.slane %v394, 4
        %v408 = vrot.slane %v396, 4
        %v409 = vrot.slane %v398, 4
        %v410 = vrot.slane %v400, 4
        %v411 = vrot.slane %v402, 4
        %v412 = vrot.slane %v404, 4
        %v413 = vsel %vm343, %v405, %v406
        %vm414 = vcmask 130048
        %v415 = vsel %vm414, %v390, %v413
        %v416 = vsel %vm343, %v407, %v408
        %v417 = vsel %vm414, %v394, %v416
        %v418 = vsel %vm343, %v409, %v410
        %v419 = vsel %vm414, %v398, %v418
        %v420 = vsel %vm343, %v411, %v412
        %v421 = vsel %vm414, %v402, %v420
        %426 = vst [vmem:[#allocation3 + $0x20] sm:$0xff] %v415
        %427 = vst [vmem:[#allocation3 + $0x28] sm:$0xff] %v417
        %428 = vst [vmem:[#allocation3 + $0x30] sm:$0xff] %v419
        %429 = vst [vmem:[#allocation3 + $0x38] sm:$0xff] %v421
        %v430 = vld [vmem:[#allocation2] sm:$0xff]
        %v431 = vld [vmem:[#allocation2 + $0x8] sm:$0xff]
        %v432 = vld [vmem:[#allocation2 + $0x10] sm:$0xff]
        %v433 = vld [vmem:[#allocation2 + $0x20] sm:$0xff]
        %v434 = vld [vmem:[#allocation2 + $0x28] sm:$0xff]
        %v435 = vld [vmem:[#allocation2 + $0x30] sm:$0xff]
        %v436 = vld [vmem:[#allocation2 + $0x40] sm:$0xff]
        %v437 = vld [vmem:[#allocation2 + $0x48] sm:$0xff]
        %v438 = vld [vmem:[#allocation2 + $0x50] sm:$0xff]
        %v439 = vld [vmem:[#allocation2 + $0x60] sm:$0xff]
        %v440 = vld [vmem:[#allocation2 + $0x68] sm:$0xff]
        %v441 = vld [vmem:[#allocation2 + $0x70] sm:$0xff]
        %s442 = scalar_lea.vmem %s3, 2
        %v443 = vld [vmem:[%s442] ss:$4 sm:$0x3]
        %v445 = vperm.slane %v443, 0
        %v446 = vperm.slane %v443, 1
        %447 = vrot.lane.b32.xlu0 %v445, 113
        %v448 = vpop.permute.xlu0 %447
        %449 = vrot.lane.b32.xlu0 %v446, 113
        %v450 = vpop.permute.xlu0 %449
        %vm451 = vcmask 924672
        %v452 = vsel %vm451, %v448, %v450
        %v456 = vmul.f32 %v430, %v448
        %v457 = vmul.f32 %v431, %v452
        %v458 = vmul.f32 %v432, %v450
        %v459 = vmul.f32 %v433, %v448
        %v460 = vmul.f32 %v434, %v452
        %v461 = vmul.f32 %v435, %v450
        %v462 = vmul.f32 %v436, %v448
        %v463 = vmul.f32 %v437, %v452
        %v464 = vmul.f32 %v438, %v450
        %v465 = vmul.f32 %v439, %v448
        %v466 = vmul.f32 %v440, %v452
        %v467 = vmul.f32 %v441, %v450
        %v468 = vpack.c.bf16 %v457, %v456
        %v469 = vpack.c.bf16 %v458, %v458
        %v470 = vpack.c.bf16 %v460, %v459
        %v471 = vpack.c.bf16 %v461, %v461
        %v472 = vpack.c.bf16 %v463, %v462
        %v473 = vpack.c.bf16 %v464, %v464
        %v474 = vpack.c.bf16 %v466, %v465
        %v475 = vpack.c.bf16 %v467, %v467
        %484 = vrot.lane.b32.xlu0 %v468, 15
        %v485 = vpop.permute.xlu0 %484
        %486 = vrot.lane.b32.xlu0 %v469, 15
        %v487 = vpop.permute.xlu0 %486
        %488 = vrot.lane.b32.xlu0 %v470, 15
        %v489 = vpop.permute.xlu0 %488
        %490 = vrot.lane.b32.xlu0 %v471, 15
        %v491 = vpop.permute.xlu0 %490
        %492 = vrot.lane.b32.xlu0 %v472, 15
        %v493 = vpop.permute.xlu0 %492
        %494 = vrot.lane.b32.xlu0 %v473, 15
        %v495 = vpop.permute.xlu0 %494
        %496 = vrot.lane.b32.xlu0 %v474, 15
        %v497 = vpop.permute.xlu0 %496
        %498 = vrot.lane.b32.xlu0 %v475, 15
        %v499 = vpop.permute.xlu0 %498
        %v500 = vrot.slane %v485, 4
        %v501 = vrot.slane %v487, 4
        %v502 = vrot.slane %v489, 4
        %v503 = vrot.slane %v491, 4
        %v504 = vrot.slane %v493, 4
        %v505 = vrot.slane %v495, 4
        %v506 = vrot.slane %v497, 4
        %v507 = vrot.slane %v499, 4
        %v508 = vsel %vm343, %v500, %v501
        %vm509 = vcmask 121856
        %v510 = vsel %vm509, %v485, %v508
        %v511 = vsel %vm343, %v502, %v503
        %v512 = vsel %vm509, %v489, %v511
        %v513 = vsel %vm343, %v504, %v505
        %v514 = vsel %vm509, %v493, %v513
        %v515 = vsel %vm343, %v506, %v507
        %v516 = vsel %vm509, %v497, %v515
        %521 = vst [vmem:[#allocation3 + $0x40] sm:$0xff] %v510
        %522 = vst [vmem:[#allocation3 + $0x48] sm:$0xff] %v512
        %523 = vst [vmem:[#allocation3 + $0x50] sm:$0xff] %v514
        %524 = vst [vmem:[#allocation3 + $0x58] sm:$0xff] %v516
        %v525 = vld [vmem:[#allocation2] sm:$0xff]
        %v526 = vld [vmem:[#allocation2 + $0x8] sm:$0xff]
        %v527 = vld [vmem:[#allocation2 + $0x10] sm:$0xff]
        %v528 = vld [vmem:[#allocation2 + $0x20] sm:$0xff]
        %v529 = vld [vmem:[#allocation2 + $0x28] sm:$0xff]
        %v530 = vld [vmem:[#allocation2 + $0x30] sm:$0xff]
        %v531 = vld [vmem:[#allocation2 + $0x40] sm:$0xff]
        %v532 = vld [vmem:[#allocation2 + $0x48] sm:$0xff]
        %v533 = vld [vmem:[#allocation2 + $0x50] sm:$0xff]
        %v534 = vld [vmem:[#allocation2 + $0x60] sm:$0xff]
        %v535 = vld [vmem:[#allocation2 + $0x68] sm:$0xff]
        %v536 = vld [vmem:[#allocation2 + $0x70] sm:$0xff]
        %v537 = vld [vmem:[%s3] ss:$4 sm:$0x3]
        %v539 = vperm.slane %v537, 0
        %v540 = vperm.slane %v537, 1
        %541 = vrot.lane.b32.xlu0 %v539, 127
        %v542 = vpop.permute.xlu0 %541
        %543 = vrot.lane.b32.xlu0 %v540, 127
        %v544 = vpop.permute.xlu0 %543
        %vm545 = vcmask 1039360
        %v546 = vsel %vm545, %v542, %v544
        %v550 = vmul.f32 %v525, %v542
        %v551 = vmul.f32 %v526, %v546
        %v552 = vmul.f32 %v527, %v544
        %v553 = vmul.f32 %v528, %v542
        %v554 = vmul.f32 %v529, %v546
        %v555 = vmul.f32 %v530, %v544
        %v556 = vmul.f32 %v531, %v542
        %v557 = vmul.f32 %v532, %v546
        %v558 = vmul.f32 %v533, %v544
        %v559 = vmul.f32 %v534, %v542
        %v560 = vmul.f32 %v535, %v546
        %v561 = vmul.f32 %v536, %v544
        %v562 = vpack.c.bf16 %v551, %v550
        %v563 = vpack.c.bf16 %v552, %v552
        %v564 = vpack.c.bf16 %v554, %v553
        %v565 = vpack.c.bf16 %v555, %v555
        %v566 = vpack.c.bf16 %v557, %v556
        %v567 = vpack.c.bf16 %v558, %v558
        %v568 = vpack.c.bf16 %v560, %v559
        %v569 = vpack.c.bf16 %v561, %v561
        %578 = vrot.lane.b32.xlu0 %v562, 1
        %v579 = vpop.permute.xlu0 %578
        %580 = vrot.lane.b32.xlu0 %v563, 1
        %v581 = vpop.permute.xlu0 %580
        %582 = vrot.lane.b32.xlu0 %v564, 1
        %v583 = vpop.permute.xlu0 %582
        %584 = vrot.lane.b32.xlu0 %v565, 1
        %v585 = vpop.permute.xlu0 %584
        %586 = vrot.lane.b32.xlu0 %v566, 1
        %v587 = vpop.permute.xlu0 %586
        %588 = vrot.lane.b32.xlu0 %v567, 1
        %v589 = vpop.permute.xlu0 %588
        %590 = vrot.lane.b32.xlu0 %v568, 1
        %v591 = vpop.permute.xlu0 %590
        %592 = vrot.lane.b32.xlu0 %v569, 1
        %v593 = vpop.permute.xlu0 %592
        %v594 = vrot.slane %v579, 4
        %v595 = vrot.slane %v581, 4
        %v596 = vrot.slane %v583, 4
        %v597 = vrot.slane %v585, 4
        %v598 = vrot.slane %v587, 4
        %v599 = vrot.slane %v589, 4
        %v600 = vrot.slane %v591, 4
        %v601 = vrot.slane %v593, 4
        %v602 = vsel %vm343, %v594, %v595
        %vm603 = vcmask 7168
        %v604 = vsel %vm603, %v579, %v602
        %v605 = vsel %vm343, %v596, %v597
        %v606 = vsel %vm603, %v583, %v605
        %v607 = vsel %vm343, %v598, %v599
        %v608 = vsel %vm603, %v587, %v607
        %v609 = vsel %vm343, %v600, %v601
        %v610 = vsel %vm603, %v591, %v609
        %615 = vst [vmem:[#allocation3 + $0x60] sm:$0xff] %v604
        %616 = vst [vmem:[#allocation3 + $0x68] sm:$0xff] %v606
        %617 = vst [vmem:[#allocation3 + $0x70] sm:$0xff] %v608
        %618 = vst [vmem:[#allocation3 + $0x78] sm:$0xff] %v610
        %v619 = vld [vmem:[#allocation2 + $0x8] sm:$0xff]
        %v620 = vld [vmem:[#allocation2 + $0x10] sm:$0xff]
        %v621 = vld [vmem:[#allocation2 + $0x28] sm:$0xff]
        %v622 = vld [vmem:[#allocation2 + $0x30] sm:$0xff]
        %v623 = vld [vmem:[#allocation2 + $0x48] sm:$0xff]
        %v624 = vld [vmem:[#allocation2 + $0x50] sm:$0xff]
        %v625 = vld [vmem:[#allocation2 + $0x68] sm:$0xff]
        %v626 = vld [vmem:[#allocation2 + $0x70] sm:$0xff]
        %v627 = vpack.c.bf16 %v620, %v619
        %v628 = vpack.c.bf16 %v622, %v621
        %v629 = vpack.c.bf16 %v624, %v623
        %v630 = vpack.c.bf16 %v626, %v625
        %631 = vst [vmem:[#allocation3 + $0x80] sm:$0xff] %v627
        %632 = vst [vmem:[#allocation3 + $0x88] sm:$0xff] %v628
        %633 = vst [vmem:[#allocation3 + $0x90] sm:$0xff] %v629
        %634 = vst [vmem:[#allocation3 + $0x98] sm:$0xff] %v630
        %v635 = vld [vmem:[#allocation2 + $0x8] sm:$0xff]
        %v636 = vld [vmem:[#allocation2 + $0x10] sm:$0xff]
        %v637 = vld [vmem:[#allocation2 + $0x18] sm:$0xff]
        %v638 = vld [vmem:[#allocation2 + $0x28] sm:$0xff]
        %v639 = vld [vmem:[#allocation2 + $0x30] sm:$0xff]
        %v640 = vld [vmem:[#allocation2 + $0x38] sm:$0xff]
        %v641 = vld [vmem:[#allocation2 + $0x48] sm:$0xff]
        %v642 = vld [vmem:[#allocation2 + $0x50] sm:$0xff]
        %v643 = vld [vmem:[#allocation2 + $0x58] sm:$0xff]
        %v644 = vld [vmem:[#allocation2 + $0x68] sm:$0xff]
        %v645 = vld [vmem:[#allocation2 + $0x70] sm:$0xff]
        %v646 = vld [vmem:[#allocation2 + $0x78] sm:$0xff]
        %v647 = vld [vmem:[%s442] ss:$4 sm:$0x3]
        %v649 = vperm.slane %v647, 0
        %v650 = vperm.slane %v647, 1
        %651 = vrot.lane.b32.xlu0 %v649, 1
        %v652 = vpop.permute.xlu0 %651
        %653 = vrot.lane.b32.xlu0 %v650, 1
        %v654 = vpop.permute.xlu0 %653
        %vm655 = vcmask 7168
        %v656 = vsel %vm655, %v652, %v654
        %v660 = vmul.f32 %v635, %v652
        %v661 = vmul.f32 %v636, %v656
        %v662 = vmul.f32 %v637, %v654
        %v663 = vmul.f32 %v638, %v652
        %v664 = vmul.f32 %v639, %v656
        %v665 = vmul.f32 %v640, %v654
        %v666 = vmul.f32 %v641, %v652
        %v667 = vmul.f32 %v642, %v656
        %v668 = vmul.f32 %v643, %v654
        %v669 = vmul.f32 %v644, %v652
        %v670 = vmul.f32 %v645, %v656
        %v671 = vmul.f32 %v646, %v654
        %v672 = vpack.c.bf16 %v661, %v660
        %v673 = vpack.c.bf16 %v662, %v662
        %v674 = vpack.c.bf16 %v664, %v663
        %v675 = vpack.c.bf16 %v665, %v665
        %v676 = vpack.c.bf16 %v667, %v666
        %v677 = vpack.c.bf16 %v668, %v668
        %v678 = vpack.c.bf16 %v670, %v669
        %v679 = vpack.c.bf16 %v671, %v671
        %688 = vrot.lane.b32.xlu0 %v672, 127
        %v689 = vpop.permute.xlu0 %688
        %690 = vrot.lane.b32.xlu0 %v673, 127
        %v691 = vpop.permute.xlu0 %690
        %692 = vrot.lane.b32.xlu0 %v674, 127
        %v693 = vpop.permute.xlu0 %692
        %694 = vrot.lane.b32.xlu0 %v675, 127
        %v695 = vpop.permute.xlu0 %694
        %696 = vrot.lane.b32.xlu0 %v676, 127
        %v697 = vpop.permute.xlu0 %696
        %698 = vrot.lane.b32.xlu0 %v677, 127
        %v699 = vpop.permute.xlu0 %698
        %700 = vrot.lane.b32.xlu0 %v678, 127
        %v701 = vpop.permute.xlu0 %700
        %702 = vrot.lane.b32.xlu0 %v679, 127
        %v703 = vpop.permute.xlu0 %702
        %v704 = vrot.slane %v689, 4
        %v705 = vrot.slane %v691, 4
        %v706 = vrot.slane %v693, 4
        %v707 = vrot.slane %v695, 4
        %v708 = vrot.slane %v697, 4
        %v709 = vrot.slane %v699, 4
        %v710 = vrot.slane %v701, 4
        %v711 = vrot.slane %v703, 4
        %v712 = vsel %vm343, %v704, %v705
        %vm713 = vcmask 1039360
        %v714 = vsel %vm713, %v689, %v712
        %v715 = vsel %vm343, %v706, %v707
        %v716 = vsel %vm713, %v693, %v715
        %v717 = vsel %vm343, %v708, %v709
        %v718 = vsel %vm713, %v697, %v717
        %v719 = vsel %vm343, %v710, %v711
        %v720 = vsel %vm713, %v701, %v719
        %725 = vst [vmem:[#allocation3 + $0xa0] sm:$0xff] %v714
        %726 = vst [vmem:[#allocation3 + $0xa8] sm:$0xff] %v716
        %727 = vst [vmem:[#allocation3 + $0xb0] sm:$0xff] %v718
        %728 = vst [vmem:[#allocation3 + $0xb8] sm:$0xff] %v720
        %v729 = vld [vmem:[#allocation2 + $0x8] sm:$0xff]
        %v730 = vld [vmem:[#allocation2 + $0x10] sm:$0xff]
        %v731 = vld [vmem:[#allocation2 + $0x18] sm:$0xff]
        %v732 = vld [vmem:[#allocation2 + $0x28] sm:$0xff]
        %v733 = vld [vmem:[#allocation2 + $0x30] sm:$0xff]
        %v734 = vld [vmem:[#allocation2 + $0x38] sm:$0xff]
        %v735 = vld [vmem:[#allocation2 + $0x48] sm:$0xff]
        %v736 = vld [vmem:[#allocation2 + $0x50] sm:$0xff]
        %v737 = vld [vmem:[#allocation2 + $0x58] sm:$0xff]
        %v738 = vld [vmem:[#allocation2 + $0x68] sm:$0xff]
        %v739 = vld [vmem:[#allocation2 + $0x70] sm:$0xff]
        %v740 = vld [vmem:[#allocation2 + $0x78] sm:$0xff]
        %v741 = vld [vmem:[%s3] ss:$4 sm:$0x3]
        %v743 = vperm.slane %v741, 0
        %v744 = vperm.slane %v741, 1
        %745 = vrot.lane.b32.xlu0 %v743, 15
        %v746 = vpop.permute.xlu0 %745
        %747 = vrot.lane.b32.xlu0 %v744, 15
        %v748 = vpop.permute.xlu0 %747
        %vm749 = vcmask 121856
        %v750 = vsel %vm749, %v746, %v748
        %v754 = vmul.f32 %v729, %v746
        %v755 = vmul.f32 %v730, %v750
        %v756 = vmul.f32 %v731, %v748
        %v757 = vmul.f32 %v732, %v746
        %v758 = vmul.f32 %v733, %v750
        %v759 = vmul.f32 %v734, %v748
        %v760 = vmul.f32 %v735, %v746
        %v761 = vmul.f32 %v736, %v750
        %v762 = vmul.f32 %v737, %v748
        %v763 = vmul.f32 %v738, %v746
        %v764 = vmul.f32 %v739, %v750
        %v765 = vmul.f32 %v740, %v748
        %v766 = vpack.c.bf16 %v755, %v754
        %v767 = vpack.c.bf16 %v756, %v756
        %v768 = vpack.c.bf16 %v758, %v757
        %v769 = vpack.c.bf16 %v759, %v759
        %v770 = vpack.c.bf16 %v761, %v760
        %v771 = vpack.c.bf16 %v762, %v762
        %v772 = vpack.c.bf16 %v764, %v763
        %v773 = vpack.c.bf16 %v765, %v765
        %782 = vrot.lane.b32.xlu0 %v766, 113
        %v783 = vpop.permute.xlu0 %782
        %784 = vrot.lane.b32.xlu0 %v767, 113
        %v785 = vpop.permute.xlu0 %784
        %786 = vrot.lane.b32.xlu0 %v768, 113
        %v787 = vpop.permute.xlu0 %786
        %788 = vrot.lane.b32.xlu0 %v769, 113
        %v789 = vpop.permute.xlu0 %788
        %790 = vrot.lane.b32.xlu0 %v770, 113
        %v791 = vpop.permute.xlu0 %790
        %792 = vrot.lane.b32.xlu0 %v771, 113
        %v793 = vpop.permute.xlu0 %792
        %794 = vrot.lane.b32.xlu0 %v772, 113
        %v795 = vpop.permute.xlu0 %794
        %796 = vrot.lane.b32.xlu0 %v773, 113
        %v797 = vpop.permute.xlu0 %796
        %v798 = vrot.slane %v783, 4
        %v799 = vrot.slane %v785, 4
        %v800 = vrot.slane %v787, 4
        %v801 = vrot.slane %v789, 4
        %v802 = vrot.slane %v791, 4
        %v803 = vrot.slane %v793, 4
        %v804 = vrot.slane %v795, 4
        %v805 = vrot.slane %v797, 4
        %v806 = vsel %vm343, %v798, %v799
        %vm807 = vcmask 924672
        %v808 = vsel %vm807, %v783, %v806
        %v809 = vsel %vm343, %v800, %v801
        %v810 = vsel %vm807, %v787, %v809
        %v811 = vsel %vm343, %v802, %v803
        %v812 = vsel %vm807, %v791, %v811
        %v813 = vsel %vm343, %v804, %v805
        %v814 = vsel %vm807, %v795, %v813
        %819 = vst [vmem:[#allocation3 + $0xc0] sm:$0xff] %v808
        %820 = vst [vmem:[#allocation3 + $0xc8] sm:$0xff] %v810
        %821 = vst [vmem:[#allocation3 + $0xd0] sm:$0xff] %v812
        %822 = vst [vmem:[#allocation3 + $0xd8] sm:$0xff] %v814
        %v823 = vld [vmem:[#allocation2 + $0x8] sm:$0xff]
        %v824 = vld [vmem:[#allocation2 + $0x10] sm:$0xff]
        %v825 = vld [vmem:[#allocation2 + $0x18] sm:$0xff]
        %v826 = vld [vmem:[#allocation2 + $0x28] sm:$0xff]
        %v827 = vld [vmem:[#allocation2 + $0x30] sm:$0xff]
        %v828 = vld [vmem:[#allocation2 + $0x38] sm:$0xff]
        %v829 = vld [vmem:[#allocation2 + $0x48] sm:$0xff]
        %v830 = vld [vmem:[#allocation2 + $0x50] sm:$0xff]
        %v831 = vld [vmem:[#allocation2 + $0x58] sm:$0xff]
        %v832 = vld [vmem:[#allocation2 + $0x68] sm:$0xff]
        %v833 = vld [vmem:[#allocation2 + $0x70] sm:$0xff]
        %v834 = vld [vmem:[#allocation2 + $0x78] sm:$0xff]
        %v835 = vpack.c.bf16 %v824, %v823
        %v836 = vpack.c.bf16 %v825, %v825
        %v837 = vpack.c.bf16 %v827, %v826
        %v838 = vpack.c.bf16 %v828, %v828
        %v839 = vpack.c.bf16 %v830, %v829
        %v840 = vpack.c.bf16 %v831, %v831
        %v841 = vpack.c.bf16 %v833, %v832
        %v842 = vpack.c.bf16 %v834, %v834
        %851 = vrot.lane.b32.xlu0 %v835, 112
        %v852 = vpop.permute.xlu0 %851
        %853 = vrot.lane.b32.xlu0 %v836, 112
        %v854 = vpop.permute.xlu0 %853
        %855 = vrot.lane.b32.xlu0 %v837, 112
        %v856 = vpop.permute.xlu0 %855
        %857 = vrot.lane.b32.xlu0 %v838, 112
        %v858 = vpop.permute.xlu0 %857
        %859 = vrot.lane.b32.xlu0 %v839, 112
        %v860 = vpop.permute.xlu0 %859
        %861 = vrot.lane.b32.xlu0 %v840, 112
        %v862 = vpop.permute.xlu0 %861
        %863 = vrot.lane.b32.xlu0 %v841, 112
        %v864 = vpop.permute.xlu0 %863
        %865 = vrot.lane.b32.xlu0 %v842, 112
        %v866 = vpop.permute.xlu0 %865
        %v867 = vrot.slane %v852, 4
        %v868 = vrot.slane %v854, 4
        %v869 = vrot.slane %v856, 4
        %v870 = vrot.slane %v858, 4
        %v871 = vrot.slane %v860, 4
        %v872 = vrot.slane %v862, 4
        %v873 = vrot.slane %v864, 4
        %v874 = vrot.slane %v866, 4
        %v875 = vsel %vm343, %v867, %v868
        %vm876 = vcmask 916480
        %v877 = vsel %vm876, %v852, %v875
        %v878 = vsel %vm343, %v869, %v870
        %v879 = vsel %vm876, %v856, %v878
        %v880 = vsel %vm343, %v871, %v872
        %v881 = vsel %vm876, %v860, %v880
        %v882 = vsel %vm343, %v873, %v874
        %v883 = vsel %vm876, %v864, %v882
        %888 = vst [vmem:[#allocation3 + $0xe0] sm:$0xff] %v877
        %889 = vst [vmem:[#allocation3 + $0xe8] sm:$0xff] %v879
        %890 = vst [vmem:[#allocation3 + $0xf0] sm:$0xff] %v881
        %891 = vst [vmem:[#allocation3 + $0xf8] sm:$0xff] %v883
        %v892 = vld [vmem:[#allocation2 + $0x8] sm:$0xff]
        %v893 = vld [vmem:[#allocation2 + $0x10] sm:$0xff]
        %v894 = vld [vmem:[#allocation2 + $0x18] sm:$0xff]
        %v895 = vld [vmem:[#allocation2 + $0x28] sm:$0xff]
        %v896 = vld [vmem:[#allocation2 + $0x30] sm:$0xff]
        %v897 = vld [vmem:[#allocation2 + $0x38] sm:$0xff]
        %v898 = vld [vmem:[#allocation2 + $0x48] sm:$0xff]
        %v899 = vld [vmem:[#allocation2 + $0x50] sm:$0xff]
        %v900 = vld [vmem:[#allocation2 + $0x58] sm:$0xff]
        %v901 = vld [vmem:[#allocation2 + $0x68] sm:$0xff]
        %v902 = vld [vmem:[#allocation2 + $0x70] sm:$0xff]
        %v903 = vld [vmem:[#allocation2 + $0x78] sm:$0xff]
        %v904 = vld [vmem:[%s442] ss:$4 sm:$0x3]
        %v906 = vperm.slane %v904, 0
        %v907 = vperm.slane %v904, 1
        %908 = vrot.lane.b32.xlu0 %v906, 17
        %v909 = vpop.permute.xlu0 %908
        %910 = vrot.lane.b32.xlu0 %v907, 17
        %v911 = vpop.permute.xlu0 %910
        %v912 = vsel %vm244, %v909, %v911
        %v916 = vmul.f32 %v892, %v909
        %v917 = vmul.f32 %v893, %v912
        %v918 = vmul.f32 %v894, %v911
        %v919 = vmul.f32 %v895, %v909
        %v920 = vmul.f32 %v896, %v912
        %v921 = vmul.f32 %v897, %v911
        %v922 = vmul.f32 %v898, %v909
        %v923 = vmul.f32 %v899, %v912
        %v924 = vmul.f32 %v900, %v911
        %v925 = vmul.f32 %v901, %v909
        %v926 = vmul.f32 %v902, %v912
        %v927 = vmul.f32 %v903, %v911
        %v928 = vpack.c.bf16 %v917, %v916
        %v929 = vpack.c.bf16 %v918, %v918
        %v930 = vpack.c.bf16 %v920, %v919
        %v931 = vpack.c.bf16 %v921, %v921
        %v932 = vpack.c.bf16 %v923, %v922
        %v933 = vpack.c.bf16 %v924, %v924
        %v934 = vpack.c.bf16 %v926, %v925
        %v935 = vpack.c.bf16 %v927, %v927
        %944 = vrot.lane.b32.xlu0 %v928, 111
        %v945 = vpop.permute.xlu0 %944
        %946 = vrot.lane.b32.xlu0 %v929, 111
        %v947 = vpop.permute.xlu0 %946
        %948 = vrot.lane.b32.xlu0 %v930, 111
        %v949 = vpop.permute.xlu0 %948
        %950 = vrot.lane.b32.xlu0 %v931, 111
        %v951 = vpop.permute.xlu0 %950
        %952 = vrot.lane.b32.xlu0 %v932, 111
        %v953 = vpop.permute.xlu0 %952
        %954 = vrot.lane.b32.xlu0 %v933, 111
        %v955 = vpop.permute.xlu0 %954
        %956 = vrot.lane.b32.xlu0 %v934, 111
        %v957 = vpop.permute.xlu0 %956
        %958 = vrot.lane.b32.xlu0 %v935, 111
        %v959 = vpop.permute.xlu0 %958
        %v960 = vrot.slane %v945, 4
        %v961 = vrot.slane %v947, 4
        %v962 = vrot.slane %v949, 4
        %v963 = vrot.slane %v951, 4
        %v964 = vrot.slane %v953, 4
        %v965 = vrot.slane %v955, 4
        %v966 = vrot.slane %v957, 4
        %v967 = vrot.slane %v959, 4
        %v968 = vsel %vm343, %v960, %v961
        %vm969 = vcmask 908288
        %v970 = vsel %vm969, %v945, %v968
        %v971 = vsel %vm343, %v962, %v963
        %v972 = vsel %vm969, %v949, %v971
        %v973 = vsel %vm343, %v964, %v965
        %v974 = vsel %vm969, %v953, %v973
        %v975 = vsel %vm343, %v966, %v967
        %v976 = vsel %vm969, %v957, %v975
        %981 = vst [vmem:[#allocation3 + $0x100] sm:$0xff] %v970
        %982 = vst [vmem:[#allocation3 + $0x108] sm:$0xff] %v972
        %983 = vst [vmem:[#allocation3 + $0x110] sm:$0xff] %v974
        %984 = vst [vmem:[#allocation3 + $0x118] sm:$0xff] %v976
        %v985 = vld [vmem:[#allocation4] sm:$0xff]
        %v986 = vld [vmem:[#allocation4 + $0x8] sm:$0xf]
        %v987 = vld [vmem:[#allocation4 + $0xc] sm:$0xff]
        %v988 = vld [vmem:[#allocation4 + $0x14] sm:$0xf]
        %v989 = vld [vmem:[#allocation4 + $0x18] sm:$0xff]
        %v990 = vld [vmem:[#allocation4 + $0x20] sm:$0xf]
        %v991 = vld [vmem:[#allocation4 + $0x24] sm:$0xff]
        %v992 = vld [vmem:[#allocation4 + $0x2c] sm:$0xf]
        %v993 = vld [vmem:[#allocation4 + $0x30] sm:$0xff]
        %v994 = vld [vmem:[#allocation4 + $0x38] sm:$0xf]
        %v995 = vld [vmem:[#allocation4 + $0x3c] sm:$0xff]
        %v996 = vld [vmem:[#allocation4 + $0x44] sm:$0xf]
        %v997 = vld [vmem:[#allocation4 + $0x48] sm:$0xff]
        %v998 = vld [vmem:[#allocation4 + $0x50] sm:$0xf]
        %v999 = vld [vmem:[#allocation4 + $0x54] sm:$0xff]
        %v1000 = vld [vmem:[#allocation4 + $0x5c] sm:$0xf]
        %v1001 = vld [vmem:[#allocation4 + $0x60] sm:$0xff]
        %v1002 = vld [vmem:[#allocation4 + $0x68] sm:$0xf]
        %v1003 = vld [vmem:[#allocation4 + $0x6c] sm:$0xff]
        %v1004 = vld [vmem:[#allocation4 + $0x74] sm:$0xf]
        %v1005 = vld [vmem:[#allocation4 + $0x78] sm:$0xff]
        %v1006 = vld [vmem:[#allocation4 + $0x80] sm:$0xf]
        %v1007 = vld [vmem:[#allocation4 + $0x84] sm:$0xff]
        %v1008 = vld [vmem:[#allocation4 + $0x8c] sm:$0xf]
        %v1009 = vld [vmem:[#allocation4 + $0x90] sm:$0xff]
        %v1010 = vld [vmem:[#allocation4 + $0x98] sm:$0xf]
        %v1011 = vld [vmem:[#allocation4 + $0x9c] sm:$0xff]
        %v1012 = vld [vmem:[#allocation4 + $0xa4] sm:$0xf]
        %v1013 = vld [vmem:[#allocation4 + $0xa8] sm:$0xff]
        %v1014 = vld [vmem:[#allocation4 + $0xb0] sm:$0xf]
        %v1015 = vld [vmem:[#allocation4 + $0xb4] sm:$0xff]
        %v1016 = vld [vmem:[#allocation4 + $0xbc] sm:$0xf]
        %v1017 = vld [vmem:[#allocation3] sm:$0xff]
        %v1018 = vld [vmem:[#allocation3 + $0x8] sm:$0xff]
        %v1019 = vld [vmem:[#allocation3 + $0x10] sm:$0xff]
        %v1020 = vld [vmem:[#allocation3 + $0x18] sm:$0xff]
        %v1021 = vld [vmem:[#allocation3 + $0x20] sm:$0xff]
        %v1022 = vld [vmem:[#allocation3 + $0x28] sm:$0xff]
        %v1023 = vld [vmem:[#allocation3 + $0x30] sm:$0xff]
        %v1024 = vld [vmem:[#allocation3 + $0x38] sm:$0xff]
        %v1025 = vld [vmem:[#allocation3 + $0x40] sm:$0xff]
        %v1026 = vld [vmem:[#allocation3 + $0x48] sm:$0xff]
        %v1027 = vld [vmem:[#allocation3 + $0x50] sm:$0xff]
        %v1028 = vld [vmem:[#allocation3 + $0x58] sm:$0xff]
        %v1029 = vld [vmem:[#allocation3 + $0x60] sm:$0xff]
        %v1030 = vld [vmem:[#allocation3 + $0x68] sm:$0xff]
        %v1031 = vld [vmem:[#allocation3 + $0x70] sm:$0xff]
        %v1032 = vld [vmem:[#allocation3 + $0x78] sm:$0xff]
        %v1033 = vld [vmem:[#allocation3 + $0x80] sm:$0xff]
        %v1034 = vld [vmem:[#allocation3 + $0x88] sm:$0xff]
        %v1035 = vld [vmem:[#allocation3 + $0x90] sm:$0xff]
        %v1036 = vld [vmem:[#allocation3 + $0x98] sm:$0xff]
        %v1037 = vld [vmem:[#allocation3 + $0xa0] sm:$0xff]
        %v1038 = vld [vmem:[#allocation3 + $0xa8] sm:$0xff]
        %v1039 = vld [vmem:[#allocation3 + $0xb0] sm:$0xff]
        %v1040 = vld [vmem:[#allocation3 + $0xb8] sm:$0xff]
        %v1041 = vld [vmem:[#allocation3 + $0xc0] sm:$0xff]
        %v1042 = vld [vmem:[#allocation3 + $0xc8] sm:$0xff]
        %v1043 = vld [vmem:[#allocation3 + $0xd0] sm:$0xff]
        %v1044 = vld [vmem:[#allocation3 + $0xd8] sm:$0xff]
        %v1045 = vld [vmem:[#allocation3 + $0xe0] sm:$0xff]
        %v1046 = vld [vmem:[#allocation3 + $0xe8] sm:$0xff]
        %v1047 = vld [vmem:[#allocation3 + $0xf0] sm:$0xff]
        %v1048 = vld [vmem:[#allocation3 + $0xf8] sm:$0xff]
        %v1049 = vld [vmem:[#allocation3 + $0x100] sm:$0xff]
        %v1050 = vld [vmem:[#allocation3 + $0x108] sm:$0xff]
        %v1051 = vld [vmem:[#allocation3 + $0x110] sm:$0xff]
        %v1052 = vld [vmem:[#allocation3 + $0x118] sm:$0xff]
        %v1053 = vld [vmem:[#allocation6] sm:$0xff]
        %v1054 = vld [vmem:[#allocation6 + $0x8] sm:$0xff]
        %v1055 = vld [vmem:[#allocation6 + $0x10] sm:$0xff]
        %v1056 = vld [vmem:[#allocation6 + $0x18] sm:$0xff]
        %v1057 = vld [vmem:[#allocation6 + $0x20] sm:$0xff]
        %v1058 = vld [vmem:[#allocation6 + $0x28] sm:$0xff]
        %v1059 = vld [vmem:[#allocation6 + $0x30] sm:$0xff]
        %v1060 = vld [vmem:[#allocation6 + $0x38] sm:$0xff]
        %v1061 = vld [vmem:[#allocation6 + $0x40] sm:$0xff]
        %v1062 = vld [vmem:[#allocation6 + $0x48] sm:$0xff]
        %v1063 = vld [vmem:[#allocation6 + $0x50] sm:$0xff]
        %v1064 = vld [vmem:[#allocation6 + $0x58] sm:$0xff]
        %v1065 = vld [vmem:[#allocation6 + $0x60] sm:$0xff]
        %v1066 = vld [vmem:[#allocation6 + $0x68] sm:$0xff]
        %v1067 = vld [vmem:[#allocation6 + $0x70] sm:$0xff]
        %v1068 = vld [vmem:[#allocation6 + $0x78] sm:$0xff]
        %1070 = vset.pattern.permute.xlu0 0
        %1071 = vperm.xlu0 %1070, %v1053
        %v1072 = vpop.permute.xlu0 %1071
        %1075 = vset.pattern.permute.xlu0 0
        %1076 = vperm.xlu0 %1075, %v1054
        %v1077 = vpop.permute.xlu0 %1076
        %1080 = vset.pattern.permute.xlu0 0
        %1081 = vperm.xlu0 %1080, %v1055
        %v1082 = vpop.permute.xlu0 %1081
        %1085 = vset.pattern.permute.xlu0 0
        %1086 = vperm.xlu0 %1085, %v1056
        %v1087 = vpop.permute.xlu0 %1086
        %1090 = vset.pattern.permute.xlu0 0
        %1091 = vperm.xlu0 %1090, %v1057
        %v1092 = vpop.permute.xlu0 %1091
        %1095 = vset.pattern.permute.xlu0 0
        %1096 = vperm.xlu0 %1095, %v1058
        %v1097 = vpop.permute.xlu0 %1096
        %1100 = vset.pattern.permute.xlu0 0
        %1101 = vperm.xlu0 %1100, %v1059
        %v1102 = vpop.permute.xlu0 %1101
        %1105 = vset.pattern.permute.xlu0 0
        %1106 = vperm.xlu0 %1105, %v1060
        %v1107 = vpop.permute.xlu0 %1106
        %1110 = vset.pattern.permute.xlu0 0
        %1111 = vperm.xlu0 %1110, %v1061
        %v1112 = vpop.permute.xlu0 %1111
        %1115 = vset.pattern.permute.xlu0 0
        %1116 = vperm.xlu0 %1115, %v1062
        %v1117 = vpop.permute.xlu0 %1116
        %1120 = vset.pattern.permute.xlu0 0
        %1121 = vperm.xlu0 %1120, %v1063
        %v1122 = vpop.permute.xlu0 %1121
        %1125 = vset.pattern.permute.xlu0 0
        %1126 = vperm.xlu0 %1125, %v1064
        %v1127 = vpop.permute.xlu0 %1126
        %1130 = vset.pattern.permute.xlu0 0
        %1131 = vperm.xlu0 %1130, %v1065
        %v1132 = vpop.permute.xlu0 %1131
        %1135 = vset.pattern.permute.xlu0 0
        %1136 = vperm.xlu0 %1135, %v1066
        %v1137 = vpop.permute.xlu0 %1136
        %1140 = vset.pattern.permute.xlu0 0
        %1141 = vperm.xlu0 %1140, %v1067
        %v1142 = vpop.permute.xlu0 %1141
        %1145 = vset.pattern.permute.xlu0 0
        %1146 = vperm.xlu0 %1145, %v1068
        %v1147 = vpop.permute.xlu0 %1146
        %v1181 = vunpack.c.l.b16 %v985
        %v1182 = vunpack.c.h.b16 %v985
        %v1183 = vunpack.c.l.b16 %v986
        %v1184 = vunpack.c.l.b16 %v987
        %v1185 = vunpack.c.h.b16 %v987
        %v1186 = vunpack.c.l.b16 %v988
        %v1187 = vunpack.c.l.b16 %v989
        %v1188 = vunpack.c.h.b16 %v989
        %v1189 = vunpack.c.l.b16 %v990
        %v1190 = vunpack.c.l.b16 %v991
        %v1191 = vunpack.c.h.b16 %v991
        %v1192 = vunpack.c.l.b16 %v992
        %v1193 = vunpack.c.l.b16 %v993
        %v1194 = vunpack.c.h.b16 %v993
        %v1195 = vunpack.c.l.b16 %v994
        %v1196 = vunpack.c.l.b16 %v995
        %v1197 = vunpack.c.h.b16 %v995
        %v1198 = vunpack.c.l.b16 %v996
        %v1199 = vunpack.c.l.b16 %v997
        %v1200 = vunpack.c.h.b16 %v997
        %v1201 = vunpack.c.l.b16 %v998
        %v1202 = vunpack.c.l.b16 %v999
        %v1203 = vunpack.c.h.b16 %v999
        %v1204 = vunpack.c.l.b16 %v1000
        %v1205 = vunpack.c.l.b16 %v1001
        %v1206 = vunpack.c.h.b16 %v1001
        %v1207 = vunpack.c.l.b16 %v1002
        %v1208 = vunpack.c.l.b16 %v1003
        %v1209 = vunpack.c.h.b16 %v1003
        %v1210 = vunpack.c.l.b16 %v1004
        %v1211 = vunpack.c.l.b16 %v1005
        %v1212 = vunpack.c.h.b16 %v1005
        %v1213 = vunpack.c.l.b16 %v1006
        %v1214 = vunpack.c.l.b16 %v1007
        %v1215 = vunpack.c.h.b16 %v1007
        %v1216 = vunpack.c.l.b16 %v1008
        %v1217 = vunpack.c.l.b16 %v1009
        %v1218 = vunpack.c.h.b16 %v1009
        %v1219 = vunpack.c.l.b16 %v1010
        %v1220 = vunpack.c.l.b16 %v1011
        %v1221 = vunpack.c.h.b16 %v1011
        %v1222 = vunpack.c.l.b16 %v1012
        %v1223 = vunpack.c.l.b16 %v1013
        %v1224 = vunpack.c.h.b16 %v1013
        %v1225 = vunpack.c.l.b16 %v1014
        %v1226 = vunpack.c.l.b16 %v1015
        %v1227 = vunpack.c.h.b16 %v1015
        %v1228 = vunpack.c.l.b16 %v1016
        %v1229 = vpack.c.b16 %v1184, %v1181
        %v1230 = vpack.c.b16 %v1185, %v1182
        %v1231 = vpack.c.b16 %v1186, %v1183
        %v1232 = vpack.c.b16 %v1190, %v1187
        %v1233 = vpack.c.b16 %v1191, %v1188
        %v1234 = vpack.c.b16 %v1192, %v1189
        %v1235 = vpack.c.b16 %v1196, %v1193
        %v1236 = vpack.c.b16 %v1197, %v1194
        %v1237 = vpack.c.b16 %v1198, %v1195
        %v1238 = vpack.c.b16 %v1202, %v1199
        %v1239 = vpack.c.b16 %v1203, %v1200
        %v1240 = vpack.c.b16 %v1204, %v1201
        %v1241 = vpack.c.b16 %v1208, %v1205
        %v1242 = vpack.c.b16 %v1209, %v1206
        %v1243 = vpack.c.b16 %v1210, %v1207
        %v1244 = vpack.c.b16 %v1214, %v1211
        %v1245 = vpack.c.b16 %v1215, %v1212
        %v1246 = vpack.c.b16 %v1216, %v1213
        %v1247 = vpack.c.b16 %v1220, %v1217
        %v1248 = vpack.c.b16 %v1221, %v1218
        %v1249 = vpack.c.b16 %v1222, %v1219
        %v1250 = vpack.c.b16 %v1226, %v1223
        %v1251 = vpack.c.b16 %v1227, %v1224
        %v1252 = vpack.c.b16 %v1228, %v1225
        %v1305 = vunpack.c.l.b16 %v1017
        %v1306 = vunpack.c.h.b16 %v1017
        %v1307 = vunpack.c.l.b16 %v1018
        %v1308 = vunpack.c.h.b16 %v1018
        %v1309 = vunpack.c.l.b16 %v1019
        %v1310 = vunpack.c.h.b16 %v1019
        %v1311 = vunpack.c.l.b16 %v1020
        %v1312 = vunpack.c.h.b16 %v1020
        %v1313 = vunpack.c.l.b16 %v1021
        %v1314 = vunpack.c.h.b16 %v1021
        %v1315 = vunpack.c.l.b16 %v1022
        %v1316 = vunpack.c.h.b16 %v1022
        %v1317 = vunpack.c.l.b16 %v1023
        %v1318 = vunpack.c.h.b16 %v1023
        %v1319 = vunpack.c.l.b16 %v1024
        %v1320 = vunpack.c.h.b16 %v1024
        %v1321 = vunpack.c.l.b16 %v1025
        %v1322 = vunpack.c.h.b16 %v1025
        %v1323 = vunpack.c.l.b16 %v1026
        %v1324 = vunpack.c.h.b16 %v1026
        %v1325 = vunpack.c.l.b16 %v1027
        %v1326 = vunpack.c.h.b16 %v1027
        %v1327 = vunpack.c.l.b16 %v1028
        %v1328 = vunpack.c.h.b16 %v1028
        %v1329 = vunpack.c.l.b16 %v1029
        %v1330 = vunpack.c.h.b16 %v1029
        %v1331 = vunpack.c.l.b16 %v1030
        %v1332 = vunpack.c.h.b16 %v1030
        %v1333 = vunpack.c.l.b16 %v1031
        %v1334 = vunpack.c.h.b16 %v1031
        %v1335 = vunpack.c.l.b16 %v1032
        %v1336 = vunpack.c.h.b16 %v1032
        %v1337 = vunpack.c.l.b16 %v1033
        %v1338 = vunpack.c.h.b16 %v1033
        %v1339 = vunpack.c.l.b16 %v1034
        %v1340 = vunpack.c.h.b16 %v1034
        %v1341 = vunpack.c.l.b16 %v1035
        %v1342 = vunpack.c.h.b16 %v1035
        %v1343 = vunpack.c.l.b16 %v1036
        %v1344 = vunpack.c.h.b16 %v1036
        %v1345 = vunpack.c.l.b16 %v1037
        %v1346 = vunpack.c.h.b16 %v1037
        %v1347 = vunpack.c.l.b16 %v1038
        %v1348 = vunpack.c.h.b16 %v1038
        %v1349 = vunpack.c.l.b16 %v1039
        %v1350 = vunpack.c.h.b16 %v1039
        %v1351 = vunpack.c.l.b16 %v1040
        %v1352 = vunpack.c.h.b16 %v1040
        %v1353 = vunpack.c.l.b16 %v1041
        %v1354 = vunpack.c.h.b16 %v1041
        %v1355 = vunpack.c.l.b16 %v1042
        %v1356 = vunpack.c.h.b16 %v1042
        %v1357 = vunpack.c.l.b16 %v1043
        %v1358 = vunpack.c.h.b16 %v1043
        %v1359 = vunpack.c.l.b16 %v1044
        %v1360 = vunpack.c.h.b16 %v1044
        %v1361 = vunpack.c.l.b16 %v1045
        %v1362 = vunpack.c.h.b16 %v1045
        %v1363 = vunpack.c.l.b16 %v1046
        %v1364 = vunpack.c.h.b16 %v1046
        %v1365 = vunpack.c.l.b16 %v1047
        %v1366 = vunpack.c.h.b16 %v1047
        %v1367 = vunpack.c.l.b16 %v1048
        %v1368 = vunpack.c.h.b16 %v1048
        %v1369 = vunpack.c.l.b16 %v1049
        %v1370 = vunpack.c.h.b16 %v1049
        %v1371 = vunpack.c.l.b16 %v1050
        %v1372 = vunpack.c.h.b16 %v1050
        %v1373 = vunpack.c.l.b16 %v1051
        %v1374 = vunpack.c.h.b16 %v1051
        %v1375 = vunpack.c.l.b16 %v1052
        %v1376 = vunpack.c.h.b16 %v1052
        %v1377 = vpack.c.b16 %v1307, %v1305
        %v1378 = vpack.c.b16 %v1308, %v1306
        %v1379 = vpack.c.b16 %v1311, %v1309
        %v1380 = vpack.c.b16 %v1312, %v1310
        %v1381 = vpack.c.b16 %v1315, %v1313
        %v1382 = vpack.c.b16 %v1316, %v1314
        %v1383 = vpack.c.b16 %v1319, %v1317
        %v1384 = vpack.c.b16 %v1320, %v1318
        %v1385 = vpack.c.b16 %v1323, %v1321
        %v1386 = vpack.c.b16 %v1324, %v1322
        %v1387 = vpack.c.b16 %v1327, %v1325
        %v1388 = vpack.c.b16 %v1328, %v1326
        %v1389 = vpack.c.b16 %v1331, %v1329
        %v1390 = vpack.c.b16 %v1332, %v1330
        %v1391 = vpack.c.b16 %v1335, %v1333
        %v1392 = vpack.c.b16 %v1336, %v1334
        %v1393 = vpack.c.b16 %v1339, %v1337
        %v1394 = vpack.c.b16 %v1340, %v1338
        %v1395 = vpack.c.b16 %v1343, %v1341
        %v1396 = vpack.c.b16 %v1344, %v1342
        %v1397 = vpack.c.b16 %v1347, %v1345
        %v1398 = vpack.c.b16 %v1348, %v1346
        %v1399 = vpack.c.b16 %v1351, %v1349
        %v1400 = vpack.c.b16 %v1352, %v1350
        %v1401 = vpack.c.b16 %v1355, %v1353
        %v1402 = vpack.c.b16 %v1356, %v1354
        %v1403 = vpack.c.b16 %v1359, %v1357
        %v1404 = vpack.c.b16 %v1360, %v1358
        %v1405 = vpack.c.b16 %v1363, %v1361
        %v1406 = vpack.c.b16 %v1364, %v1362
        %v1407 = vpack.c.b16 %v1367, %v1365
        %v1408 = vpack.c.b16 %v1368, %v1366
        %v1409 = vpack.c.b16 %v1371, %v1369
        %v1410 = vpack.c.b16 %v1372, %v1370
        %v1411 = vpack.c.b16 %v1375, %v1373
        %v1412 = vpack.c.b16 %v1376, %v1374
        %vm1449 = vcmask 261120
        %v1451 = vsel %vm1449, %v1231, 0
        %v1454 = vsel %vm1449, %v1234, 0
        %v1457 = vsel %vm1449, %v1237, 0
        %v1460 = vsel %vm1449, %v1240, 0
        %v1463 = vsel %vm1449, %v1243, 0
        %v1466 = vsel %vm1449, %v1246, 0
        %v1469 = vsel %vm1449, %v1249, 0
        %v1472 = vsel %vm1449, %v1252, 0
        %1474 = vmatpush.bf16.msra.mxu0 %v1391
        %1475 = vmatpush.bf16.msra.mxu0 %v1389
        %1476 = vmatpush.bf16.msra.mxu0 %v1387
        %1477 = vmatpush.bf16.msra.mxu0 %v1385
        %1478 = vmatpush.bf16.msra.mxu0 %v1383
        %1479 = vmatpush.bf16.msra.mxu0 %v1381
        %1480 = vmatpush.bf16.msra.mxu0 %v1379
        %1481 = vmatpush.bf16.msra.mxu0 %v1377
        %1482 = vmatmul.bf16.gmra.mxu0 %v1229
        %v1483 = vpop.f32.mrf.mxu0
        %v1484 = vadd.f32 %v1072, %v1483
        %v1485 = vpop.f32.mrf.mxu0
        %v1486 = vadd.f32 %v1077, %v1485
        %1487 = vmatmul.bf16.gmra.mxu0 %v1232
        %v1488 = vpop.f32.mrf.mxu0
        %v1489 = vadd.f32 %v1082, %v1488
        %v1490 = vpop.f32.mrf.mxu0
        %v1491 = vadd.f32 %v1087, %v1490
        %1492 = vmatmul.bf16.gmra.mxu0 %v1235
        %v1493 = vpop.f32.mrf.mxu0
        %v1494 = vadd.f32 %v1092, %v1493
        %v1495 = vpop.f32.mrf.mxu0
        %v1496 = vadd.f32 %v1097, %v1495
        %1497 = vmatmul.bf16.gmra.mxu0 %v1238
        %v1498 = vpop.f32.mrf.mxu0
        %v1499 = vadd.f32 %v1102, %v1498
        %v1500 = vpop.f32.mrf.mxu0
        %v1501 = vadd.f32 %v1107, %v1500
        %1502 = vmatmul.bf16.gmra.mxu0 %v1241
        %v1503 = vpop.f32.mrf.mxu0
        %v1504 = vadd.f32 %v1112, %v1503
        %v1505 = vpop.f32.mrf.mxu0
        %v1506 = vadd.f32 %v1117, %v1505
        %1507 = vmatmul.bf16.gmra.mxu0 %v1244
        %v1508 = vpop.f32.mrf.mxu0
        %v1509 = vadd.f32 %v1122, %v1508
        %v1510 = vpop.f32.mrf.mxu0
        %v1511 = vadd.f32 %v1127, %v1510
        %1512 = vmatmul.bf16.gmra.mxu0 %v1247
        %v1513 = vpop.f32.mrf.mxu0
        %v1514 = vadd.f32 %v1132, %v1513
        %v1515 = vpop.f32.mrf.mxu0
        %v1516 = vadd.f32 %v1137, %v1515
        %1517 = vmatmul.bf16.gmra.mxu0 %v1250
        %v1518 = vpop.f32.mrf.mxu0
        %v1519 = vadd.f32 %v1142, %v1518
        %v1520 = vpop.f32.mrf.mxu0
        %v1521 = vadd.f32 %v1147, %v1520
        %1522 = vdwg.mxu0
        %1523 = vmatpush.bf16.msra.mxu0 %v1407
        %1524 = vmatpush.bf16.msra.mxu0 %v1405
        %1525 = vmatpush.bf16.msra.mxu0 %v1403
        %1526 = vmatpush.bf16.msra.mxu0 %v1401
        %1527 = vmatpush.bf16.msra.mxu0 %v1399
        %1528 = vmatpush.bf16.msra.mxu0 %v1397
        %1529 = vmatpush.bf16.msra.mxu0 %v1395
        %1530 = vmatpush.bf16.msra.mxu0 %v1393
        %1531 = vmatmul.bf16.gmra.mxu0 %v1230
        %v1532 = vpop.f32.mrf.mxu0
        %v1533 = vadd.f32 %v1484, %v1532
        %v1534 = vpop.f32.mrf.mxu0
        %v1535 = vadd.f32 %v1486, %v1534
        %1536 = vmatmul.bf16.gmra.mxu0 %v1233
        %v1537 = vpop.f32.mrf.mxu0
        %v1538 = vadd.f32 %v1489, %v1537
        %v1539 = vpop.f32.mrf.mxu0
        %v1540 = vadd.f32 %v1491, %v1539
        %1541 = vmatmul.bf16.gmra.mxu0 %v1236
        %v1542 = vpop.f32.mrf.mxu0
        %v1543 = vadd.f32 %v1494, %v1542
        %v1544 = vpop.f32.mrf.mxu0
        %v1545 = vadd.f32 %v1496, %v1544
        %1546 = vmatmul.bf16.gmra.mxu0 %v1239
        %v1547 = vpop.f32.mrf.mxu0
        %v1548 = vadd.f32 %v1499, %v1547
        %v1549 = vpop.f32.mrf.mxu0
        %v1550 = vadd.f32 %v1501, %v1549
        %1551 = vmatmul.bf16.gmra.mxu0 %v1242
        %v1552 = vpop.f32.mrf.mxu0
        %v1553 = vadd.f32 %v1504, %v1552
        %v1554 = vpop.f32.mrf.mxu0
        %v1555 = vadd.f32 %v1506, %v1554
        %1556 = vmatmul.bf16.gmra.mxu0 %v1245
        %v1557 = vpop.f32.mrf.mxu0
        %v1558 = vadd.f32 %v1509, %v1557
        %v1559 = vpop.f32.mrf.mxu0
        %v1560 = vadd.f32 %v1511, %v1559
        %1561 = vmatmul.bf16.gmra.mxu0 %v1248
        %v1562 = vpop.f32.mrf.mxu0
        %v1563 = vadd.f32 %v1514, %v1562
        %v1564 = vpop.f32.mrf.mxu0
        %v1565 = vadd.f32 %v1516, %v1564
        %1566 = vmatmul.bf16.gmra.mxu0 %v1251
        %v1567 = vpop.f32.mrf.mxu0
        %v1568 = vadd.f32 %v1519, %v1567
        %v1569 = vpop.f32.mrf.mxu0
        %v1570 = vadd.f32 %v1521, %v1569
        %1571 = vdwg.mxu0
        %1572 = vmatpush.bf16.msra.mxu0 0
        %1573 = vmatpush.bf16.msra.mxu0 0
        %1574 = vmatpush.bf16.msra.mxu0 0
        %1575 = vmatpush.bf16.msra.mxu0 0
        %1576 = vmatpush.bf16.msra.mxu0 0
        %1577 = vmatpush.bf16.msra.mxu0 0
        %1578 = vmatpush.bf16.msra.mxu0 %v1411
        %1579 = vmatpush.bf16.msra.mxu0 %v1409
        %1580 = vmatmul.bf16.gmra.mxu0 %v1451
        %v1581 = vpop.f32.mrf.mxu0
        %v1582 = vadd.f32 %v1533, %v1581
        %v1583 = vpop.f32.mrf.mxu0
        %v1584 = vadd.f32 %v1535, %v1583
        %1585 = vmatmul.bf16.gmra.mxu0 %v1454
        %v1586 = vpop.f32.mrf.mxu0
        %v1587 = vadd.f32 %v1538, %v1586
        %v1588 = vpop.f32.mrf.mxu0
        %v1589 = vadd.f32 %v1540, %v1588
        %1590 = vmatmul.bf16.gmra.mxu0 %v1457
        %v1591 = vpop.f32.mrf.mxu0
        %v1592 = vadd.f32 %v1543, %v1591
        %v1593 = vpop.f32.mrf.mxu0
        %v1594 = vadd.f32 %v1545, %v1593
        %1595 = vmatmul.bf16.gmra.mxu0 %v1460
        %v1596 = vpop.f32.mrf.mxu0
        %v1597 = vadd.f32 %v1548, %v1596
        %v1598 = vpop.f32.mrf.mxu0
        %v1599 = vadd.f32 %v1550, %v1598
        %1600 = vmatmul.bf16.gmra.mxu0 %v1463
        %v1601 = vpop.f32.mrf.mxu0
        %v1602 = vadd.f32 %v1553, %v1601
        %v1603 = vpop.f32.mrf.mxu0
        %v1604 = vadd.f32 %v1555, %v1603
        %1605 = vmatmul.bf16.gmra.mxu0 %v1466
        %v1606 = vpop.f32.mrf.mxu0
        %v1607 = vadd.f32 %v1558, %v1606
        %v1608 = vpop.f32.mrf.mxu0
        %v1609 = vadd.f32 %v1560, %v1608
        %1610 = vmatmul.bf16.gmra.mxu0 %v1469
        %v1611 = vpop.f32.mrf.mxu0
        %v1612 = vadd.f32 %v1563, %v1611
        %v1613 = vpop.f32.mrf.mxu0
        %v1614 = vadd.f32 %v1565, %v1613
        %1615 = vmatmul.bf16.gmra.mxu0 %v1472
        %v1616 = vpop.f32.mrf.mxu0
        %v1617 = vadd.f32 %v1568, %v1616
        %v1618 = vpop.f32.mrf.mxu0
        %v1619 = vadd.f32 %v1570, %v1618
        %1620 = vdwg.mxu0
        %1621 = vmatpush.bf16.msra.mxu0 %v1392
        %1622 = vmatpush.bf16.msra.mxu0 %v1390
        %1623 = vmatpush.bf16.msra.mxu0 %v1388
        %1624 = vmatpush.bf16.msra.mxu0 %v1386
        %1625 = vmatpush.bf16.msra.mxu0 %v1384
        %1626 = vmatpush.bf16.msra.mxu0 %v1382
        %1627 = vmatpush.bf16.msra.mxu0 %v1380
        %1628 = vmatpush.bf16.msra.mxu0 %v1378
        %1629 = vmatmul.bf16.gmra.mxu0 %v1229
        %v1630 = vpop.f32.mrf.mxu0
        %v1631 = vadd.f32 %v1072, %v1630
        %v1632 = vpop.f32.mrf.mxu0
        %v1633 = vadd.f32 %v1077, %v1632
        %1634 = vmatmul.bf16.gmra.mxu0 %v1232
        %v1635 = vpop.f32.mrf.mxu0
        %v1636 = vadd.f32 %v1082, %v1635
        %v1637 = vpop.f32.mrf.mxu0
        %v1638 = vadd.f32 %v1087, %v1637
        %1639 = vmatmul.bf16.gmra.mxu0 %v1235
        %v1640 = vpop.f32.mrf.mxu0
        %v1641 = vadd.f32 %v1092, %v1640
        %v1642 = vpop.f32.mrf.mxu0
        %v1643 = vadd.f32 %v1097, %v1642
        %1644 = vmatmul.bf16.gmra.mxu0 %v1238
        %v1645 = vpop.f32.mrf.mxu0
        %v1646 = vadd.f32 %v1102, %v1645
        %v1647 = vpop.f32.mrf.mxu0
        %v1648 = vadd.f32 %v1107, %v1647
        %1649 = vmatmul.bf16.gmra.mxu0 %v1241
        %v1650 = vpop.f32.mrf.mxu0
        %v1651 = vadd.f32 %v1112, %v1650
        %v1652 = vpop.f32.mrf.mxu0
        %v1653 = vadd.f32 %v1117, %v1652
        %1654 = vmatmul.bf16.gmra.mxu0 %v1244
        %v1655 = vpop.f32.mrf.mxu0
        %v1656 = vadd.f32 %v1122, %v1655
        %v1657 = vpop.f32.mrf.mxu0
        %v1658 = vadd.f32 %v1127, %v1657
        %1659 = vmatmul.bf16.gmra.mxu0 %v1247
        %v1660 = vpop.f32.mrf.mxu0
        %v1661 = vadd.f32 %v1132, %v1660
        %v1662 = vpop.f32.mrf.mxu0
        %v1663 = vadd.f32 %v1137, %v1662
        %1664 = vmatmul.bf16.gmra.mxu0 %v1250
        %v1665 = vpop.f32.mrf.mxu0
        %v1666 = vadd.f32 %v1142, %v1665
        %v1667 = vpop.f32.mrf.mxu0
        %v1668 = vadd.f32 %v1147, %v1667
        %1669 = vdwg.mxu0
        %1670 = vmatpush.bf16.msra.mxu0 %v1408
        %1671 = vmatpush.bf16.msra.mxu0 %v1406
        %1672 = vmatpush.bf16.msra.mxu0 %v1404
        %1673 = vmatpush.bf16.msra.mxu0 %v1402
        %1674 = vmatpush.bf16.msra.mxu0 %v1400
        %1675 = vmatpush.bf16.msra.mxu0 %v1398
        %1676 = vmatpush.bf16.msra.mxu0 %v1396
        %1677 = vmatpush.bf16.msra.mxu0 %v1394
        %1678 = vmatmul.bf16.gmra.mxu0 %v1230
        %v1679 = vpop.f32.mrf.mxu0
        %v1680 = vadd.f32 %v1631, %v1679
        %v1681 = vpop.f32.mrf.mxu0
        %v1682 = vadd.f32 %v1633, %v1681
        %1683 = vmatmul.bf16.gmra.mxu0 %v1233
        %v1684 = vpop.f32.mrf.mxu0
        %v1685 = vadd.f32 %v1636, %v1684
        %v1686 = vpop.f32.mrf.mxu0
        %v1687 = vadd.f32 %v1638, %v1686
        %1688 = vmatmul.bf16.gmra.mxu0 %v1236
        %v1689 = vpop.f32.mrf.mxu0
        %v1690 = vadd.f32 %v1641, %v1689
        %v1691 = vpop.f32.mrf.mxu0
        %v1692 = vadd.f32 %v1643, %v1691
        %1693 = vmatmul.bf16.gmra.mxu0 %v1239
        %v1694 = vpop.f32.mrf.mxu0
        %v1695 = vadd.f32 %v1646, %v1694
        %v1696 = vpop.f32.mrf.mxu0
        %v1697 = vadd.f32 %v1648, %v1696
        %1698 = vmatmul.bf16.gmra.mxu0 %v1242
        %v1699 = vpop.f32.mrf.mxu0
        %v1700 = vadd.f32 %v1651, %v1699
        %v1701 = vpop.f32.mrf.mxu0
        %v1702 = vadd.f32 %v1653, %v1701
        %1703 = vmatmul.bf16.gmra.mxu0 %v1245
        %v1704 = vpop.f32.mrf.mxu0
        %v1705 = vadd.f32 %v1656, %v1704
        %v1706 = vpop.f32.mrf.mxu0
        %v1707 = vadd.f32 %v1658, %v1706
        %1708 = vmatmul.bf16.gmra.mxu0 %v1248
        %v1709 = vpop.f32.mrf.mxu0
        %v1710 = vadd.f32 %v1661, %v1709
        %v1711 = vpop.f32.mrf.mxu0
        %v1712 = vadd.f32 %v1663, %v1711
        %1713 = vmatmul.bf16.gmra.mxu0 %v1251
        %v1714 = vpop.f32.mrf.mxu0
        %v1715 = vadd.f32 %v1666, %v1714
        %v1716 = vpop.f32.mrf.mxu0
        %v1717 = vadd.f32 %v1668, %v1716
        %1718 = vdwg.mxu0
        %1719 = vmatpush.bf16.msra.mxu0 0
        %1720 = vmatpush.bf16.msra.mxu0 0
        %1721 = vmatpush.bf16.msra.mxu0 0
        %1722 = vmatpush.bf16.msra.mxu0 0
        %1723 = vmatpush.bf16.msra.mxu0 0
        %1724 = vmatpush.bf16.msra.mxu0 0
        %1725 = vmatpush.bf16.msra.mxu0 %v1412
        %1726 = vmatpush.bf16.msra.mxu0 %v1410
        %1727 = vmatmul.bf16.gmra.mxu0 %v1451
        %v1728 = vpop.f32.mrf.mxu0
        %v1729 = vadd.f32 %v1680, %v1728
        %v1730 = vpop.f32.mrf.mxu0
        %v1731 = vadd.f32 %v1682, %v1730
        %1732 = vmatmul.bf16.gmra.mxu0 %v1454
        %v1733 = vpop.f32.mrf.mxu0
        %v1734 = vadd.f32 %v1685, %v1733
        %v1735 = vpop.f32.mrf.mxu0
        %v1736 = vadd.f32 %v1687, %v1735
        %1737 = vmatmul.bf16.gmra.mxu0 %v1457
        %v1738 = vpop.f32.mrf.mxu0
        %v1739 = vadd.f32 %v1690, %v1738
        %v1740 = vpop.f32.mrf.mxu0
        %v1741 = vadd.f32 %v1692, %v1740
        %1742 = vmatmul.bf16.gmra.mxu0 %v1460
        %v1743 = vpop.f32.mrf.mxu0
        %v1744 = vadd.f32 %v1695, %v1743
        %v1745 = vpop.f32.mrf.mxu0
        %v1746 = vadd.f32 %v1697, %v1745
        %1747 = vmatmul.bf16.gmra.mxu0 %v1463
        %v1748 = vpop.f32.mrf.mxu0
        %v1749 = vadd.f32 %v1700, %v1748
        %v1750 = vpop.f32.mrf.mxu0
        %v1751 = vadd.f32 %v1702, %v1750
        %1752 = vmatmul.bf16.gmra.mxu0 %v1466
        %v1753 = vpop.f32.mrf.mxu0
        %v1754 = vadd.f32 %v1705, %v1753
        %v1755 = vpop.f32.mrf.mxu0
        %v1756 = vadd.f32 %v1707, %v1755
        %1757 = vmatmul.bf16.gmra.mxu0 %v1469
        %v1758 = vpop.f32.mrf.mxu0
        %v1759 = vadd.f32 %v1710, %v1758
        %v1760 = vpop.f32.mrf.mxu0
        %v1761 = vadd.f32 %v1712, %v1760
        %1762 = vmatmul.bf16.gmra.mxu0 %v1472
        %v1763 = vpop.f32.mrf.mxu0
        %v1764 = vadd.f32 %v1715, %v1763
        %v1765 = vpop.f32.mrf.mxu0
        %v1766 = vadd.f32 %v1717, %v1765
        %1767 = vdwg.mxu0
        %1768 = vst [vmem:[%s231] sm:$0xff] %v1582
        %1769 = vst [vmem:[%s231 + $0x8] sm:$0xff] %v1729
        %1770 = vst [vmem:[%s231 + $0x10] sm:$0xff] %v1584
        %1771 = vst [vmem:[%s231 + $0x18] sm:$0xff] %v1731
        %1772 = vst [vmem:[%s231 + $0x20] sm:$0xff] %v1587
        %1773 = vst [vmem:[%s231 + $0x28] sm:$0xff] %v1734
        %1774 = vst [vmem:[%s231 + $0x30] sm:$0xff] %v1589
        %1775 = vst [vmem:[%s231 + $0x38] sm:$0xff] %v1736
        %1776 = vst [vmem:[%s231 + $0x40] sm:$0xff] %v1592
        %1777 = vst [vmem:[%s231 + $0x48] sm:$0xff] %v1739
        %1778 = vst [vmem:[%s231 + $0x50] sm:$0xff] %v1594
        %1779 = vst [vmem:[%s231 + $0x58] sm:$0xff] %v1741
        %1780 = vst [vmem:[%s231 + $0x60] sm:$0xff] %v1597
        %1781 = vst [vmem:[%s231 + $0x68] sm:$0xff] %v1744
        %1782 = vst [vmem:[%s231 + $0x70] sm:$0xff] %v1599
        %1783 = vst [vmem:[%s231 + $0x78] sm:$0xff] %v1746
        %1784 = vst [vmem:[%s231 + $0x80] sm:$0xff] %v1602
        %1785 = vst [vmem:[%s231 + $0x88] sm:$0xff] %v1749
        %1786 = vst [vmem:[%s231 + $0x90] sm:$0xff] %v1604
        %1787 = vst [vmem:[%s231 + $0x98] sm:$0xff] %v1751
        %1788 = vst [vmem:[%s231 + $0xa0] sm:$0xff] %v1607
        %1789 = vst [vmem:[%s231 + $0xa8] sm:$0xff] %v1754
        %1790 = vst [vmem:[%s231 + $0xb0] sm:$0xff] %v1609
        %1791 = vst [vmem:[%s231 + $0xb8] sm:$0xff] %v1756
        %1792 = vst [vmem:[%s231 + $0xc0] sm:$0xff] %v1612
        %1793 = vst [vmem:[%s231 + $0xc8] sm:$0xff] %v1759
        %1794 = vst [vmem:[%s231 + $0xd0] sm:$0xff] %v1614
        %1795 = vst [vmem:[%s231 + $0xd8] sm:$0xff] %v1761
        %1796 = vst [vmem:[%s231 + $0xe0] sm:$0xff] %v1617
        %1797 = vst [vmem:[%s231 + $0xe8] sm:$0xff] %v1764
        %1798 = vst [vmem:[%s231 + $0xf0] sm:$0xff] %v1619
        %1799 = vst [vmem:[%s231 + $0xf8] sm:$0xff] %v1766
        %p1800 = scmp.lt.s32.totalorder %s17, 1
        %s1801 = scalar_select %p1800, %s17, 1
        %s1802 = smul.addr %s1801, 32
        %s1803 = smul.addr %s1802, 8
        %s1804 = scalar_lea.vmem %s4, %s1803
        // Predicated region
        $region45: #{_lambda_.5} parent=35 // pred_check
          %p1805 = pneg %p124
        $region46: #{_lambda_.5} parent=35 // pred_check_branch
          %1807 = sbr.rel (%p1805) target = $region48
        $region47: #{_lambda_.5} parent=35 // pred_region
          _
        $region48: #{_lambda_.5} parent=35 // pred_fallthru
          _
      $region36: #{_lambda_.5} parent=5 // pred_fallthru
        _
      %p1808 = scmp.le.s32.totalorder 2, %s12
      // Predicated region
      $region49: #{_lambda_.5} parent=5 // pred_check
        %p1809 = pneg %p1808
      $region50: #{_lambda_.5} parent=5 // pred_check_branch
        %1811 = sbr.rel (%p1809) target = $region52
      $region51: #{_lambda_.5} parent=5 // pred_region
        %s1812 = ssub.s32 %s12, 2
        // Predicated region
        $region53: #{_lambda_.5} parent=51 // pred_check
          %p1813 = pneg %p130
        $region54: #{_lambda_.5} parent=51 // pred_check_branch
          %1815 = sbr.rel (%p1813) target = $region56
        $region55: #{_lambda_.5} parent=51 // pred_region
          %p1816 = scmp.lt.s32.totalorder %s18, 1
          %s1817 = scalar_select %p1816, %s18, 1
          %s1818 = smul.addr %s1817, 32
          %s1819 = smul.addr %s1818, 8
          %s1820 = scalar_lea.vmem %s4, %s1819
        $region56: #{_lambda_.5} parent=51 // pred_fallthru
          _
      $region52: #{_lambda_.5} parent=5 // pred_fallthru
        _
    $region6: #{_lambda_.5} parent=1 // loop_footer
      %s16 = sadd.s32 1, %s12
    $region7: #{_lambda_.5} parent=1 // loop_footer_branch
      %11 = sbr.rel target = $region3
    $region8: #{_lambda_.5} parent=1 // loop_exit
      _
    %1821 = vsyncpa [#allocation5], 1
    %s1822 = scalar_lea.sflag [#allocation5], 1
    %1823 = vsyncpa %s1822, 1
    %1824 = vsyncpa [#allocation7], 1

// kernel: _lambda_.4
$region0: #{_lambda_.4}
  #allocation0 [shape = 'u32[]', space=smem, size = 0x4, offset = 0x4, fixed_abs, tag = 'smem constant byte address 0x4 - core index']
  #allocation1 [shape = 'u32[72,128]{1,0:T(1,128)}', space=vmem, size = 0x9000, scoped, tag = 'internal scratch']
  #allocation2 [shape = 'f32[34,401]{1,0:T(8,128)}', space=vmem, size = 0x14000, scoped, tag = 'scratch operand']
  #allocation3 [shape = 'bf16[288,256]{1,0:T(8,128)(2,1)}', space=vmem, size = 0x24000, scoped, tag = 'scratch operand']
  %s0 = inlined_call_operand.vmem [shape: f32[2,32,256], index: 0, kind: input, shape index: {}, may-alias: {0,1}]
  %s1 = inlined_call_operand.vmem [shape: f32[2,32,256], index: 1, kind: input, shape index: {}, may-alias: {0,1}]
  %s2 = inlined_call_operand.hbm [shape: f32[14], index: 2, kind: input, shape index: {}]
  %s3 = inlined_call_operand.vmem [shape: f32[3,256], index: 3, kind: input, shape index: {}]
  %s4 = inlined_call_operand.hbm [shape: bf16[32,288], index: 4, kind: input, shape index: {}]
  %s5 = inlined_call_operand.hbm [shape: f32[32,1], index: 5, kind: input, shape index: {}]
  %s6 = inlined_call_operand.hbm [shape: f32[32,1], index: 6, kind: input, shape index: {}]
  %s7 = inlined_call_operand.hbm [shape: f32[32,1], index: 7, kind: input, shape index: {}]
  %s8 = inlined_call_operand.hbm [shape: bf16[8,72], index: 8, kind: input, shape index: {}]
  %s9 = inlined_call_operand.hbm [shape: bf16[32,32], index: 9, kind: input, shape index: {}]
  %s10 = inlined_call_operand.hbm [shape: f32[32,1], index: 10, kind: input, shape index: {}]
  %s11 = inlined_call_operand.hbm [shape: f32[32,2], index: 11, kind: input, shape index: {}]
  %s12 = inlined_call_operand.hbm [shape: f32[1,2], index: 12, kind: input, shape index: {}]
  %s13 = inlined_call_operand.hbm [shape: f32[32,2], index: 13, kind: input, shape index: {}]
  %s14 = inlined_call_operand.hbm [shape: f32[32,1], index: 14, kind: input, shape index: {}]
  %s15 = inlined_call_operand.hbm [shape: bf16[32,32], index: 15, kind: input, shape index: {}]
  %s16 = inlined_call_operand.hbm [shape: f32[32,1], index: 16, kind: input, shape index: {}]
  %s17 = inlined_call_operand.hbm [shape: bf16[32,288], index: 17, kind: input, shape index: {}]
  %s18 = inlined_call_operand.hbm [shape: f32[32,1], index: 18, kind: input, shape index: {}]
  %s19 = inlined_call_operand.vmem [shape: f32[2,32,256], index: 19, kind: output, shape index: {}]
  %s20 = sld [smem:[#allocation0]]
  $region173: #{_lambda_.4} parent=0
    _
  %s22 = ssub.s32 1, %s20
  %s23 = scalar_select 0, %s22, %s20
  $region1: #{_lambda_.4} parent=0
    #allocation4 [shape = 'u8[512]{0}', space=smem, size = 0x200, scoped, tag = 'input window, operand 2, single buffered']
    #allocation5 [shape = 's32[2]{0}', space=sflag, size = 0x8, scoped, tag = 'scoped memory for _lambda_.4']
    #allocation6 [shape = 's32[2]{0}', space=sflag, size = 0x8, scoped, tag = 'scoped memory for _lambda_.4']
    #allocation7 [shape = 'u8[24576]{0}', space=vmem, size = 0x6000, scoped, tag = 'input window, operand 4, single buffered']
    #allocation8 [shape = 'u8[16384]{0}', space=vmem, size = 0x4000, scoped, tag = 'input window, operand 5, single buffered']
    #allocation9 [shape = 's32[1]{0}', space=sflag, size = 0x4, scoped, tag = 'scoped memory for _lambda_.4']
    #allocation10 [shape = 'u8[16384]{0}', space=vmem, size = 0x4000, scoped, tag = 'input window, operand 6, single buffered']
    #allocation11 [shape = 'u8[16384]{0}', space=vmem, size = 0x4000, scoped, tag = 'input window, operand 7, single buffered']
    #allocation12 [shape = 's32[1]{0}', space=sflag, size = 0x4, scoped, tag = 'scoped memory for _lambda_.4']
    #allocation13 [shape = 'u8[2048]{0}', space=vmem, size = 0x800, scoped, tag = 'input window, operand 8, single buffered']
    #allocation14 [shape = 'u8[8192]{0}', space=vmem, size = 0x2000, scoped, tag = 'input window, operand 9, single buffered']
    #allocation15 [shape = 's32[1]{0}', space=sflag, size = 0x4, scoped, tag = 'scoped memory for _lambda_.4']
    #allocation16 [shape = 'u8[16384]{0}', space=vmem, size = 0x4000, scoped, tag = 'input window, operand 10, single buffered']
    #allocation17 [shape = 'u8[16384]{0}', space=vmem, size = 0x4000, scoped, tag = 'input window, operand 11, single buffered']
    #allocation18 [shape = 's32[1]{0}', space=sflag, size = 0x4, scoped, tag = 'scoped memory for _lambda_.4']
    #allocation19 [shape = 'u8[512]{0}', space=vmem, size = 0x400, scoped, tag = 'input window, operand 12, single buffered']
    #allocation20 [shape = 'u8[16384]{0}', space=vmem, size = 0x4000, scoped, tag = 'input window, operand 13, single buffered']
    #allocation21 [shape = 's32[1]{0}', space=sflag, size = 0x4, scoped, tag = 'scoped memory for _lambda_.4']
    #allocation22 [shape = 'u8[16384]{0}', space=vmem, size = 0x4000, scoped, tag = 'input window, operand 14, single buffered']
    #allocation23 [shape = 'u8[8192]{0}', space=vmem, size = 0x2000, scoped, tag = 'input window, operand 15, single buffered']
    #allocation24 [shape = 's32[1]{0}', space=sflag, size = 0x4, scoped, tag = 'scoped memory for _lambda_.4']
    #allocation25 [shape = 'u8[16384]{0}', space=vmem, size = 0x4000, scoped, tag = 'input window, operand 16, single buffered']
    #allocation26 [shape = 'u8[24576]{0}', space=vmem, size = 0x6000, scoped, tag = 'input window, operand 17, single buffered']
    #allocation27 [shape = 's32[1]{0}', space=sflag, size = 0x4, scoped, tag = 'scoped memory for _lambda_.4']
    #allocation28 [shape = 'u8[16384]{0}', space=vmem, size = 0x4000, scoped, tag = 'input window, operand 18, single buffered']
    %24 = vsyncpa [#allocation6], 0
    %25 = vsyncpa [#allocation5], 0
    %26 = vsyncpa [#allocation9], 0
    %27 = vsyncpa [#allocation12], 0
    %28 = vsyncpa [#allocation15], 0
    %29 = vsyncpa [#allocation18], 0
    %30 = vsyncpa [#allocation21], 0
    %31 = vsyncpa [#allocation24], 0
    %32 = vsyncpa [#allocation27], 0
    loop: start=0, step=1, limit=4
    $region2: #{_lambda_.4} parent=1 // loop_pre_header
      _
    $region3: #{_lambda_.4} parent=1 // loop_header
      %s34 = sphi 0, %s38
      %p35 = scmp.ge.s32.totalorder %s34, 4
      %s44 = sphi 0, %s46
      %s47 = sphi 0, %s44
      %s48 = sphi 0, %s47
      %s64 = sphi 0, %s48
      %s70 = sphi 0, %s72
      %s73 = sphi 0, %s70
      %s74 = sphi 0, %s73
      %s90 = sphi 0, %s74
      %s94 = sphi 0, %s94
      %s96 = sphi 0, %s94
      %s97 = sphi 0, %s96
      %s111 = sphi 0, %s97
      %s115 = sphi 0, %s115
      %s117 = sphi 0, %s115
      %s118 = sphi 0, %s117
      %s132 = sphi 0, %s118
      %s136 = sphi 0, %s136
      %s138 = sphi 0, %s136
      %s139 = sphi 0, %s138
      %s153 = sphi 0, %s139
      %s157 = sphi 0, %s157
      %s159 = sphi 0, %s157
      %s160 = sphi 0, %s159
      %s174 = sphi 0, %s160
      %s178 = sphi 0, %s178
      %s180 = sphi 0, %s178
      %s181 = sphi 0, %s180
      %s195 = sphi 0, %s181
      %s199 = sphi 0, %s199
      %s201 = sphi 0, %s199
      %s202 = sphi 0, %s201
      %s216 = sphi 0, %s202
      %s220 = sphi 0, %s220
      %s222 = sphi 0, %s220
      %s223 = sphi 0, %s222
      %s237 = sphi 0, %s223
      %s241 = sphi 0, %s241
      %s243 = sphi 0, %s241
      %s244 = sphi 0, %s243
      %s258 = sphi 0, %s244
      %s262 = sphi 0, %s262
      %s264 = sphi 0, %s262
      %s265 = sphi 0, %s264
      %s279 = sphi 0, %s265
      %s283 = sphi 0, %s283
      %s285 = sphi 0, %s283
      %s286 = sphi 0, %s285
      %s300 = sphi 0, %s286
      %s304 = sphi 0, %s304
      %s306 = sphi 0, %s304
      %s307 = sphi 0, %s306
      %s321 = sphi 0, %s307
      %s325 = sphi 0, %s325
      %s327 = sphi 0, %s325
      %s328 = sphi 0, %s327
      %s342 = sphi 0, %s328
      %s346 = sphi 0, %s346
      %s348 = sphi 0, %s346
      %s349 = sphi 0, %s348
      %s363 = sphi 0, %s349
      %s367 = sphi 0, %s367
      %s369 = sphi 0, %s367
      %s370 = sphi 0, %s369
      %s384 = sphi 0, %s370
      %s388 = sphi 0, %s388
      %s390 = sphi 0, %s388
      %s391 = sphi 0, %s390
      %s405 = sphi 0, %s391
      %s409 = sphi 0, %s409
      %s411 = sphi 0, %s409
      %s412 = sphi 0, %s411
      %s426 = sphi 0, %s412
      %s430 = sphi 0, %s430
      %s432 = sphi 0, %s430
      %s433 = sphi 0, %s432
      %s447 = sphi 0, %s433
      %s453 = sphi 0, %s455
      %s456 = sphi 0, %s453
      %s457 = sphi 0, %s456
      %s473 = sphi 0, %s457
    $region4: #{_lambda_.4} parent=1 // loop_header_branch
      %37 = sbr.rel (%p35) target = $region8
    $region5: #{_lambda_.4} parent=1 // loop_body
      %s39 = ssub.s32 %s34, 1
      %s40 = ssub.s32 %s34, 2
      %s41 = sadd.s32 %s34, 1
      %s42 = ssub.s32 %s34, %s41
      %p43 = scmp.eq.s32.totalorder %s42, 0
      %s45 = sadd.s32 %s44, 1
      %s46 = scalar_select %p43, %s44, %s45
      %p49 = pneg %p43
      %p50 = scmp.eq.s32.totalorder %s34, 1
      %p51 = por %p49, %p50
      %p52 = scmp.ne.s32.totalorder %s44, %s47
      %p53 = scmp.eq.s32.totalorder %s34, 0
      %p54 = por %p52, %p53
      %p55 = scmp.ne.s32.totalorder %s44, %s47
      %p56 = scmp.eq.s32.totalorder %s39, 1
      %p57 = por %p55, %p56
      %p58 = scmp.ne.s32.totalorder %s47, %s48
      %p59 = scmp.eq.s32.totalorder %s39, 0
      %p60 = por %p58, %p59
      %p61 = scmp.ne.s32.totalorder %s47, %s48
      %p62 = scmp.eq.s32.totalorder %s40, 1
      %p63 = por %p61, %p62
      %p65 = scmp.ne.s32.totalorder %s48, %s64
      %p66 = scmp.eq.s32.totalorder %s40, 0
      %p67 = por %p65, %p66
      %s68 = ssub.s32 %s34, %s41
      %p69 = scmp.eq.s32.totalorder %s68, 0
      %s71 = sadd.s32 %s70, 1
      %s72 = scalar_select %p69, %s70, %s71
      %p75 = pneg %p69
      %p76 = scmp.eq.s32.totalorder %s34, 1
      %p77 = por %p75, %p76
      %p78 = scmp.ne.s32.totalorder %s70, %s73
      %p79 = scmp.eq.s32.totalorder %s34, 0
      %p80 = por %p78, %p79
      %p81 = scmp.ne.s32.totalorder %s70, %s73
      %p82 = scmp.eq.s32.totalorder %s39, 1
      %p83 = por %p81, %p82
      %p84 = scmp.ne.s32.totalorder %s73, %s74
      %p85 = scmp.eq.s32.totalorder %s39, 0
      %p86 = por %p84, %p85
      %p87 = scmp.ne.s32.totalorder %s73, %s74
      %p88 = scmp.eq.s32.totalorder %s40, 1
      %p89 = por %p87, %p88
      %p91 = scmp.ne.s32.totalorder %s74, %s90
      %p92 = scmp.eq.s32.totalorder %s40, 0
      %p93 = por %p91, %p92
      %s95 = sadd.s32 %s94, 1
      %p98 = scmp.eq.s32.totalorder %s34, 1
      %p99 = scmp.ne.s32.totalorder %s94, %s96
      %p100 = scmp.eq.s32.totalorder %s34, 0
      %p101 = por %p99, %p100
      %p102 = scmp.ne.s32.totalorder %s94, %s96
      %p103 = scmp.eq.s32.totalorder %s39, 1
      %p104 = por %p102, %p103
      %p105 = scmp.ne.s32.totalorder %s96, %s97
      %p106 = scmp.eq.s32.totalorder %s39, 0
      %p107 = por %p105, %p106
      %p108 = scmp.ne.s32.totalorder %s96, %s97
      %p109 = scmp.eq.s32.totalorder %s40, 1
      %p110 = por %p108, %p109
      %p112 = scmp.ne.s32.totalorder %s97, %s111
      %p113 = scmp.eq.s32.totalorder %s40, 0
      %p114 = por %p112, %p113
      %s116 = sadd.s32 %s115, 1
      %p119 = scmp.eq.s32.totalorder %s34, 1
      %p120 = scmp.ne.s32.totalorder %s115, %s117
      %p121 = scmp.eq.s32.totalorder %s34, 0
      %p122 = por %p120, %p121
      %p123 = scmp.ne.s32.totalorder %s115, %s117
      %p124 = scmp.eq.s32.totalorder %s39, 1
      %p125 = por %p123, %p124
      %p126 = scmp.ne.s32.totalorder %s117, %s118
      %p127 = scmp.eq.s32.totalorder %s39, 0
      %p128 = por %p126, %p127
      %p129 = scmp.ne.s32.totalorder %s117, %s118
      %p130 = scmp.eq.s32.totalorder %s40, 1
      %p131 = por %p129, %p130
      %p133 = scmp.ne.s32.totalorder %s118, %s132
      %p134 = scmp.eq.s32.totalorder %s40, 0
      %p135 = por %p133, %p134
      %s137 = sadd.s32 %s136, 1
      %p140 = scmp.eq.s32.totalorder %s34, 1
      %p141 = scmp.ne.s32.totalorder %s136, %s138
      %p142 = scmp.eq.s32.totalorder %s34, 0
      %p143 = por %p141, %p142
      %p144 = scmp.ne.s32.totalorder %s136, %s138
      %p145 = scmp.eq.s32.totalorder %s39, 1
      %p146 = por %p144, %p145
      %p147 = scmp.ne.s32.totalorder %s138, %s139
      %p148 = scmp.eq.s32.totalorder %s39, 0
      %p149 = por %p147, %p148
      %p150 = scmp.ne.s32.totalorder %s138, %s139
      %p151 = scmp.eq.s32.totalorder %s40, 1
      %p152 = por %p150, %p151
      %p154 = scmp.ne.s32.totalorder %s139, %s153
      %p155 = scmp.eq.s32.totalorder %s40, 0
      %p156 = por %p154, %p155
      %s158 = sadd.s32 %s157, 1
      %p161 = scmp.eq.s32.totalorder %s34, 1
      %p162 = scmp.ne.s32.totalorder %s157, %s159
      %p163 = scmp.eq.s32.totalorder %s34, 0
      %p164 = por %p162, %p163
      %p165 = scmp.ne.s32.totalorder %s157, %s159
      %p166 = scmp.eq.s32.totalorder %s39, 1
      %p167 = por %p165, %p166
      %p168 = scmp.ne.s32.totalorder %s159, %s160
      %p169 = scmp.eq.s32.totalorder %s39, 0
      %p170 = por %p168, %p169
      %p171 = scmp.ne.s32.totalorder %s159, %s160
      %p172 = scmp.eq.s32.totalorder %s40, 1
      %p173 = por %p171, %p172
      %p175 = scmp.ne.s32.totalorder %s160, %s174
      %p176 = scmp.eq.s32.totalorder %s40, 0
      %p177 = por %p175, %p176
      %s179 = sadd.s32 %s178, 1
      %p182 = scmp.eq.s32.totalorder %s34, 1
      %p183 = scmp.ne.s32.totalorder %s178, %s180
      %p184 = scmp.eq.s32.totalorder %s34, 0
      %p185 = por %p183, %p184
      %p186 = scmp.ne.s32.totalorder %s178, %s180
      %p187 = scmp.eq.s32.totalorder %s39, 1
      %p188 = por %p186, %p187
      %p189 = scmp.ne.s32.totalorder %s180, %s181
      %p190 = scmp.eq.s32.totalorder %s39, 0
      %p191 = por %p189, %p190
      %p192 = scmp.ne.s32.totalorder %s180, %s181
      %p193 = scmp.eq.s32.totalorder %s40, 1
      %p194 = por %p192, %p193
      %p196 = scmp.ne.s32.totalorder %s181, %s195
      %p197 = scmp.eq.s32.totalorder %s40, 0
      %p198 = por %p196, %p197
      %s200 = sadd.s32 %s199, 1
      %p203 = scmp.eq.s32.totalorder %s34, 1
      %p204 = scmp.ne.s32.totalorder %s199, %s201
      %p205 = scmp.eq.s32.totalorder %s34, 0
      %p206 = por %p204, %p205
      %p207 = scmp.ne.s32.totalorder %s199, %s201
      %p208 = scmp.eq.s32.totalorder %s39, 1
      %p209 = por %p207, %p208
      %p210 = scmp.ne.s32.totalorder %s201, %s202
      %p211 = scmp.eq.s32.totalorder %s39, 0
      %p212 = por %p210, %p211
      %p213 = scmp.ne.s32.totalorder %s201, %s202
      %p214 = scmp.eq.s32.totalorder %s40, 1
      %p215 = por %p213, %p214
      %p217 = scmp.ne.s32.totalorder %s202, %s216
      %p218 = scmp.eq.s32.totalorder %s40, 0
      %p219 = por %p217, %p218
      %s221 = sadd.s32 %s220, 1
      %p224 = scmp.eq.s32.totalorder %s34, 1
      %p225 = scmp.ne.s32.totalorder %s220, %s222
      %p226 = scmp.eq.s32.totalorder %s34, 0
      %p227 = por %p225, %p226
      %p228 = scmp.ne.s32.totalorder %s220, %s222
      %p229 = scmp.eq.s32.totalorder %s39, 1
      %p230 = por %p228, %p229
      %p231 = scmp.ne.s32.totalorder %s222, %s223
      %p232 = scmp.eq.s32.totalorder %s39, 0
      %p233 = por %p231, %p232
      %p234 = scmp.ne.s32.totalorder %s222, %s223
      %p235 = scmp.eq.s32.totalorder %s40, 1
      %p236 = por %p234, %p235
      %p238 = scmp.ne.s32.totalorder %s223, %s237
      %p239 = scmp.eq.s32.totalorder %s40, 0
      %p240 = por %p238, %p239
      %s242 = sadd.s32 %s241, 1
      %p245 = scmp.eq.s32.totalorder %s34, 1
      %p246 = scmp.ne.s32.totalorder %s241, %s243
      %p247 = scmp.eq.s32.totalorder %s34, 0
      %p248 = por %p246, %p247
      %p249 = scmp.ne.s32.totalorder %s241, %s243
      %p250 = scmp.eq.s32.totalorder %s39, 1
      %p251 = por %p249, %p250
      %p252 = scmp.ne.s32.totalorder %s243, %s244
      %p253 = scmp.eq.s32.totalorder %s39, 0
      %p254 = por %p252, %p253
      %p255 = scmp.ne.s32.totalorder %s243, %s244
      %p256 = scmp.eq.s32.totalorder %s40, 1
      %p257 = por %p255, %p256
      %p259 = scmp.ne.s32.totalorder %s244, %s258
      %p260 = scmp.eq.s32.totalorder %s40, 0
      %p261 = por %p259, %p260
      %s263 = sadd.s32 %s262, 1
      %p266 = scmp.eq.s32.totalorder %s34, 1
      %p267 = scmp.ne.s32.totalorder %s262, %s264
      %p268 = scmp.eq.s32.totalorder %s34, 0
      %p269 = por %p267, %p268
      %p270 = scmp.ne.s32.totalorder %s262, %s264
      %p271 = scmp.eq.s32.totalorder %s39, 1
      %p272 = por %p270, %p271
      %p273 = scmp.ne.s32.totalorder %s264, %s265
      %p274 = scmp.eq.s32.totalorder %s39, 0
      %p275 = por %p273, %p274
      %p276 = scmp.ne.s32.totalorder %s264, %s265
      %p277 = scmp.eq.s32.totalorder %s40, 1
      %p278 = por %p276, %p277
      %p280 = scmp.ne.s32.totalorder %s265, %s279
      %p281 = scmp.eq.s32.totalorder %s40, 0
      %p282 = por %p280, %p281
      %s284 = sadd.s32 %s283, 1
      %p287 = scmp.eq.s32.totalorder %s34, 1
      %p288 = scmp.ne.s32.totalorder %s283, %s285
      %p289 = scmp.eq.s32.totalorder %s34, 0
      %p290 = por %p288, %p289
      %p291 = scmp.ne.s32.totalorder %s283, %s285
      %p292 = scmp.eq.s32.totalorder %s39, 1
      %p293 = por %p291, %p292
      %p294 = scmp.ne.s32.totalorder %s285, %s286
      %p295 = scmp.eq.s32.totalorder %s39, 0
      %p296 = por %p294, %p295
      %p297 = scmp.ne.s32.totalorder %s285, %s286
      %p298 = scmp.eq.s32.totalorder %s40, 1
      %p299 = por %p297, %p298
      %p301 = scmp.ne.s32.totalorder %s286, %s300
      %p302 = scmp.eq.s32.totalorder %s40, 0
      %p303 = por %p301, %p302
      %s305 = sadd.s32 %s304, 1
      %p308 = scmp.eq.s32.totalorder %s34, 1
      %p309 = scmp.ne.s32.totalorder %s304, %s306
      %p310 = scmp.eq.s32.totalorder %s34, 0
      %p311 = por %p309, %p310
      %p312 = scmp.ne.s32.totalorder %s304, %s306
      %p313 = scmp.eq.s32.totalorder %s39, 1
      %p314 = por %p312, %p313
      %p315 = scmp.ne.s32.totalorder %s306, %s307
      %p316 = scmp.eq.s32.totalorder %s39, 0
      %p317 = por %p315, %p316
      %p318 = scmp.ne.s32.totalorder %s306, %s307
      %p319 = scmp.eq.s32.totalorder %s40, 1
      %p320 = por %p318, %p319
      %p322 = scmp.ne.s32.totalorder %s307, %s321
      %p323 = scmp.eq.s32.totalorder %s40, 0
      %p324 = por %p322, %p323
      %s326 = sadd.s32 %s325, 1
      %p329 = scmp.eq.s32.totalorder %s34, 1
      %p330 = scmp.ne.s32.totalorder %s325, %s327
      %p331 = scmp.eq.s32.totalorder %s34, 0
      %p332 = por %p330, %p331
      %p333 = scmp.ne.s32.totalorder %s325, %s327
      %p334 = scmp.eq.s32.totalorder %s39, 1
      %p335 = por %p333, %p334
      %p336 = scmp.ne.s32.totalorder %s327, %s328
      %p337 = scmp.eq.s32.totalorder %s39, 0
      %p338 = por %p336, %p337
      %p339 = scmp.ne.s32.totalorder %s327, %s328
      %p340 = scmp.eq.s32.totalorder %s40, 1
      %p341 = por %p339, %p340
      %p343 = scmp.ne.s32.totalorder %s328, %s342
      %p344 = scmp.eq.s32.totalorder %s40, 0
      %p345 = por %p343, %p344
      %s347 = sadd.s32 %s346, 1
      %p350 = scmp.eq.s32.totalorder %s34, 1
      %p351 = scmp.ne.s32.totalorder %s346, %s348
      %p352 = scmp.eq.s32.totalorder %s34, 0
      %p353 = por %p351, %p352
      %p354 = scmp.ne.s32.totalorder %s346, %s348
      %p355 = scmp.eq.s32.totalorder %s39, 1
      %p356 = por %p354, %p355
      %p357 = scmp.ne.s32.totalorder %s348, %s349
      %p358 = scmp.eq.s32.totalorder %s39, 0
      %p359 = por %p357, %p358
      %p360 = scmp.ne.s32.totalorder %s348, %s349
      %p361 = scmp.eq.s32.totalorder %s40, 1
      %p362 = por %p360, %p361
      %p364 = scmp.ne.s32.totalorder %s349, %s363
      %p365 = scmp.eq.s32.totalorder %s40, 0
      %p366 = por %p364, %p365
      %s368 = sadd.s32 %s367, 1
      %p371 = scmp.eq.s32.totalorder %s34, 1
      %p372 = scmp.ne.s32.totalorder %s367, %s369
      %p373 = scmp.eq.s32.totalorder %s34, 0
      %p374 = por %p372, %p373
      %p375 = scmp.ne.s32.totalorder %s367, %s369
      %p376 = scmp.eq.s32.totalorder %s39, 1
      %p377 = por %p375, %p376
      %p378 = scmp.ne.s32.totalorder %s369, %s370
      %p379 = scmp.eq.s32.totalorder %s39, 0
      %p380 = por %p378, %p379
      %p381 = scmp.ne.s32.totalorder %s369, %s370
      %p382 = scmp.eq.s32.totalorder %s40, 1
      %p383 = por %p381, %p382
      %p385 = scmp.ne.s32.totalorder %s370, %s384
      %p386 = scmp.eq.s32.totalorder %s40, 0
      %p387 = por %p385, %p386
      %s389 = sadd.s32 %s388, 1
      %p392 = scmp.eq.s32.totalorder %s34, 1
      %p393 = scmp.ne.s32.totalorder %s388, %s390
      %p394 = scmp.eq.s32.totalorder %s34, 0
      %p395 = por %p393, %p394
      %p396 = scmp.ne.s32.totalorder %s388, %s390
      %p397 = scmp.eq.s32.totalorder %s39, 1
      %p398 = por %p396, %p397
      %p399 = scmp.ne.s32.totalorder %s390, %s391
      %p400 = scmp.eq.s32.totalorder %s39, 0
      %p401 = por %p399, %p400
      %p402 = scmp.ne.s32.totalorder %s390, %s391
      %p403 = scmp.eq.s32.totalorder %s40, 1
      %p404 = por %p402, %p403
      %p406 = scmp.ne.s32.totalorder %s391, %s405
      %p407 = scmp.eq.s32.totalorder %s40, 0
      %p408 = por %p406, %p407
      %s410 = sadd.s32 %s409, 1
      %p413 = scmp.eq.s32.totalorder %s34, 1
      %p414 = scmp.ne.s32.totalorder %s409, %s411
      %p415 = scmp.eq.s32.totalorder %s34, 0
      %p416 = por %p414, %p415
      %p417 = scmp.ne.s32.totalorder %s409, %s411
      %p418 = scmp.eq.s32.totalorder %s39, 1
      %p419 = por %p417, %p418
      %p420 = scmp.ne.s32.totalorder %s411, %s412
      %p421 = scmp.eq.s32.totalorder %s39, 0
      %p422 = por %p420, %p421
      %p423 = scmp.ne.s32.totalorder %s411, %s412
      %p424 = scmp.eq.s32.totalorder %s40, 1
      %p425 = por %p423, %p424
      %p427 = scmp.ne.s32.totalorder %s412, %s426
      %p428 = scmp.eq.s32.totalorder %s40, 0
      %p429 = por %p427, %p428
      %s431 = sadd.s32 %s430, 1
      %p434 = scmp.eq.s32.totalorder %s34, 1
      %p435 = scmp.ne.s32.totalorder %s430, %s432
      %p436 = scmp.eq.s32.totalorder %s34, 0
      %p437 = por %p435, %p436
      %p438 = scmp.ne.s32.totalorder %s430, %s432
      %p439 = scmp.eq.s32.totalorder %s39, 1
      %p440 = por %p438, %p439
      %p441 = scmp.ne.s32.totalorder %s432, %s433
      %p442 = scmp.eq.s32.totalorder %s39, 0
      %p443 = por %p441, %p442
      %p444 = scmp.ne.s32.totalorder %s432, %s433
      %p445 = scmp.eq.s32.totalorder %s40, 1
      %p446 = por %p444, %p445
      %p448 = scmp.ne.s32.totalorder %s433, %s447
      %p449 = scmp.eq.s32.totalorder %s40, 0
      %p450 = por %p448, %p449
      %s451 = ssub.s32 %s34, %s41
      %p452 = scmp.eq.s32.totalorder %s451, 0
      %s454 = sadd.s32 %s453, 1
      %s455 = scalar_select %p452, %s453, %s454
      %p458 = pneg %p452
      %p459 = scmp.eq.s32.totalorder %s34, 1
      %p460 = por %p458, %p459
      %p461 = scmp.ne.s32.totalorder %s453, %s456
      %p462 = scmp.eq.s32.totalorder %s34, 0
      %p463 = por %p461, %p462
      %p464 = scmp.ne.s32.totalorder %s453, %s456
      %p465 = scmp.eq.s32.totalorder %s39, 1
      %p466 = por %p464, %p465
      %p467 = scmp.ne.s32.totalorder %s456, %s457
      %p468 = scmp.eq.s32.totalorder %s39, 0
      %p469 = por %p467, %p468
      %p470 = scmp.ne.s32.totalorder %s456, %s457
      %p471 = scmp.eq.s32.totalorder %s40, 1
      %p472 = por %p470, %p471
      %p474 = scmp.ne.s32.totalorder %s457, %s473
      %p475 = scmp.eq.s32.totalorder %s40, 0
      %p476 = por %p474, %p475
      %p477 = scmp.le.s32.totalorder 1, %s34
      %p478 = scmp.lt.s32.totalorder %s34, 3
      %p479 = pnand %p477, %p478
      %p480 = pneg %p479
      // Predicated region
      $region9: #{_lambda_.4} parent=5 // pred_check
        _
      $region10: #{_lambda_.4} parent=5 // pred_check_branch
        %482 = sbr.rel (%p479) target = $region12
      $region11: #{_lambda_.4} parent=5 // pred_region
        %s483 = ssub.s32 %s34, 1
        // Predicated region
        $region13: #{_lambda_.4} parent=11 // pred_check
          %p484 = pneg %p107
        $region14: #{_lambda_.4} parent=11 // pred_check_branch
          %486 = sbr.rel (%p484) target = $region16
        $region15: #{_lambda_.4} parent=11 // pred_region
          %488 = vsyncadd [#allocation6], 0
          %s490 = sshll.u32 %s2, 4
          %s491 = int_to_ptr.hbm [resolvable:$true] %s490
          %493 = dma.hbm_to_smem %s491, 16, [#allocation4], [#allocation6]
        $region16: #{_lambda_.4} parent=11 // pred_fallthru
          _
        // Predicated region
        $region17: #{_lambda_.4} parent=11 // pred_check
          %p494 = pneg %p128
        $region18: #{_lambda_.4} parent=11 // pred_check_branch
          %496 = sbr.rel (%p494) target = $region20
        $region19: #{_lambda_.4} parent=11 // pred_region
          _
        $region20: #{_lambda_.4} parent=11 // pred_fallthru
          _
        // Predicated region
        $region21: #{_lambda_.4} parent=11 // pred_check
          %p497 = pneg %p149
        $region22: #{_lambda_.4} parent=11 // pred_check_branch
          %499 = sbr.rel (%p497) target = $region24
        $region23: #{_lambda_.4} parent=11 // pred_region
          %501 = vsyncadd [#allocation5], 0
          %s502 = sshll.u32 %s4, 4
          %s503 = int_to_ptr.hbm [resolvable:$true] %s502
          %s504 = sshll.u32 [#allocation7], 4
          %s505 = int_to_ptr.vmem [resolvable:$true] %s504
          %510 = dma.hbm_to_vmem [thread:$0]  %s503, 768, %s505, [#allocation5], 192, 192, 12
        $region24: #{_lambda_.4} parent=11 // pred_fallthru
          _
        // Predicated region
        $region25: #{_lambda_.4} parent=11 // pred_check
          %p511 = pneg %p170
        $region26: #{_lambda_.4} parent=11 // pred_check_branch
          %513 = sbr.rel (%p511) target = $region28
        $region27: #{_lambda_.4} parent=11 // pred_region
          %515 = vsyncadd [#allocation9], 0
          %s516 = sshll.u32 %s5, 4
          %s517 = int_to_ptr.hbm [resolvable:$true] %s516
          %s518 = sshll.u32 [#allocation8], 4
          %s519 = int_to_ptr.vmem [resolvable:$true] %s518
          %524 = dma.hbm_to_vmem [thread:$0]  %s517, 512, %s519, [#allocation9], 128, 128, 8
        $region28: #{_lambda_.4} parent=11 // pred_fallthru
          _
        // Predicated region
        $region29: #{_lambda_.4} parent=11 // pred_check
          %p525 = pneg %p191
        $region30: #{_lambda_.4} parent=11 // pred_check_branch
          %527 = sbr.rel (%p525) target = $region32
        $region31: #{_lambda_.4} parent=11 // pred_region
          %529 = vsyncadd [#allocation9], 0
          %s530 = sshll.u32 %s6, 4
          %s531 = int_to_ptr.hbm [resolvable:$true] %s530
          %s532 = sshll.u32 [#allocation10], 4
          %s533 = int_to_ptr.vmem [resolvable:$true] %s532
          %538 = dma.hbm_to_vmem [thread:$0]  %s531, 512, %s533, [#allocation9], 128, 128, 8
        $region32: #{_lambda_.4} parent=11 // pred_fallthru
          _
        // Predicated region
        $region33: #{_lambda_.4} parent=11 // pred_check
          %p539 = pneg %p212
        $region34: #{_lambda_.4} parent=11 // pred_check_branch
          %541 = sbr.rel (%p539) target = $region36
        $region35: #{_lambda_.4} parent=11 // pred_region
          %543 = vsyncadd [#allocation12], 0
          %s544 = sshll.u32 %s7, 4
          %s545 = int_to_ptr.hbm [resolvable:$true] %s544
          %s546 = sshll.u32 [#allocation11], 4
          %s547 = int_to_ptr.vmem [resolvable:$true] %s546
          %552 = dma.hbm_to_vmem [thread:$0]  %s545, 512, %s547, [#allocation12], 128, 128, 8
        $region36: #{_lambda_.4} parent=11 // pred_fallthru
          _
        // Predicated region
        $region37: #{_lambda_.4} parent=11 // pred_check
          %p553 = pneg %p233
        $region38: #{_lambda_.4} parent=11 // pred_check_branch
          %555 = sbr.rel (%p553) target = $region40
        $region39: #{_lambda_.4} parent=11 // pred_region
          %557 = vsyncadd [#allocation12], 0
          %s559 = sshll.u32 %s8, 4
          %s560 = int_to_ptr.hbm [resolvable:$true] %s559
          %s561 = sshll.u32 [#allocation13], 4
          %s562 = int_to_ptr.vmem [resolvable:$true] %s561
          %564 = dma.hbm_to_vmem [thread:$0]  %s560, 64, %s562, [#allocation12]
        $region40: #{_lambda_.4} parent=11 // pred_fallthru
          _
        // Predicated region
        $region41: #{_lambda_.4} parent=11 // pred_check
          %p565 = pneg %p254
        $region42: #{_lambda_.4} parent=11 // pred_check_branch
          %567 = sbr.rel (%p565) target = $region44
        $region43: #{_lambda_.4} parent=11 // pred_region
          %569 = vsyncadd [#allocation15], 0
          %s570 = sshll.u32 %s9, 4
          %s571 = int_to_ptr.hbm [resolvable:$true] %s570
          %s572 = sshll.u32 [#allocation14], 4
          %s573 = int_to_ptr.vmem [resolvable:$true] %s572
          %578 = dma.hbm_to_vmem [thread:$0]  %s571, 256, %s573, [#allocation15], 64, 64, 4
        $region44: #{_lambda_.4} parent=11 // pred_fallthru
          _
        // Predicated region
        $region45: #{_lambda_.4} parent=11 // pred_check
          %p579 = pneg %p275
        $region46: #{_lambda_.4} parent=11 // pred_check_branch
          %581 = sbr.rel (%p579) target = $region48
        $region47: #{_lambda_.4} parent=11 // pred_region
          %583 = vsyncadd [#allocation15], 0
          %s584 = sshll.u32 %s10, 4
          %s585 = int_to_ptr.hbm [resolvable:$true] %s584
          %s586 = sshll.u32 [#allocation16], 4
          %s587 = int_to_ptr.vmem [resolvable:$true] %s586
          %592 = dma.hbm_to_vmem [thread:$0]  %s585, 512, %s587, [#allocation15], 128, 128, 8
        $region48: #{_lambda_.4} parent=11 // pred_fallthru
          _
        // Predicated region
        $region49: #{_lambda_.4} parent=11 // pred_check
          %p593 = pneg %p296
        $region50: #{_lambda_.4} parent=11 // pred_check_branch
          %595 = sbr.rel (%p593) target = $region52
        $region51: #{_lambda_.4} parent=11 // pred_region
          %597 = vsyncadd [#allocation18], 0
          %s598 = sshll.u32 %s11, 4
          %s599 = int_to_ptr.hbm [resolvable:$true] %s598
          %s600 = sshll.u32 [#allocation17], 4
          %s601 = int_to_ptr.vmem [resolvable:$true] %s600
          %606 = dma.hbm_to_vmem [thread:$0]  %s599, 512, %s601, [#allocation18], 128, 128, 8
        $region52: #{_lambda_.4} parent=11 // pred_fallthru
          _
        // Predicated region
        $region53: #{_lambda_.4} parent=11 // pred_check
          %p607 = pneg %p317
        $region54: #{_lambda_.4} parent=11 // pred_check_branch
          %609 = sbr.rel (%p607) target = $region56
        $region55: #{_lambda_.4} parent=11 // pred_region
          %611 = vsyncadd [#allocation18], 0
          %s613 = sshll.u32 %s12, 4
          %s614 = int_to_ptr.hbm [resolvable:$true] %s613
          %s615 = sshll.u32 [#allocation19], 4
          %s616 = int_to_ptr.vmem [resolvable:$true] %s615
          %618 = dma.hbm_to_vmem [thread:$0]  %s614, 16, %s616, [#allocation18]
        $region56: #{_lambda_.4} parent=11 // pred_fallthru
          _
        // Predicated region
        $region57: #{_lambda_.4} parent=11 // pred_check
          %p619 = pneg %p338
        $region58: #{_lambda_.4} parent=11 // pred_check_branch
          %621 = sbr.rel (%p619) target = $region60
        $region59: #{_lambda_.4} parent=11 // pred_region
          %623 = vsyncadd [#allocation21], 0
          %s624 = sshll.u32 %s13, 4
          %s625 = int_to_ptr.hbm [resolvable:$true] %s624
          %s626 = sshll.u32 [#allocation20], 4
          %s627 = int_to_ptr.vmem [resolvable:$true] %s626
          %632 = dma.hbm_to_vmem [thread:$0]  %s625, 512, %s627, [#allocation21], 128, 128, 8
        $region60: #{_lambda_.4} parent=11 // pred_fallthru
          _
        // Predicated region
        $region61: #{_lambda_.4} parent=11 // pred_check
          %p633 = pneg %p359
        $region62: #{_lambda_.4} parent=11 // pred_check_branch
          %635 = sbr.rel (%p633) target = $region64
        $region63: #{_lambda_.4} parent=11 // pred_region
          %637 = vsyncadd [#allocation21], 0
          %s638 = sshll.u32 %s14, 4
          %s639 = int_to_ptr.hbm [resolvable:$true] %s638
          %s640 = sshll.u32 [#allocation22], 4
          %s641 = int_to_ptr.vmem [resolvable:$true] %s640
          %646 = dma.hbm_to_vmem [thread:$0]  %s639, 512, %s641, [#allocation21], 128, 128, 8
        $region64: #{_lambda_.4} parent=11 // pred_fallthru
          _
        // Predicated region
        $region65: #{_lambda_.4} parent=11 // pred_check
          %p647 = pneg %p380
        $region66: #{_lambda_.4} parent=11 // pred_check_branch
          %649 = sbr.rel (%p647) target = $region68
        $region67: #{_lambda_.4} parent=11 // pred_region
          %651 = vsyncadd [#allocation24], 0
          %s652 = sshll.u32 %s15, 4
          %s653 = int_to_ptr.hbm [resolvable:$true] %s652
          %s654 = sshll.u32 [#allocation23], 4
          %s655 = int_to_ptr.vmem [resolvable:$true] %s654
          %660 = dma.hbm_to_vmem [thread:$0]  %s653, 256, %s655, [#allocation24], 64, 64, 4
        $region68: #{_lambda_.4} parent=11 // pred_fallthru
          _
        // Predicated region
        $region69: #{_lambda_.4} parent=11 // pred_check
          %p661 = pneg %p401
        $region70: #{_lambda_.4} parent=11 // pred_check_branch
          %663 = sbr.rel (%p661) target = $region72
        $region71: #{_lambda_.4} parent=11 // pred_region
          %665 = vsyncadd [#allocation24], 0
          %s666 = sshll.u32 %s16, 4
          %s667 = int_to_ptr.hbm [resolvable:$true] %s666
          %s668 = sshll.u32 [#allocation25], 4
          %s669 = int_to_ptr.vmem [resolvable:$true] %s668
          %674 = dma.hbm_to_vmem [thread:$0]  %s667, 512, %s669, [#allocation24], 128, 128, 8
        $region72: #{_lambda_.4} parent=11 // pred_fallthru
          _
        // Predicated region
        $region73: #{_lambda_.4} parent=11 // pred_check
          %p675 = pneg %p422
        $region74: #{_lambda_.4} parent=11 // pred_check_branch
          %677 = sbr.rel (%p675) target = $region76
        $region75: #{_lambda_.4} parent=11 // pred_region
          %679 = vsyncadd [#allocation27], 0
          %s680 = sshll.u32 %s17, 4
          %s681 = int_to_ptr.hbm [resolvable:$true] %s680
          %s682 = sshll.u32 [#allocation26], 4
          %s683 = int_to_ptr.vmem [resolvable:$true] %s682
          %688 = dma.hbm_to_vmem [thread:$0]  %s681, 768, %s683, [#allocation27], 192, 192, 12
        $region76: #{_lambda_.4} parent=11 // pred_fallthru
          _
        // Predicated region
        $region77: #{_lambda_.4} parent=11 // pred_check
          %p689 = pneg %p443
        $region78: #{_lambda_.4} parent=11 // pred_check_branch
          %691 = sbr.rel (%p689) target = $region80
        $region79: #{_lambda_.4} parent=11 // pred_region
          %693 = vsyncadd [#allocation27], 0
          %s694 = sshll.u32 %s18, 4
          %s695 = int_to_ptr.hbm [resolvable:$true] %s694
          %s696 = sshll.u32 [#allocation28], 4
          %s697 = int_to_ptr.vmem [resolvable:$true] %s696
          %702 = dma.hbm_to_vmem [thread:$0]  %s695, 512, %s697, [#allocation27], 128, 128, 8
        $region80: #{_lambda_.4} parent=11 // pred_fallthru
          _
      $region12: #{_lambda_.4} parent=5 // pred_fallthru
        _
      %p703 = scmp.lt.s32.totalorder %s34, 2
      // Predicated region
      $region81: #{_lambda_.4} parent=5 // pred_check
        %p704 = pneg %p703
      $region82: #{_lambda_.4} parent=5 // pred_check_branch
        %706 = sbr.rel (%p704) target = $region84
      $region83: #{_lambda_.4} parent=5 // pred_region
        // Predicated region
        $region85: #{_lambda_.4} parent=83 // pred_check
          %p707 = pneg %p54
        $region86: #{_lambda_.4} parent=83 // pred_check_branch
          %709 = sbr.rel (%p707) target = $region88
        $region87: #{_lambda_.4} parent=83 // pred_region
          %p710 = scmp.lt.s32.totalorder %s34, 1
          %s711 = scalar_select %p710, %s34, 1
          %s712 = smul.addr %s711, 8
          %s713 = smul.addr %s712, 8
          %s714 = scalar_lea.vmem %s0, %s713
        $region88: #{_lambda_.4} parent=83 // pred_fallthru
          _
        // Predicated region
        $region89: #{_lambda_.4} parent=83 // pred_check
          %p715 = pneg %p80
        $region90: #{_lambda_.4} parent=83 // pred_check_branch
          %717 = sbr.rel (%p715) target = $region92
        $region91: #{_lambda_.4} parent=83 // pred_region
          %p718 = scmp.lt.s32.totalorder %s34, 1
          %s719 = scalar_select %p718, %s34, 1
          %s720 = smul.addr %s719, 8
          %s721 = smul.addr %s720, 8
          %s722 = scalar_lea.vmem %s1, %s721
        $region92: #{_lambda_.4} parent=83 // pred_fallthru
          _
      $region84: #{_lambda_.4} parent=5 // pred_fallthru
        _
      %p723 = scmp.le.s32.totalorder 1, %s34
      %p724 = scmp.lt.s32.totalorder %s34, 3
      %p725 = pnand %p723, %p724
      %p726 = pneg %p725
      // Predicated region
      $region93: #{_lambda_.4} parent=5 // pred_check
        _
      $region94: #{_lambda_.4} parent=5 // pred_check_branch
        %728 = sbr.rel (%p725) target = $region96
      $region95: #{_lambda_.4} parent=5 // pred_region
        %s729 = ssub.s32 %s34, 1
        // Predicated region
        $region97: #{_lambda_.4} parent=95 // pred_check
          %p730 = pneg %p107
        $region98: #{_lambda_.4} parent=95 // pred_check_branch
          %732 = sbr.rel (%p730) target = $region100
        $region99: #{_lambda_.4} parent=95 // pred_region
          %734 = dma.done [#allocation6], 16
        $region100: #{_lambda_.4} parent=95 // pred_fallthru
          _
        // Predicated region
        $region101: #{_lambda_.4} parent=95 // pred_check
          %p735 = pneg %p149
        $region102: #{_lambda_.4} parent=95 // pred_check_branch
          %737 = sbr.rel (%p735) target = $region104
        $region103: #{_lambda_.4} parent=95 // pred_region
          %739 = dma.done [#allocation5], 768
        $region104: #{_lambda_.4} parent=95 // pred_fallthru
          _
        // Predicated region
        $region105: #{_lambda_.4} parent=95 // pred_check
          %p740 = pneg %p170
        $region106: #{_lambda_.4} parent=95 // pred_check_branch
          %742 = sbr.rel (%p740) target = $region108
        $region107: #{_lambda_.4} parent=95 // pred_region
          %744 = dma.done [#allocation9], 512
        $region108: #{_lambda_.4} parent=95 // pred_fallthru
          _
        // Predicated region
        $region109: #{_lambda_.4} parent=95 // pred_check
          %p745 = pneg %p191
        $region110: #{_lambda_.4} parent=95 // pred_check_branch
          %747 = sbr.rel (%p745) target = $region112
        $region111: #{_lambda_.4} parent=95 // pred_region
          %749 = dma.done [#allocation9], 512
        $region112: #{_lambda_.4} parent=95 // pred_fallthru
          _
        // Predicated region
        $region113: #{_lambda_.4} parent=95 // pred_check
          %p750 = pneg %p212
        $region114: #{_lambda_.4} parent=95 // pred_check_branch
          %752 = sbr.rel (%p750) target = $region116
        $region115: #{_lambda_.4} parent=95 // pred_region
          %754 = dma.done [#allocation12], 512
        $region116: #{_lambda_.4} parent=95 // pred_fallthru
          _
        // Predicated region
        $region117: #{_lambda_.4} parent=95 // pred_check
          %p755 = pneg %p233
        $region118: #{_lambda_.4} parent=95 // pred_check_branch
          %757 = sbr.rel (%p755) target = $region120
        $region119: #{_lambda_.4} parent=95 // pred_region
          %759 = dma.done [#allocation12], 64
        $region120: #{_lambda_.4} parent=95 // pred_fallthru
          _
        // Predicated region
        $region121: #{_lambda_.4} parent=95 // pred_check
          %p760 = pneg %p254
        $region122: #{_lambda_.4} parent=95 // pred_check_branch
          %762 = sbr.rel (%p760) target = $region124
        $region123: #{_lambda_.4} parent=95 // pred_region
          %764 = dma.done [#allocation15], 256
        $region124: #{_lambda_.4} parent=95 // pred_fallthru
          _
        // Predicated region
        $region125: #{_lambda_.4} parent=95 // pred_check
          %p765 = pneg %p275
        $region126: #{_lambda_.4} parent=95 // pred_check_branch
          %767 = sbr.rel (%p765) target = $region128
        $region127: #{_lambda_.4} parent=95 // pred_region
          %769 = dma.done [#allocation15], 512
        $region128: #{_lambda_.4} parent=95 // pred_fallthru
          _
        // Predicated region
        $region129: #{_lambda_.4} parent=95 // pred_check
          %p770 = pneg %p296
        $region130: #{_lambda_.4} parent=95 // pred_check_branch
          %772 = sbr.rel (%p770) target = $region132
        $region131: #{_lambda_.4} parent=95 // pred_region
          %774 = dma.done [#allocation18], 512
        $region132: #{_lambda_.4} parent=95 // pred_fallthru
          _
        // Predicated region
        $region133: #{_lambda_.4} parent=95 // pred_check
          %p775 = pneg %p317
        $region134: #{_lambda_.4} parent=95 // pred_check_branch
          %777 = sbr.rel (%p775) target = $region136
        $region135: #{_lambda_.4} parent=95 // pred_region
          %779 = dma.done [#allocation18], 16
        $region136: #{_lambda_.4} parent=95 // pred_fallthru
          _
        // Predicated region
        $region137: #{_lambda_.4} parent=95 // pred_check
          %p780 = pneg %p338
        $region138: #{_lambda_.4} parent=95 // pred_check_branch
          %782 = sbr.rel (%p780) target = $region140
        $region139: #{_lambda_.4} parent=95 // pred_region
          %784 = dma.done [#allocation21], 512
        $region140: #{_lambda_.4} parent=95 // pred_fallthru
          _
        // Predicated region
        $region141: #{_lambda_.4} parent=95 // pred_check
          %p785 = pneg %p359
        $region142: #{_lambda_.4} parent=95 // pred_check_branch
          %787 = sbr.rel (%p785) target = $region144
        $region143: #{_lambda_.4} parent=95 // pred_region
          %789 = dma.done [#allocation21], 512
        $region144: #{_lambda_.4} parent=95 // pred_fallthru
          _
        // Predicated region
        $region145: #{_lambda_.4} parent=95 // pred_check
          %p790 = pneg %p380
        $region146: #{_lambda_.4} parent=95 // pred_check_branch
          %792 = sbr.rel (%p790) target = $region148
        $region147: #{_lambda_.4} parent=95 // pred_region
          %794 = dma.done [#allocation24], 256
        $region148: #{_lambda_.4} parent=95 // pred_fallthru
          _
        // Predicated region
        $region149: #{_lambda_.4} parent=95 // pred_check
          %p795 = pneg %p401
        $region150: #{_lambda_.4} parent=95 // pred_check_branch
          %797 = sbr.rel (%p795) target = $region152
        $region151: #{_lambda_.4} parent=95 // pred_region
          %799 = dma.done [#allocation24], 512
        $region152: #{_lambda_.4} parent=95 // pred_fallthru
          _
        // Predicated region
        $region153: #{_lambda_.4} parent=95 // pred_check
          %p800 = pneg %p422
        $region154: #{_lambda_.4} parent=95 // pred_check_branch
          %802 = sbr.rel (%p800) target = $region156
        $region155: #{_lambda_.4} parent=95 // pred_region
          %804 = dma.done [#allocation27], 768
        $region156: #{_lambda_.4} parent=95 // pred_fallthru
          _
        // Predicated region
        $region157: #{_lambda_.4} parent=95 // pred_check
          %p805 = pneg %p443
        $region158: #{_lambda_.4} parent=95 // pred_check_branch
          %807 = sbr.rel (%p805) target = $region160
        $region159: #{_lambda_.4} parent=95 // pred_region
          %809 = dma.done [#allocation27], 512
        $region160: #{_lambda_.4} parent=95 // pred_fallthru
          _
        %810 = sfence
        %p811 = scmp.lt.s32.totalorder %s39, 1
        %s812 = scalar_select %p811, %s39, 1
        %s813 = smul.addr %s812, 8
        %s814 = smul.addr %s813, 8
        %s815 = scalar_lea.vmem %s0, %s814
        %p816 = pneg %p60
        %p817 = pneg %p57
        %p818 = scmp.lt.s32.totalorder %s39, 1
        %s819 = scalar_select %p818, %s39, 1
        %s820 = smul.addr %s819, 8
        %s821 = smul.addr %s820, 8
        %s822 = scalar_lea.vmem %s1, %s821
        %p823 = pneg %p86
        %p824 = pneg %p83
        %p825 = pneg %p107
        %p826 = pneg %p104
        %p827 = pneg %p128
        %p828 = pneg %p125
        %p829 = pneg %p149
        %p830 = pneg %p146
        %p831 = pneg %p170
        %p832 = pneg %p167
        %p833 = pneg %p191
        %p834 = pneg %p188
        %p835 = pneg %p212
        %p836 = pneg %p209
        %p837 = pneg %p233
        %p838 = pneg %p230
        %p839 = pneg %p254
        %p840 = pneg %p251
        %p841 = pneg %p275
        %p842 = pneg %p272
        %p843 = pneg %p296
        %p844 = pneg %p293
        %p845 = pneg %p317
        %p846 = pneg %p314
        %p847 = pneg %p338
        %p848 = pneg %p335
        %p849 = pneg %p359
        %p850 = pneg %p356
        %p851 = pneg %p380
        %p852 = pneg %p377
        %p853 = pneg %p401
        %p854 = pneg %p398
        %p855 = pneg %p422
        %p856 = pneg %p419
        %p857 = pneg %p443
        %p858 = pneg %p440
        %p859 = pneg %p469
        %p860 = pneg %p466
        %p861 = scmp.lt.s32.totalorder %s39, 1
        %s862 = scalar_select %p861, %s39, 1
        %s863 = smul.addr %s862, 8
        %s864 = smul.addr %s863, 8
        %s865 = scalar_lea.vmem %s19, %s864
        %p866 = scmp.lt.s32.totalorder %s39, 1
        %s867 = scalar_select %p866, %s39, 1
        %s868 = smul.addr %s867, 8
        %s869 = smul.addr %s868, 8
        %s870 = scalar_lea.vmem %s0, %s869
        %p871 = scmp.lt.s32.totalorder %s39, 1
        %s872 = scalar_select %p871, %s39, 1
        %s873 = smul.addr %s872, 8
        %s874 = smul.addr %s873, 8
        %s875 = scalar_lea.vmem %s1, %s874
        %p876 = scmp.lt.s32.totalorder %s39, 1
        %s877 = scalar_select %p876, %s39, 1
        %s878 = smul.addr %s877, 8
        %s879 = smul.addr %s878, 8
        %s880 = scalar_lea.vmem %s19, %s879
        %v882 = vld [vmem:[%s870] sm:$0xff]
        %v883 = vld [vmem:[%s870 + $0x8] sm:$0xff]
        %v884 = vld [vmem:[%s870 + $0x10] sm:$0xff]
        %v885 = vld [vmem:[%s870 + $0x18] sm:$0xff]
        %v886 = vld [vmem:[%s870 + $0x20] sm:$0xff]
        %v887 = vld [vmem:[%s870 + $0x28] sm:$0xff]
        %v888 = vld [vmem:[%s870 + $0x30] sm:$0xff]
        %v889 = vld [vmem:[%s870 + $0x38] sm:$0xff]
        %890 = vst [vmem:[#allocation2] sm:$0xff] 0.0
        %891 = vst [vmem:[#allocation2 + $0x8] sm:$0xff] 0.0
        %892 = vst [vmem:[#allocation2 + $0x10] sm:$0xff] 0.0
        %vm893 = vcmask 138240
        %894 = vst.msk [vmem:[#allocation2 + $0x18] sm:$0xff] %vm893, 0.0
        %895 = vst [vmem:[#allocation2 + $0x20] sm:$0xff] 0.0
        %896 = vst [vmem:[#allocation2 + $0x28] sm:$0xff] 0.0
        %897 = vst [vmem:[#allocation2 + $0x30] sm:$0xff] 0.0
        %898 = vst.msk [vmem:[#allocation2 + $0x38] sm:$0xff] %vm893, 0.0
        %899 = vst [vmem:[#allocation2 + $0x40] sm:$0xff] 0.0
        %900 = vst [vmem:[#allocation2 + $0x48] sm:$0xff] 0.0
        %901 = vst [vmem:[#allocation2 + $0x50] sm:$0xff] 0.0
        %902 = vst.msk [vmem:[#allocation2 + $0x58] sm:$0xff] %vm893, 0.0
        %903 = vst [vmem:[#allocation2 + $0x60] sm:$0xff] 0.0
        %904 = vst [vmem:[#allocation2 + $0x68] sm:$0xff] 0.0
        %905 = vst [vmem:[#allocation2 + $0x70] sm:$0xff] 0.0
        %906 = vst.msk [vmem:[#allocation2 + $0x78] sm:$0xff] %vm893, 0.0
        %907 = vst [vmem:[#allocation2 + $0x80] sm:$0x3] 0.0
        %908 = vst [vmem:[#allocation2 + $0x88] sm:$0x3] 0.0
        %909 = vst [vmem:[#allocation2 + $0x90] sm:$0x3] 0.0
        %vm910 = vcmask 132096
        %911 = vst.msk [vmem:[#allocation2 + $0x98] sm:$0x3] %vm910, 0.0
        %912 = vst [vmem:[#allocation2 + $0x8] sm:$0xff] %v882
        %913 = vst [vmem:[#allocation2 + $0x10] sm:$0xff] %v883
        %914 = vst [vmem:[#allocation2 + $0x28] sm:$0xff] %v884
        %915 = vst [vmem:[#allocation2 + $0x30] sm:$0xff] %v885
        %916 = vst [vmem:[#allocation2 + $0x48] sm:$0xff] %v886
        %917 = vst [vmem:[#allocation2 + $0x50] sm:$0xff] %v887
        %918 = vst [vmem:[#allocation2 + $0x68] sm:$0xff] %v888
        %919 = vst [vmem:[#allocation2 + $0x70] sm:$0xff] %v889
        %v920 = vld [vmem:[#allocation2] sm:$0xff]
        %v921 = vld [vmem:[#allocation2 + $0x8] sm:$0xff]
        %v922 = vld [vmem:[#allocation2 + $0x10] sm:$0xff]
        %v923 = vld [vmem:[#allocation2 + $0x20] sm:$0xff]
        %v924 = vld [vmem:[#allocation2 + $0x28] sm:$0xff]
        %v925 = vld [vmem:[#allocation2 + $0x30] sm:$0xff]
        %v926 = vld [vmem:[#allocation2 + $0x40] sm:$0xff]
        %v927 = vld [vmem:[#allocation2 + $0x48] sm:$0xff]
        %v928 = vld [vmem:[#allocation2 + $0x50] sm:$0xff]
        %v929 = vld [vmem:[#allocation2 + $0x60] sm:$0xff]
        %v930 = vld [vmem:[#allocation2 + $0x68] sm:$0xff]
        %v931 = vld [vmem:[#allocation2 + $0x70] sm:$0xff]
        %v932 = vld [vmem:[%s3] ss:$4 sm:$0x3]
        %v934 = vperm.slane %v932, 0
        %v935 = vperm.slane %v932, 1
        %936 = vrot.lane.b32.xlu0 %v934, 111
        %v937 = vpop.permute.xlu0 %936
        %938 = vrot.lane.b32.xlu0 %v935, 111
        %v939 = vpop.permute.xlu0 %938
        %vm940 = vcmask 908288
        %v941 = vsel %vm940, %v937, %v939
        %v945 = vmul.f32 %v920, %v937
        %v946 = vmul.f32 %v921, %v941
        %v947 = vmul.f32 %v922, %v939
        %v948 = vmul.f32 %v923, %v937
        %v949 = vmul.f32 %v924, %v941
        %v950 = vmul.f32 %v925, %v939
        %v951 = vmul.f32 %v926, %v937
        %v952 = vmul.f32 %v927, %v941
        %v953 = vmul.f32 %v928, %v939
        %v954 = vmul.f32 %v929, %v937
        %v955 = vmul.f32 %v930, %v941
        %v956 = vmul.f32 %v931, %v939
        %v957 = vpack.c.bf16 %v946, %v945
        %v958 = vpack.c.bf16 %v947, %v947
        %v959 = vpack.c.bf16 %v949, %v948
        %v960 = vpack.c.bf16 %v950, %v950
        %v961 = vpack.c.bf16 %v952, %v951
        %v962 = vpack.c.bf16 %v953, %v953
        %v963 = vpack.c.bf16 %v955, %v954
        %v964 = vpack.c.bf16 %v956, %v956
        %973 = vrot.lane.b32.xlu0 %v957, 17
        %v974 = vpop.permute.xlu0 %973
        %975 = vrot.lane.b32.xlu0 %v958, 17
        %v976 = vpop.permute.xlu0 %975
        %977 = vrot.lane.b32.xlu0 %v959, 17
        %v978 = vpop.permute.xlu0 %977
        %979 = vrot.lane.b32.xlu0 %v960, 17
        %v980 = vpop.permute.xlu0 %979
        %981 = vrot.lane.b32.xlu0 %v961, 17
        %v982 = vpop.permute.xlu0 %981
        %983 = vrot.lane.b32.xlu0 %v962, 17
        %v984 = vpop.permute.xlu0 %983
        %985 = vrot.lane.b32.xlu0 %v963, 17
        %v986 = vpop.permute.xlu0 %985
        %987 = vrot.lane.b32.xlu0 %v964, 17
        %v988 = vpop.permute.xlu0 %987
        %v989 = vrot.slane %v974, 4
        %v990 = vrot.slane %v976, 4
        %v991 = vrot.slane %v978, 4
        %v992 = vrot.slane %v980, 4
        %v993 = vrot.slane %v982, 4
        %v994 = vrot.slane %v984, 4
        %v995 = vrot.slane %v986, 4
        %v996 = vrot.slane %v988, 4
        %vm997 = vcmask 1043456
        %v998 = vsel %vm997, %v989, %v990
        %vm999 = vcmask 138240
        %v1000 = vsel %vm999, %v974, %v998
        %v1001 = vsel %vm997, %v991, %v992
        %v1002 = vsel %vm999, %v978, %v1001
        %v1003 = vsel %vm997, %v993, %v994
        %v1004 = vsel %vm999, %v982, %v1003
        %v1005 = vsel %vm997, %v995, %v996
        %v1006 = vsel %vm999, %v986, %v1005
        %1011 = vst [vmem:[#allocation3] sm:$0xff] %v1000
        %1012 = vst [vmem:[#allocation3 + $0x8] sm:$0xff] %v1002
        %1013 = vst [vmem:[#allocation3 + $0x10] sm:$0xff] %v1004
        %1014 = vst [vmem:[#allocation3 + $0x18] sm:$0xff] %v1006
        %v1015 = vld [vmem:[#allocation2] sm:$0xff]
        %v1016 = vld [vmem:[#allocation2 + $0x8] sm:$0xff]
        %v1017 = vld [vmem:[#allocation2 + $0x10] sm:$0xff]
        %v1018 = vld [vmem:[#allocation2 + $0x20] sm:$0xff]
        %v1019 = vld [vmem:[#allocation2 + $0x28] sm:$0xff]
        %v1020 = vld [vmem:[#allocation2 + $0x30] sm:$0xff]
        %v1021 = vld [vmem:[#allocation2 + $0x40] sm:$0xff]
        %v1022 = vld [vmem:[#allocation2 + $0x48] sm:$0xff]
        %v1023 = vld [vmem:[#allocation2 + $0x50] sm:$0xff]
        %v1024 = vld [vmem:[#allocation2 + $0x60] sm:$0xff]
        %v1025 = vld [vmem:[#allocation2 + $0x68] sm:$0xff]
        %v1026 = vld [vmem:[#allocation2 + $0x70] sm:$0xff]
        %v1027 = vpack.c.bf16 %v1016, %v1015
        %v1028 = vpack.c.bf16 %v1017, %v1017
        %v1029 = vpack.c.bf16 %v1019, %v1018
        %v1030 = vpack.c.bf16 %v1020, %v1020
        %v1031 = vpack.c.bf16 %v1022, %v1021
        %v1032 = vpack.c.bf16 %v1023, %v1023
        %v1033 = vpack.c.bf16 %v1025, %v1024
        %v1034 = vpack.c.bf16 %v1026, %v1026
        %1043 = vrot.lane.b32.xlu0 %v1027, 16
        %v1044 = vpop.permute.xlu0 %1043
        %1045 = vrot.lane.b32.xlu0 %v1028, 16
        %v1046 = vpop.permute.xlu0 %1045
        %1047 = vrot.lane.b32.xlu0 %v1029, 16
        %v1048 = vpop.permute.xlu0 %1047
        %1049 = vrot.lane.b32.xlu0 %v1030, 16
        %v1050 = vpop.permute.xlu0 %1049
        %1051 = vrot.lane.b32.xlu0 %v1031, 16
        %v1052 = vpop.permute.xlu0 %1051
        %1053 = vrot.lane.b32.xlu0 %v1032, 16
        %v1054 = vpop.permute.xlu0 %1053
        %1055 = vrot.lane.b32.xlu0 %v1033, 16
        %v1056 = vpop.permute.xlu0 %1055
        %1057 = vrot.lane.b32.xlu0 %v1034, 16
        %v1058 = vpop.permute.xlu0 %1057
        %v1059 = vrot.slane %v1044, 4
        %v1060 = vrot.slane %v1046, 4
        %v1061 = vrot.slane %v1048, 4
        %v1062 = vrot.slane %v1050, 4
        %v1063 = vrot.slane %v1052, 4
        %v1064 = vrot.slane %v1054, 4
        %v1065 = vrot.slane %v1056, 4
        %v1066 = vrot.slane %v1058, 4
        %v1067 = vsel %vm997, %v1059, %v1060
        %vm1068 = vcmask 130048
        %v1069 = vsel %vm1068, %v1044, %v1067
        %v1070 = vsel %vm997, %v1061, %v1062
        %v1071 = vsel %vm1068, %v1048, %v1070
        %v1072 = vsel %vm997, %v1063, %v1064
        %v1073 = vsel %vm1068, %v1052, %v1072
        %v1074 = vsel %vm997, %v1065, %v1066
        %v1075 = vsel %vm1068, %v1056, %v1074
        %1080 = vst [vmem:[#allocation3 + $0x20] sm:$0xff] %v1069
        %1081 = vst [vmem:[#allocation3 + $0x28] sm:$0xff] %v1071
        %1082 = vst [vmem:[#allocation3 + $0x30] sm:$0xff] %v1073
        %1083 = vst [vmem:[#allocation3 + $0x38] sm:$0xff] %v1075
        %v1084 = vld [vmem:[#allocation2] sm:$0xff]
        %v1085 = vld [vmem:[#allocation2 + $0x8] sm:$0xff]
        %v1086 = vld [vmem:[#allocation2 + $0x10] sm:$0xff]
        %v1087 = vld [vmem:[#allocation2 + $0x20] sm:$0xff]
        %v1088 = vld [vmem:[#allocation2 + $0x28] sm:$0xff]
        %v1089 = vld [vmem:[#allocation2 + $0x30] sm:$0xff]
        %v1090 = vld [vmem:[#allocation2 + $0x40] sm:$0xff]
        %v1091 = vld [vmem:[#allocation2 + $0x48] sm:$0xff]
        %v1092 = vld [vmem:[#allocation2 + $0x50] sm:$0xff]
        %v1093 = vld [vmem:[#allocation2 + $0x60] sm:$0xff]
        %v1094 = vld [vmem:[#allocation2 + $0x68] sm:$0xff]
        %v1095 = vld [vmem:[#allocation2 + $0x70] sm:$0xff]
        %s1096 = scalar_lea.vmem %s3, 2
        %v1097 = vld [vmem:[%s1096] ss:$4 sm:$0x3]
        %v1099 = vperm.slane %v1097, 0
        %v1100 = vperm.slane %v1097, 1
        %1101 = vrot.lane.b32.xlu0 %v1099, 113
        %v1102 = vpop.permute.xlu0 %1101
        %1103 = vrot.lane.b32.xlu0 %v1100, 113
        %v1104 = vpop.permute.xlu0 %1103
        %vm1105 = vcmask 924672
        %v1106 = vsel %vm1105, %v1102, %v1104
        %v1110 = vmul.f32 %v1084, %v1102
        %v1111 = vmul.f32 %v1085, %v1106
        %v1112 = vmul.f32 %v1086, %v1104
        %v1113 = vmul.f32 %v1087, %v1102
        %v1114 = vmul.f32 %v1088, %v1106
        %v1115 = vmul.f32 %v1089, %v1104
        %v1116 = vmul.f32 %v1090, %v1102
        %v1117 = vmul.f32 %v1091, %v1106
        %v1118 = vmul.f32 %v1092, %v1104
        %v1119 = vmul.f32 %v1093, %v1102
        %v1120 = vmul.f32 %v1094, %v1106
        %v1121 = vmul.f32 %v1095, %v1104
        %v1122 = vpack.c.bf16 %v1111, %v1110
        %v1123 = vpack.c.bf16 %v1112, %v1112
        %v1124 = vpack.c.bf16 %v1114, %v1113
        %v1125 = vpack.c.bf16 %v1115, %v1115
        %v1126 = vpack.c.bf16 %v1117, %v1116
        %v1127 = vpack.c.bf16 %v1118, %v1118
        %v1128 = vpack.c.bf16 %v1120, %v1119
        %v1129 = vpack.c.bf16 %v1121, %v1121
        %1138 = vrot.lane.b32.xlu0 %v1122, 15
        %v1139 = vpop.permute.xlu0 %1138
        %1140 = vrot.lane.b32.xlu0 %v1123, 15
        %v1141 = vpop.permute.xlu0 %1140
        %1142 = vrot.lane.b32.xlu0 %v1124, 15
        %v1143 = vpop.permute.xlu0 %1142
        %1144 = vrot.lane.b32.xlu0 %v1125, 15
        %v1145 = vpop.permute.xlu0 %1144
        %1146 = vrot.lane.b32.xlu0 %v1126, 15
        %v1147 = vpop.permute.xlu0 %1146
        %1148 = vrot.lane.b32.xlu0 %v1127, 15
        %v1149 = vpop.permute.xlu0 %1148
        %1150 = vrot.lane.b32.xlu0 %v1128, 15
        %v1151 = vpop.permute.xlu0 %1150
        %1152 = vrot.lane.b32.xlu0 %v1129, 15
        %v1153 = vpop.permute.xlu0 %1152
        %v1154 = vrot.slane %v1139, 4
        %v1155 = vrot.slane %v1141, 4
        %v1156 = vrot.slane %v1143, 4
        %v1157 = vrot.slane %v1145, 4
        %v1158 = vrot.slane %v1147, 4
        %v1159 = vrot.slane %v1149, 4
        %v1160 = vrot.slane %v1151, 4
        %v1161 = vrot.slane %v1153, 4
        %v1162 = vsel %vm997, %v1154, %v1155
        %vm1163 = vcmask 121856
        %v1164 = vsel %vm1163, %v1139, %v1162
        %v1165 = vsel %vm997, %v1156, %v1157
        %v1166 = vsel %vm1163, %v1143, %v1165
        %v1167 = vsel %vm997, %v1158, %v1159
        %v1168 = vsel %vm1163, %v1147, %v1167
        %v1169 = vsel %vm997, %v1160, %v1161
        %v1170 = vsel %vm1163, %v1151, %v1169
        %1175 = vst [vmem:[#allocation3 + $0x40] sm:$0xff] %v1164
        %1176 = vst [vmem:[#allocation3 + $0x48] sm:$0xff] %v1166
        %1177 = vst [vmem:[#allocation3 + $0x50] sm:$0xff] %v1168
        %1178 = vst [vmem:[#allocation3 + $0x58] sm:$0xff] %v1170
        %v1179 = vld [vmem:[#allocation2] sm:$0xff]
        %v1180 = vld [vmem:[#allocation2 + $0x8] sm:$0xff]
        %v1181 = vld [vmem:[#allocation2 + $0x10] sm:$0xff]
        %v1182 = vld [vmem:[#allocation2 + $0x20] sm:$0xff]
        %v1183 = vld [vmem:[#allocation2 + $0x28] sm:$0xff]
        %v1184 = vld [vmem:[#allocation2 + $0x30] sm:$0xff]
        %v1185 = vld [vmem:[#allocation2 + $0x40] sm:$0xff]
        %v1186 = vld [vmem:[#allocation2 + $0x48] sm:$0xff]
        %v1187 = vld [vmem:[#allocation2 + $0x50] sm:$0xff]
        %v1188 = vld [vmem:[#allocation2 + $0x60] sm:$0xff]
        %v1189 = vld [vmem:[#allocation2 + $0x68] sm:$0xff]
        %v1190 = vld [vmem:[#allocation2 + $0x70] sm:$0xff]
        %v1191 = vld [vmem:[%s3] ss:$4 sm:$0x3]
        %v1193 = vperm.slane %v1191, 0
        %v1194 = vperm.slane %v1191, 1
        %1195 = vrot.lane.b32.xlu0 %v1193, 127
        %v1196 = vpop.permute.xlu0 %1195
        %1197 = vrot.lane.b32.xlu0 %v1194, 127
        %v1198 = vpop.permute.xlu0 %1197
        %vm1199 = vcmask 1039360
        %v1200 = vsel %vm1199, %v1196, %v1198
        %v1204 = vmul.f32 %v1179, %v1196
        %v1205 = vmul.f32 %v1180, %v1200
        %v1206 = vmul.f32 %v1181, %v1198
        %v1207 = vmul.f32 %v1182, %v1196
        %v1208 = vmul.f32 %v1183, %v1200
        %v1209 = vmul.f32 %v1184, %v1198
        %v1210 = vmul.f32 %v1185, %v1196
        %v1211 = vmul.f32 %v1186, %v1200
        %v1212 = vmul.f32 %v1187, %v1198
        %v1213 = vmul.f32 %v1188, %v1196
        %v1214 = vmul.f32 %v1189, %v1200
        %v1215 = vmul.f32 %v1190, %v1198
        %v1216 = vpack.c.bf16 %v1205, %v1204
        %v1217 = vpack.c.bf16 %v1206, %v1206
        %v1218 = vpack.c.bf16 %v1208, %v1207
        %v1219 = vpack.c.bf16 %v1209, %v1209
        %v1220 = vpack.c.bf16 %v1211, %v1210
        %v1221 = vpack.c.bf16 %v1212, %v1212
        %v1222 = vpack.c.bf16 %v1214, %v1213
        %v1223 = vpack.c.bf16 %v1215, %v1215
        %1232 = vrot.lane.b32.xlu0 %v1216, 1
        %v1233 = vpop.permute.xlu0 %1232
        %1234 = vrot.lane.b32.xlu0 %v1217, 1
        %v1235 = vpop.permute.xlu0 %1234
        %1236 = vrot.lane.b32.xlu0 %v1218, 1
        %v1237 = vpop.permute.xlu0 %1236
        %1238 = vrot.lane.b32.xlu0 %v1219, 1
        %v1239 = vpop.permute.xlu0 %1238
        %1240 = vrot.lane.b32.xlu0 %v1220, 1
        %v1241 = vpop.permute.xlu0 %1240
        %1242 = vrot.lane.b32.xlu0 %v1221, 1
        %v1243 = vpop.permute.xlu0 %1242
        %1244 = vrot.lane.b32.xlu0 %v1222, 1
        %v1245 = vpop.permute.xlu0 %1244
        %1246 = vrot.lane.b32.xlu0 %v1223, 1
        %v1247 = vpop.permute.xlu0 %1246
        %v1248 = vrot.slane %v1233, 4
        %v1249 = vrot.slane %v1235, 4
        %v1250 = vrot.slane %v1237, 4
        %v1251 = vrot.slane %v1239, 4
        %v1252 = vrot.slane %v1241, 4
        %v1253 = vrot.slane %v1243, 4
        %v1254 = vrot.slane %v1245, 4
        %v1255 = vrot.slane %v1247, 4
        %v1256 = vsel %vm997, %v1248, %v1249
        %vm1257 = vcmask 7168
        %v1258 = vsel %vm1257, %v1233, %v1256
        %v1259 = vsel %vm997, %v1250, %v1251
        %v1260 = vsel %vm1257, %v1237, %v1259
        %v1261 = vsel %vm997, %v1252, %v1253
        %v1262 = vsel %vm1257, %v1241, %v1261
        %v1263 = vsel %vm997, %v1254, %v1255
        %v1264 = vsel %vm1257, %v1245, %v1263
        %1269 = vst [vmem:[#allocation3 + $0x60] sm:$0xff] %v1258
        %1270 = vst [vmem:[#allocation3 + $0x68] sm:$0xff] %v1260
        %1271 = vst [vmem:[#allocation3 + $0x70] sm:$0xff] %v1262
        %1272 = vst [vmem:[#allocation3 + $0x78] sm:$0xff] %v1264
        %v1273 = vld [vmem:[#allocation2 + $0x8] sm:$0xff]
        %v1274 = vld [vmem:[#allocation2 + $0x10] sm:$0xff]
        %v1275 = vld [vmem:[#allocation2 + $0x28] sm:$0xff]
        %v1276 = vld [vmem:[#allocation2 + $0x30] sm:$0xff]
        %v1277 = vld [vmem:[#allocation2 + $0x48] sm:$0xff]
        %v1278 = vld [vmem:[#allocation2 + $0x50] sm:$0xff]
        %v1279 = vld [vmem:[#allocation2 + $0x68] sm:$0xff]
        %v1280 = vld [vmem:[#allocation2 + $0x70] sm:$0xff]
        %v1281 = vpack.c.bf16 %v1274, %v1273
        %v1282 = vpack.c.bf16 %v1276, %v1275
        %v1283 = vpack.c.bf16 %v1278, %v1277
        %v1284 = vpack.c.bf16 %v1280, %v1279
        %1285 = vst [vmem:[#allocation3 + $0x80] sm:$0xff] %v1281
        %1286 = vst [vmem:[#allocation3 + $0x88] sm:$0xff] %v1282
        %1287 = vst [vmem:[#allocation3 + $0x90] sm:$0xff] %v1283
        %1288 = vst [vmem:[#allocation3 + $0x98] sm:$0xff] %v1284
        %v1289 = vld [vmem:[#allocation2 + $0x8] sm:$0xff]
        %v1290 = vld [vmem:[#allocation2 + $0x10] sm:$0xff]
        %v1291 = vld [vmem:[#allocation2 + $0x18] sm:$0xff]
        %v1292 = vld [vmem:[#allocation2 + $0x28] sm:$0xff]
        %v1293 = vld [vmem:[#allocation2 + $0x30] sm:$0xff]
        %v1294 = vld [vmem:[#allocation2 + $0x38] sm:$0xff]
        %v1295 = vld [vmem:[#allocation2 + $0x48] sm:$0xff]
        %v1296 = vld [vmem:[#allocation2 + $0x50] sm:$0xff]
        %v1297 = vld [vmem:[#allocation2 + $0x58] sm:$0xff]
        %v1298 = vld [vmem:[#allocation2 + $0x68] sm:$0xff]
        %v1299 = vld [vmem:[#allocation2 + $0x70] sm:$0xff]
        %v1300 = vld [vmem:[#allocation2 + $0x78] sm:$0xff]
        %v1301 = vld [vmem:[%s1096] ss:$4 sm:$0x3]
        %v1303 = vperm.slane %v1301, 0
        %v1304 = vperm.slane %v1301, 1
        %1305 = vrot.lane.b32.xlu0 %v1303, 1
        %v1306 = vpop.permute.xlu0 %1305
        %1307 = vrot.lane.b32.xlu0 %v1304, 1
        %v1308 = vpop.permute.xlu0 %1307
        %vm1309 = vcmask 7168
        %v1310 = vsel %vm1309, %v1306, %v1308
        %v1314 = vmul.f32 %v1289, %v1306
        %v1315 = vmul.f32 %v1290, %v1310
        %v1316 = vmul.f32 %v1291, %v1308
        %v1317 = vmul.f32 %v1292, %v1306
        %v1318 = vmul.f32 %v1293, %v1310
        %v1319 = vmul.f32 %v1294, %v1308
        %v1320 = vmul.f32 %v1295, %v1306
        %v1321 = vmul.f32 %v1296, %v1310
        %v1322 = vmul.f32 %v1297, %v1308
        %v1323 = vmul.f32 %v1298, %v1306
        %v1324 = vmul.f32 %v1299, %v1310
        %v1325 = vmul.f32 %v1300, %v1308
        %v1326 = vpack.c.bf16 %v1315, %v1314
        %v1327 = vpack.c.bf16 %v1316, %v1316
        %v1328 = vpack.c.bf16 %v1318, %v1317
        %v1329 = vpack.c.bf16 %v1319, %v1319
        %v1330 = vpack.c.bf16 %v1321, %v1320
        %v1331 = vpack.c.bf16 %v1322, %v1322
        %v1332 = vpack.c.bf16 %v1324, %v1323
        %v1333 = vpack.c.bf16 %v1325, %v1325
        %1342 = vrot.lane.b32.xlu0 %v1326, 127
        %v1343 = vpop.permute.xlu0 %1342
        %1344 = vrot.lane.b32.xlu0 %v1327, 127
        %v1345 = vpop.permute.xlu0 %1344
        %1346 = vrot.lane.b32.xlu0 %v1328, 127
        %v1347 = vpop.permute.xlu0 %1346
        %1348 = vrot.lane.b32.xlu0 %v1329, 127
        %v1349 = vpop.permute.xlu0 %1348
        %1350 = vrot.lane.b32.xlu0 %v1330, 127
        %v1351 = vpop.permute.xlu0 %1350
        %1352 = vrot.lane.b32.xlu0 %v1331, 127
        %v1353 = vpop.permute.xlu0 %1352
        %1354 = vrot.lane.b32.xlu0 %v1332, 127
        %v1355 = vpop.permute.xlu0 %1354
        %1356 = vrot.lane.b32.xlu0 %v1333, 127
        %v1357 = vpop.permute.xlu0 %1356
        %v1358 = vrot.slane %v1343, 4
        %v1359 = vrot.slane %v1345, 4
        %v1360 = vrot.slane %v1347, 4
        %v1361 = vrot.slane %v1349, 4
        %v1362 = vrot.slane %v1351, 4
        %v1363 = vrot.slane %v1353, 4
        %v1364 = vrot.slane %v1355, 4
        %v1365 = vrot.slane %v1357, 4
        %v1366 = vsel %vm997, %v1358, %v1359
        %vm1367 = vcmask 1039360
        %v1368 = vsel %vm1367, %v1343, %v1366
        %v1369 = vsel %vm997, %v1360, %v1361
        %v1370 = vsel %vm1367, %v1347, %v1369
        %v1371 = vsel %vm997, %v1362, %v1363
        %v1372 = vsel %vm1367, %v1351, %v1371
        %v1373 = vsel %vm997, %v1364, %v1365
        %v1374 = vsel %vm1367, %v1355, %v1373
        %1379 = vst [vmem:[#allocation3 + $0xa0] sm:$0xff] %v1368
        %1380 = vst [vmem:[#allocation3 + $0xa8] sm:$0xff] %v1370
        %1381 = vst [vmem:[#allocation3 + $0xb0] sm:$0xff] %v1372
        %1382 = vst [vmem:[#allocation3 + $0xb8] sm:$0xff] %v1374
        %v1383 = vld [vmem:[#allocation2 + $0x8] sm:$0xff]
        %v1384 = vld [vmem:[#allocation2 + $0x10] sm:$0xff]
        %v1385 = vld [vmem:[#allocation2 + $0x18] sm:$0xff]
        %v1386 = vld [vmem:[#allocation2 + $0x28] sm:$0xff]
        %v1387 = vld [vmem:[#allocation2 + $0x30] sm:$0xff]
        %v1388 = vld [vmem:[#allocation2 + $0x38] sm:$0xff]
        %v1389 = vld [vmem:[#allocation2 + $0x48] sm:$0xff]
        %v1390 = vld [vmem:[#allocation2 + $0x50] sm:$0xff]
        %v1391 = vld [vmem:[#allocation2 + $0x58] sm:$0xff]
        %v1392 = vld [vmem:[#allocation2 + $0x68] sm:$0xff]
        %v1393 = vld [vmem:[#allocation2 + $0x70] sm:$0xff]
        %v1394 = vld [vmem:[#allocation2 + $0x78] sm:$0xff]
        %v1395 = vld [vmem:[%s3] ss:$4 sm:$0x3]
        %v1397 = vperm.slane %v1395, 0
        %v1398 = vperm.slane %v1395, 1
        %1399 = vrot.lane.b32.xlu0 %v1397, 15
        %v1400 = vpop.permute.xlu0 %1399
        %1401 = vrot.lane.b32.xlu0 %v1398, 15
        %v1402 = vpop.permute.xlu0 %1401
        %vm1403 = vcmask 121856
        %v1404 = vsel %vm1403, %v1400, %v1402
        %v1408 = vmul.f32 %v1383, %v1400
        %v1409 = vmul.f32 %v1384, %v1404
        %v1410 = vmul.f32 %v1385, %v1402
        %v1411 = vmul.f32 %v1386, %v1400
        %v1412 = vmul.f32 %v1387, %v1404
        %v1413 = vmul.f32 %v1388, %v1402
        %v1414 = vmul.f32 %v1389, %v1400
        %v1415 = vmul.f32 %v1390, %v1404
        %v1416 = vmul.f32 %v1391, %v1402
        %v1417 = vmul.f32 %v1392, %v1400
        %v1418 = vmul.f32 %v1393, %v1404
        %v1419 = vmul.f32 %v1394, %v1402
        %v1420 = vpack.c.bf16 %v1409, %v1408
        %v1421 = vpack.c.bf16 %v1410, %v1410
        %v1422 = vpack.c.bf16 %v1412, %v1411
        %v1423 = vpack.c.bf16 %v1413, %v1413
        %v1424 = vpack.c.bf16 %v1415, %v1414
        %v1425 = vpack.c.bf16 %v1416, %v1416
        %v1426 = vpack.c.bf16 %v1418, %v1417
        %v1427 = vpack.c.bf16 %v1419, %v1419
        %1436 = vrot.lane.b32.xlu0 %v1420, 113
        %v1437 = vpop.permute.xlu0 %1436
        %1438 = vrot.lane.b32.xlu0 %v1421, 113
        %v1439 = vpop.permute.xlu0 %1438
        %1440 = vrot.lane.b32.xlu0 %v1422, 113
        %v1441 = vpop.permute.xlu0 %1440
        %1442 = vrot.lane.b32.xlu0 %v1423, 113
        %v1443 = vpop.permute.xlu0 %1442
        %1444 = vrot.lane.b32.xlu0 %v1424, 113
        %v1445 = vpop.permute.xlu0 %1444
        %1446 = vrot.lane.b32.xlu0 %v1425, 113
        %v1447 = vpop.permute.xlu0 %1446
        %1448 = vrot.lane.b32.xlu0 %v1426, 113
        %v1449 = vpop.permute.xlu0 %1448
        %1450 = vrot.lane.b32.xlu0 %v1427, 113
        %v1451 = vpop.permute.xlu0 %1450
        %v1452 = vrot.slane %v1437, 4
        %v1453 = vrot.slane %v1439, 4
        %v1454 = vrot.slane %v1441, 4
        %v1455 = vrot.slane %v1443, 4
        %v1456 = vrot.slane %v1445, 4
        %v1457 = vrot.slane %v1447, 4
        %v1458 = vrot.slane %v1449, 4
        %v1459 = vrot.slane %v1451, 4
        %v1460 = vsel %vm997, %v1452, %v1453
        %vm1461 = vcmask 924672
        %v1462 = vsel %vm1461, %v1437, %v1460
        %v1463 = vsel %vm997, %v1454, %v1455
        %v1464 = vsel %vm1461, %v1441, %v1463
        %v1465 = vsel %vm997, %v1456, %v1457
        %v1466 = vsel %vm1461, %v1445, %v1465
        %v1467 = vsel %vm997, %v1458, %v1459
        %v1468 = vsel %vm1461, %v1449, %v1467
        %1473 = vst [vmem:[#allocation3 + $0xc0] sm:$0xff] %v1462
        %1474 = vst [vmem:[#allocation3 + $0xc8] sm:$0xff] %v1464
        %1475 = vst [vmem:[#allocation3 + $0xd0] sm:$0xff] %v1466
        %1476 = vst [vmem:[#allocation3 + $0xd8] sm:$0xff] %v1468
        %v1477 = vld [vmem:[#allocation2 + $0x8] sm:$0xff]
        %v1478 = vld [vmem:[#allocation2 + $0x10] sm:$0xff]
        %v1479 = vld [vmem:[#allocation2 + $0x18] sm:$0xff]
        %v1480 = vld [vmem:[#allocation2 + $0x28] sm:$0xff]
        %v1481 = vld [vmem:[#allocation2 + $0x30] sm:$0xff]
        %v1482 = vld [vmem:[#allocation2 + $0x38] sm:$0xff]
        %v1483 = vld [vmem:[#allocation2 + $0x48] sm:$0xff]
        %v1484 = vld [vmem:[#allocation2 + $0x50] sm:$0xff]
        %v1485 = vld [vmem:[#allocation2 + $0x58] sm:$0xff]
        %v1486 = vld [vmem:[#allocation2 + $0x68] sm:$0xff]
        %v1487 = vld [vmem:[#allocation2 + $0x70] sm:$0xff]
        %v1488 = vld [vmem:[#allocation2 + $0x78] sm:$0xff]
        %v1489 = vpack.c.bf16 %v1478, %v1477
        %v1490 = vpack.c.bf16 %v1479, %v1479
        %v1491 = vpack.c.bf16 %v1481, %v1480
        %v1492 = vpack.c.bf16 %v1482, %v1482
        %v1493 = vpack.c.bf16 %v1484, %v1483
        %v1494 = vpack.c.bf16 %v1485, %v1485
        %v1495 = vpack.c.bf16 %v1487, %v1486
        %v1496 = vpack.c.bf16 %v1488, %v1488
        %1505 = vrot.lane.b32.xlu0 %v1489, 112
        %v1506 = vpop.permute.xlu0 %1505
        %1507 = vrot.lane.b32.xlu0 %v1490, 112
        %v1508 = vpop.permute.xlu0 %1507
        %1509 = vrot.lane.b32.xlu0 %v1491, 112
        %v1510 = vpop.permute.xlu0 %1509
        %1511 = vrot.lane.b32.xlu0 %v1492, 112
        %v1512 = vpop.permute.xlu0 %1511
        %1513 = vrot.lane.b32.xlu0 %v1493, 112
        %v1514 = vpop.permute.xlu0 %1513
        %1515 = vrot.lane.b32.xlu0 %v1494, 112
        %v1516 = vpop.permute.xlu0 %1515
        %1517 = vrot.lane.b32.xlu0 %v1495, 112
        %v1518 = vpop.permute.xlu0 %1517
        %1519 = vrot.lane.b32.xlu0 %v1496, 112
        %v1520 = vpop.permute.xlu0 %1519
        %v1521 = vrot.slane %v1506, 4
        %v1522 = vrot.slane %v1508, 4
        %v1523 = vrot.slane %v1510, 4
        %v1524 = vrot.slane %v1512, 4
        %v1525 = vrot.slane %v1514, 4
        %v1526 = vrot.slane %v1516, 4
        %v1527 = vrot.slane %v1518, 4
        %v1528 = vrot.slane %v1520, 4
        %v1529 = vsel %vm997, %v1521, %v1522
        %vm1530 = vcmask 916480
        %v1531 = vsel %vm1530, %v1506, %v1529
        %v1532 = vsel %vm997, %v1523, %v1524
        %v1533 = vsel %vm1530, %v1510, %v1532
        %v1534 = vsel %vm997, %v1525, %v1526
        %v1535 = vsel %vm1530, %v1514, %v1534
        %v1536 = vsel %vm997, %v1527, %v1528
        %v1537 = vsel %vm1530, %v1518, %v1536
        %1542 = vst [vmem:[#allocation3 + $0xe0] sm:$0xff] %v1531
        %1543 = vst [vmem:[#allocation3 + $0xe8] sm:$0xff] %v1533
        %1544 = vst [vmem:[#allocation3 + $0xf0] sm:$0xff] %v1535
        %1545 = vst [vmem:[#allocation3 + $0xf8] sm:$0xff] %v1537
        %v1546 = vld [vmem:[#allocation2 + $0x8] sm:$0xff]
        %v1547 = vld [vmem:[#allocation2 + $0x10] sm:$0xff]
        %v1548 = vld [vmem:[#allocation2 + $0x18] sm:$0xff]
        %v1549 = vld [vmem:[#allocation2 + $0x28] sm:$0xff]
        %v1550 = vld [vmem:[#allocation2 + $0x30] sm:$0xff]
        %v1551 = vld [vmem:[#allocation2 + $0x38] sm:$0xff]
        %v1552 = vld [vmem:[#allocation2 + $0x48] sm:$0xff]
        %v1553 = vld [vmem:[#allocation2 + $0x50] sm:$0xff]
        %v1554 = vld [vmem:[#allocation2 + $0x58] sm:$0xff]
        %v1555 = vld [vmem:[#allocation2 + $0x68] sm:$0xff]
        %v1556 = vld [vmem:[#allocation2 + $0x70] sm:$0xff]
        %v1557 = vld [vmem:[#allocation2 + $0x78] sm:$0xff]
        %v1558 = vld [vmem:[%s1096] ss:$4 sm:$0x3]
        %v1560 = vperm.slane %v1558, 0
        %v1561 = vperm.slane %v1558, 1
        %1562 = vrot.lane.b32.xlu0 %v1560, 17
        %v1563 = vpop.permute.xlu0 %1562
        %1564 = vrot.lane.b32.xlu0 %v1561, 17
        %v1565 = vpop.permute.xlu0 %1564
        %v1566 = vsel %vm893, %v1563, %v1565
        %v1570 = vmul.f32 %v1546, %v1563
        %v1571 = vmul.f32 %v1547, %v1566
        %v1572 = vmul.f32 %v1548, %v1565
        %v1573 = vmul.f32 %v1549, %v1563
        %v1574 = vmul.f32 %v1550, %v1566
        %v1575 = vmul.f32 %v1551, %v1565
        %v1576 = vmul.f32 %v1552, %v1563
        %v1577 = vmul.f32 %v1553, %v1566
        %v1578 = vmul.f32 %v1554, %v1565
        %v1579 = vmul.f32 %v1555, %v1563
        %v1580 = vmul.f32 %v1556, %v1566
        %v1581 = vmul.f32 %v1557, %v1565
        %v1582 = vpack.c.bf16 %v1571, %v1570
        %v1583 = vpack.c.bf16 %v1572, %v1572
        %v1584 = vpack.c.bf16 %v1574, %v1573
        %v1585 = vpack.c.bf16 %v1575, %v1575
        %v1586 = vpack.c.bf16 %v1577, %v1576
        %v1587 = vpack.c.bf16 %v1578, %v1578
        %v1588 = vpack.c.bf16 %v1580, %v1579
        %v1589 = vpack.c.bf16 %v1581, %v1581
        %1598 = vrot.lane.b32.xlu0 %v1582, 111
        %v1599 = vpop.permute.xlu0 %1598
        %1600 = vrot.lane.b32.xlu0 %v1583, 111
        %v1601 = vpop.permute.xlu0 %1600
        %1602 = vrot.lane.b32.xlu0 %v1584, 111
        %v1603 = vpop.permute.xlu0 %1602
        %1604 = vrot.lane.b32.xlu0 %v1585, 111
        %v1605 = vpop.permute.xlu0 %1604
        %1606 = vrot.lane.b32.xlu0 %v1586, 111
        %v1607 = vpop.permute.xlu0 %1606
        %1608 = vrot.lane.b32.xlu0 %v1587, 111
        %v1609 = vpop.permute.xlu0 %1608
        %1610 = vrot.lane.b32.xlu0 %v1588, 111
        %v1611 = vpop.permute.xlu0 %1610
        %1612 = vrot.lane.b32.xlu0 %v1589, 111
        %v1613 = vpop.permute.xlu0 %1612
        %v1614 = vrot.slane %v1599, 4
        %v1615 = vrot.slane %v1601, 4
        %v1616 = vrot.slane %v1603, 4
        %v1617 = vrot.slane %v1605, 4
        %v1618 = vrot.slane %v1607, 4
        %v1619 = vrot.slane %v1609, 4
        %v1620 = vrot.slane %v1611, 4
        %v1621 = vrot.slane %v1613, 4
        %v1622 = vsel %vm997, %v1614, %v1615
        %vm1623 = vcmask 908288
        %v1624 = vsel %vm1623, %v1599, %v1622
        %v1625 = vsel %vm997, %v1616, %v1617
        %v1626 = vsel %vm1623, %v1603, %v1625
        %v1627 = vsel %vm997, %v1618, %v1619
        %v1628 = vsel %vm1623, %v1607, %v1627
        %v1629 = vsel %vm997, %v1620, %v1621
        %v1630 = vsel %vm1623, %v1611, %v1629
        %1635 = vst [vmem:[#allocation3 + $0x100] sm:$0xff] %v1624
        %1636 = vst [vmem:[#allocation3 + $0x108] sm:$0xff] %v1626
        %1637 = vst [vmem:[#allocation3 + $0x110] sm:$0xff] %v1628
        %1638 = vst [vmem:[#allocation3 + $0x118] sm:$0xff] %v1630
        %v1639 = vld [vmem:[#allocation7] sm:$0xff]
        %v1640 = vld [vmem:[#allocation7 + $0x8] sm:$0xf]
        %v1641 = vld [vmem:[#allocation7 + $0xc] sm:$0xff]
        %v1642 = vld [vmem:[#allocation7 + $0x14] sm:$0xf]
        %v1643 = vld [vmem:[#allocation7 + $0x18] sm:$0xff]
        %v1644 = vld [vmem:[#allocation7 + $0x20] sm:$0xf]
        %v1645 = vld [vmem:[#allocation7 + $0x24] sm:$0xff]
        %v1646 = vld [vmem:[#allocation7 + $0x2c] sm:$0xf]
        %v1647 = vld [vmem:[#allocation3] sm:$0xff]
        %v1648 = vld [vmem:[#allocation3 + $0x8] sm:$0xff]
        %v1649 = vld [vmem:[#allocation3 + $0x10] sm:$0xff]
        %v1650 = vld [vmem:[#allocation3 + $0x18] sm:$0xff]
        %v1651 = vld [vmem:[#allocation3 + $0x20] sm:$0xff]
        %v1652 = vld [vmem:[#allocation3 + $0x28] sm:$0xff]
        %v1653 = vld [vmem:[#allocation3 + $0x30] sm:$0xff]
        %v1654 = vld [vmem:[#allocation3 + $0x38] sm:$0xff]
        %v1655 = vld [vmem:[#allocation3 + $0x40] sm:$0xff]
        %v1656 = vld [vmem:[#allocation3 + $0x48] sm:$0xff]
        %v1657 = vld [vmem:[#allocation3 + $0x50] sm:$0xff]
        %v1658 = vld [vmem:[#allocation3 + $0x58] sm:$0xff]
        %v1659 = vld [vmem:[#allocation3 + $0x60] sm:$0xff]
        %v1660 = vld [vmem:[#allocation3 + $0x68] sm:$0xff]
        %v1661 = vld [vmem:[#allocation3 + $0x70] sm:$0xff]
        %v1662 = vld [vmem:[#allocation3 + $0x78] sm:$0xff]
        %v1663 = vld [vmem:[#allocation3 + $0x80] sm:$0xff]
        %v1664 = vld [vmem:[#allocation3 + $0x88] sm:$0xff]
        %v1665 = vld [vmem:[#allocation3 + $0x90] sm:$0xff]
        %v1666 = vld [vmem:[#allocation3 + $0x98] sm:$0xff]
        %v1667 = vld [vmem:[#allocation3 + $0xa0] sm:$0xff]
        %v1668 = vld [vmem:[#allocation3 + $0xa8] sm:$0xff]
        %v1669 = vld [vmem:[#allocation3 + $0xb0] sm:$0xff]
        %v1670 = vld [vmem:[#allocation3 + $0xb8] sm:$0xff]
        %v1671 = vld [vmem:[#allocation3 + $0xc0] sm:$0xff]
        %v1672 = vld [vmem:[#allocation3 + $0xc8] sm:$0xff]
        %v1673 = vld [vmem:[#allocation3 + $0xd0] sm:$0xff]
        %v1674 = vld [vmem:[#allocation3 + $0xd8] sm:$0xff]
        %v1675 = vld [vmem:[#allocation3 + $0xe0] sm:$0xff]
        %v1676 = vld [vmem:[#allocation3 + $0xe8] sm:$0xff]
        %v1677 = vld [vmem:[#allocation3 + $0xf0] sm:$0xff]
        %v1678 = vld [vmem:[#allocation3 + $0xf8] sm:$0xff]
        %v1679 = vld [vmem:[#allocation3 + $0x100] sm:$0xff]
        %v1680 = vld [vmem:[#allocation3 + $0x108] sm:$0xff]
        %v1681 = vld [vmem:[#allocation3 + $0x110] sm:$0xff]
        %v1682 = vld [vmem:[#allocation3 + $0x118] sm:$0xff]
        %v1683 = vld [vmem:[#allocation8] sm:$0xff]
        %v1684 = vld [vmem:[#allocation8 + $0x8] sm:$0xff]
        %v1685 = vld [vmem:[#allocation8 + $0x10] sm:$0xff]
        %v1686 = vld [vmem:[#allocation8 + $0x18] sm:$0xff]
        %1688 = vset.pattern.permute.xlu0 0
        %1689 = vperm.xlu0 %1688, %v1683
        %v1690 = vpop.permute.xlu0 %1689
        %1693 = vset.pattern.permute.xlu0 0
        %1694 = vperm.xlu0 %1693, %v1684
        %v1695 = vpop.permute.xlu0 %1694
        %1698 = vset.pattern.permute.xlu0 0
        %1699 = vperm.xlu0 %1698, %v1685
        %v1700 = vpop.permute.xlu0 %1699
        %1703 = vset.pattern.permute.xlu0 0
        %1704 = vperm.xlu0 %1703, %v1686
        %v1705 = vpop.permute.xlu0 %1704
        %v1715 = vunpack.c.l.b16 %v1639
        %v1716 = vunpack.c.h.b16 %v1639
        %v1717 = vunpack.c.l.b16 %v1640
        %v1718 = vunpack.c.l.b16 %v1641
        %v1719 = vunpack.c.h.b16 %v1641
        %v1720 = vunpack.c.l.b16 %v1642
        %v1721 = vunpack.c.l.b16 %v1643
        %v1722 = vunpack.c.h.b16 %v1643
        %v1723 = vunpack.c.l.b16 %v1644
        %v1724 = vunpack.c.l.b16 %v1645
        %v1725 = vunpack.c.h.b16 %v1645
        %v1726 = vunpack.c.l.b16 %v1646
        %v1727 = vpack.c.b16 %v1718, %v1715
        %v1728 = vpack.c.b16 %v1719, %v1716
        %v1729 = vpack.c.b16 %v1720, %v1717
        %v1730 = vpack.c.b16 %v1724, %v1721
        %v1731 = vpack.c.b16 %v1725, %v1722
        %v1732 = vpack.c.b16 %v1726, %v1723
        %v1773 = vunpack.c.l.b16 %v1647
        %v1774 = vunpack.c.h.b16 %v1647
        %v1775 = vunpack.c.l.b16 %v1648
        %v1776 = vunpack.c.h.b16 %v1648
        %v1777 = vunpack.c.l.b16 %v1649
        %v1778 = vunpack.c.h.b16 %v1649
        %v1779 = vunpack.c.l.b16 %v1650
        %v1780 = vunpack.c.h.b16 %v1650
        %v1781 = vunpack.c.l.b16 %v1651
        %v1782 = vunpack.c.h.b16 %v1651
        %v1783 = vunpack.c.l.b16 %v1652
        %v1784 = vunpack.c.h.b16 %v1652
        %v1785 = vunpack.c.l.b16 %v1653
        %v1786 = vunpack.c.h.b16 %v1653
        %v1787 = vunpack.c.l.b16 %v1654
        %v1788 = vunpack.c.h.b16 %v1654
        %v1789 = vunpack.c.l.b16 %v1655
        %v1790 = vunpack.c.h.b16 %v1655
        %v1791 = vunpack.c.l.b16 %v1656
        %v1792 = vunpack.c.h.b16 %v1656
        %v1793 = vunpack.c.l.b16 %v1657
        %v1794 = vunpack.c.h.b16 %v1657
        %v1795 = vunpack.c.l.b16 %v1658
        %v1796 = vunpack.c.h.b16 %v1658
        %v1797 = vunpack.c.l.b16 %v1659
        %v1798 = vunpack.c.h.b16 %v1659
        %v1799 = vunpack.c.l.b16 %v1660
        %v1800 = vunpack.c.h.b16 %v1660
        %v1801 = vunpack.c.l.b16 %v1661
        %v1802 = vunpack.c.h.b16 %v1661
        %v1803 = vunpack.c.l.b16 %v1662
        %v1804 = vunpack.c.h.b16 %v1662
        %v1805 = vunpack.c.l.b16 %v1663
        %v1806 = vunpack.c.h.b16 %v1663
        %v1807 = vunpack.c.l.b16 %v1664
        %v1808 = vunpack.c.h.b16 %v1664
        %v1809 = vunpack.c.l.b16 %v1665
        %v1810 = vunpack.c.h.b16 %v1665
        %v1811 = vunpack.c.l.b16 %v1666
        %v1812 = vunpack.c.h.b16 %v1666
        %v1813 = vunpack.c.l.b16 %v1667
        %v1814 = vunpack.c.h.b16 %v1667
        %v1815 = vunpack.c.l.b16 %v1668
        %v1816 = vunpack.c.h.b16 %v1668
        %v1817 = vunpack.c.l.b16 %v1669
        %v1818 = vunpack.c.h.b16 %v1669
        %v1819 = vunpack.c.l.b16 %v1670
        %v1820 = vunpack.c.h.b16 %v1670
        %v1821 = vunpack.c.l.b16 %v1671
        %v1822 = vunpack.c.h.b16 %v1671
        %v1823 = vunpack.c.l.b16 %v1672
        %v1824 = vunpack.c.h.b16 %v1672
        %v1825 = vunpack.c.l.b16 %v1673
        %v1826 = vunpack.c.h.b16 %v1673
        %v1827 = vunpack.c.l.b16 %v1674
        %v1828 = vunpack.c.h.b16 %v1674
        %v1829 = vunpack.c.l.b16 %v1675
        %v1830 = vunpack.c.h.b16 %v1675
        %v1831 = vunpack.c.l.b16 %v1676
        %v1832 = vunpack.c.h.b16 %v1676
        %v1833 = vunpack.c.l.b16 %v1677
        %v1834 = vunpack.c.h.b16 %v1677
        %v1835 = vunpack.c.l.b16 %v1678
        %v1836 = vunpack.c.h.b16 %v1678
        %v1837 = vunpack.c.l.b16 %v1679
        %v1838 = vunpack.c.h.b16 %v1679
        %v1839 = vunpack.c.l.b16 %v1680
        %v1840 = vunpack.c.h.b16 %v1680
        %v1841 = vunpack.c.l.b16 %v1681
        %v1842 = vunpack.c.h.b16 %v1681
        %v1843 = vunpack.c.l.b16 %v1682
        %v1844 = vunpack.c.h.b16 %v1682
        %v1845 = vpack.c.b16 %v1775, %v1773
        %v1846 = vpack.c.b16 %v1776, %v1774
        %v1847 = vpack.c.b16 %v1779, %v1777
        %v1848 = vpack.c.b16 %v1780, %v1778
        %v1849 = vpack.c.b16 %v1783, %v1781
        %v1850 = vpack.c.b16 %v1784, %v1782
        %v1851 = vpack.c.b16 %v1787, %v1785
        %v1852 = vpack.c.b16 %v1788, %v1786
        %v1853 = vpack.c.b16 %v1791, %v1789
        %v1854 = vpack.c.b16 %v1792, %v1790
        %v1855 = vpack.c.b16 %v1795, %v1793
        %v1856 = vpack.c.b16 %v1796, %v1794
        %v1857 = vpack.c.b16 %v1799, %v1797
        %v1858 = vpack.c.b16 %v1800, %v1798
        %v1859 = vpack.c.b16 %v1803, %v1801
        %v1860 = vpack.c.b16 %v1804, %v1802
        %v1861 = vpack.c.b16 %v1807, %v1805
        %v1862 = vpack.c.b16 %v1808, %v1806
        %v1863 = vpack.c.b16 %v1811, %v1809
        %v1864 = vpack.c.b16 %v1812, %v1810
        %v1865 = vpack.c.b16 %v1815, %v1813
        %v1866 = vpack.c.b16 %v1816, %v1814
        %v1867 = vpack.c.b16 %v1819, %v1817
        %v1868 = vpack.c.b16 %v1820, %v1818
        %v1869 = vpack.c.b16 %v1823, %v1821
        %v1870 = vpack.c.b16 %v1824, %v1822
        %v1871 = vpack.c.b16 %v1827, %v1825
        %v1872 = vpack.c.b16 %v1828, %v1826
        %v1873 = vpack.c.b16 %v1831, %v1829
        %v1874 = vpack.c.b16 %v1832, %v1830
        %v1875 = vpack.c.b16 %v1835, %v1833
        %v1876 = vpack.c.b16 %v1836, %v1834
        %v1877 = vpack.c.b16 %v1839, %v1837
        %v1878 = vpack.c.b16 %v1840, %v1838
        %v1879 = vpack.c.b16 %v1843, %v1841
        %v1880 = vpack.c.b16 %v1844, %v1842
        %vm1917 = vcmask 261120
        %v1919 = vsel %vm1917, %v1729, 0
        %v1922 = vsel %vm1917, %v1732, 0
        %1924 = vmatpush.bf16.msra.mxu0 %v1859
        %1925 = vmatpush.bf16.msra.mxu0 %v1857
        %1926 = vmatpush.bf16.msra.mxu0 %v1855
        %1927 = vmatpush.bf16.msra.mxu0 %v1853
        %1928 = vmatpush.bf16.msra.mxu0 %v1851
        %1929 = vmatpush.bf16.msra.mxu0 %v1849
        %1930 = vmatpush.bf16.msra.mxu0 %v1847
        %1931 = vmatpush.bf16.msra.mxu0 %v1845
        %1932 = vmatmul.bf16.gmra.mxu0 %v1727
        %v1933 = vpop.f32.mrf.mxu0
        %v1934 = vadd.f32 %v1690, %v1933
        %v1935 = vpop.f32.mrf.mxu0
        %v1936 = vadd.f32 %v1695, %v1935
        %1937 = vmatmul.bf16.gmra.mxu0 %v1730
        %v1938 = vpop.f32.mrf.mxu0
        %v1939 = vadd.f32 %v1700, %v1938
        %v1940 = vpop.f32.mrf.mxu0
        %v1941 = vadd.f32 %v1705, %v1940
        %1942 = vdwg.mxu0
        %1943 = vmatpush.bf16.msra.mxu0 %v1875
        %1944 = vmatpush.bf16.msra.mxu0 %v1873
        %1945 = vmatpush.bf16.msra.mxu0 %v1871
        %1946 = vmatpush.bf16.msra.mxu0 %v1869
        %1947 = vmatpush.bf16.msra.mxu0 %v1867
        %1948 = vmatpush.bf16.msra.mxu0 %v1865
        %1949 = vmatpush.bf16.msra.mxu0 %v1863
        %1950 = vmatpush.bf16.msra.mxu0 %v1861
        %1951 = vmatmul.bf16.gmra.mxu0 %v1728
        %v1952 = vpop.f32.mrf.mxu0
        %v1953 = vadd.f32 %v1934, %v1952
        %v1954 = vpop.f32.mrf.mxu0
        %v1955 = vadd.f32 %v1936, %v1954
        %1956 = vmatmul.bf16.gmra.mxu0 %v1731
        %v1957 = vpop.f32.mrf.mxu0
        %v1958 = vadd.f32 %v1939, %v1957
        %v1959 = vpop.f32.mrf.mxu0
        %v1960 = vadd.f32 %v1941, %v1959
        %1961 = vdwg.mxu0
        %1962 = vmatpush.bf16.msra.mxu0 0
        %1963 = vmatpush.bf16.msra.mxu0 0
        %1964 = vmatpush.bf16.msra.mxu0 0
        %1965 = vmatpush.bf16.msra.mxu0 0
        %1966 = vmatpush.bf16.msra.mxu0 0
        %1967 = vmatpush.bf16.msra.mxu0 0
        %1968 = vmatpush.bf16.msra.mxu0 %v1879
        %1969 = vmatpush.bf16.msra.mxu0 %v1877
        %1970 = vmatmul.bf16.gmra.mxu0 %v1919
        %v1971 = vpop.f32.mrf.mxu0
        %v1972 = vadd.f32 %v1953, %v1971
        %v1973 = vpop.f32.mrf.mxu0
        %v1974 = vadd.f32 %v1955, %v1973
        %1975 = vmatmul.bf16.gmra.mxu0 %v1922
        %v1976 = vpop.f32.mrf.mxu0
        %v1977 = vadd.f32 %v1958, %v1976
        %v1978 = vpop.f32.mrf.mxu0
        %v1979 = vadd.f32 %v1960, %v1978
        %1980 = vdwg.mxu0
        %1981 = vmatpush.bf16.msra.mxu0 %v1860
        %1982 = vmatpush.bf16.msra.mxu0 %v1858
        %1983 = vmatpush.bf16.msra.mxu0 %v1856
        %1984 = vmatpush.bf16.msra.mxu0 %v1854
        %1985 = vmatpush.bf16.msra.mxu0 %v1852
        %1986 = vmatpush.bf16.msra.mxu0 %v1850
        %1987 = vmatpush.bf16.msra.mxu0 %v1848
        %1988 = vmatpush.bf16.msra.mxu0 %v1846
        %1989 = vmatmul.bf16.gmra.mxu0 %v1727
        %v1990 = vpop.f32.mrf.mxu0
        %v1991 = vadd.f32 %v1690, %v1990
        %v1992 = vpop.f32.mrf.mxu0
        %v1993 = vadd.f32 %v1695, %v1992
        %1994 = vmatmul.bf16.gmra.mxu0 %v1730
        %v1995 = vpop.f32.mrf.mxu0
        %v1996 = vadd.f32 %v1700, %v1995
        %v1997 = vpop.f32.mrf.mxu0
        %v1998 = vadd.f32 %v1705, %v1997
        %1999 = vdwg.mxu0
        %2000 = vmatpush.bf16.msra.mxu0 %v1876
        %2001 = vmatpush.bf16.msra.mxu0 %v1874
        %2002 = vmatpush.bf16.msra.mxu0 %v1872
        %2003 = vmatpush.bf16.msra.mxu0 %v1870
        %2004 = vmatpush.bf16.msra.mxu0 %v1868
        %2005 = vmatpush.bf16.msra.mxu0 %v1866
        %2006 = vmatpush.bf16.msra.mxu0 %v1864
        %2007 = vmatpush.bf16.msra.mxu0 %v1862
        %2008 = vmatmul.bf16.gmra.mxu0 %v1728
        %v2009 = vpop.f32.mrf.mxu0
        %v2010 = vadd.f32 %v1991, %v2009
        %v2011 = vpop.f32.mrf.mxu0
        %v2012 = vadd.f32 %v1993, %v2011
        %2013 = vmatmul.bf16.gmra.mxu0 %v1731
        %v2014 = vpop.f32.mrf.mxu0
        %v2015 = vadd.f32 %v1996, %v2014
        %v2016 = vpop.f32.mrf.mxu0
        %v2017 = vadd.f32 %v1998, %v2016
        %2018 = vdwg.mxu0
        %2019 = vmatpush.bf16.msra.mxu0 0
        %2020 = vmatpush.bf16.msra.mxu0 0
        %2021 = vmatpush.bf16.msra.mxu0 0
        %2022 = vmatpush.bf16.msra.mxu0 0
        %2023 = vmatpush.bf16.msra.mxu0 0
        %2024 = vmatpush.bf16.msra.mxu0 0
        %2025 = vmatpush.bf16.msra.mxu0 %v1880
        %2026 = vmatpush.bf16.msra.mxu0 %v1878
        %2027 = vmatmul.bf16.gmra.mxu0 %v1919
        %v2028 = vpop.f32.mrf.mxu0
        %v2029 = vadd.f32 %v2010, %v2028
        %v2030 = vpop.f32.mrf.mxu0
        %v2031 = vadd.f32 %v2012, %v2030
        %2032 = vmatmul.bf16.gmra.mxu0 %v1922
        %v2033 = vpop.f32.mrf.mxu0
        %v2034 = vadd.f32 %v2015, %v2033
        %v2035 = vpop.f32.mrf.mxu0
        %v2036 = vadd.f32 %v2017, %v2035
        %2037 = vdwg.mxu0
        %v2038 = vadd.f32 %v1972, %v1974
        %v2039 = vadd.f32 %v2038, %v1977
        %v2040 = vadd.f32 %v2039, %v1979
        %v2041 = vrot.slane %v2040, 4
        %v2042 = vadd.f32 %v2040, %v2041
        %v2043 = vrot.slane %v2042, 2
        %v2044 = vadd.f32 %v2042, %v2043
        %v2045 = vrot.slane %v2044, 1
        %v2046 = vadd.f32 %v2044, %v2045
        %v2047 = vadd.f32 %v2029, %v2031
        %v2048 = vadd.f32 %v2047, %v2034
        %v2049 = vadd.f32 %v2048, %v2036
        %v2050 = vrot.slane %v2049, 4
        %v2051 = vadd.f32 %v2049, %v2050
        %v2052 = vrot.slane %v2051, 2
        %v2053 = vadd.f32 %v2051, %v2052
        %v2054 = vrot.slane %v2053, 1
        %v2055 = vadd.f32 %v2053, %v2054
        %v2056 = vrcp.pop 32.0
        %v2057 = vmul.f32 32.0, %v2056
        %v2058 = vsub.f32 1.0, %v2057
        %v2059 = vmul.f32 %v2056, %v2058
        %v2060 = vadd.f32 %v2056, %v2059
        %vm2061 = vweird.f32 %v2056
        %v2062 = vsel %vm2061, %v2056, %v2060
        %v2063 = vmul.f32 %v2046, %v2062
        %v2064 = vmul.f32 %v2055, %v2062
        %v2065 = vsub.f32 %v1972, %v2063
        %v2066 = vsub.f32 %v2029, %v2064
        %v2067 = vsub.f32 %v1974, %v2063
        %v2068 = vsub.f32 %v2031, %v2064
        %v2069 = vsub.f32 %v1977, %v2063
        %v2070 = vsub.f32 %v2034, %v2064
        %v2071 = vsub.f32 %v1979, %v2063
        %v2072 = vsub.f32 %v2036, %v2064
        %v2073 = vmul.f32 %v2065, %v2065
        %v2074 = vmul.f32 %v2066, %v2066
        %v2075 = vmul.f32 %v2067, %v2067
        %v2076 = vmul.f32 %v2068, %v2068
        %v2077 = vmul.f32 %v2069, %v2069
        %v2078 = vmul.f32 %v2070, %v2070
        %v2079 = vmul.f32 %v2071, %v2071
        %v2080 = vmul.f32 %v2072, %v2072
        %v2081 = vadd.f32 %v2073, %v2075
        %v2082 = vadd.f32 %v2081, %v2077
        %v2083 = vadd.f32 %v2082, %v2079
        %v2084 = vrot.slane %v2083, 4
        %v2085 = vadd.f32 %v2083, %v2084
        %v2086 = vrot.slane %v2085, 2
        %v2087 = vadd.f32 %v2085, %v2086
        %v2088 = vrot.slane %v2087, 1
        %v2089 = vadd.f32 %v2087, %v2088
        %v2090 = vadd.f32 %v2074, %v2076
        %v2091 = vadd.f32 %v2090, %v2078
        %v2092 = vadd.f32 %v2091, %v2080
        %v2093 = vrot.slane %v2092, 4
        %v2094 = vadd.f32 %v2092, %v2093
        %v2095 = vrot.slane %v2094, 2
        %v2096 = vadd.f32 %v2094, %v2095
        %v2097 = vrot.slane %v2096, 1
        %v2098 = vadd.f32 %v2096, %v2097
        %v2099 = vmul.f32 %v2089, %v2062
        %v2100 = vmul.f32 %v2098, %v2062
        %v2101 = vadd.f32 %v2099, 1e-05
        %v2102 = vadd.f32 %v2100, 1e-05
        %v2103 = vrsqrt.pop %v2101
        %v2104 = vmul.f32 %v2103, %v2101
        %v2105 = vmul.f32 %v2104, %v2103
        %v2106 = vmul.f32 0.5, %v2105
        %v2107 = vsub.f32 1.5, %v2106
        %v2108 = vmul.f32 %v2103, %v2107
        %vm2109 = vweird.f32 %v2101
        %vm2110 = vweird.f32 %v2103
        %vm2111 = vmor %vm2109, %vm2110
        %v2112 = vsel %vm2111, %v2103, %v2108
        %v2113 = vrsqrt.pop %v2102
        %v2114 = vmul.f32 %v2113, %v2102
        %v2115 = vmul.f32 %v2114, %v2113
        %v2116 = vmul.f32 0.5, %v2115
        %v2117 = vsub.f32 1.5, %v2116
        %v2118 = vmul.f32 %v2113, %v2117
        %vm2119 = vweird.f32 %v2102
        %vm2120 = vweird.f32 %v2113
        %vm2121 = vmor %vm2119, %vm2120
        %v2122 = vsel %vm2121, %v2113, %v2118
        %v2123 = vmul.f32 %v2065, %v2112
        %v2124 = vmul.f32 %v2066, %v2122
        %v2125 = vmul.f32 %v2067, %v2112
        %v2126 = vmul.f32 %v2068, %v2122
        %v2127 = vmul.f32 %v2069, %v2112
        %v2128 = vmul.f32 %v2070, %v2122
        %v2129 = vmul.f32 %v2071, %v2112
        %v2130 = vmul.f32 %v2072, %v2122
        %v2131 = vld [vmem:[#allocation10] sm:$0xff]
        %v2132 = vld [vmem:[#allocation10 + $0x8] sm:$0xff]
        %v2133 = vld [vmem:[#allocation10 + $0x10] sm:$0xff]
        %v2134 = vld [vmem:[#allocation10 + $0x18] sm:$0xff]
        %2136 = vset.pattern.permute.xlu0 0
        %2137 = vperm.xlu0 %2136, %v2131
        %v2138 = vpop.permute.xlu0 %2137
        %2141 = vset.pattern.permute.xlu0 0
        %2142 = vperm.xlu0 %2141, %v2132
        %v2143 = vpop.permute.xlu0 %2142
        %2146 = vset.pattern.permute.xlu0 0
        %2147 = vperm.xlu0 %2146, %v2133
        %v2148 = vpop.permute.xlu0 %2147
        %2151 = vset.pattern.permute.xlu0 0
        %2152 = vperm.xlu0 %2151, %v2134
        %v2153 = vpop.permute.xlu0 %2152
        %v2155 = vmul.f32 %v2123, %v2138
        %v2156 = vmul.f32 %v2124, %v2138
        %v2157 = vmul.f32 %v2125, %v2143
        %v2158 = vmul.f32 %v2126, %v2143
        %v2159 = vmul.f32 %v2127, %v2148
        %v2160 = vmul.f32 %v2128, %v2148
        %v2161 = vmul.f32 %v2129, %v2153
        %v2162 = vmul.f32 %v2130, %v2153
        %v2163 = vld [vmem:[#allocation11] sm:$0xff]
        %v2164 = vld [vmem:[#allocation11 + $0x8] sm:$0xff]
        %v2165 = vld [vmem:[#allocation11 + $0x10] sm:$0xff]
        %v2166 = vld [vmem:[#allocation11 + $0x18] sm:$0xff]
        %2168 = vset.pattern.permute.xlu0 0
        %2169 = vperm.xlu0 %2168, %v2163
        %v2170 = vpop.permute.xlu0 %2169
        %2173 = vset.pattern.permute.xlu0 0
        %2174 = vperm.xlu0 %2173, %v2164
        %v2175 = vpop.permute.xlu0 %2174
        %2178 = vset.pattern.permute.xlu0 0
        %2179 = vperm.xlu0 %2178, %v2165
        %v2180 = vpop.permute.xlu0 %2179
        %2183 = vset.pattern.permute.xlu0 0
        %2184 = vperm.xlu0 %2183, %v2166
        %v2185 = vpop.permute.xlu0 %2184
        %v2187 = vadd.f32 %v2155, %v2170
        %v2188 = vadd.f32 %v2156, %v2170
        %v2189 = vadd.f32 %v2157, %v2175
        %v2190 = vadd.f32 %v2158, %v2175
        %v2191 = vadd.f32 %v2159, %v2180
        %v2192 = vadd.f32 %v2160, %v2180
        %v2193 = vadd.f32 %v2161, %v2185
        %v2194 = vadd.f32 %v2162, %v2185
        %2195 = vst [vmem:[#allocation2] sm:$0xff] 0.0
        %2196 = vst [vmem:[#allocation2 + $0x8] sm:$0xff] 0.0
        %2197 = vst [vmem:[#allocation2 + $0x10] sm:$0xff] 0.0
        %2198 = vst.msk [vmem:[#allocation2 + $0x18] sm:$0xff] %vm893, 0.0
        %2199 = vst [vmem:[#allocation2 + $0x20] sm:$0xff] 0.0
        %2200 = vst [vmem:[#allocation2 + $0x28] sm:$0xff] 0.0
        %2201 = vst [vmem:[#allocation2 + $0x30] sm:$0xff] 0.0
        %2202 = vst.msk [vmem:[#allocation2 + $0x38] sm:$0xff] %vm893, 0.0
        %2203 = vst [vmem:[#allocation2 + $0x40] sm:$0xff] 0.0
        %2204 = vst [vmem:[#allocation2 + $0x48] sm:$0xff] 0.0
        %2205 = vst [vmem:[#allocation2 + $0x50] sm:$0xff] 0.0
        %2206 = vst.msk [vmem:[#allocation2 + $0x58] sm:$0xff] %vm893, 0.0
        %2207 = vst [vmem:[#allocation2 + $0x60] sm:$0xff] 0.0
        %2208 = vst [vmem:[#allocation2 + $0x68] sm:$0xff] 0.0
        %2209 = vst [vmem:[#allocation2 + $0x70] sm:$0xff] 0.0
        %2210 = vst.msk [vmem:[#allocation2 + $0x78] sm:$0xff] %vm893, 0.0
        %2211 = vst [vmem:[#allocation2 + $0x80] sm:$0x3] 0.0
        %2212 = vst [vmem:[#allocation2 + $0x88] sm:$0x3] 0.0
        %2213 = vst [vmem:[#allocation2 + $0x90] sm:$0x3] 0.0
        %2214 = vst.msk [vmem:[#allocation2 + $0x98] sm:$0x3] %vm910, 0.0
        %vm2223 = vcmask 1040384
        %v2224 = vrot.slane %v2187, 7
        %v2225 = vrot.slane %v2188, 7
        %v2226 = vrot.slane %v2189, 7
        %v2227 = vsel %vm2223, %v2224, %v2226
        %v2228 = vrot.slane %v2190, 7
        %v2229 = vsel %vm2223, %v2225, %v2228
        %v2230 = vrot.slane %v2191, 7
        %v2231 = vsel %vm2223, %v2226, %v2230
        %v2232 = vrot.slane %v2192, 7
        %v2233 = vsel %vm2223, %v2228, %v2232
        %v2234 = vrot.slane %v2193, 7
        %v2235 = vsel %vm2223, %v2230, %v2234
        %v2236 = vrot.slane %v2194, 7
        %v2237 = vsel %vm2223, %v2232, %v2236
        %2248 = vst [vmem:[#allocation2 + $0x8] sm:$0xfe] %v2224
        %2249 = vst [vmem:[#allocation2 + $0x10] sm:$0xfe] %v2225
        %2250 = vst [vmem:[#allocation2 + $0x28] sm:$0xff] %v2227
        %2251 = vst [vmem:[#allocation2 + $0x30] sm:$0xff] %v2229
        %2252 = vst [vmem:[#allocation2 + $0x48] sm:$0xff] %v2231
        %2253 = vst [vmem:[#allocation2 + $0x50] sm:$0xff] %v2233
        %2254 = vst [vmem:[#allocation2 + $0x68] sm:$0xff] %v2235
        %2255 = vst [vmem:[#allocation2 + $0x70] sm:$0xff] %v2237
        %2256 = vst [vmem:[#allocation2 + $0x88] sm:$0x1] %v2234
        %2257 = vst [vmem:[#allocation2 + $0x90] sm:$0x1] %v2236
        %s2258 = sld [smem:[#allocation4]]
        %v2259 = vld [vmem:[#allocation2] sm:$0xff]
        %v2260 = vld [vmem:[#allocation2 + $0x8] sm:$0xff]
        %v2261 = vld [vmem:[#allocation2 + $0x10] sm:$0xff]
        %v2262 = vld [vmem:[#allocation2 + $0x20] sm:$0xff]
        %v2263 = vld [vmem:[#allocation2 + $0x28] sm:$0xff]
        %v2264 = vld [vmem:[#allocation2 + $0x30] sm:$0xff]
        %v2265 = vld [vmem:[#allocation2 + $0x40] sm:$0xff]
        %v2266 = vld [vmem:[#allocation2 + $0x48] sm:$0xff]
        %v2267 = vld [vmem:[#allocation2 + $0x50] sm:$0xff]
        %v2268 = vld [vmem:[#allocation2 + $0x60] sm:$0xff]
        %v2269 = vld [vmem:[#allocation2 + $0x68] sm:$0xff]
        %v2270 = vld [vmem:[#allocation2 + $0x70] sm:$0xff]
        %v2271 = vstv %s2258
        %v2272 = vmul.f32 %v2271, %v2259
        %v2273 = vmul.f32 %v2271, %v2260
        %v2274 = vmul.f32 %v2271, %v2261
        %v2275 = vmul.f32 %v2271, %v2262
        %v2276 = vmul.f32 %v2271, %v2263
        %v2277 = vmul.f32 %v2271, %v2264
        %v2278 = vmul.f32 %v2271, %v2265
        %v2279 = vmul.f32 %v2271, %v2266
        %v2280 = vmul.f32 %v2271, %v2267
        %v2281 = vmul.f32 %v2271, %v2268
        %v2282 = vmul.f32 %v2271, %v2269
        %v2283 = vmul.f32 %v2271, %v2270
        %v2284 = vadd.f32 %v2272, 0.0
        %v2285 = vadd.f32 %v2273, 0.0
        %v2286 = vadd.f32 %v2274, 0.0
        %v2287 = vadd.f32 %v2275, 0.0
        %v2288 = vadd.f32 %v2276, 0.0
        %v2289 = vadd.f32 %v2277, 0.0
        %v2290 = vadd.f32 %v2278, 0.0
        %v2291 = vadd.f32 %v2279, 0.0
        %v2292 = vadd.f32 %v2280, 0.0
        %v2293 = vadd.f32 %v2281, 0.0
        %v2294 = vadd.f32 %v2282, 0.0
        %v2295 = vadd.f32 %v2283, 0.0
        %s2296 = sld [smem:[#allocation4 + $0x1]]
        %v2297 = vstv %s2296
        %v2298 = vmul.f32 %v2297, %v2260
        %v2299 = vmul.f32 %v2297, %v2261
        %v2300 = vmul.f32 %v2297, %v2263
        %v2301 = vmul.f32 %v2297, %v2264
        %v2302 = vmul.f32 %v2297, %v2266
        %v2303 = vmul.f32 %v2297, %v2267
        %v2304 = vmul.f32 %v2297, %v2269
        %v2305 = vmul.f32 %v2297, %v2270
        %2314 = vrot.lane.b32.xlu0 %v2298, 112
        %v2315 = vpop.permute.xlu0 %2314
        %2316 = vrot.lane.b32.xlu0 %v2299, 112
        %v2317 = vpop.permute.xlu0 %2316
        %2318 = vrot.lane.b32.xlu0 %v2300, 112
        %v2319 = vpop.permute.xlu0 %2318
        %2320 = vrot.lane.b32.xlu0 %v2301, 112
        %v2321 = vpop.permute.xlu0 %2320
        %2322 = vrot.lane.b32.xlu0 %v2302, 112
        %v2323 = vpop.permute.xlu0 %2322
        %2324 = vrot.lane.b32.xlu0 %v2303, 112
        %v2325 = vpop.permute.xlu0 %2324
        %2326 = vrot.lane.b32.xlu0 %v2304, 112
        %v2327 = vpop.permute.xlu0 %2326
        %2328 = vrot.lane.b32.xlu0 %v2305, 112
        %v2329 = vpop.permute.xlu0 %2328
        %vm2330 = vcmask 916480
        %v2331 = vsel %vm2330, %v2315, %v2317
        %v2332 = vsel %vm2330, %v2319, %v2321
        %v2333 = vsel %vm2330, %v2323, %v2325
        %v2334 = vsel %vm2330, %v2327, %v2329
        %v2347 = vadd.f32 %v2284, %v2315
        %v2348 = vadd.f32 %v2285, %v2331
        %v2349 = vadd.f32 %v2286, %v2317
        %v2350 = vadd.f32 %v2287, %v2319
        %v2351 = vadd.f32 %v2288, %v2332
        %v2352 = vadd.f32 %v2289, %v2321
        %v2353 = vadd.f32 %v2290, %v2323
        %v2354 = vadd.f32 %v2291, %v2333
        %v2355 = vadd.f32 %v2292, %v2325
        %v2356 = vadd.f32 %v2293, %v2327
        %v2357 = vadd.f32 %v2294, %v2334
        %v2358 = vadd.f32 %v2295, %v2329
        %s2359 = sld [smem:[#allocation4 + $0x2]]
        %v2360 = vld [vmem:[#allocation2 + $0x8] sm:$0xff]
        %v2361 = vld [vmem:[#allocation2 + $0x10] sm:$0xff]
        %v2362 = vld [vmem:[#allocation2 + $0x18] sm:$0xff]
        %v2363 = vld [vmem:[#allocation2 + $0x28] sm:$0xff]
        %v2364 = vld [vmem:[#allocation2 + $0x30] sm:$0xff]
        %v2365 = vld [vmem:[#allocation2 + $0x38] sm:$0xff]
        %v2366 = vld [vmem:[#allocation2 + $0x48] sm:$0xff]
        %v2367 = vld [vmem:[#allocation2 + $0x50] sm:$0xff]
        %v2368 = vld [vmem:[#allocation2 + $0x58] sm:$0xff]
        %v2369 = vld [vmem:[#allocation2 + $0x68] sm:$0xff]
        %v2370 = vld [vmem:[#allocation2 + $0x70] sm:$0xff]
        %v2371 = vld [vmem:[#allocation2 + $0x78] sm:$0xff]
        %v2372 = vstv %s2359
        %v2373 = vmul.f32 %v2372, %v2360
        %v2374 = vmul.f32 %v2372, %v2361
        %v2375 = vmul.f32 %v2372, %v2362
        %v2376 = vmul.f32 %v2372, %v2363
        %v2377 = vmul.f32 %v2372, %v2364
        %v2378 = vmul.f32 %v2372, %v2365
        %v2379 = vmul.f32 %v2372, %v2366
        %v2380 = vmul.f32 %v2372, %v2367
        %v2381 = vmul.f32 %v2372, %v2368
        %v2382 = vmul.f32 %v2372, %v2369
        %v2383 = vmul.f32 %v2372, %v2370
        %v2384 = vmul.f32 %v2372, %v2371
        %2397 = vrot.lane.b32.xlu0 %v2373, 96
        %v2398 = vpop.permute.xlu0 %2397
        %2399 = vrot.lane.b32.xlu0 %v2374, 96
        %v2400 = vpop.permute.xlu0 %2399
        %2401 = vrot.lane.b32.xlu0 %v2375, 96
        %v2402 = vpop.permute.xlu0 %2401
        %2403 = vrot.lane.b32.xlu0 %v2376, 96
        %v2404 = vpop.permute.xlu0 %2403
        %2405 = vrot.lane.b32.xlu0 %v2377, 96
        %v2406 = vpop.permute.xlu0 %2405
        %2407 = vrot.lane.b32.xlu0 %v2378, 96
        %v2408 = vpop.permute.xlu0 %2407
        %2409 = vrot.lane.b32.xlu0 %v2379, 96
        %v2410 = vpop.permute.xlu0 %2409
        %2411 = vrot.lane.b32.xlu0 %v2380, 96
        %v2412 = vpop.permute.xlu0 %2411
        %2413 = vrot.lane.b32.xlu0 %v2381, 96
        %v2414 = vpop.permute.xlu0 %2413
        %2415 = vrot.lane.b32.xlu0 %v2382, 96
        %v2416 = vpop.permute.xlu0 %2415
        %2417 = vrot.lane.b32.xlu0 %v2383, 96
        %v2418 = vpop.permute.xlu0 %2417
        %2419 = vrot.lane.b32.xlu0 %v2384, 96
        %v2420 = vpop.permute.xlu0 %2419
        %vm2421 = vcmask 785408
        %v2422 = vsel %vm2421, %v2398, %v2400
        %v2423 = vsel %vm2421, %v2400, %v2402
        %v2424 = vsel %vm2421, %v2404, %v2406
        %v2425 = vsel %vm2421, %v2406, %v2408
        %v2426 = vsel %vm2421, %v2410, %v2412
        %v2427 = vsel %vm2421, %v2412, %v2414
        %v2428 = vsel %vm2421, %v2416, %v2418
        %v2429 = vsel %vm2421, %v2418, %v2420
        %v2442 = vadd.f32 %v2347, %v2398
        %v2443 = vadd.f32 %v2348, %v2422
        %v2444 = vadd.f32 %v2349, %v2423
        %v2445 = vadd.f32 %v2350, %v2404
        %v2446 = vadd.f32 %v2351, %v2424
        %v2447 = vadd.f32 %v2352, %v2425
        %v2448 = vadd.f32 %v2353, %v2410
        %v2449 = vadd.f32 %v2354, %v2426
        %v2450 = vadd.f32 %v2355, %v2427
        %v2451 = vadd.f32 %v2356, %v2416
        %v2452 = vadd.f32 %v2357, %v2428
        %v2453 = vadd.f32 %v2358, %v2429
        %s2454 = sld [smem:[#allocation4 + $0x3]]
        %v2455 = vld [vmem:[#allocation2] sm:$0xfe]
        %v2456 = vld [vmem:[#allocation2 + $0x8] sm:$0xfe]
        %v2457 = vld [vmem:[#allocation2 + $0x10] sm:$0xfe]
        %v2458 = vld [vmem:[#allocation2 + $0x20] sm:$0xff]
        %v2459 = vld [vmem:[#allocation2 + $0x28] sm:$0xff]
        %v2460 = vld [vmem:[#allocation2 + $0x30] sm:$0xff]
        %v2461 = vld [vmem:[#allocation2 + $0x40] sm:$0xff]
        %v2462 = vld [vmem:[#allocation2 + $0x48] sm:$0xff]
        %v2463 = vld [vmem:[#allocation2 + $0x50] sm:$0xff]
        %v2464 = vld [vmem:[#allocation2 + $0x60] sm:$0xff]
        %v2465 = vld [vmem:[#allocation2 + $0x68] sm:$0xff]
        %v2466 = vld [vmem:[#allocation2 + $0x70] sm:$0xff]
        %v2467 = vld [vmem:[#allocation2 + $0x80] sm:$0x1]
        %v2468 = vld [vmem:[#allocation2 + $0x88] sm:$0x1]
        %v2469 = vld [vmem:[#allocation2 + $0x90] sm:$0x1]
        %v2470 = vstv %s2454
        %v2471 = vmul.f32 %v2470, %v2455
        %v2472 = vmul.f32 %v2470, %v2456
        %v2473 = vmul.f32 %v2470, %v2457
        %v2474 = vmul.f32 %v2470, %v2458
        %v2475 = vmul.f32 %v2470, %v2459
        %v2476 = vmul.f32 %v2470, %v2460
        %v2477 = vmul.f32 %v2470, %v2461
        %v2478 = vmul.f32 %v2470, %v2462
        %v2479 = vmul.f32 %v2470, %v2463
        %v2480 = vmul.f32 %v2470, %v2464
        %v2481 = vmul.f32 %v2470, %v2465
        %v2482 = vmul.f32 %v2470, %v2466
        %v2483 = vmul.f32 %v2470, %v2467
        %v2484 = vmul.f32 %v2470, %v2468
        %v2485 = vmul.f32 %v2470, %v2469
        %vm2501 = vcmask 1046528
        %v2502 = vrot.slane %v2471, 1
        %v2503 = vrot.slane %v2474, 1
        %v2504 = vsel %vm2501, %v2502, %v2503
        %v2505 = vrot.slane %v2472, 1
        %v2506 = vrot.slane %v2475, 1
        %v2507 = vsel %vm2501, %v2505, %v2506
        %v2508 = vrot.slane %v2473, 1
        %v2509 = vrot.slane %v2476, 1
        %v2510 = vsel %vm2501, %v2508, %v2509
        %v2511 = vrot.slane %v2477, 1
        %v2512 = vsel %vm2501, %v2503, %v2511
        %v2513 = vrot.slane %v2478, 1
        %v2514 = vsel %vm2501, %v2506, %v2513
        %v2515 = vrot.slane %v2479, 1
        %v2516 = vsel %vm2501, %v2509, %v2515
        %v2517 = vrot.slane %v2480, 1
        %v2518 = vsel %vm2501, %v2511, %v2517
        %v2519 = vrot.slane %v2481, 1
        %v2520 = vsel %vm2501, %v2513, %v2519
        %v2521 = vrot.slane %v2482, 1
        %v2522 = vsel %vm2501, %v2515, %v2521
        %v2523 = vrot.slane %v2483, 1
        %v2524 = vsel %vm2501, %v2517, %v2523
        %v2525 = vrot.slane %v2484, 1
        %v2526 = vsel %vm2501, %v2519, %v2525
        %v2527 = vrot.slane %v2485, 1
        %v2528 = vsel %vm2501, %v2521, %v2527
        %v2541 = vadd.f32 %v2442, %v2504
        %v2542 = vadd.f32 %v2443, %v2507
        %v2543 = vadd.f32 %v2444, %v2510
        %v2544 = vadd.f32 %v2445, %v2512
        %v2545 = vadd.f32 %v2446, %v2514
        %v2546 = vadd.f32 %v2447, %v2516
        %v2547 = vadd.f32 %v2448, %v2518
        %v2548 = vadd.f32 %v2449, %v2520
        %v2549 = vadd.f32 %v2450, %v2522
        %v2550 = vadd.f32 %v2451, %v2524
        %v2551 = vadd.f32 %v2452, %v2526
        %v2552 = vadd.f32 %v2453, %v2528
        %s2553 = sld [smem:[#allocation4 + $0x4]]
        %v2554 = vstv %s2553
        %v2555 = vmul.f32 %v2554, %v2456
        %v2556 = vmul.f32 %v2554, %v2457
        %v2557 = vmul.f32 %v2554, %v2459
        %v2558 = vmul.f32 %v2554, %v2460
        %v2559 = vmul.f32 %v2554, %v2462
        %v2560 = vmul.f32 %v2554, %v2463
        %v2561 = vmul.f32 %v2554, %v2465
        %v2562 = vmul.f32 %v2554, %v2466
        %v2563 = vmul.f32 %v2554, %v2468
        %v2564 = vmul.f32 %v2554, %v2469
        %v2575 = vrot.slane %v2555, 1
        %v2576 = vrot.slane %v2557, 1
        %v2577 = vsel %vm2501, %v2575, %v2576
        %v2578 = vrot.slane %v2556, 1
        %v2579 = vrot.slane %v2558, 1
        %v2580 = vsel %vm2501, %v2578, %v2579
        %v2581 = vrot.slane %v2559, 1
        %v2582 = vsel %vm2501, %v2576, %v2581
        %v2583 = vrot.slane %v2560, 1
        %v2584 = vsel %vm2501, %v2579, %v2583
        %v2585 = vrot.slane %v2561, 1
        %v2586 = vsel %vm2501, %v2581, %v2585
        %v2587 = vrot.slane %v2562, 1
        %v2588 = vsel %vm2501, %v2583, %v2587
        %v2589 = vrot.slane %v2563, 1
        %v2590 = vsel %vm2501, %v2585, %v2589
        %v2591 = vrot.slane %v2564, 1
        %v2592 = vsel %vm2501, %v2587, %v2591
        %2593 = vrot.lane.b32.xlu0 %v2577, 112
        %v2594 = vpop.permute.xlu0 %2593
        %2595 = vrot.lane.b32.xlu0 %v2580, 112
        %v2596 = vpop.permute.xlu0 %2595
        %2597 = vrot.lane.b32.xlu0 %v2582, 112
        %v2598 = vpop.permute.xlu0 %2597
        %2599 = vrot.lane.b32.xlu0 %v2584, 112
        %v2600 = vpop.permute.xlu0 %2599
        %2601 = vrot.lane.b32.xlu0 %v2586, 112
        %v2602 = vpop.permute.xlu0 %2601
        %2603 = vrot.lane.b32.xlu0 %v2588, 112
        %v2604 = vpop.permute.xlu0 %2603
        %2605 = vrot.lane.b32.xlu0 %v2590, 112
        %v2606 = vpop.permute.xlu0 %2605
        %2607 = vrot.lane.b32.xlu0 %v2592, 112
        %v2608 = vpop.permute.xlu0 %2607
        %v2609 = vsel %vm2330, %v2594, %v2596
        %v2610 = vsel %vm2330, %v2598, %v2600
        %v2611 = vsel %vm2330, %v2602, %v2604
        %v2612 = vsel %vm2330, %v2606, %v2608
        %v2625 = vadd.f32 %v2541, %v2594
        %v2626 = vadd.f32 %v2542, %v2609
        %v2627 = vadd.f32 %v2543, %v2596
        %v2628 = vadd.f32 %v2544, %v2598
        %v2629 = vadd.f32 %v2545, %v2610
        %v2630 = vadd.f32 %v2546, %v2600
        %v2631 = vadd.f32 %v2547, %v2602
        %v2632 = vadd.f32 %v2548, %v2611
        %v2633 = vadd.f32 %v2549, %v2604
        %v2634 = vadd.f32 %v2550, %v2606
        %v2635 = vadd.f32 %v2551, %v2612
        %v2636 = vadd.f32 %v2552, %v2608
        %s2637 = sld [smem:[#allocation4 + $0x5]]
        %v2638 = vld [vmem:[#allocation2 + $0x8] sm:$0xfe]
        %v2639 = vld [vmem:[#allocation2 + $0x10] sm:$0xfe]
        %v2640 = vld [vmem:[#allocation2 + $0x18] sm:$0xfe]
        %v2641 = vld [vmem:[#allocation2 + $0x28] sm:$0xff]
        %v2642 = vld [vmem:[#allocation2 + $0x30] sm:$0xff]
        %v2643 = vld [vmem:[#allocation2 + $0x38] sm:$0xff]
        %v2644 = vld [vmem:[#allocation2 + $0x48] sm:$0xff]
        %v2645 = vld [vmem:[#allocation2 + $0x50] sm:$0xff]
        %v2646 = vld [vmem:[#allocation2 + $0x58] sm:$0xff]
        %v2647 = vld [vmem:[#allocation2 + $0x68] sm:$0xff]
        %v2648 = vld [vmem:[#allocation2 + $0x70] sm:$0xff]
        %v2649 = vld [vmem:[#allocation2 + $0x78] sm:$0xff]
        %v2650 = vld [vmem:[#allocation2 + $0x88] sm:$0x1]
        %v2651 = vld [vmem:[#allocation2 + $0x90] sm:$0x1]
        %v2652 = vld [vmem:[#allocation2 + $0x98] sm:$0x1]
        %v2653 = vstv %s2637
        %v2654 = vmul.f32 %v2653, %v2638
        %v2655 = vmul.f32 %v2653, %v2639
        %v2656 = vmul.f32 %v2653, %v2640
        %v2657 = vmul.f32 %v2653, %v2641
        %v2658 = vmul.f32 %v2653, %v2642
        %v2659 = vmul.f32 %v2653, %v2643
        %v2660 = vmul.f32 %v2653, %v2644
        %v2661 = vmul.f32 %v2653, %v2645
        %v2662 = vmul.f32 %v2653, %v2646
        %v2663 = vmul.f32 %v2653, %v2647
        %v2664 = vmul.f32 %v2653, %v2648
        %v2665 = vmul.f32 %v2653, %v2649
        %v2666 = vmul.f32 %v2653, %v2650
        %v2667 = vmul.f32 %v2653, %v2651
        %v2668 = vmul.f32 %v2653, %v2652
        %v2684 = vrot.slane %v2654, 1
        %v2685 = vrot.slane %v2657, 1
        %v2686 = vsel %vm2501, %v2684, %v2685
        %v2687 = vrot.slane %v2655, 1
        %v2688 = vrot.slane %v2658, 1
        %v2689 = vsel %vm2501, %v2687, %v2688
        %v2690 = vrot.slane %v2656, 1
        %v2691 = vrot.slane %v2659, 1
        %v2692 = vsel %vm2501, %v2690, %v2691
        %v2693 = vrot.slane %v2660, 1
        %v2694 = vsel %vm2501, %v2685, %v2693
        %v2695 = vrot.slane %v2661, 1
        %v2696 = vsel %vm2501, %v2688, %v2695
        %v2697 = vrot.slane %v2662, 1
        %v2698 = vsel %vm2501, %v2691, %v2697
        %v2699 = vrot.slane %v2663, 1
        %v2700 = vsel %vm2501, %v2693, %v2699
        %v2701 = vrot.slane %v2664, 1
        %v2702 = vsel %vm2501, %v2695, %v2701
        %v2703 = vrot.slane %v2665, 1
        %v2704 = vsel %vm2501, %v2697, %v2703
        %v2705 = vrot.slane %v2666, 1
        %v2706 = vsel %vm2501, %v2699, %v2705
        %v2707 = vrot.slane %v2667, 1
        %v2708 = vsel %vm2501, %v2701, %v2707
        %v2709 = vrot.slane %v2668, 1
        %v2710 = vsel %vm2501, %v2703, %v2709
        %2711 = vrot.lane.b32.xlu0 %v2686, 96
        %v2712 = vpop.permute.xlu0 %2711
        %2713 = vrot.lane.b32.xlu0 %v2689, 96
        %v2714 = vpop.permute.xlu0 %2713
        %2715 = vrot.lane.b32.xlu0 %v2692, 96
        %v2716 = vpop.permute.xlu0 %2715
        %2717 = vrot.lane.b32.xlu0 %v2694, 96
        %v2718 = vpop.permute.xlu0 %2717
        %2719 = vrot.lane.b32.xlu0 %v2696, 96
        %v2720 = vpop.permute.xlu0 %2719
        %2721 = vrot.lane.b32.xlu0 %v2698, 96
        %v2722 = vpop.permute.xlu0 %2721
        %2723 = vrot.lane.b32.xlu0 %v2700, 96
        %v2724 = vpop.permute.xlu0 %2723
        %2725 = vrot.lane.b32.xlu0 %v2702, 96
        %v2726 = vpop.permute.xlu0 %2725
        %2727 = vrot.lane.b32.xlu0 %v2704, 96
        %v2728 = vpop.permute.xlu0 %2727
        %2729 = vrot.lane.b32.xlu0 %v2706, 96
        %v2730 = vpop.permute.xlu0 %2729
        %2731 = vrot.lane.b32.xlu0 %v2708, 96
        %v2732 = vpop.permute.xlu0 %2731
        %2733 = vrot.lane.b32.xlu0 %v2710, 96
        %v2734 = vpop.permute.xlu0 %2733
        %v2735 = vsel %vm2421, %v2712, %v2714
        %v2736 = vsel %vm2421, %v2714, %v2716
        %v2737 = vsel %vm2421, %v2718, %v2720
        %v2738 = vsel %vm2421, %v2720, %v2722
        %v2739 = vsel %vm2421, %v2724, %v2726
        %v2740 = vsel %vm2421, %v2726, %v2728
        %v2741 = vsel %vm2421, %v2730, %v2732
        %v2742 = vsel %vm2421, %v2732, %v2734
        %v2755 = vadd.f32 %v2625, %v2712
        %v2756 = vadd.f32 %v2626, %v2735
        %v2757 = vadd.f32 %v2627, %v2736
        %v2758 = vadd.f32 %v2628, %v2718
        %v2759 = vadd.f32 %v2629, %v2737
        %v2760 = vadd.f32 %v2630, %v2738
        %v2761 = vadd.f32 %v2631, %v2724
        %v2762 = vadd.f32 %v2632, %v2739
        %v2763 = vadd.f32 %v2633, %v2740
        %v2764 = vadd.f32 %v2634, %v2730
        %v2765 = vadd.f32 %v2635, %v2741
        %v2766 = vadd.f32 %v2636, %v2742
        %s2767 = sld [smem:[#allocation4 + $0x6]]
        %v2768 = vld [vmem:[#allocation2] sm:$0xfc]
        %v2769 = vld [vmem:[#allocation2 + $0x8] sm:$0xfc]
        %v2770 = vld [vmem:[#allocation2 + $0x10] sm:$0xfc]
        %v2771 = vld [vmem:[#allocation2 + $0x80] sm:$0x3]
        %v2772 = vld [vmem:[#allocation2 + $0x88] sm:$0x3]
        %v2773 = vld [vmem:[#allocation2 + $0x90] sm:$0x3]
        %v2774 = vstv %s2767
        %v2775 = vmul.f32 %v2774, %v2768
        %v2776 = vmul.f32 %v2774, %v2769
        %v2777 = vmul.f32 %v2774, %v2770
        %v2778 = vmul.f32 %v2774, %v2458
        %v2779 = vmul.f32 %v2774, %v2459
        %v2780 = vmul.f32 %v2774, %v2460
        %v2781 = vmul.f32 %v2774, %v2461
        %v2782 = vmul.f32 %v2774, %v2462
        %v2783 = vmul.f32 %v2774, %v2463
        %v2784 = vmul.f32 %v2774, %v2464
        %v2785 = vmul.f32 %v2774, %v2465
        %v2786 = vmul.f32 %v2774, %v2466
        %v2787 = vmul.f32 %v2774, %v2771
        %v2788 = vmul.f32 %v2774, %v2772
        %v2789 = vmul.f32 %v2774, %v2773
        %vm2805 = vcmask 1045504
        %v2806 = vrot.slane %v2775, 2
        %v2807 = vrot.slane %v2778, 2
        %v2808 = vsel %vm2805, %v2806, %v2807
        %v2809 = vrot.slane %v2776, 2
        %v2810 = vrot.slane %v2779, 2
        %v2811 = vsel %vm2805, %v2809, %v2810
        %v2812 = vrot.slane %v2777, 2
        %v2813 = vrot.slane %v2780, 2
        %v2814 = vsel %vm2805, %v2812, %v2813
        %v2815 = vrot.slane %v2781, 2
        %v2816 = vsel %vm2805, %v2807, %v2815
        %v2817 = vrot.slane %v2782, 2
        %v2818 = vsel %vm2805, %v2810, %v2817
        %v2819 = vrot.slane %v2783, 2
        %v2820 = vsel %vm2805, %v2813, %v2819
        %v2821 = vrot.slane %v2784, 2
        %v2822 = vsel %vm2805, %v2815, %v2821
        %v2823 = vrot.slane %v2785, 2
        %v2824 = vsel %vm2805, %v2817, %v2823
        %v2825 = vrot.slane %v2786, 2
        %v2826 = vsel %vm2805, %v2819, %v2825
        %v2827 = vrot.slane %v2787, 2
        %v2828 = vsel %vm2805, %v2821, %v2827
        %v2829 = vrot.slane %v2788, 2
        %v2830 = vsel %vm2805, %v2823, %v2829
        %v2831 = vrot.slane %v2789, 2
        %v2832 = vsel %vm2805, %v2825, %v2831
        %v2845 = vadd.f32 %v2755, %v2808
        %v2846 = vadd.f32 %v2756, %v2811
        %v2847 = vadd.f32 %v2757, %v2814
        %v2848 = vadd.f32 %v2758, %v2816
        %v2849 = vadd.f32 %v2759, %v2818
        %v2850 = vadd.f32 %v2760, %v2820
        %v2851 = vadd.f32 %v2761, %v2822
        %v2852 = vadd.f32 %v2762, %v2824
        %v2853 = vadd.f32 %v2763, %v2826
        %v2854 = vadd.f32 %v2764, %v2828
        %v2855 = vadd.f32 %v2765, %v2830
        %v2856 = vadd.f32 %v2766, %v2832
        %s2857 = sld [smem:[#allocation4 + $0x7]]
        %v2858 = vstv %s2857
        %v2859 = vmul.f32 %v2858, %v2769
        %v2860 = vmul.f32 %v2858, %v2770
        %v2861 = vmul.f32 %v2858, %v2459
        %v2862 = vmul.f32 %v2858, %v2460
        %v2863 = vmul.f32 %v2858, %v2462
        %v2864 = vmul.f32 %v2858, %v2463
        %v2865 = vmul.f32 %v2858, %v2465
        %v2866 = vmul.f32 %v2858, %v2466
        %v2867 = vmul.f32 %v2858, %v2772
        %v2868 = vmul.f32 %v2858, %v2773
        %v2879 = vrot.slane %v2859, 2
        %v2880 = vrot.slane %v2861, 2
        %v2881 = vsel %vm2805, %v2879, %v2880
        %v2882 = vrot.slane %v2860, 2
        %v2883 = vrot.slane %v2862, 2
        %v2884 = vsel %vm2805, %v2882, %v2883
        %v2885 = vrot.slane %v2863, 2
        %v2886 = vsel %vm2805, %v2880, %v2885
        %v2887 = vrot.slane %v2864, 2
        %v2888 = vsel %vm2805, %v2883, %v2887
        %v2889 = vrot.slane %v2865, 2
        %v2890 = vsel %vm2805, %v2885, %v2889
        %v2891 = vrot.slane %v2866, 2
        %v2892 = vsel %vm2805, %v2887, %v2891
        %v2893 = vrot.slane %v2867, 2
        %v2894 = vsel %vm2805, %v2889, %v2893
        %v2895 = vrot.slane %v2868, 2
        %v2896 = vsel %vm2805, %v2891, %v2895
        %2897 = vrot.lane.b32.xlu0 %v2881, 112
        %v2898 = vpop.permute.xlu0 %2897
        %2899 = vrot.lane.b32.xlu0 %v2884, 112
        %v2900 = vpop.permute.xlu0 %2899
        %2901 = vrot.lane.b32.xlu0 %v2886, 112
        %v2902 = vpop.permute.xlu0 %2901
        %2903 = vrot.lane.b32.xlu0 %v2888, 112
        %v2904 = vpop.permute.xlu0 %2903
        %2905 = vrot.lane.b32.xlu0 %v2890, 112
        %v2906 = vpop.permute.xlu0 %2905
        %2907 = vrot.lane.b32.xlu0 %v2892, 112
        %v2908 = vpop.permute.xlu0 %2907
        %2909 = vrot.lane.b32.xlu0 %v2894, 112
        %v2910 = vpop.permute.xlu0 %2909
        %2911 = vrot.lane.b32.xlu0 %v2896, 112
        %v2912 = vpop.permute.xlu0 %2911
        %v2913 = vsel %vm2330, %v2898, %v2900
        %v2914 = vsel %vm2330, %v2902, %v2904
        %v2915 = vsel %vm2330, %v2906, %v2908
        %v2916 = vsel %vm2330, %v2910, %v2912
        %v2929 = vadd.f32 %v2845, %v2898
        %v2930 = vadd.f32 %v2846, %v2913
        %v2931 = vadd.f32 %v2847, %v2900
        %v2932 = vadd.f32 %v2848, %v2902
        %v2933 = vadd.f32 %v2849, %v2914
        %v2934 = vadd.f32 %v2850, %v2904
        %v2935 = vadd.f32 %v2851, %v2906
        %v2936 = vadd.f32 %v2852, %v2915
        %v2937 = vadd.f32 %v2853, %v2908
        %v2938 = vadd.f32 %v2854, %v2910
        %v2939 = vadd.f32 %v2855, %v2916
        %v2940 = vadd.f32 %v2856, %v2912
        %s2941 = sld [smem:[#allocation4 + $0x8]]
        %v2942 = vld [vmem:[#allocation2 + $0x8] sm:$0xfc]
        %v2943 = vld [vmem:[#allocation2 + $0x10] sm:$0xfc]
        %v2944 = vld [vmem:[#allocation2 + $0x18] sm:$0xfc]
        %v2945 = vld [vmem:[#allocation2 + $0x88] sm:$0x3]
        %v2946 = vld [vmem:[#allocation2 + $0x90] sm:$0x3]
        %v2947 = vld [vmem:[#allocation2 + $0x98] sm:$0x3]
        %v2948 = vstv %s2941
        %v2949 = vmul.f32 %v2948, %v2942
        %v2950 = vmul.f32 %v2948, %v2943
        %v2951 = vmul.f32 %v2948, %v2944
        %v2952 = vmul.f32 %v2948, %v2641
        %v2953 = vmul.f32 %v2948, %v2642
        %v2954 = vmul.f32 %v2948, %v2643
        %v2955 = vmul.f32 %v2948, %v2644
        %v2956 = vmul.f32 %v2948, %v2645
        %v2957 = vmul.f32 %v2948, %v2646
        %v2958 = vmul.f32 %v2948, %v2647
        %v2959 = vmul.f32 %v2948, %v2648
        %v2960 = vmul.f32 %v2948, %v2649
        %v2961 = vmul.f32 %v2948, %v2945
        %v2962 = vmul.f32 %v2948, %v2946
        %v2963 = vmul.f32 %v2948, %v2947
        %v2979 = vrot.slane %v2949, 2
        %v2980 = vrot.slane %v2952, 2
        %v2981 = vsel %vm2805, %v2979, %v2980
        %v2982 = vrot.slane %v2950, 2
        %v2983 = vrot.slane %v2953, 2
        %v2984 = vsel %vm2805, %v2982, %v2983
        %v2985 = vrot.slane %v2951, 2
        %v2986 = vrot.slane %v2954, 2
        %v2987 = vsel %vm2805, %v2985, %v2986
        %v2988 = vrot.slane %v2955, 2
        %v2989 = vsel %vm2805, %v2980, %v2988
        %v2990 = vrot.slane %v2956, 2
        %v2991 = vsel %vm2805, %v2983, %v2990
        %v2992 = vrot.slane %v2957, 2
        %v2993 = vsel %vm2805, %v2986, %v2992
        %v2994 = vrot.slane %v2958, 2
        %v2995 = vsel %vm2805, %v2988, %v2994
        %v2996 = vrot.slane %v2959, 2
        %v2997 = vsel %vm2805, %v2990, %v2996
        %v2998 = vrot.slane %v2960, 2
        %v2999 = vsel %vm2805, %v2992, %v2998
        %v3000 = vrot.slane %v2961, 2
        %v3001 = vsel %vm2805, %v2994, %v3000
        %v3002 = vrot.slane %v2962, 2
        %v3003 = vsel %vm2805, %v2996, %v3002
        %v3004 = vrot.slane %v2963, 2
        %v3005 = vsel %vm2805, %v2998, %v3004
        %3006 = vrot.lane.b32.xlu0 %v2981, 96
        %v3007 = vpop.permute.xlu0 %3006
        %3008 = vrot.lane.b32.xlu0 %v2984, 96
        %v3009 = vpop.permute.xlu0 %3008
        %3010 = vrot.lane.b32.xlu0 %v2987, 96
        %v3011 = vpop.permute.xlu0 %3010
        %3012 = vrot.lane.b32.xlu0 %v2989, 96
        %v3013 = vpop.permute.xlu0 %3012
        %3014 = vrot.lane.b32.xlu0 %v2991, 96
        %v3015 = vpop.permute.xlu0 %3014
        %3016 = vrot.lane.b32.xlu0 %v2993, 96
        %v3017 = vpop.permute.xlu0 %3016
        %3018 = vrot.lane.b32.xlu0 %v2995, 96
        %v3019 = vpop.permute.xlu0 %3018
        %3020 = vrot.lane.b32.xlu0 %v2997, 96
        %v3021 = vpop.permute.xlu0 %3020
        %3022 = vrot.lane.b32.xlu0 %v2999, 96
        %v3023 = vpop.permute.xlu0 %3022
        %3024 = vrot.lane.b32.xlu0 %v3001, 96
        %v3025 = vpop.permute.xlu0 %3024
        %3026 = vrot.lane.b32.xlu0 %v3003, 96
        %v3027 = vpop.permute.xlu0 %3026
        %3028 = vrot.lane.b32.xlu0 %v3005, 96
        %v3029 = vpop.permute.xlu0 %3028
        %v3030 = vsel %vm2421, %v3007, %v3009
        %v3031 = vsel %vm2421, %v3009, %v3011
        %v3032 = vsel %vm2421, %v3013, %v3015
        %v3033 = vsel %vm2421, %v3015, %v3017
        %v3034 = vsel %vm2421, %v3019, %v3021
        %v3035 = vsel %vm2421, %v3021, %v3023
        %v3036 = vsel %vm2421, %v3025, %v3027
        %v3037 = vsel %vm2421, %v3027, %v3029
        %v3050 = vadd.f32 %v2929, %v3007
        %v3051 = vadd.f32 %v2930, %v3030
        %v3052 = vadd.f32 %v2931, %v3031
        %v3053 = vadd.f32 %v2932, %v3013
        %v3054 = vadd.f32 %v2933, %v3032
        %v3055 = vadd.f32 %v2934, %v3033
        %v3056 = vadd.f32 %v2935, %v3019
        %v3057 = vadd.f32 %v2936, %v3034
        %v3058 = vadd.f32 %v2937, %v3035
        %v3059 = vadd.f32 %v2938, %v3025
        %v3060 = vadd.f32 %v2939, %v3036
        %v3061 = vadd.f32 %v2940, %v3037
        %s3062 = sld [smem:[#allocation4 + $0x9]]
        %v3063 = vstv %s3062
        %v3064 = vadd.f32 %v3050, %v3063
        %v3065 = vadd.f32 %v3051, %v3063
        %v3066 = vadd.f32 %v3052, %v3063
        %v3067 = vadd.f32 %v3053, %v3063
        %v3068 = vadd.f32 %v3054, %v3063
        %v3069 = vadd.f32 %v3055, %v3063
        %v3070 = vadd.f32 %v3056, %v3063
        %v3071 = vadd.f32 %v3057, %v3063
        %v3072 = vadd.f32 %v3058, %v3063
        %v3073 = vadd.f32 %v3059, %v3063
        %v3074 = vadd.f32 %v3060, %v3063
        %v3075 = vadd.f32 %v3061, %v3063
        %v3076 = vld [vmem:[%s3] ss:$4 sm:$0x3]
        %v3078 = vperm.slane %v3076, 0
        %v3079 = vperm.slane %v3076, 1
        %3080 = vrot.lane.b32.xlu0 %v3078, 127
        %v3081 = vpop.permute.xlu0 %3080
        %3082 = vrot.lane.b32.xlu0 %v3079, 127
        %v3083 = vpop.permute.xlu0 %3082
        %v3084 = vsel %vm1199, %v3081, %v3083
        %v3088 = vmul.f32 %v2455, %v3081
        %v3089 = vmul.f32 %v2456, %v3084
        %v3090 = vmul.f32 %v2457, %v3083
        %v3091 = vmul.f32 %v2458, %v3081
        %v3092 = vmul.f32 %v2459, %v3084
        %v3093 = vmul.f32 %v2460, %v3083
        %v3094 = vmul.f32 %v2461, %v3081
        %v3095 = vmul.f32 %v2462, %v3084
        %v3096 = vmul.f32 %v2463, %v3083
        %v3097 = vmul.f32 %v2464, %v3081
        %v3098 = vmul.f32 %v2465, %v3084
        %v3099 = vmul.f32 %v2466, %v3083
        %v3100 = vmul.f32 %v2467, %v3081
        %v3101 = vmul.f32 %v2468, %v3084
        %v3102 = vmul.f32 %v2469, %v3083
        %s3103 = sld [smem:[#allocation4 + $0xa]]
        %v3104 = vstv %s3103
        %v3105 = vmul.f32 %v3104, %v3088
        %v3106 = vmul.f32 %v3104, %v3089
        %v3107 = vmul.f32 %v3104, %v3090
        %v3108 = vmul.f32 %v3104, %v3091
        %v3109 = vmul.f32 %v3104, %v3092
        %v3110 = vmul.f32 %v3104, %v3093
        %v3111 = vmul.f32 %v3104, %v3094
        %v3112 = vmul.f32 %v3104, %v3095
        %v3113 = vmul.f32 %v3104, %v3096
        %v3114 = vmul.f32 %v3104, %v3097
        %v3115 = vmul.f32 %v3104, %v3098
        %v3116 = vmul.f32 %v3104, %v3099
        %v3117 = vmul.f32 %v3104, %v3100
        %v3118 = vmul.f32 %v3104, %v3101
        %v3119 = vmul.f32 %v3104, %v3102
        %v3120 = vadd.f32 %v3105, 0.0
        %v3121 = vadd.f32 %v3106, 0.0
        %v3122 = vadd.f32 %v3107, 0.0
        %v3123 = vadd.f32 %v3108, 0.0
        %v3124 = vadd.f32 %v3109, 0.0
        %v3125 = vadd.f32 %v3110, 0.0
        %v3126 = vadd.f32 %v3111, 0.0
        %v3127 = vadd.f32 %v3112, 0.0
        %v3128 = vadd.f32 %v3113, 0.0
        %v3129 = vadd.f32 %v3114, 0.0
        %v3130 = vadd.f32 %v3115, 0.0
        %v3131 = vadd.f32 %v3116, 0.0
        %v3132 = vadd.f32 %v3117, 0.0
        %v3133 = vadd.f32 %v3118, 0.0
        %v3134 = vadd.f32 %v3119, 0.0
        %s3135 = sld [smem:[#allocation4 + $0xb]]
        %v3136 = vstv %s3135
        %v3137 = vmul.f32 %v3136, %v2456
        %v3138 = vmul.f32 %v3136, %v2457
        %v3139 = vmul.f32 %v3136, %v2459
        %v3140 = vmul.f32 %v3136, %v2460
        %v3141 = vmul.f32 %v3136, %v2462
        %v3142 = vmul.f32 %v3136, %v2463
        %v3143 = vmul.f32 %v3136, %v2465
        %v3144 = vmul.f32 %v3136, %v2466
        %v3145 = vmul.f32 %v3136, %v2468
        %v3146 = vmul.f32 %v3136, %v2469
        %3157 = vrot.lane.b32.xlu0 %v3137, 127
        %v3158 = vpop.permute.xlu0 %3157
        %3159 = vrot.lane.b32.xlu0 %v3138, 127
        %v3160 = vpop.permute.xlu0 %3159
        %3161 = vrot.lane.b32.xlu0 %v3139, 127
        %v3162 = vpop.permute.xlu0 %3161
        %3163 = vrot.lane.b32.xlu0 %v3140, 127
        %v3164 = vpop.permute.xlu0 %3163
        %3165 = vrot.lane.b32.xlu0 %v3141, 127
        %v3166 = vpop.permute.xlu0 %3165
        %3167 = vrot.lane.b32.xlu0 %v3142, 127
        %v3168 = vpop.permute.xlu0 %3167
        %3169 = vrot.lane.b32.xlu0 %v3143, 127
        %v3170 = vpop.permute.xlu0 %3169
        %3171 = vrot.lane.b32.xlu0 %v3144, 127
        %v3172 = vpop.permute.xlu0 %3171
        %3173 = vrot.lane.b32.xlu0 %v3145, 127
        %v3174 = vpop.permute.xlu0 %3173
        %3175 = vrot.lane.b32.xlu0 %v3146, 127
        %v3176 = vpop.permute.xlu0 %3175
        %v3177 = vsel %vm1199, %v3158, %v3160
        %v3178 = vsel %vm1199, %v3162, %v3164
        %v3179 = vsel %vm1199, %v3166, %v3168
        %v3180 = vsel %vm1199, %v3170, %v3172
        %v3181 = vsel %vm1199, %v3174, %v3176
        %v3197 = vadd.f32 %v3120, %v3158
        %v3198 = vadd.f32 %v3121, %v3177
        %v3199 = vadd.f32 %v3122, %v3160
        %v3200 = vadd.f32 %v3123, %v3162
        %v3201 = vadd.f32 %v3124, %v3178
        %v3202 = vadd.f32 %v3125, %v3164
        %v3203 = vadd.f32 %v3126, %v3166
        %v3204 = vadd.f32 %v3127, %v3179
        %v3205 = vadd.f32 %v3128, %v3168
        %v3206 = vadd.f32 %v3129, %v3170
        %v3207 = vadd.f32 %v3130, %v3180
        %v3208 = vadd.f32 %v3131, %v3172
        %v3209 = vadd.f32 %v3132, %v3174
        %v3210 = vadd.f32 %v3133, %v3181
        %v3211 = vadd.f32 %v3134, %v3176
        %v3212 = vld [vmem:[%s1096] ss:$4 sm:$0x3]
        %v3214 = vperm.slane %v3212, 0
        %v3215 = vperm.slane %v3212, 1
        %3216 = vrot.lane.b32.xlu0 %v3214, 1
        %v3217 = vpop.permute.xlu0 %3216
        %3218 = vrot.lane.b32.xlu0 %v3215, 1
        %v3219 = vpop.permute.xlu0 %3218
        %v3220 = vsel %vm1309, %v3217, %v3219
        %v3224 = vmul.f32 %v2638, %v3217
        %v3225 = vmul.f32 %v2639, %v3220
        %v3226 = vmul.f32 %v2640, %v3219
        %v3227 = vmul.f32 %v2641, %v3217
        %v3228 = vmul.f32 %v2642, %v3220
        %v3229 = vmul.f32 %v2643, %v3219
        %v3230 = vmul.f32 %v2644, %v3217
        %v3231 = vmul.f32 %v2645, %v3220
        %v3232 = vmul.f32 %v2646, %v3219
        %v3233 = vmul.f32 %v2647, %v3217
        %v3234 = vmul.f32 %v2648, %v3220
        %v3235 = vmul.f32 %v2649, %v3219
        %v3236 = vmul.f32 %v2650, %v3217
        %v3237 = vmul.f32 %v2651, %v3220
        %v3238 = vmul.f32 %v2652, %v3219
        %s3239 = sld [smem:[#allocation4 + $0xc]]
        %v3240 = vstv %s3239
        %v3241 = vmul.f32 %v3240, %v3224
        %v3242 = vmul.f32 %v3240, %v3225
        %v3243 = vmul.f32 %v3240, %v3226
        %v3244 = vmul.f32 %v3240, %v3227
        %v3245 = vmul.f32 %v3240, %v3228
        %v3246 = vmul.f32 %v3240, %v3229
        %v3247 = vmul.f32 %v3240, %v3230
        %v3248 = vmul.f32 %v3240, %v3231
        %v3249 = vmul.f32 %v3240, %v3232
        %v3250 = vmul.f32 %v3240, %v3233
        %v3251 = vmul.f32 %v3240, %v3234
        %v3252 = vmul.f32 %v3240, %v3235
        %v3253 = vmul.f32 %v3240, %v3236
        %v3254 = vmul.f32 %v3240, %v3237
        %v3255 = vmul.f32 %v3240, %v3238
        %3271 = vrot.lane.b32.xlu0 %v3241, 126
        %v3272 = vpop.permute.xlu0 %3271
        %3273 = vrot.lane.b32.xlu0 %v3242, 126
        %v3274 = vpop.permute.xlu0 %3273
        %3275 = vrot.lane.b32.xlu0 %v3243, 126
        %v3276 = vpop.permute.xlu0 %3275
        %3277 = vrot.lane.b32.xlu0 %v3244, 126
        %v3278 = vpop.permute.xlu0 %3277
        %3279 = vrot.lane.b32.xlu0 %v3245, 126
        %v3280 = vpop.permute.xlu0 %3279
        %3281 = vrot.lane.b32.xlu0 %v3246, 126
        %v3282 = vpop.permute.xlu0 %3281
        %3283 = vrot.lane.b32.xlu0 %v3247, 126
        %v3284 = vpop.permute.xlu0 %3283
        %3285 = vrot.lane.b32.xlu0 %v3248, 126
        %v3286 = vpop.permute.xlu0 %3285
        %3287 = vrot.lane.b32.xlu0 %v3249, 126
        %v3288 = vpop.permute.xlu0 %3287
        %3289 = vrot.lane.b32.xlu0 %v3250, 126
        %v3290 = vpop.permute.xlu0 %3289
        %3291 = vrot.lane.b32.xlu0 %v3251, 126
        %v3292 = vpop.permute.xlu0 %3291
        %3293 = vrot.lane.b32.xlu0 %v3252, 126
        %v3294 = vpop.permute.xlu0 %3293
        %3295 = vrot.lane.b32.xlu0 %v3253, 126
        %v3296 = vpop.permute.xlu0 %3295
        %3297 = vrot.lane.b32.xlu0 %v3254, 126
        %v3298 = vpop.permute.xlu0 %3297
        %3299 = vrot.lane.b32.xlu0 %v3255, 126
        %v3300 = vpop.permute.xlu0 %3299
        %vm3301 = vcmask 1031168
        %v3302 = vsel %vm3301, %v3272, %v3274
        %v3303 = vsel %vm3301, %v3274, %v3276
        %v3304 = vsel %vm3301, %v3278, %v3280
        %v3305 = vsel %vm3301, %v3280, %v3282
        %v3306 = vsel %vm3301, %v3284, %v3286
        %v3307 = vsel %vm3301, %v3286, %v3288
        %v3308 = vsel %vm3301, %v3290, %v3292
        %v3309 = vsel %vm3301, %v3292, %v3294
        %v3310 = vsel %vm3301, %v3296, %v3298
        %v3311 = vsel %vm3301, %v3298, %v3300
        %v3327 = vadd.f32 %v3197, %v3272
        %v3328 = vadd.f32 %v3198, %v3302
        %v3329 = vadd.f32 %v3199, %v3303
        %v3330 = vadd.f32 %v3200, %v3278
        %v3331 = vadd.f32 %v3201, %v3304
        %v3332 = vadd.f32 %v3202, %v3305
        %v3333 = vadd.f32 %v3203, %v3284
        %v3334 = vadd.f32 %v3204, %v3306
        %v3335 = vadd.f32 %v3205, %v3307
        %v3336 = vadd.f32 %v3206, %v3290
        %v3337 = vadd.f32 %v3207, %v3308
        %v3338 = vadd.f32 %v3208, %v3309
        %v3339 = vadd.f32 %v3209, %v3296
        %v3340 = vadd.f32 %v3210, %v3310
        %v3341 = vadd.f32 %v3211, %v3311
        %s3342 = sld [smem:[#allocation4 + $0xd]]
        %v3343 = vstv %s3342
        %v3344 = vadd.f32 %v3327, %v3343
        %v3345 = vadd.f32 %v3328, %v3343
        %v3346 = vadd.f32 %v3329, %v3343
        %v3347 = vadd.f32 %v3330, %v3343
        %v3348 = vadd.f32 %v3331, %v3343
        %v3349 = vadd.f32 %v3332, %v3343
        %v3350 = vadd.f32 %v3333, %v3343
        %v3351 = vadd.f32 %v3334, %v3343
        %v3352 = vadd.f32 %v3335, %v3343
        %v3353 = vadd.f32 %v3336, %v3343
        %v3354 = vadd.f32 %v3337, %v3343
        %v3355 = vadd.f32 %v3338, %v3343
        %v3356 = vadd.f32 %v3339, %v3343
        %v3357 = vadd.f32 %v3340, %v3343
        %v3358 = vadd.f32 %v3341, %v3343
        %v3374 = vrot.slane %v3344, 1
        %v3375 = vrot.slane %v3347, 1
        %v3376 = vsel %vm2501, %v3374, %v3375
        %v3377 = vrot.slane %v3345, 1
        %v3378 = vrot.slane %v3348, 1
        %v3379 = vsel %vm2501, %v3377, %v3378
        %v3380 = vrot.slane %v3346, 1
        %v3381 = vrot.slane %v3349, 1
        %v3382 = vsel %vm2501, %v3380, %v3381
        %v3383 = vrot.slane %v3350, 1
        %v3384 = vsel %vm2501, %v3375, %v3383
        %v3385 = vrot.slane %v3351, 1
        %v3386 = vsel %vm2501, %v3378, %v3385
        %v3387 = vrot.slane %v3352, 1
        %v3388 = vsel %vm2501, %v3381, %v3387
        %v3389 = vrot.slane %v3353, 1
        %v3390 = vsel %vm2501, %v3383, %v3389
        %v3391 = vrot.slane %v3354, 1
        %v3392 = vsel %vm2501, %v3385, %v3391
        %v3393 = vrot.slane %v3355, 1
        %v3394 = vsel %vm2501, %v3387, %v3393
        %v3395 = vrot.slane %v3356, 1
        %v3396 = vsel %vm2501, %v3389, %v3395
        %v3397 = vrot.slane %v3357, 1
        %v3398 = vsel %vm2501, %v3391, %v3397
        %v3399 = vrot.slane %v3358, 1
        %v3400 = vsel %vm2501, %v3393, %v3399
        %3401 = vrot.lane.b32.xlu0 %v3376, 113
        %v3402 = vpop.permute.xlu0 %3401
        %3403 = vrot.lane.b32.xlu0 %v3379, 113
        %v3404 = vpop.permute.xlu0 %3403
        %3405 = vrot.lane.b32.xlu0 %v3382, 113
        %v3406 = vpop.permute.xlu0 %3405
        %3407 = vrot.lane.b32.xlu0 %v3384, 113
        %v3408 = vpop.permute.xlu0 %3407
        %3409 = vrot.lane.b32.xlu0 %v3386, 113
        %v3410 = vpop.permute.xlu0 %3409
        %3411 = vrot.lane.b32.xlu0 %v3388, 113
        %v3412 = vpop.permute.xlu0 %3411
        %3413 = vrot.lane.b32.xlu0 %v3390, 113
        %v3414 = vpop.permute.xlu0 %3413
        %3415 = vrot.lane.b32.xlu0 %v3392, 113
        %v3416 = vpop.permute.xlu0 %3415
        %3417 = vrot.lane.b32.xlu0 %v3394, 113
        %v3418 = vpop.permute.xlu0 %3417
        %3419 = vrot.lane.b32.xlu0 %v3396, 113
        %v3420 = vpop.permute.xlu0 %3419
        %3421 = vrot.lane.b32.xlu0 %v3398, 113
        %v3422 = vpop.permute.xlu0 %3421
        %3423 = vrot.lane.b32.xlu0 %v3400, 113
        %v3424 = vpop.permute.xlu0 %3423
        %v3425 = vsel %vm1105, %v3402, %v3404
        %v3426 = vsel %vm1105, %v3404, %v3406
        %v3427 = vsel %vm1105, %v3408, %v3410
        %v3428 = vsel %vm1105, %v3410, %v3412
        %v3429 = vsel %vm1105, %v3414, %v3416
        %v3430 = vsel %vm1105, %v3416, %v3418
        %v3431 = vsel %vm1105, %v3420, %v3422
        %v3432 = vsel %vm1105, %v3422, %v3424
        %v3445 = vmul.f32 %v3064, %v3425
        %v3446 = vmul.f32 %v3065, %v3426
        %v3447 = vmul.f32 %v3066, %v3406
        %v3448 = vmul.f32 %v3067, %v3427
        %v3449 = vmul.f32 %v3068, %v3428
        %v3450 = vmul.f32 %v3069, %v3412
        %v3451 = vmul.f32 %v3070, %v3429
        %v3452 = vmul.f32 %v3071, %v3430
        %v3453 = vmul.f32 %v3072, %v3418
        %v3454 = vmul.f32 %v3073, %v3431
        %v3455 = vmul.f32 %v3074, %v3432
        %v3456 = vmul.f32 %v3075, %v3424
        %3469 = vrot.lane.b32.xlu0 %v3445, 16
        %v3470 = vpop.permute.xlu0 %3469
        %3471 = vrot.lane.b32.xlu0 %v3446, 16
        %v3472 = vpop.permute.xlu0 %3471
        %3473 = vrot.lane.b32.xlu0 %v3447, 16
        %v3474 = vpop.permute.xlu0 %3473
        %3475 = vrot.lane.b32.xlu0 %v3448, 16
        %v3476 = vpop.permute.xlu0 %3475
        %3477 = vrot.lane.b32.xlu0 %v3449, 16
        %v3478 = vpop.permute.xlu0 %3477
        %3479 = vrot.lane.b32.xlu0 %v3450, 16
        %v3480 = vpop.permute.xlu0 %3479
        %3481 = vrot.lane.b32.xlu0 %v3451, 16
        %v3482 = vpop.permute.xlu0 %3481
        %3483 = vrot.lane.b32.xlu0 %v3452, 16
        %v3484 = vpop.permute.xlu0 %3483
        %3485 = vrot.lane.b32.xlu0 %v3453, 16
        %v3486 = vpop.permute.xlu0 %3485
        %3487 = vrot.lane.b32.xlu0 %v3454, 16
        %v3488 = vpop.permute.xlu0 %3487
        %3489 = vrot.lane.b32.xlu0 %v3455, 16
        %v3490 = vpop.permute.xlu0 %3489
        %3491 = vrot.lane.b32.xlu0 %v3456, 16
        %v3492 = vpop.permute.xlu0 %3491
        %vm3493 = vcmask 130048
        %v3494 = vsel %vm3493, %v3470, %v3472
        %v3495 = vsel %vm3493, %v3472, %v3474
        %v3496 = vsel %vm3493, %v3476, %v3478
        %v3497 = vsel %vm3493, %v3478, %v3480
        %v3498 = vsel %vm3493, %v3482, %v3484
        %v3499 = vsel %vm3493, %v3484, %v3486
        %v3500 = vsel %vm3493, %v3488, %v3490
        %v3501 = vsel %vm3493, %v3490, %v3492
        %v3510 = vadd.f32 %v2187, %v3494
        %v3511 = vadd.f32 %v2188, %v3495
        %v3512 = vadd.f32 %v2189, %v3496
        %v3513 = vadd.f32 %v2190, %v3497
        %v3514 = vadd.f32 %v2191, %v3498
        %v3515 = vadd.f32 %v2192, %v3499
        %v3516 = vadd.f32 %v2193, %v3500
        %v3517 = vadd.f32 %v2194, %v3501
        %3518 = vst [vmem:[#allocation2] sm:$0xff] 0.0
        %3519 = vst [vmem:[#allocation2 + $0x8] sm:$0xff] 0.0
        %3520 = vst [vmem:[#allocation2 + $0x10] sm:$0xff] 0.0
        %3521 = vst.msk [vmem:[#allocation2 + $0x18] sm:$0xff] %vm893, 0.0
        %3522 = vst [vmem:[#allocation2 + $0x20] sm:$0xff] 0.0
        %3523 = vst [vmem:[#allocation2 + $0x28] sm:$0xff] 0.0
        %3524 = vst [vmem:[#allocation2 + $0x30] sm:$0xff] 0.0
        %3525 = vst.msk [vmem:[#allocation2 + $0x38] sm:$0xff] %vm893, 0.0
        %3526 = vst [vmem:[#allocation2 + $0x40] sm:$0xff] 0.0
        %3527 = vst [vmem:[#allocation2 + $0x48] sm:$0xff] 0.0
        %3528 = vst [vmem:[#allocation2 + $0x50] sm:$0xff] 0.0
        %3529 = vst.msk [vmem:[#allocation2 + $0x58] sm:$0xff] %vm893, 0.0
        %3530 = vst [vmem:[#allocation2 + $0x60] sm:$0xff] 0.0
        %3531 = vst [vmem:[#allocation2 + $0x68] sm:$0xff] 0.0
        %3532 = vst [vmem:[#allocation2 + $0x70] sm:$0xff] 0.0
        %3533 = vst.msk [vmem:[#allocation2 + $0x78] sm:$0xff] %vm893, 0.0
        %3534 = vst [vmem:[#allocation2 + $0x80] sm:$0x3] 0.0
        %3535 = vst [vmem:[#allocation2 + $0x88] sm:$0x3] 0.0
        %3536 = vst [vmem:[#allocation2 + $0x90] sm:$0x3] 0.0
        %3537 = vst.msk [vmem:[#allocation2 + $0x98] sm:$0x3] %vm910, 0.0
        %3538 = vst [vmem:[#allocation2 + $0x8] sm:$0xff] %v3510
        %3539 = vst [vmem:[#allocation2 + $0x10] sm:$0xff] %v3511
        %v3540 = vld [vmem:[#allocation2] sm:$0xff]
        %v3541 = vld [vmem:[#allocation2 + $0x8] sm:$0xff]
        %v3542 = vld [vmem:[#allocation2 + $0x10] sm:$0xff]
        %v3543 = vld [vmem:[%s3] ss:$4 sm:$0x3]
        %v3545 = vperm.slane %v3543, 0
        %v3546 = vperm.slane %v3543, 1
        %3547 = vrot.lane.b32.xlu0 %v3545, 111
        %v3548 = vpop.permute.xlu0 %3547
        %3549 = vrot.lane.b32.xlu0 %v3546, 111
        %v3550 = vpop.permute.xlu0 %3549
        %v3551 = vsel %vm940, %v3548, %v3550
        %v3555 = vmul.f32 %v3540, %v3548
        %v3556 = vmul.f32 %v3541, %v3551
        %v3557 = vmul.f32 %v3542, %v3550
        %v3558 = vpack.c.bf16 %v3555, %v3555
        %v3559 = vpack.c.bf16 %v3556, %v3556
        %v3560 = vpack.c.bf16 %v3557, %v3557
        %v3561 = vld [vmem:[#allocation13] sm:$0xf]
        %v3562 = vpack.c.bf16 %v3540, %v3540
        %v3563 = vpack.c.bf16 %v3541, %v3541
        %v3564 = vpack.c.bf16 %v3542, %v3542
        %v3566 = vunpack.c.l.b16 %v3561
        %v3567 = vpack.c.b16 %v3566, %v3566
        %3568 = vrot.lane.b32.xlu0 %v3567, 120
        %v3569 = vpop.permute.xlu0 %3568
        %3573 = vrot.lane.b32.xlu0 %v3562, 16
        %v3574 = vpop.permute.xlu0 %3573
        %3575 = vrot.lane.b32.xlu0 %v3563, 16
        %v3576 = vpop.permute.xlu0 %3575
        %3577 = vrot.lane.b32.xlu0 %v3564, 16
        %v3578 = vpop.permute.xlu0 %3577
        %v3579 = vsel %vm1068, %v3574, %v3576
        %v3580 = vsel %vm1068, %v3576, %v3578
        %vm3581 = vcmask 64512
        %v3583 = vsel %vm3581, %v3569, 0
        %vm3585 = vcmask 1043456
        %v3587 = vsel %vm3585, %v3579, 0
        %v3590 = vsel %vm3585, %v3580, 0
        %3592 = vmatpush.bf16.msra.mxu0 0
        %3593 = vmatpush.bf16.msra.mxu0 0
        %3594 = vmatpush.bf16.msra.mxu0 0
        %3595 = vmatpush.bf16.msra.mxu0 0
        %3596 = vmatpush.bf16.msra.mxu0 0
        %3597 = vmatpush.bf16.msra.mxu0 0
        %3598 = vmatpush.bf16.msra.mxu0 0
        %3599 = vmatpush.bf16.msra.mxu0 %v3587
        %3600 = vmatmul.bf16.gmra.mxu0 %v3583
        %v3601 = vpop.f32.mrf.mxu0
        %v3602 = vadd.f32 0.0, %v3601
        %v3603 = vpop.f32.mrf.mxu0
        %3604 = vdwg.mxu0
        %3605 = vmatpush.bf16.msra.mxu0 0
        %3606 = vmatpush.bf16.msra.mxu0 0
        %3607 = vmatpush.bf16.msra.mxu0 0
        %3608 = vmatpush.bf16.msra.mxu0 0
        %3609 = vmatpush.bf16.msra.mxu0 0
        %3610 = vmatpush.bf16.msra.mxu0 0
        %3611 = vmatpush.bf16.msra.mxu0 0
        %3612 = vmatpush.bf16.msra.mxu0 %v3590
        %3613 = vmatmul.bf16.gmra.mxu0 %v3583
        %v3614 = vpop.f32.mrf.mxu0
        %v3615 = vadd.f32 0.0, %v3614
        %v3616 = vpop.f32.mrf.mxu0
        %3617 = vdwg.mxu0
        %3621 = vrot.lane.b32.xlu0 %v3558, 17
        %v3622 = vpop.permute.xlu0 %3621
        %3623 = vrot.lane.b32.xlu0 %v3559, 17
        %v3624 = vpop.permute.xlu0 %3623
        %3625 = vrot.lane.b32.xlu0 %v3560, 17
        %v3626 = vpop.permute.xlu0 %3625
        %v3627 = vsel %vm999, %v3622, %v3624
        %v3628 = vsel %vm999, %v3624, %v3626
        %v3630 = vsel %vm3581, %v3561, 0
        %v3633 = vsel %vm3585, %v3627, 0
        %v3636 = vsel %vm3585, %v3628, 0
        %3638 = vmatpush.bf16.msra.mxu0 0
        %3639 = vmatpush.bf16.msra.mxu0 0
        %3640 = vmatpush.bf16.msra.mxu0 0
        %3641 = vmatpush.bf16.msra.mxu0 0
        %3642 = vmatpush.bf16.msra.mxu0 0
        %3643 = vmatpush.bf16.msra.mxu0 0
        %3644 = vmatpush.bf16.msra.mxu0 0
        %3645 = vmatpush.bf16.msra.mxu0 %v3633
        %3646 = vmatmul.bf16.gmra.mxu0 %v3630
        %v3647 = vpop.f32.mrf.mxu0
        %v3648 = vadd.f32 %v3602, %v3647
        %v3649 = vpop.f32.mrf.mxu0
        %3650 = vdwg.mxu0
        %3651 = vmatpush.bf16.msra.mxu0 0
        %3652 = vmatpush.bf16.msra.mxu0 0
        %3653 = vmatpush.bf16.msra.mxu0 0
        %3654 = vmatpush.bf16.msra.mxu0 0
        %3655 = vmatpush.bf16.msra.mxu0 0
        %3656 = vmatpush.bf16.msra.mxu0 0
        %3657 = vmatpush.bf16.msra.mxu0 0
        %3658 = vmatpush.bf16.msra.mxu0 %v3636
        %3659 = vmatmul.bf16.gmra.mxu0 %v3630
        %v3660 = vpop.f32.mrf.mxu0
        %v3661 = vadd.f32 %v3615, %v3660
        %v3662 = vpop.f32.mrf.mxu0
        %3663 = vdwg.mxu0
        %v3664 = vld [vmem:[%s1096] ss:$4 sm:$0x3]
        %v3666 = vperm.slane %v3664, 0
        %v3667 = vperm.slane %v3664, 1
        %3668 = vrot.lane.b32.xlu0 %v3666, 113
        %v3669 = vpop.permute.xlu0 %3668
        %3670 = vrot.lane.b32.xlu0 %v3667, 113
        %v3671 = vpop.permute.xlu0 %3670
        %v3672 = vsel %vm1105, %v3669, %v3671
        %v3676 = vmul.f32 %v3540, %v3669
        %v3677 = vmul.f32 %v3541, %v3672
        %v3678 = vmul.f32 %v3542, %v3671
        %v3679 = vpack.c.bf16 %v3676, %v3676
        %v3680 = vpack.c.bf16 %v3677, %v3677
        %v3681 = vpack.c.bf16 %v3678, %v3678
        %3682 = vrot.lane.b32.xlu0 %v3567, 112
        %v3683 = vpop.permute.xlu0 %3682
        %3687 = vrot.lane.b32.xlu0 %v3679, 15
        %v3688 = vpop.permute.xlu0 %3687
        %3689 = vrot.lane.b32.xlu0 %v3680, 15
        %v3690 = vpop.permute.xlu0 %3689
        %3691 = vrot.lane.b32.xlu0 %v3681, 15
        %v3692 = vpop.permute.xlu0 %3691
        %v3693 = vsel %vm1163, %v3688, %v3690
        %v3694 = vsel %vm1163, %v3690, %v3692
        %v3696 = vsel %vm3581, %v3683, 0
        %v3699 = vsel %vm3585, %v3693, 0
        %v3702 = vsel %vm3585, %v3694, 0
        %3704 = vmatpush.bf16.msra.mxu0 0
        %3705 = vmatpush.bf16.msra.mxu0 0
        %3706 = vmatpush.bf16.msra.mxu0 0
        %3707 = vmatpush.bf16.msra.mxu0 0
        %3708 = vmatpush.bf16.msra.mxu0 0
        %3709 = vmatpush.bf16.msra.mxu0 0
        %3710 = vmatpush.bf16.msra.mxu0 0
        %3711 = vmatpush.bf16.msra.mxu0 %v3699
        %3712 = vmatmul.bf16.gmra.mxu0 %v3696
        %v3713 = vpop.f32.mrf.mxu0
        %v3714 = vadd.f32 0.0, %v3713
        %v3715 = vpop.f32.mrf.mxu0
        %3716 = vdwg.mxu0
        %3717 = vmatpush.bf16.msra.mxu0 0
        %3718 = vmatpush.bf16.msra.mxu0 0
        %3719 = vmatpush.bf16.msra.mxu0 0
        %3720 = vmatpush.bf16.msra.mxu0 0
        %3721 = vmatpush.bf16.msra.mxu0 0
        %3722 = vmatpush.bf16.msra.mxu0 0
        %3723 = vmatpush.bf16.msra.mxu0 0
        %3724 = vmatpush.bf16.msra.mxu0 %v3702
        %3725 = vmatmul.bf16.gmra.mxu0 %v3696
        %v3726 = vpop.f32.mrf.mxu0
        %v3727 = vadd.f32 0.0, %v3726
        %v3728 = vpop.f32.mrf.mxu0
        %3729 = vdwg.mxu0
        %v3730 = vadd.f32 %v3648, %v3714
        %v3731 = vadd.f32 %v3661, %v3727
        %3732 = vrot.lane.b32.xlu0 %v3545, 127
        %v3733 = vpop.permute.xlu0 %3732
        %3734 = vrot.lane.b32.xlu0 %v3546, 127
        %v3735 = vpop.permute.xlu0 %3734
        %v3736 = vsel %vm1199, %v3733, %v3735
        %v3740 = vmul.f32 %v3540, %v3733
        %v3741 = vmul.f32 %v3541, %v3736
        %v3742 = vmul.f32 %v3542, %v3735
        %v3743 = vpack.c.bf16 %v3740, %v3740
        %v3744 = vpack.c.bf16 %v3741, %v3741
        %v3745 = vpack.c.bf16 %v3742, %v3742
        %3746 = vrot.lane.b32.xlu0 %v3567, 104
        %v3747 = vpop.permute.xlu0 %3746
        %3751 = vrot.lane.b32.xlu0 %v3743, 1
        %v3752 = vpop.permute.xlu0 %3751
        %3753 = vrot.lane.b32.xlu0 %v3744, 1
        %v3754 = vpop.permute.xlu0 %3753
        %3755 = vrot.lane.b32.xlu0 %v3745, 1
        %v3756 = vpop.permute.xlu0 %3755
        %v3757 = vsel %vm1257, %v3752, %v3754
        %v3758 = vsel %vm1257, %v3754, %v3756
        %v3760 = vsel %vm3581, %v3747, 0
        %v3763 = vsel %vm3585, %v3757, 0
        %v3766 = vsel %vm3585, %v3758, 0
        %3768 = vmatpush.bf16.msra.mxu0 0
        %3769 = vmatpush.bf16.msra.mxu0 0
        %3770 = vmatpush.bf16.msra.mxu0 0
        %3771 = vmatpush.bf16.msra.mxu0 0
        %3772 = vmatpush.bf16.msra.mxu0 0
        %3773 = vmatpush.bf16.msra.mxu0 0
        %3774 = vmatpush.bf16.msra.mxu0 0
        %3775 = vmatpush.bf16.msra.mxu0 %v3763
        %3776 = vmatmul.bf16.gmra.mxu0 %v3760
        %v3777 = vpop.f32.mrf.mxu0
        %v3778 = vadd.f32 0.0, %v3777
        %v3779 = vpop.f32.mrf.mxu0
        %3780 = vdwg.mxu0
        %3781 = vmatpush.bf16.msra.mxu0 0
        %3782 = vmatpush.bf16.msra.mxu0 0
        %3783 = vmatpush.bf16.msra.mxu0 0
        %3784 = vmatpush.bf16.msra.mxu0 0
        %3785 = vmatpush.bf16.msra.mxu0 0
        %3786 = vmatpush.bf16.msra.mxu0 0
        %3787 = vmatpush.bf16.msra.mxu0 0
        %3788 = vmatpush.bf16.msra.mxu0 %v3766
        %3789 = vmatmul.bf16.gmra.mxu0 %v3760
        %v3790 = vpop.f32.mrf.mxu0
        %v3791 = vadd.f32 0.0, %v3790
        %v3792 = vpop.f32.mrf.mxu0
        %3793 = vdwg.mxu0
        %v3794 = vadd.f32 %v3730, %v3778
        %v3795 = vadd.f32 %v3731, %v3791
        %3796 = vrot.lane.b32.xlu0 %v3567, 96
        %v3797 = vpop.permute.xlu0 %3796
        %v3799 = vsel %vm3581, %v3797, 0
        %v3802 = vsel %vm3585, %v3563, 0
        %v3805 = vsel %vm3585, %v3564, 0
        %3807 = vmatpush.bf16.msra.mxu0 0
        %3808 = vmatpush.bf16.msra.mxu0 0
        %3809 = vmatpush.bf16.msra.mxu0 0
        %3810 = vmatpush.bf16.msra.mxu0 0
        %3811 = vmatpush.bf16.msra.mxu0 0
        %3812 = vmatpush.bf16.msra.mxu0 0
        %3813 = vmatpush.bf16.msra.mxu0 0
        %3814 = vmatpush.bf16.msra.mxu0 %v3802
        %3815 = vmatmul.bf16.gmra.mxu0 %v3799
        %v3816 = vpop.f32.mrf.mxu0
        %v3817 = vadd.f32 0.0, %v3816
        %v3818 = vpop.f32.mrf.mxu0
        %3819 = vdwg.mxu0
        %3820 = vmatpush.bf16.msra.mxu0 0
        %3821 = vmatpush.bf16.msra.mxu0 0
        %3822 = vmatpush.bf16.msra.mxu0 0
        %3823 = vmatpush.bf16.msra.mxu0 0
        %3824 = vmatpush.bf16.msra.mxu0 0
        %3825 = vmatpush.bf16.msra.mxu0 0
        %3826 = vmatpush.bf16.msra.mxu0 0
        %3827 = vmatpush.bf16.msra.mxu0 %v3805
        %3828 = vmatmul.bf16.gmra.mxu0 %v3799
        %v3829 = vpop.f32.mrf.mxu0
        %v3830 = vadd.f32 0.0, %v3829
        %v3831 = vpop.f32.mrf.mxu0
        %3832 = vdwg.mxu0
        %v3833 = vadd.f32 %v3794, %v3817
        %v3834 = vadd.f32 %v3795, %v3830
        %v3835 = vld [vmem:[#allocation2 + $0x8] sm:$0xff]
        %v3836 = vld [vmem:[#allocation2 + $0x10] sm:$0xff]
        %v3837 = vld [vmem:[#allocation2 + $0x18] sm:$0xff]
        %3838 = vrot.lane.b32.xlu0 %v3666, 1
        %v3839 = vpop.permute.xlu0 %3838
        %3840 = vrot.lane.b32.xlu0 %v3667, 1
        %v3841 = vpop.permute.xlu0 %3840
        %v3842 = vsel %vm1309, %v3839, %v3841
        %v3846 = vmul.f32 %v3835, %v3839
        %v3847 = vmul.f32 %v3836, %v3842
        %v3848 = vmul.f32 %v3837, %v3841
        %v3849 = vpack.c.bf16 %v3846, %v3846
        %v3850 = vpack.c.bf16 %v3847, %v3847
        %v3851 = vpack.c.bf16 %v3848, %v3848
        %3852 = vrot.lane.b32.xlu0 %v3567, 88
        %v3853 = vpop.permute.xlu0 %3852
        %3857 = vrot.lane.b32.xlu0 %v3849, 127
        %v3858 = vpop.permute.xlu0 %3857
        %3859 = vrot.lane.b32.xlu0 %v3850, 127
        %v3860 = vpop.permute.xlu0 %3859
        %3861 = vrot.lane.b32.xlu0 %v3851, 127
        %v3862 = vpop.permute.xlu0 %3861
        %v3863 = vsel %vm1367, %v3858, %v3860
        %v3864 = vsel %vm1367, %v3860, %v3862
        %v3866 = vsel %vm3581, %v3853, 0
        %v3869 = vsel %vm3585, %v3863, 0
        %v3872 = vsel %vm3585, %v3864, 0
        %3874 = vmatpush.bf16.msra.mxu0 0
        %3875 = vmatpush.bf16.msra.mxu0 0
        %3876 = vmatpush.bf16.msra.mxu0 0
        %3877 = vmatpush.bf16.msra.mxu0 0
        %3878 = vmatpush.bf16.msra.mxu0 0
        %3879 = vmatpush.bf16.msra.mxu0 0
        %3880 = vmatpush.bf16.msra.mxu0 0
        %3881 = vmatpush.bf16.msra.mxu0 %v3869
        %3882 = vmatmul.bf16.gmra.mxu0 %v3866
        %v3883 = vpop.f32.mrf.mxu0
        %v3884 = vadd.f32 0.0, %v3883
        %v3885 = vpop.f32.mrf.mxu0
        %3886 = vdwg.mxu0
        %3887 = vmatpush.bf16.msra.mxu0 0
        %3888 = vmatpush.bf16.msra.mxu0 0
        %3889 = vmatpush.bf16.msra.mxu0 0
        %3890 = vmatpush.bf16.msra.mxu0 0
        %3891 = vmatpush.bf16.msra.mxu0 0
        %3892 = vmatpush.bf16.msra.mxu0 0
        %3893 = vmatpush.bf16.msra.mxu0 0
        %3894 = vmatpush.bf16.msra.mxu0 %v3872
        %3895 = vmatmul.bf16.gmra.mxu0 %v3866
        %v3896 = vpop.f32.mrf.mxu0
        %v3897 = vadd.f32 0.0, %v3896
        %v3898 = vpop.f32.mrf.mxu0
        %3899 = vdwg.mxu0
        %v3900 = vadd.f32 %v3833, %v3884
        %v3901 = vadd.f32 %v3834, %v3897
        %3902 = vrot.lane.b32.xlu0 %v3545, 15
        %v3903 = vpop.permute.xlu0 %3902
        %3904 = vrot.lane.b32.xlu0 %v3546, 15
        %v3905 = vpop.permute.xlu0 %3904
        %v3906 = vsel %vm1403, %v3903, %v3905
        %v3910 = vmul.f32 %v3835, %v3903
        %v3911 = vmul.f32 %v3836, %v3906
        %v3912 = vmul.f32 %v3837, %v3905
        %v3913 = vpack.c.bf16 %v3910, %v3910
        %v3914 = vpack.c.bf16 %v3911, %v3911
        %v3915 = vpack.c.bf16 %v3912, %v3912
        %3916 = vrot.lane.b32.xlu0 %v3567, 80
        %v3917 = vpop.permute.xlu0 %3916
        %3921 = vrot.lane.b32.xlu0 %v3913, 113
        %v3922 = vpop.permute.xlu0 %3921
        %3923 = vrot.lane.b32.xlu0 %v3914, 113
        %v3924 = vpop.permute.xlu0 %3923
        %3925 = vrot.lane.b32.xlu0 %v3915, 113
        %v3926 = vpop.permute.xlu0 %3925
        %v3927 = vsel %vm1461, %v3922, %v3924
        %v3928 = vsel %vm1461, %v3924, %v3926
        %v3930 = vsel %vm3581, %v3917, 0
        %v3933 = vsel %vm3585, %v3927, 0
        %v3936 = vsel %vm3585, %v3928, 0
        %3938 = vmatpush.bf16.msra.mxu0 0
        %3939 = vmatpush.bf16.msra.mxu0 0
        %3940 = vmatpush.bf16.msra.mxu0 0
        %3941 = vmatpush.bf16.msra.mxu0 0
        %3942 = vmatpush.bf16.msra.mxu0 0
        %3943 = vmatpush.bf16.msra.mxu0 0
        %3944 = vmatpush.bf16.msra.mxu0 0
        %3945 = vmatpush.bf16.msra.mxu0 %v3933
        %3946 = vmatmul.bf16.gmra.mxu0 %v3930
        %v3947 = vpop.f32.mrf.mxu0
        %v3948 = vadd.f32 0.0, %v3947
        %v3949 = vpop.f32.mrf.mxu0
        %3950 = vdwg.mxu0
        %3951 = vmatpush.bf16.msra.mxu0 0
        %3952 = vmatpush.bf16.msra.mxu0 0
        %3953 = vmatpush.bf16.msra.mxu0 0
        %3954 = vmatpush.bf16.msra.mxu0 0
        %3955 = vmatpush.bf16.msra.mxu0 0
        %3956 = vmatpush.bf16.msra.mxu0 0
        %3957 = vmatpush.bf16.msra.mxu0 0
        %3958 = vmatpush.bf16.msra.mxu0 %v3936
        %3959 = vmatmul.bf16.gmra.mxu0 %v3930
        %v3960 = vpop.f32.mrf.mxu0
        %v3961 = vadd.f32 0.0, %v3960
        %v3962 = vpop.f32.mrf.mxu0
        %3963 = vdwg.mxu0
        %v3964 = vadd.f32 %v3900, %v3948
        %v3965 = vadd.f32 %v3901, %v3961
        %v3966 = vpack.c.bf16 %v3835, %v3835
        %v3967 = vpack.c.bf16 %v3836, %v3836
        %v3968 = vpack.c.bf16 %v3837, %v3837
        %3969 = vrot.lane.b32.xlu0 %v3567, 72
        %v3970 = vpop.permute.xlu0 %3969
        %3974 = vrot.lane.b32.xlu0 %v3966, 112
        %v3975 = vpop.permute.xlu0 %3974
        %3976 = vrot.lane.b32.xlu0 %v3967, 112
        %v3977 = vpop.permute.xlu0 %3976
        %3978 = vrot.lane.b32.xlu0 %v3968, 112
        %v3979 = vpop.permute.xlu0 %3978
        %v3980 = vsel %vm1530, %v3975, %v3977
        %v3981 = vsel %vm1530, %v3977, %v3979
        %v3983 = vsel %vm3581, %v3970, 0
        %v3986 = vsel %vm3585, %v3980, 0
        %v3989 = vsel %vm3585, %v3981, 0
        %3991 = vmatpush.bf16.msra.mxu0 0
        %3992 = vmatpush.bf16.msra.mxu0 0
        %3993 = vmatpush.bf16.msra.mxu0 0
        %3994 = vmatpush.bf16.msra.mxu0 0
        %3995 = vmatpush.bf16.msra.mxu0 0
        %3996 = vmatpush.bf16.msra.mxu0 0
        %3997 = vmatpush.bf16.msra.mxu0 0
        %3998 = vmatpush.bf16.msra.mxu0 %v3986
        %3999 = vmatmul.bf16.gmra.mxu0 %v3983
        %v4000 = vpop.f32.mrf.mxu0
        %v4001 = vadd.f32 0.0, %v4000
        %v4002 = vpop.f32.mrf.mxu0
        %4003 = vdwg.mxu0
        %4004 = vmatpush.bf16.msra.mxu0 0
        %4005 = vmatpush.bf16.msra.mxu0 0
        %4006 = vmatpush.bf16.msra.mxu0 0
        %4007 = vmatpush.bf16.msra.mxu0 0
        %4008 = vmatpush.bf16.msra.mxu0 0
        %4009 = vmatpush.bf16.msra.mxu0 0
        %4010 = vmatpush.bf16.msra.mxu0 0
        %4011 = vmatpush.bf16.msra.mxu0 %v3989
        %4012 = vmatmul.bf16.gmra.mxu0 %v3983
        %v4013 = vpop.f32.mrf.mxu0
        %v4014 = vadd.f32 0.0, %v4013
        %v4015 = vpop.f32.mrf.mxu0
        %4016 = vdwg.mxu0
        %v4017 = vadd.f32 %v3964, %v4001
        %v4018 = vadd.f32 %v3965, %v4014
        %4019 = vrot.lane.b32.xlu0 %v3666, 17
        %v4020 = vpop.permute.xlu0 %4019
        %4021 = vrot.lane.b32.xlu0 %v3667, 17
        %v4022 = vpop.permute.xlu0 %4021
        %v4023 = vsel %vm893, %v4020, %v4022
        %v4027 = vmul.f32 %v3835, %v4020
        %v4028 = vmul.f32 %v3836, %v4023
        %v4029 = vmul.f32 %v3837, %v4022
        %v4030 = vpack.c.bf16 %v4027, %v4027
        %v4031 = vpack.c.bf16 %v4028, %v4028
        %v4032 = vpack.c.bf16 %v4029, %v4029
        %4033 = vrot.lane.b32.xlu0 %v3567, 64
        %v4034 = vpop.permute.xlu0 %4033
        %4038 = vrot.lane.b32.xlu0 %v4030, 111
        %v4039 = vpop.permute.xlu0 %4038
        %4040 = vrot.lane.b32.xlu0 %v4031, 111
        %v4041 = vpop.permute.xlu0 %4040
        %4042 = vrot.lane.b32.xlu0 %v4032, 111
        %v4043 = vpop.permute.xlu0 %4042
        %v4044 = vsel %vm1623, %v4039, %v4041
        %v4045 = vsel %vm1623, %v4041, %v4043
        %v4047 = vsel %vm3581, %v4034, 0
        %v4050 = vsel %vm3585, %v4044, 0
        %v4053 = vsel %vm3585, %v4045, 0
        %4055 = vmatpush.bf16.msra.mxu0 0
        %4056 = vmatpush.bf16.msra.mxu0 0
        %4057 = vmatpush.bf16.msra.mxu0 0
        %4058 = vmatpush.bf16.msra.mxu0 0
        %4059 = vmatpush.bf16.msra.mxu0 0
        %4060 = vmatpush.bf16.msra.mxu0 0
        %4061 = vmatpush.bf16.msra.mxu0 0
        %4062 = vmatpush.bf16.msra.mxu0 %v4050
        %4063 = vmatmul.bf16.gmra.mxu0 %v4047
        %v4064 = vpop.f32.mrf.mxu0
        %v4065 = vadd.f32 0.0, %v4064
        %v4066 = vpop.f32.mrf.mxu0
        %4067 = vdwg.mxu0
        %4068 = vmatpush.bf16.msra.mxu0 0
        %4069 = vmatpush.bf16.msra.mxu0 0
        %4070 = vmatpush.bf16.msra.mxu0 0
        %4071 = vmatpush.bf16.msra.mxu0 0
        %4072 = vmatpush.bf16.msra.mxu0 0
        %4073 = vmatpush.bf16.msra.mxu0 0
        %4074 = vmatpush.bf16.msra.mxu0 0
        %4075 = vmatpush.bf16.msra.mxu0 %v4053
        %4076 = vmatmul.bf16.gmra.mxu0 %v4047
        %v4077 = vpop.f32.mrf.mxu0
        %v4078 = vadd.f32 0.0, %v4077
        %v4079 = vpop.f32.mrf.mxu0
        %4080 = vdwg.mxu0
        %v4081 = vadd.f32 %v4017, %v4065
        %v4082 = vadd.f32 %v4018, %v4078
        %v4083 = vpack.c.bf16 %v3512, %v4081
        %v4084 = vpack.c.bf16 %v3513, %v4082
        %v4085 = vpack.c.bf16 %v3516, %v3514
        %v4086 = vpack.c.bf16 %v3517, %v3515
        %v4087 = vld [vmem:[#allocation14] sm:$0xf]
        %v4088 = vld [vmem:[#allocation14 + $0x4] sm:$0xf]
        %v4089 = vld [vmem:[#allocation14 + $0x8] sm:$0xf]
        %v4090 = vld [vmem:[#allocation14 + $0xc] sm:$0xf]
        %v4091 = vld [vmem:[#allocation16] sm:$0xff]
        %v4092 = vld [vmem:[#allocation16 + $0x8] sm:$0xff]
        %v4093 = vld [vmem:[#allocation16 + $0x10] sm:$0xff]
        %v4094 = vld [vmem:[#allocation16 + $0x18] sm:$0xff]
        %4096 = vset.pattern.permute.xlu0 0
        %4097 = vperm.xlu0 %4096, %v4091
        %v4098 = vpop.permute.xlu0 %4097
        %4101 = vset.pattern.permute.xlu0 0
        %4102 = vperm.xlu0 %4101, %v4092
        %v4103 = vpop.permute.xlu0 %4102
        %4106 = vset.pattern.permute.xlu0 0
        %4107 = vperm.xlu0 %4106, %v4093
        %v4108 = vpop.permute.xlu0 %4107
        %4111 = vset.pattern.permute.xlu0 0
        %4112 = vperm.xlu0 %4111, %v4094
        %v4113 = vpop.permute.xlu0 %4112
        %v4119 = vunpack.c.l.b16 %v4087
        %v4120 = vunpack.c.l.b16 %v4088
        %v4121 = vunpack.c.l.b16 %v4089
        %v4122 = vunpack.c.l.b16 %v4090
        %v4123 = vpack.c.b16 %v4120, %v4119
        %v4124 = vpack.c.b16 %v4122, %v4121
        %v4126 = vsel %vm1917, %v4123, 0
        %v4129 = vsel %vm1917, %v4124, 0
        %4131 = vmatpush.bf16.msra.mxu0 0
        %4132 = vmatpush.bf16.msra.mxu0 0
        %4133 = vmatpush.bf16.msra.mxu0 0
        %4134 = vmatpush.bf16.msra.mxu0 0
        %4135 = vmatpush.bf16.msra.mxu0 0
        %4136 = vmatpush.bf16.msra.mxu0 0
        %4137 = vmatpush.bf16.msra.mxu0 %v4085
        %4138 = vmatpush.bf16.msra.mxu0 %v4083
        %4139 = vmatmul.bf16.gmra.mxu0 %v4126
        %v4140 = vpop.f32.mrf.mxu0
        %v4141 = vadd.f32 %v4098, %v4140
        %v4142 = vpop.f32.mrf.mxu0
        %v4143 = vadd.f32 %v4103, %v4142
        %4144 = vmatmul.bf16.gmra.mxu0 %v4129
        %v4145 = vpop.f32.mrf.mxu0
        %v4146 = vadd.f32 %v4108, %v4145
        %v4147 = vpop.f32.mrf.mxu0
        %v4148 = vadd.f32 %v4113, %v4147
        %4149 = vdwg.mxu0
        %4150 = vmatpush.bf16.msra.mxu0 0
        %4151 = vmatpush.bf16.msra.mxu0 0
        %4152 = vmatpush.bf16.msra.mxu0 0
        %4153 = vmatpush.bf16.msra.mxu0 0
        %4154 = vmatpush.bf16.msra.mxu0 0
        %4155 = vmatpush.bf16.msra.mxu0 0
        %4156 = vmatpush.bf16.msra.mxu0 %v4086
        %4157 = vmatpush.bf16.msra.mxu0 %v4084
        %4158 = vmatmul.bf16.gmra.mxu0 %v4126
        %v4159 = vpop.f32.mrf.mxu0
        %v4160 = vadd.f32 %v4098, %v4159
        %v4161 = vpop.f32.mrf.mxu0
        %v4162 = vadd.f32 %v4103, %v4161
        %4163 = vmatmul.bf16.gmra.mxu0 %v4129
        %v4164 = vpop.f32.mrf.mxu0
        %v4165 = vadd.f32 %v4108, %v4164
        %v4166 = vpop.f32.mrf.mxu0
        %v4167 = vadd.f32 %v4113, %v4166
        %4168 = vdwg.mxu0
        %v4169 = vadd.f32 %v4081, %v4082
        %4170 = vadd.xlane.f32.xlu0 %v4169
        %v4171 = vpop.xlane.xlu0 %4170
        %v4172 = vadd.f32 %v3512, %v3513
        %4173 = vadd.xlane.f32.xlu0 %v4172
        %v4174 = vpop.xlane.xlu0 %4173
        %v4175 = vadd.f32 %v3514, %v3515
        %4176 = vadd.xlane.f32.xlu0 %v4175
        %v4177 = vpop.xlane.xlu0 %4176
        %v4178 = vadd.f32 %v3516, %v3517
        %4179 = vadd.xlane.f32.xlu0 %v4178
        %v4180 = vpop.xlane.xlu0 %4179
        %v4181 = vrcp.pop 256.0
        %v4182 = vmul.f32 256.0, %v4181
        %v4183 = vsub.f32 1.0, %v4182
        %v4184 = vmul.f32 %v4181, %v4183
        %v4185 = vadd.f32 %v4181, %v4184
        %vm4186 = vweird.f32 %v4181
        %v4187 = vsel %vm4186, %v4181, %v4185
        %v4188 = vmul.f32 %v4171, %v4187
        %v4189 = vmul.f32 %v4174, %v4187
        %v4190 = vmul.f32 %v4177, %v4187
        %v4191 = vmul.f32 %v4180, %v4187
        %v4192 = vld [vmem:[#allocation17] sm:$0xff]
        %v4193 = vld [vmem:[#allocation17 + $0x8] sm:$0xff]
        %v4194 = vld [vmem:[#allocation17 + $0x10] sm:$0xff]
        %v4195 = vld [vmem:[#allocation17 + $0x18] sm:$0xff]
        %v4196 = vmul.f32 %v4188, %v4192
        %v4197 = vmul.f32 %v4189, %v4193
        %v4198 = vmul.f32 %v4190, %v4194
        %v4199 = vmul.f32 %v4191, %v4195
        %vm4200 = vcmask 15360
        %v4201 = vsel %vm4200, %v4196, 0.0
        %v4202 = vsel %vm4200, %v4197, 0.0
        %v4203 = vadd.f32 %v4201, %v4202
        %v4204 = vsel %vm4200, %v4198, 0.0
        %v4205 = vadd.f32 %v4203, %v4204
        %v4206 = vsel %vm4200, %v4199, 0.0
        %v4207 = vadd.f32 %v4205, %v4206
        %v4208 = vrot.slane %v4207, 4
        %v4209 = vadd.f32 %v4207, %v4208
        %v4210 = vrot.slane %v4209, 2
        %v4211 = vadd.f32 %v4209, %v4210
        %v4212 = vrot.slane %v4211, 1
        %v4213 = vadd.f32 %v4211, %v4212
        %v4214 = vld [vmem:[#allocation19] sm:$0x1]
        %v4215 = vadd.f32 %v4213, %v4214
        %v4216 = vmax.f32 %v4215, 0.0
        %v4217 = vld [vmem:[#allocation20] sm:$0xff]
        %v4218 = vld [vmem:[#allocation20 + $0x8] sm:$0xff]
        %v4219 = vld [vmem:[#allocation20 + $0x10] sm:$0xff]
        %v4220 = vld [vmem:[#allocation20 + $0x18] sm:$0xff]
        %v4221 = vperm.slane %v4216, 0
        %v4222 = vmul.f32 %v4217, %v4221
        %v4223 = vmul.f32 %v4218, %v4221
        %v4224 = vmul.f32 %v4219, %v4221
        %v4225 = vmul.f32 %v4220, %v4221
        %v4226 = vsel %vm4200, %v4222, 0.0
        %4227 = vadd.xlane.f32.xlu0 %v4226
        %v4228 = vpop.xlane.xlu0 %4227
        %v4229 = vsel %vm4200, %v4223, 0.0
        %4230 = vadd.xlane.f32.xlu0 %v4229
        %v4231 = vpop.xlane.xlu0 %4230
        %v4232 = vsel %vm4200, %v4224, 0.0
        %4233 = vadd.xlane.f32.xlu0 %v4232
        %v4234 = vpop.xlane.xlu0 %4233
        %v4235 = vsel %vm4200, %v4225, 0.0
        %4236 = vadd.xlane.f32.xlu0 %v4235
        %v4237 = vpop.xlane.xlu0 %4236
        %v4238 = vld [vmem:[#allocation22] sm:$0xff]
        %v4239 = vld [vmem:[#allocation22 + $0x8] sm:$0xff]
        %v4240 = vld [vmem:[#allocation22 + $0x10] sm:$0xff]
        %v4241 = vld [vmem:[#allocation22 + $0x18] sm:$0xff]
        %v4242 = vadd.f32 %v4228, %v4238
        %v4243 = vadd.f32 %v4231, %v4239
        %v4244 = vadd.f32 %v4234, %v4240
        %v4245 = vadd.f32 %v4237, %v4241
        %v4246 = vxor.u32 %v4242, 2147483648
        %v4247 = vxor.u32 %v4243, 2147483648
        %v4248 = vxor.u32 %v4244, 2147483648
        %v4249 = vxor.u32 %v4245, 2147483648
        %v4250 = vmul.f32 %v4246, 1.442695
        %v4251 = vpow.pop %v4250
        %v4252 = vmul.f32 %v4247, 1.442695
        %v4253 = vpow.pop %v4252
        %v4254 = vmul.f32 %v4248, 1.442695
        %v4255 = vpow.pop %v4254
        %v4256 = vmul.f32 %v4249, 1.442695
        %v4257 = vpow.pop %v4256
        %v4258 = vadd.f32 %v4251, 1.0
        %v4259 = vadd.f32 %v4253, 1.0
        %v4260 = vadd.f32 %v4255, 1.0
        %v4261 = vadd.f32 %v4257, 1.0
        %v4262 = vrcp.pop %v4258
        %v4263 = vmul.f32 %v4258, %v4262
        %v4264 = vsub.f32 1.0, %v4263
        %v4265 = vmul.f32 %v4262, %v4264
        %v4266 = vadd.f32 %v4262, %v4265
        %vm4267 = vweird.f32 %v4258
        %vm4268 = vweird.f32 %v4262
        %vm4269 = vmor %vm4267, %vm4268
        %v4270 = vsel %vm4269, %v4262, %v4266
        %v4271 = vand.u32 2147483647, %v4258
        %vm4272 = vcmp.eq.f32.partialorder %v4271, 8.507059e+37
        %v4273 = vand.u32 %v4258, 2147483648
        %v4274 = vor.u32 1.1754944e-38, %v4273
        %v4275 = vsel %vm4272, %v4274, %v4270
        %v4276 = vmul.f32 1.0, %v4275
        %v4277 = vrcp.pop %v4259
        %v4278 = vmul.f32 %v4259, %v4277
        %v4279 = vsub.f32 1.0, %v4278
        %v4280 = vmul.f32 %v4277, %v4279
        %v4281 = vadd.f32 %v4277, %v4280
        %vm4282 = vweird.f32 %v4259
        %vm4283 = vweird.f32 %v4277
        %vm4284 = vmor %vm4282, %vm4283
        %v4285 = vsel %vm4284, %v4277, %v4281
        %v4286 = vand.u32 2147483647, %v4259
        %vm4287 = vcmp.eq.f32.partialorder %v4286, 8.507059e+37
        %v4288 = vand.u32 %v4259, 2147483648
        %v4289 = vor.u32 1.1754944e-38, %v4288
        %v4290 = vsel %vm4287, %v4289, %v4285
        %v4291 = vmul.f32 1.0, %v4290
        %v4292 = vrcp.pop %v4260
        %v4293 = vmul.f32 %v4260, %v4292
        %v4294 = vsub.f32 1.0, %v4293
        %v4295 = vmul.f32 %v4292, %v4294
        %v4296 = vadd.f32 %v4292, %v4295
        %vm4297 = vweird.f32 %v4260
        %vm4298 = vweird.f32 %v4292
        %vm4299 = vmor %vm4297, %vm4298
        %v4300 = vsel %vm4299, %v4292, %v4296
        %v4301 = vand.u32 2147483647, %v4260
        %vm4302 = vcmp.eq.f32.partialorder %v4301, 8.507059e+37
        %v4303 = vand.u32 %v4260, 2147483648
        %v4304 = vor.u32 1.1754944e-38, %v4303
        %v4305 = vsel %vm4302, %v4304, %v4300
        %v4306 = vmul.f32 1.0, %v4305
        %v4307 = vrcp.pop %v4261
        %v4308 = vmul.f32 %v4261, %v4307
        %v4309 = vsub.f32 1.0, %v4308
        %v4310 = vmul.f32 %v4307, %v4309
        %v4311 = vadd.f32 %v4307, %v4310
        %vm4312 = vweird.f32 %v4261
        %vm4313 = vweird.f32 %v4307
        %vm4314 = vmor %vm4312, %vm4313
        %v4315 = vsel %vm4314, %v4307, %v4311
        %v4316 = vand.u32 2147483647, %v4261
        %vm4317 = vcmp.eq.f32.partialorder %v4316, 8.507059e+37
        %v4318 = vand.u32 %v4261, 2147483648
        %v4319 = vor.u32 1.1754944e-38, %v4318
        %v4320 = vsel %vm4317, %v4319, %v4315
        %v4321 = vmul.f32 1.0, %v4320
        %4323 = vset.pattern.permute.xlu0 0
        %4324 = vperm.xlu0 %4323, %v4276
        %v4325 = vpop.permute.xlu0 %4324
        %4328 = vset.pattern.permute.xlu0 0
        %4329 = vperm.xlu0 %4328, %v4291
        %v4330 = vpop.permute.xlu0 %4329
        %4333 = vset.pattern.permute.xlu0 0
        %4334 = vperm.xlu0 %4333, %v4306
        %v4335 = vpop.permute.xlu0 %4334
        %4338 = vset.pattern.permute.xlu0 0
        %4339 = vperm.xlu0 %4338, %v4321
        %v4340 = vpop.permute.xlu0 %4339
        %v4342 = vmul.f32 %v4081, %v4325
        %v4343 = vmul.f32 %v4082, %v4325
        %v4344 = vmul.f32 %v3512, %v4330
        %v4345 = vmul.f32 %v3513, %v4330
        %v4346 = vmul.f32 %v3514, %v4335
        %v4347 = vmul.f32 %v3515, %v4335
        %v4348 = vmul.f32 %v3516, %v4340
        %v4349 = vmul.f32 %v3517, %v4340
        %v4350 = vmul.f32 %v4141, %v4342
        %v4351 = vmul.f32 %v4160, %v4343
        %v4352 = vmul.f32 %v4143, %v4344
        %v4353 = vmul.f32 %v4162, %v4345
        %v4354 = vmul.f32 %v4146, %v4346
        %v4355 = vmul.f32 %v4165, %v4347
        %v4356 = vmul.f32 %v4148, %v4348
        %v4357 = vmul.f32 %v4167, %v4349
        %v4358 = vadd.f32 %v4081, %v4350
        %v4359 = vadd.f32 %v4082, %v4351
        %v4360 = vadd.f32 %v3512, %v4352
        %v4361 = vadd.f32 %v3513, %v4353
        %v4362 = vadd.f32 %v3514, %v4354
        %v4363 = vadd.f32 %v3515, %v4355
        %v4364 = vadd.f32 %v3516, %v4356
        %v4365 = vadd.f32 %v3517, %v4357
        %v4366 = vld [vmem:[#allocation23] sm:$0xf]
        %v4367 = vld [vmem:[#allocation23 + $0x4] sm:$0xf]
        %v4368 = vld [vmem:[#allocation23 + $0x8] sm:$0xf]
        %v4369 = vld [vmem:[#allocation23 + $0xc] sm:$0xf]
        %v4370 = vpack.c.bf16 %v4360, %v4358
        %v4371 = vpack.c.bf16 %v4361, %v4359
        %v4372 = vpack.c.bf16 %v4364, %v4362
        %v4373 = vpack.c.bf16 %v4365, %v4363
        %v4374 = vld [vmem:[#allocation25] sm:$0xff]
        %v4375 = vld [vmem:[#allocation25 + $0x8] sm:$0xff]
        %v4376 = vld [vmem:[#allocation25 + $0x10] sm:$0xff]
        %v4377 = vld [vmem:[#allocation25 + $0x18] sm:$0xff]
        %4379 = vset.pattern.permute.xlu0 0
        %4380 = vperm.xlu0 %4379, %v4374
        %v4381 = vpop.permute.xlu0 %4380
        %4384 = vset.pattern.permute.xlu0 0
        %4385 = vperm.xlu0 %4384, %v4375
        %v4386 = vpop.permute.xlu0 %4385
        %4389 = vset.pattern.permute.xlu0 0
        %4390 = vperm.xlu0 %4389, %v4376
        %v4391 = vpop.permute.xlu0 %4390
        %4394 = vset.pattern.permute.xlu0 0
        %4395 = vperm.xlu0 %4394, %v4377
        %v4396 = vpop.permute.xlu0 %4395
        %v4402 = vunpack.c.l.b16 %v4366
        %v4403 = vunpack.c.l.b16 %v4367
        %v4404 = vunpack.c.l.b16 %v4368
        %v4405 = vunpack.c.l.b16 %v4369
        %v4406 = vpack.c.b16 %v4403, %v4402
        %v4407 = vpack.c.b16 %v4405, %v4404
        %v4409 = vsel %vm1917, %v4406, 0
        %v4412 = vsel %vm1917, %v4407, 0
        %4414 = vmatpush.bf16.msra.mxu0 0
        %4415 = vmatpush.bf16.msra.mxu0 0
        %4416 = vmatpush.bf16.msra.mxu0 0
        %4417 = vmatpush.bf16.msra.mxu0 0
        %4418 = vmatpush.bf16.msra.mxu0 0
        %4419 = vmatpush.bf16.msra.mxu0 0
        %4420 = vmatpush.bf16.msra.mxu0 %v4372
        %4421 = vmatpush.bf16.msra.mxu0 %v4370
        %4422 = vmatmul.bf16.gmra.mxu0 %v4409
        %v4423 = vpop.f32.mrf.mxu0
        %v4424 = vadd.f32 %v4381, %v4423
        %v4425 = vpop.f32.mrf.mxu0
        %v4426 = vadd.f32 %v4386, %v4425
        %4427 = vmatmul.bf16.gmra.mxu0 %v4412
        %v4428 = vpop.f32.mrf.mxu0
        %v4429 = vadd.f32 %v4391, %v4428
        %v4430 = vpop.f32.mrf.mxu0
        %v4431 = vadd.f32 %v4396, %v4430
        %4432 = vdwg.mxu0
        %4433 = vmatpush.bf16.msra.mxu0 0
        %4434 = vmatpush.bf16.msra.mxu0 0
        %4435 = vmatpush.bf16.msra.mxu0 0
        %4436 = vmatpush.bf16.msra.mxu0 0
        %4437 = vmatpush.bf16.msra.mxu0 0
        %4438 = vmatpush.bf16.msra.mxu0 0
        %4439 = vmatpush.bf16.msra.mxu0 %v4373
        %4440 = vmatpush.bf16.msra.mxu0 %v4371
        %4441 = vmatmul.bf16.gmra.mxu0 %v4409
        %v4442 = vpop.f32.mrf.mxu0
        %v4443 = vadd.f32 %v4381, %v4442
        %v4444 = vpop.f32.mrf.mxu0
        %v4445 = vadd.f32 %v4386, %v4444
        %4446 = vmatmul.bf16.gmra.mxu0 %v4412
        %v4447 = vpop.f32.mrf.mxu0
        %v4448 = vadd.f32 %v4391, %v4447
        %v4449 = vpop.f32.mrf.mxu0
        %v4450 = vadd.f32 %v4396, %v4449
        %4451 = vdwg.mxu0
        %v4452 = vadd.f32 %v1972, %v4424
        %v4453 = vadd.f32 %v2029, %v4443
        %v4454 = vadd.f32 %v1974, %v4426
        %v4455 = vadd.f32 %v2031, %v4445
        %v4456 = vadd.f32 %v1977, %v4429
        %v4457 = vadd.f32 %v2034, %v4448
        %v4458 = vadd.f32 %v1979, %v4431
        %v4459 = vadd.f32 %v2036, %v4450
        %4460 = vst [vmem:[#allocation2] sm:$0xff] 0.0
        %4461 = vst [vmem:[#allocation2 + $0x8] sm:$0xff] 0.0
        %4462 = vst [vmem:[#allocation2 + $0x10] sm:$0xff] 0.0
        %4463 = vst.msk [vmem:[#allocation2 + $0x18] sm:$0xff] %vm893, 0.0
        %4464 = vst [vmem:[#allocation2 + $0x20] sm:$0xff] 0.0
        %4465 = vst [vmem:[#allocation2 + $0x28] sm:$0xff] 0.0
        %4466 = vst [vmem:[#allocation2 + $0x30] sm:$0xff] 0.0
        %4467 = vst.msk [vmem:[#allocation2 + $0x38] sm:$0xff] %vm893, 0.0
        %4468 = vst [vmem:[#allocation2 + $0x40] sm:$0xff] 0.0
        %4469 = vst [vmem:[#allocation2 + $0x48] sm:$0xff] 0.0
        %4470 = vst [vmem:[#allocation2 + $0x50] sm:$0xff] 0.0
        %4471 = vst.msk [vmem:[#allocation2 + $0x58] sm:$0xff] %vm893, 0.0
        %4472 = vst [vmem:[#allocation2 + $0x60] sm:$0xff] 0.0
        %4473 = vst [vmem:[#allocation2 + $0x68] sm:$0xff] 0.0
        %4474 = vst [vmem:[#allocation2 + $0x70] sm:$0xff] 0.0
        %4475 = vst.msk [vmem:[#allocation2 + $0x78] sm:$0xff] %vm893, 0.0
        %4476 = vst [vmem:[#allocation2 + $0x80] sm:$0x3] 0.0
        %4477 = vst [vmem:[#allocation2 + $0x88] sm:$0x3] 0.0
        %4478 = vst [vmem:[#allocation2 + $0x90] sm:$0x3] 0.0
        %4479 = vst.msk [vmem:[#allocation2 + $0x98] sm:$0x3] %vm910, 0.0
        %4480 = vst [vmem:[#allocation2 + $0x8] sm:$0xff] %v4452
        %4481 = vst [vmem:[#allocation2 + $0x10] sm:$0xff] %v4453
        %4482 = vst [vmem:[#allocation2 + $0x28] sm:$0xff] %v4454
        %4483 = vst [vmem:[#allocation2 + $0x30] sm:$0xff] %v4455
        %4484 = vst [vmem:[#allocation2 + $0x48] sm:$0xff] %v4456
        %4485 = vst [vmem:[#allocation2 + $0x50] sm:$0xff] %v4457
        %4486 = vst [vmem:[#allocation2 + $0x68] sm:$0xff] %v4458
        %4487 = vst [vmem:[#allocation2 + $0x70] sm:$0xff] %v4459
        %v4488 = vld [vmem:[#allocation2] sm:$0xff]
        %v4489 = vld [vmem:[#allocation2 + $0x8] sm:$0xff]
        %v4490 = vld [vmem:[#allocation2 + $0x10] sm:$0xff]
        %v4491 = vld [vmem:[#allocation2 + $0x20] sm:$0xff]
        %v4492 = vld [vmem:[#allocation2 + $0x28] sm:$0xff]
        %v4493 = vld [vmem:[#allocation2 + $0x30] sm:$0xff]
        %v4494 = vld [vmem:[#allocation2 + $0x40] sm:$0xff]
        %v4495 = vld [vmem:[#allocation2 + $0x48] sm:$0xff]
        %v4496 = vld [vmem:[#allocation2 + $0x50] sm:$0xff]
        %v4497 = vld [vmem:[#allocation2 + $0x60] sm:$0xff]
        %v4498 = vld [vmem:[#allocation2 + $0x68] sm:$0xff]
        %v4499 = vld [vmem:[#allocation2 + $0x70] sm:$0xff]
        %v4500 = vld [vmem:[%s3] ss:$4 sm:$0x3]
        %v4502 = vperm.slane %v4500, 0
        %v4503 = vperm.slane %v4500, 1
        %4504 = vrot.lane.b32.xlu0 %v4502, 111
        %v4505 = vpop.permute.xlu0 %4504
        %4506 = vrot.lane.b32.xlu0 %v4503, 111
        %v4507 = vpop.permute.xlu0 %4506
        %v4508 = vsel %vm940, %v4505, %v4507
        %v4512 = vmul.f32 %v4488, %v4505
        %v4513 = vmul.f32 %v4489, %v4508
        %v4514 = vmul.f32 %v4490, %v4507
        %v4515 = vmul.f32 %v4491, %v4505
        %v4516 = vmul.f32 %v4492, %v4508
        %v4517 = vmul.f32 %v4493, %v4507
        %v4518 = vmul.f32 %v4494, %v4505
        %v4519 = vmul.f32 %v4495, %v4508
        %v4520 = vmul.f32 %v4496, %v4507
        %v4521 = vmul.f32 %v4497, %v4505
        %v4522 = vmul.f32 %v4498, %v4508
        %v4523 = vmul.f32 %v4499, %v4507
        %v4524 = vpack.c.bf16 %v4513, %v4512
        %v4525 = vpack.c.bf16 %v4514, %v4514
        %v4526 = vpack.c.bf16 %v4516, %v4515
        %v4527 = vpack.c.bf16 %v4517, %v4517
        %v4528 = vpack.c.bf16 %v4519, %v4518
        %v4529 = vpack.c.bf16 %v4520, %v4520
        %v4530 = vpack.c.bf16 %v4522, %v4521
        %v4531 = vpack.c.bf16 %v4523, %v4523
        %4540 = vrot.lane.b32.xlu0 %v4524, 17
        %v4541 = vpop.permute.xlu0 %4540
        %4542 = vrot.lane.b32.xlu0 %v4525, 17
        %v4543 = vpop.permute.xlu0 %4542
        %4544 = vrot.lane.b32.xlu0 %v4526, 17
        %v4545 = vpop.permute.xlu0 %4544
        %4546 = vrot.lane.b32.xlu0 %v4527, 17
        %v4547 = vpop.permute.xlu0 %4546
        %4548 = vrot.lane.b32.xlu0 %v4528, 17
        %v4549 = vpop.permute.xlu0 %4548
        %4550 = vrot.lane.b32.xlu0 %v4529, 17
        %v4551 = vpop.permute.xlu0 %4550
        %4552 = vrot.lane.b32.xlu0 %v4530, 17
        %v4553 = vpop.permute.xlu0 %4552
        %4554 = vrot.lane.b32.xlu0 %v4531, 17
        %v4555 = vpop.permute.xlu0 %4554
        %v4556 = vrot.slane %v4541, 4
        %v4557 = vrot.slane %v4543, 4
        %v4558 = vrot.slane %v4545, 4
        %v4559 = vrot.slane %v4547, 4
        %v4560 = vrot.slane %v4549, 4
        %v4561 = vrot.slane %v4551, 4
        %v4562 = vrot.slane %v4553, 4
        %v4563 = vrot.slane %v4555, 4
        %v4564 = vsel %vm997, %v4556, %v4557
        %v4565 = vsel %vm999, %v4541, %v4564
        %v4566 = vsel %vm997, %v4558, %v4559
        %v4567 = vsel %vm999, %v4545, %v4566
        %v4568 = vsel %vm997, %v4560, %v4561
        %v4569 = vsel %vm999, %v4549, %v4568
        %v4570 = vsel %vm997, %v4562, %v4563
        %v4571 = vsel %vm999, %v4553, %v4570
        %4576 = vst [vmem:[#allocation3] sm:$0xff] %v4565
        %4577 = vst [vmem:[#allocation3 + $0x8] sm:$0xff] %v4567
        %4578 = vst [vmem:[#allocation3 + $0x10] sm:$0xff] %v4569
        %4579 = vst [vmem:[#allocation3 + $0x18] sm:$0xff] %v4571
        %v4580 = vld [vmem:[#allocation2] sm:$0xff]
        %v4581 = vld [vmem:[#allocation2 + $0x8] sm:$0xff]
        %v4582 = vld [vmem:[#allocation2 + $0x10] sm:$0xff]
        %v4583 = vld [vmem:[#allocation2 + $0x20] sm:$0xff]
        %v4584 = vld [vmem:[#allocation2 + $0x28] sm:$0xff]
        %v4585 = vld [vmem:[#allocation2 + $0x30] sm:$0xff]
        %v4586 = vld [vmem:[#allocation2 + $0x40] sm:$0xff]
        %v4587 = vld [vmem:[#allocation2 + $0x48] sm:$0xff]
        %v4588 = vld [vmem:[#allocation2 + $0x50] sm:$0xff]
        %v4589 = vld [vmem:[#allocation2 + $0x60] sm:$0xff]
        %v4590 = vld [vmem:[#allocation2 + $0x68] sm:$0xff]
        %v4591 = vld [vmem:[#allocation2 + $0x70] sm:$0xff]
        %v4592 = vpack.c.bf16 %v4581, %v4580
        %v4593 = vpack.c.bf16 %v4582, %v4582
        %v4594 = vpack.c.bf16 %v4584, %v4583
        %v4595 = vpack.c.bf16 %v4585, %v4585
        %v4596 = vpack.c.bf16 %v4587, %v4586
        %v4597 = vpack.c.bf16 %v4588, %v4588
        %v4598 = vpack.c.bf16 %v4590, %v4589
        %v4599 = vpack.c.bf16 %v4591, %v4591
        %4608 = vrot.lane.b32.xlu0 %v4592, 16
        %v4609 = vpop.permute.xlu0 %4608
        %4610 = vrot.lane.b32.xlu0 %v4593, 16
        %v4611 = vpop.permute.xlu0 %4610
        %4612 = vrot.lane.b32.xlu0 %v4594, 16
        %v4613 = vpop.permute.xlu0 %4612
        %4614 = vrot.lane.b32.xlu0 %v4595, 16
        %v4615 = vpop.permute.xlu0 %4614
        %4616 = vrot.lane.b32.xlu0 %v4596, 16
        %v4617 = vpop.permute.xlu0 %4616
        %4618 = vrot.lane.b32.xlu0 %v4597, 16
        %v4619 = vpop.permute.xlu0 %4618
        %4620 = vrot.lane.b32.xlu0 %v4598, 16
        %v4621 = vpop.permute.xlu0 %4620
        %4622 = vrot.lane.b32.xlu0 %v4599, 16
        %v4623 = vpop.permute.xlu0 %4622
        %v4624 = vrot.slane %v4609, 4
        %v4625 = vrot.slane %v4611, 4
        %v4626 = vrot.slane %v4613, 4
        %v4627 = vrot.slane %v4615, 4
        %v4628 = vrot.slane %v4617, 4
        %v4629 = vrot.slane %v4619, 4
        %v4630 = vrot.slane %v4621, 4
        %v4631 = vrot.slane %v4623, 4
        %v4632 = vsel %vm997, %v4624, %v4625
        %v4633 = vsel %vm1068, %v4609, %v4632
        %v4634 = vsel %vm997, %v4626, %v4627
        %v4635 = vsel %vm1068, %v4613, %v4634
        %v4636 = vsel %vm997, %v4628, %v4629
        %v4637 = vsel %vm1068, %v4617, %v4636
        %v4638 = vsel %vm997, %v4630, %v4631
        %v4639 = vsel %vm1068, %v4621, %v4638
        %4644 = vst [vmem:[#allocation3 + $0x20] sm:$0xff] %v4633
        %4645 = vst [vmem:[#allocation3 + $0x28] sm:$0xff] %v4635
        %4646 = vst [vmem:[#allocation3 + $0x30] sm:$0xff] %v4637
        %4647 = vst [vmem:[#allocation3 + $0x38] sm:$0xff] %v4639
        %v4648 = vld [vmem:[#allocation2] sm:$0xff]
        %v4649 = vld [vmem:[#allocation2 + $0x8] sm:$0xff]
        %v4650 = vld [vmem:[#allocation2 + $0x10] sm:$0xff]
        %v4651 = vld [vmem:[#allocation2 + $0x20] sm:$0xff]
        %v4652 = vld [vmem:[#allocation2 + $0x28] sm:$0xff]
        %v4653 = vld [vmem:[#allocation2 + $0x30] sm:$0xff]
        %v4654 = vld [vmem:[#allocation2 + $0x40] sm:$0xff]
        %v4655 = vld [vmem:[#allocation2 + $0x48] sm:$0xff]
        %v4656 = vld [vmem:[#allocation2 + $0x50] sm:$0xff]
        %v4657 = vld [vmem:[#allocation2 + $0x60] sm:$0xff]
        %v4658 = vld [vmem:[#allocation2 + $0x68] sm:$0xff]
        %v4659 = vld [vmem:[#allocation2 + $0x70] sm:$0xff]
        %v4660 = vld [vmem:[%s1096] ss:$4 sm:$0x3]
        %v4662 = vperm.slane %v4660, 0
        %v4663 = vperm.slane %v4660, 1
        %4664 = vrot.lane.b32.xlu0 %v4662, 113
        %v4665 = vpop.permute.xlu0 %4664
        %4666 = vrot.lane.b32.xlu0 %v4663, 113
        %v4667 = vpop.permute.xlu0 %4666
        %v4668 = vsel %vm1105, %v4665, %v4667
        %v4672 = vmul.f32 %v4648, %v4665
        %v4673 = vmul.f32 %v4649, %v4668
        %v4674 = vmul.f32 %v4650, %v4667
        %v4675 = vmul.f32 %v4651, %v4665
        %v4676 = vmul.f32 %v4652, %v4668
        %v4677 = vmul.f32 %v4653, %v4667
        %v4678 = vmul.f32 %v4654, %v4665
        %v4679 = vmul.f32 %v4655, %v4668
        %v4680 = vmul.f32 %v4656, %v4667
        %v4681 = vmul.f32 %v4657, %v4665
        %v4682 = vmul.f32 %v4658, %v4668
        %v4683 = vmul.f32 %v4659, %v4667
        %v4684 = vpack.c.bf16 %v4673, %v4672
        %v4685 = vpack.c.bf16 %v4674, %v4674
        %v4686 = vpack.c.bf16 %v4676, %v4675
        %v4687 = vpack.c.bf16 %v4677, %v4677
        %v4688 = vpack.c.bf16 %v4679, %v4678
        %v4689 = vpack.c.bf16 %v4680, %v4680
        %v4690 = vpack.c.bf16 %v4682, %v4681
        %v4691 = vpack.c.bf16 %v4683, %v4683
        %4700 = vrot.lane.b32.xlu0 %v4684, 15
        %v4701 = vpop.permute.xlu0 %4700
        %4702 = vrot.lane.b32.xlu0 %v4685, 15
        %v4703 = vpop.permute.xlu0 %4702
        %4704 = vrot.lane.b32.xlu0 %v4686, 15
        %v4705 = vpop.permute.xlu0 %4704
        %4706 = vrot.lane.b32.xlu0 %v4687, 15
        %v4707 = vpop.permute.xlu0 %4706
        %4708 = vrot.lane.b32.xlu0 %v4688, 15
        %v4709 = vpop.permute.xlu0 %4708
        %4710 = vrot.lane.b32.xlu0 %v4689, 15
        %v4711 = vpop.permute.xlu0 %4710
        %4712 = vrot.lane.b32.xlu0 %v4690, 15
        %v4713 = vpop.permute.xlu0 %4712
        %4714 = vrot.lane.b32.xlu0 %v4691, 15
        %v4715 = vpop.permute.xlu0 %4714
        %v4716 = vrot.slane %v4701, 4
        %v4717 = vrot.slane %v4703, 4
        %v4718 = vrot.slane %v4705, 4
        %v4719 = vrot.slane %v4707, 4
        %v4720 = vrot.slane %v4709, 4
        %v4721 = vrot.slane %v4711, 4
        %v4722 = vrot.slane %v4713, 4
        %v4723 = vrot.slane %v4715, 4
        %v4724 = vsel %vm997, %v4716, %v4717
        %v4725 = vsel %vm1163, %v4701, %v4724
        %v4726 = vsel %vm997, %v4718, %v4719
        %v4727 = vsel %vm1163, %v4705, %v4726
        %v4728 = vsel %vm997, %v4720, %v4721
        %v4729 = vsel %vm1163, %v4709, %v4728
        %v4730 = vsel %vm997, %v4722, %v4723
        %v4731 = vsel %vm1163, %v4713, %v4730
        %4736 = vst [vmem:[#allocation3 + $0x40] sm:$0xff] %v4725
        %4737 = vst [vmem:[#allocation3 + $0x48] sm:$0xff] %v4727
        %4738 = vst [vmem:[#allocation3 + $0x50] sm:$0xff] %v4729
        %4739 = vst [vmem:[#allocation3 + $0x58] sm:$0xff] %v4731
        %v4740 = vld [vmem:[#allocation2] sm:$0xff]
        %v4741 = vld [vmem:[#allocation2 + $0x8] sm:$0xff]
        %v4742 = vld [vmem:[#allocation2 + $0x10] sm:$0xff]
        %v4743 = vld [vmem:[#allocation2 + $0x20] sm:$0xff]
        %v4744 = vld [vmem:[#allocation2 + $0x28] sm:$0xff]
        %v4745 = vld [vmem:[#allocation2 + $0x30] sm:$0xff]
        %v4746 = vld [vmem:[#allocation2 + $0x40] sm:$0xff]
        %v4747 = vld [vmem:[#allocation2 + $0x48] sm:$0xff]
        %v4748 = vld [vmem:[#allocation2 + $0x50] sm:$0xff]
        %v4749 = vld [vmem:[#allocation2 + $0x60] sm:$0xff]
        %v4750 = vld [vmem:[#allocation2 + $0x68] sm:$0xff]
        %v4751 = vld [vmem:[#allocation2 + $0x70] sm:$0xff]
        %v4752 = vld [vmem:[%s3] ss:$4 sm:$0x3]
        %v4754 = vperm.slane %v4752, 0
        %v4755 = vperm.slane %v4752, 1
        %4756 = vrot.lane.b32.xlu0 %v4754, 127
        %v4757 = vpop.permute.xlu0 %4756
        %4758 = vrot.lane.b32.xlu0 %v4755, 127
        %v4759 = vpop.permute.xlu0 %4758
        %v4760 = vsel %vm1199, %v4757, %v4759
        %v4764 = vmul.f32 %v4740, %v4757
        %v4765 = vmul.f32 %v4741, %v4760
        %v4766 = vmul.f32 %v4742, %v4759
        %v4767 = vmul.f32 %v4743, %v4757
        %v4768 = vmul.f32 %v4744, %v4760
        %v4769 = vmul.f32 %v4745, %v4759
        %v4770 = vmul.f32 %v4746, %v4757
        %v4771 = vmul.f32 %v4747, %v4760
        %v4772 = vmul.f32 %v4748, %v4759
        %v4773 = vmul.f32 %v4749, %v4757
        %v4774 = vmul.f32 %v4750, %v4760
        %v4775 = vmul.f32 %v4751, %v4759
        %v4776 = vpack.c.bf16 %v4765, %v4764
        %v4777 = vpack.c.bf16 %v4766, %v4766
        %v4778 = vpack.c.bf16 %v4768, %v4767
        %v4779 = vpack.c.bf16 %v4769, %v4769
        %v4780 = vpack.c.bf16 %v4771, %v4770
        %v4781 = vpack.c.bf16 %v4772, %v4772
        %v4782 = vpack.c.bf16 %v4774, %v4773
        %v4783 = vpack.c.bf16 %v4775, %v4775
        %4792 = vrot.lane.b32.xlu0 %v4776, 1
        %v4793 = vpop.permute.xlu0 %4792
        %4794 = vrot.lane.b32.xlu0 %v4777, 1
        %v4795 = vpop.permute.xlu0 %4794
        %4796 = vrot.lane.b32.xlu0 %v4778, 1
        %v4797 = vpop.permute.xlu0 %4796
        %4798 = vrot.lane.b32.xlu0 %v4779, 1
        %v4799 = vpop.permute.xlu0 %4798
        %4800 = vrot.lane.b32.xlu0 %v4780, 1
        %v4801 = vpop.permute.xlu0 %4800
        %4802 = vrot.lane.b32.xlu0 %v4781, 1
        %v4803 = vpop.permute.xlu0 %4802
        %4804 = vrot.lane.b32.xlu0 %v4782, 1
        %v4805 = vpop.permute.xlu0 %4804
        %4806 = vrot.lane.b32.xlu0 %v4783, 1
        %v4807 = vpop.permute.xlu0 %4806
        %v4808 = vrot.slane %v4793, 4
        %v4809 = vrot.slane %v4795, 4
        %v4810 = vrot.slane %v4797, 4
        %v4811 = vrot.slane %v4799, 4
        %v4812 = vrot.slane %v4801, 4
        %v4813 = vrot.slane %v4803, 4
        %v4814 = vrot.slane %v4805, 4
        %v4815 = vrot.slane %v4807, 4
        %v4816 = vsel %vm997, %v4808, %v4809
        %v4817 = vsel %vm1257, %v4793, %v4816
        %v4818 = vsel %vm997, %v4810, %v4811
        %v4819 = vsel %vm1257, %v4797, %v4818
        %v4820 = vsel %vm997, %v4812, %v4813
        %v4821 = vsel %vm1257, %v4801, %v4820
        %v4822 = vsel %vm997, %v4814, %v4815
        %v4823 = vsel %vm1257, %v4805, %v4822
        %4828 = vst [vmem:[#allocation3 + $0x60] sm:$0xff] %v4817
        %4829 = vst [vmem:[#allocation3 + $0x68] sm:$0xff] %v4819
        %4830 = vst [vmem:[#allocation3 + $0x70] sm:$0xff] %v4821
        %4831 = vst [vmem:[#allocation3 + $0x78] sm:$0xff] %v4823
        %v4832 = vld [vmem:[#allocation2 + $0x8] sm:$0xff]
        %v4833 = vld [vmem:[#allocation2 + $0x10] sm:$0xff]
        %v4834 = vld [vmem:[#allocation2 + $0x28] sm:$0xff]
        %v4835 = vld [vmem:[#allocation2 + $0x30] sm:$0xff]
        %v4836 = vld [vmem:[#allocation2 + $0x48] sm:$0xff]
        %v4837 = vld [vmem:[#allocation2 + $0x50] sm:$0xff]
        %v4838 = vld [vmem:[#allocation2 + $0x68] sm:$0xff]
        %v4839 = vld [vmem:[#allocation2 + $0x70] sm:$0xff]
        %v4840 = vpack.c.bf16 %v4833, %v4832
        %v4841 = vpack.c.bf16 %v4835, %v4834
        %v4842 = vpack.c.bf16 %v4837, %v4836
        %v4843 = vpack.c.bf16 %v4839, %v4838
        %4844 = vst [vmem:[#allocation3 + $0x80] sm:$0xff] %v4840
        %4845 = vst [vmem:[#allocation3 + $0x88] sm:$0xff] %v4841
        %4846 = vst [vmem:[#allocation3 + $0x90] sm:$0xff] %v4842
        %4847 = vst [vmem:[#allocation3 + $0x98] sm:$0xff] %v4843
        %v4848 = vld [vmem:[#allocation2 + $0x8] sm:$0xff]
        %v4849 = vld [vmem:[#allocation2 + $0x10] sm:$0xff]
        %v4850 = vld [vmem:[#allocation2 + $0x18] sm:$0xff]
        %v4851 = vld [vmem:[#allocation2 + $0x28] sm:$0xff]
        %v4852 = vld [vmem:[#allocation2 + $0x30] sm:$0xff]
        %v4853 = vld [vmem:[#allocation2 + $0x38] sm:$0xff]
        %v4854 = vld [vmem:[#allocation2 + $0x48] sm:$0xff]
        %v4855 = vld [vmem:[#allocation2 + $0x50] sm:$0xff]
        %v4856 = vld [vmem:[#allocation2 + $0x58] sm:$0xff]
        %v4857 = vld [vmem:[#allocation2 + $0x68] sm:$0xff]
        %v4858 = vld [vmem:[#allocation2 + $0x70] sm:$0xff]
        %v4859 = vld [vmem:[#allocation2 + $0x78] sm:$0xff]
        %v4860 = vld [vmem:[%s1096] ss:$4 sm:$0x3]
        %v4862 = vperm.slane %v4860, 0
        %v4863 = vperm.slane %v4860, 1
        %4864 = vrot.lane.b32.xlu0 %v4862, 1
        %v4865 = vpop.permute.xlu0 %4864
        %4866 = vrot.lane.b32.xlu0 %v4863, 1
        %v4867 = vpop.permute.xlu0 %4866
        %v4868 = vsel %vm1309, %v4865, %v4867
        %v4872 = vmul.f32 %v4848, %v4865
        %v4873 = vmul.f32 %v4849, %v4868
        %v4874 = vmul.f32 %v4850, %v4867
        %v4875 = vmul.f32 %v4851, %v4865
        %v4876 = vmul.f32 %v4852, %v4868
        %v4877 = vmul.f32 %v4853, %v4867
        %v4878 = vmul.f32 %v4854, %v4865
        %v4879 = vmul.f32 %v4855, %v4868
        %v4880 = vmul.f32 %v4856, %v4867
        %v4881 = vmul.f32 %v4857, %v4865
        %v4882 = vmul.f32 %v4858, %v4868
        %v4883 = vmul.f32 %v4859, %v4867
        %v4884 = vpack.c.bf16 %v4873, %v4872
        %v4885 = vpack.c.bf16 %v4874, %v4874
        %v4886 = vpack.c.bf16 %v4876, %v4875
        %v4887 = vpack.c.bf16 %v4877, %v4877
        %v4888 = vpack.c.bf16 %v4879, %v4878
        %v4889 = vpack.c.bf16 %v4880, %v4880
        %v4890 = vpack.c.bf16 %v4882, %v4881
        %v4891 = vpack.c.bf16 %v4883, %v4883
        %4900 = vrot.lane.b32.xlu0 %v4884, 127
        %v4901 = vpop.permute.xlu0 %4900
        %4902 = vrot.lane.b32.xlu0 %v4885, 127
        %v4903 = vpop.permute.xlu0 %4902
        %4904 = vrot.lane.b32.xlu0 %v4886, 127
        %v4905 = vpop.permute.xlu0 %4904
        %4906 = vrot.lane.b32.xlu0 %v4887, 127
        %v4907 = vpop.permute.xlu0 %4906
        %4908 = vrot.lane.b32.xlu0 %v4888, 127
        %v4909 = vpop.permute.xlu0 %4908
        %4910 = vrot.lane.b32.xlu0 %v4889, 127
        %v4911 = vpop.permute.xlu0 %4910
        %4912 = vrot.lane.b32.xlu0 %v4890, 127
        %v4913 = vpop.permute.xlu0 %4912
        %4914 = vrot.lane.b32.xlu0 %v4891, 127
        %v4915 = vpop.permute.xlu0 %4914
        %v4916 = vrot.slane %v4901, 4
        %v4917 = vrot.slane %v4903, 4
        %v4918 = vrot.slane %v4905, 4
        %v4919 = vrot.slane %v4907, 4
        %v4920 = vrot.slane %v4909, 4
        %v4921 = vrot.slane %v4911, 4
        %v4922 = vrot.slane %v4913, 4
        %v4923 = vrot.slane %v4915, 4
        %v4924 = vsel %vm997, %v4916, %v4917
        %v4925 = vsel %vm1367, %v4901, %v4924
        %v4926 = vsel %vm997, %v4918, %v4919
        %v4927 = vsel %vm1367, %v4905, %v4926
        %v4928 = vsel %vm997, %v4920, %v4921
        %v4929 = vsel %vm1367, %v4909, %v4928
        %v4930 = vsel %vm997, %v4922, %v4923
        %v4931 = vsel %vm1367, %v4913, %v4930
        %4936 = vst [vmem:[#allocation3 + $0xa0] sm:$0xff] %v4925
        %4937 = vst [vmem:[#allocation3 + $0xa8] sm:$0xff] %v4927
        %4938 = vst [vmem:[#allocation3 + $0xb0] sm:$0xff] %v4929
        %4939 = vst [vmem:[#allocation3 + $0xb8] sm:$0xff] %v4931
        %v4940 = vld [vmem:[#allocation2 + $0x8] sm:$0xff]
        %v4941 = vld [vmem:[#allocation2 + $0x10] sm:$0xff]
        %v4942 = vld [vmem:[#allocation2 + $0x18] sm:$0xff]
        %v4943 = vld [vmem:[#allocation2 + $0x28] sm:$0xff]
        %v4944 = vld [vmem:[#allocation2 + $0x30] sm:$0xff]
        %v4945 = vld [vmem:[#allocation2 + $0x38] sm:$0xff]
        %v4946 = vld [vmem:[#allocation2 + $0x48] sm:$0xff]
        %v4947 = vld [vmem:[#allocation2 + $0x50] sm:$0xff]
        %v4948 = vld [vmem:[#allocation2 + $0x58] sm:$0xff]
        %v4949 = vld [vmem:[#allocation2 + $0x68] sm:$0xff]
        %v4950 = vld [vmem:[#allocation2 + $0x70] sm:$0xff]
        %v4951 = vld [vmem:[#allocation2 + $0x78] sm:$0xff]
        %v4952 = vld [vmem:[%s3] ss:$4 sm:$0x3]
        %v4954 = vperm.slane %v4952, 0
        %v4955 = vperm.slane %v4952, 1
        %4956 = vrot.lane.b32.xlu0 %v4954, 15
        %v4957 = vpop.permute.xlu0 %4956
        %4958 = vrot.lane.b32.xlu0 %v4955, 15
        %v4959 = vpop.permute.xlu0 %4958
        %v4960 = vsel %vm1403, %v4957, %v4959
        %v4964 = vmul.f32 %v4940, %v4957
        %v4965 = vmul.f32 %v4941, %v4960
        %v4966 = vmul.f32 %v4942, %v4959
        %v4967 = vmul.f32 %v4943, %v4957
        %v4968 = vmul.f32 %v4944, %v4960
        %v4969 = vmul.f32 %v4945, %v4959
        %v4970 = vmul.f32 %v4946, %v4957
        %v4971 = vmul.f32 %v4947, %v4960
        %v4972 = vmul.f32 %v4948, %v4959
        %v4973 = vmul.f32 %v4949, %v4957
        %v4974 = vmul.f32 %v4950, %v4960
        %v4975 = vmul.f32 %v4951, %v4959
        %v4976 = vpack.c.bf16 %v4965, %v4964
        %v4977 = vpack.c.bf16 %v4966, %v4966
        %v4978 = vpack.c.bf16 %v4968, %v4967
        %v4979 = vpack.c.bf16 %v4969, %v4969
        %v4980 = vpack.c.bf16 %v4971, %v4970
        %v4981 = vpack.c.bf16 %v4972, %v4972
        %v4982 = vpack.c.bf16 %v4974, %v4973
        %v4983 = vpack.c.bf16 %v4975, %v4975
        %4992 = vrot.lane.b32.xlu0 %v4976, 113
        %v4993 = vpop.permute.xlu0 %4992
        %4994 = vrot.lane.b32.xlu0 %v4977, 113
        %v4995 = vpop.permute.xlu0 %4994
        %4996 = vrot.lane.b32.xlu0 %v4978, 113
        %v4997 = vpop.permute.xlu0 %4996
        %4998 = vrot.lane.b32.xlu0 %v4979, 113
        %v4999 = vpop.permute.xlu0 %4998
        %5000 = vrot.lane.b32.xlu0 %v4980, 113
        %v5001 = vpop.permute.xlu0 %5000
        %5002 = vrot.lane.b32.xlu0 %v4981, 113
        %v5003 = vpop.permute.xlu0 %5002
        %5004 = vrot.lane.b32.xlu0 %v4982, 113
        %v5005 = vpop.permute.xlu0 %5004
        %5006 = vrot.lane.b32.xlu0 %v4983, 113
        %v5007 = vpop.permute.xlu0 %5006
        %v5008 = vrot.slane %v4993, 4
        %v5009 = vrot.slane %v4995, 4
        %v5010 = vrot.slane %v4997, 4
        %v5011 = vrot.slane %v4999, 4
        %v5012 = vrot.slane %v5001, 4
        %v5013 = vrot.slane %v5003, 4
        %v5014 = vrot.slane %v5005, 4
        %v5015 = vrot.slane %v5007, 4
        %v5016 = vsel %vm997, %v5008, %v5009
        %v5017 = vsel %vm1461, %v4993, %v5016
        %v5018 = vsel %vm997, %v5010, %v5011
        %v5019 = vsel %vm1461, %v4997, %v5018
        %v5020 = vsel %vm997, %v5012, %v5013
        %v5021 = vsel %vm1461, %v5001, %v5020
        %v5022 = vsel %vm997, %v5014, %v5015
        %v5023 = vsel %vm1461, %v5005, %v5022
        %5028 = vst [vmem:[#allocation3 + $0xc0] sm:$0xff] %v5017
        %5029 = vst [vmem:[#allocation3 + $0xc8] sm:$0xff] %v5019
        %5030 = vst [vmem:[#allocation3 + $0xd0] sm:$0xff] %v5021
        %5031 = vst [vmem:[#allocation3 + $0xd8] sm:$0xff] %v5023
        %v5032 = vld [vmem:[#allocation2 + $0x8] sm:$0xff]
        %v5033 = vld [vmem:[#allocation2 + $0x10] sm:$0xff]
        %v5034 = vld [vmem:[#allocation2 + $0x18] sm:$0xff]
        %v5035 = vld [vmem:[#allocation2 + $0x28] sm:$0xff]
        %v5036 = vld [vmem:[#allocation2 + $0x30] sm:$0xff]
        %v5037 = vld [vmem:[#allocation2 + $0x38] sm:$0xff]
        %v5038 = vld [vmem:[#allocation2 + $0x48] sm:$0xff]
        %v5039 = vld [vmem:[#allocation2 + $0x50] sm:$0xff]
        %v5040 = vld [vmem:[#allocation2 + $0x58] sm:$0xff]
        %v5041 = vld [vmem:[#allocation2 + $0x68] sm:$0xff]
        %v5042 = vld [vmem:[#allocation2 + $0x70] sm:$0xff]
        %v5043 = vld [vmem:[#allocation2 + $0x78] sm:$0xff]
        %v5044 = vpack.c.bf16 %v5033, %v5032
        %v5045 = vpack.c.bf16 %v5034, %v5034
        %v5046 = vpack.c.bf16 %v5036, %v5035
        %v5047 = vpack.c.bf16 %v5037, %v5037
        %v5048 = vpack.c.bf16 %v5039, %v5038
        %v5049 = vpack.c.bf16 %v5040, %v5040
        %v5050 = vpack.c.bf16 %v5042, %v5041
        %v5051 = vpack.c.bf16 %v5043, %v5043
        %5060 = vrot.lane.b32.xlu0 %v5044, 112
        %v5061 = vpop.permute.xlu0 %5060
        %5062 = vrot.lane.b32.xlu0 %v5045, 112
        %v5063 = vpop.permute.xlu0 %5062
        %5064 = vrot.lane.b32.xlu0 %v5046, 112
        %v5065 = vpop.permute.xlu0 %5064
        %5066 = vrot.lane.b32.xlu0 %v5047, 112
        %v5067 = vpop.permute.xlu0 %5066
        %5068 = vrot.lane.b32.xlu0 %v5048, 112
        %v5069 = vpop.permute.xlu0 %5068
        %5070 = vrot.lane.b32.xlu0 %v5049, 112
        %v5071 = vpop.permute.xlu0 %5070
        %5072 = vrot.lane.b32.xlu0 %v5050, 112
        %v5073 = vpop.permute.xlu0 %5072
        %5074 = vrot.lane.b32.xlu0 %v5051, 112
        %v5075 = vpop.permute.xlu0 %5074
        %v5076 = vrot.slane %v5061, 4
        %v5077 = vrot.slane %v5063, 4
        %v5078 = vrot.slane %v5065, 4
        %v5079 = vrot.slane %v5067, 4
        %v5080 = vrot.slane %v5069, 4
        %v5081 = vrot.slane %v5071, 4
        %v5082 = vrot.slane %v5073, 4
        %v5083 = vrot.slane %v5075, 4
        %v5084 = vsel %vm997, %v5076, %v5077
        %v5085 = vsel %vm1530, %v5061, %v5084
        %v5086 = vsel %vm997, %v5078, %v5079
        %v5087 = vsel %vm1530, %v5065, %v5086
        %v5088 = vsel %vm997, %v5080, %v5081
        %v5089 = vsel %vm1530, %v5069, %v5088
        %v5090 = vsel %vm997, %v5082, %v5083
        %v5091 = vsel %vm1530, %v5073, %v5090
        %5096 = vst [vmem:[#allocation3 + $0xe0] sm:$0xff] %v5085
        %5097 = vst [vmem:[#allocation3 + $0xe8] sm:$0xff] %v5087
        %5098 = vst [vmem:[#allocation3 + $0xf0] sm:$0xff] %v5089
        %5099 = vst [vmem:[#allocation3 + $0xf8] sm:$0xff] %v5091
        %v5100 = vld [vmem:[#allocation2 + $0x8] sm:$0xff]
        %v5101 = vld [vmem:[#allocation2 + $0x10] sm:$0xff]
        %v5102 = vld [vmem:[#allocation2 + $0x18] sm:$0xff]
        %v5103 = vld [vmem:[#allocation2 + $0x28] sm:$0xff]
        %v5104 = vld [vmem:[#allocation2 + $0x30] sm:$0xff]
        %v5105 = vld [vmem:[#allocation2 + $0x38] sm:$0xff]
        %v5106 = vld [vmem:[#allocation2 + $0x48] sm:$0xff]
        %v5107 = vld [vmem:[#allocation2 + $0x50] sm:$0xff]
        %v5108 = vld [vmem:[#allocation2 + $0x58] sm:$0xff]
        %v5109 = vld [vmem:[#allocation2 + $0x68] sm:$0xff]
        %v5110 = vld [vmem:[#allocation2 + $0x70] sm:$0xff]
        %v5111 = vld [vmem:[#allocation2 + $0x78] sm:$0xff]
        %v5112 = vld [vmem:[%s1096] ss:$4 sm:$0x3]
        %v5114 = vperm.slane %v5112, 0
        %v5115 = vperm.slane %v5112, 1
        %5116 = vrot.lane.b32.xlu0 %v5114, 17
        %v5117 = vpop.permute.xlu0 %5116
        %5118 = vrot.lane.b32.xlu0 %v5115, 17
        %v5119 = vpop.permute.xlu0 %5118
        %v5120 = vsel %vm893, %v5117, %v5119
        %v5124 = vmul.f32 %v5100, %v5117
        %v5125 = vmul.f32 %v5101, %v5120
        %v5126 = vmul.f32 %v5102, %v5119
        %v5127 = vmul.f32 %v5103, %v5117
        %v5128 = vmul.f32 %v5104, %v5120
        %v5129 = vmul.f32 %v5105, %v5119
        %v5130 = vmul.f32 %v5106, %v5117
        %v5131 = vmul.f32 %v5107, %v5120
        %v5132 = vmul.f32 %v5108, %v5119
        %v5133 = vmul.f32 %v5109, %v5117
        %v5134 = vmul.f32 %v5110, %v5120
        %v5135 = vmul.f32 %v5111, %v5119
        %v5136 = vpack.c.bf16 %v5125, %v5124
        %v5137 = vpack.c.bf16 %v5126, %v5126
        %v5138 = vpack.c.bf16 %v5128, %v5127
        %v5139 = vpack.c.bf16 %v5129, %v5129
        %v5140 = vpack.c.bf16 %v5131, %v5130
        %v5141 = vpack.c.bf16 %v5132, %v5132
        %v5142 = vpack.c.bf16 %v5134, %v5133
        %v5143 = vpack.c.bf16 %v5135, %v5135
        %5152 = vrot.lane.b32.xlu0 %v5136, 111
        %v5153 = vpop.permute.xlu0 %5152
        %5154 = vrot.lane.b32.xlu0 %v5137, 111
        %v5155 = vpop.permute.xlu0 %5154
        %5156 = vrot.lane.b32.xlu0 %v5138, 111
        %v5157 = vpop.permute.xlu0 %5156
        %5158 = vrot.lane.b32.xlu0 %v5139, 111
        %v5159 = vpop.permute.xlu0 %5158
        %5160 = vrot.lane.b32.xlu0 %v5140, 111
        %v5161 = vpop.permute.xlu0 %5160
        %5162 = vrot.lane.b32.xlu0 %v5141, 111
        %v5163 = vpop.permute.xlu0 %5162
        %5164 = vrot.lane.b32.xlu0 %v5142, 111
        %v5165 = vpop.permute.xlu0 %5164
        %5166 = vrot.lane.b32.xlu0 %v5143, 111
        %v5167 = vpop.permute.xlu0 %5166
        %v5168 = vrot.slane %v5153, 4
        %v5169 = vrot.slane %v5155, 4
        %v5170 = vrot.slane %v5157, 4
        %v5171 = vrot.slane %v5159, 4
        %v5172 = vrot.slane %v5161, 4
        %v5173 = vrot.slane %v5163, 4
        %v5174 = vrot.slane %v5165, 4
        %v5175 = vrot.slane %v5167, 4
        %v5176 = vsel %vm997, %v5168, %v5169
        %v5177 = vsel %vm1623, %v5153, %v5176
        %v5178 = vsel %vm997, %v5170, %v5171
        %v5179 = vsel %vm1623, %v5157, %v5178
        %v5180 = vsel %vm997, %v5172, %v5173
        %v5181 = vsel %vm1623, %v5161, %v5180
        %v5182 = vsel %vm997, %v5174, %v5175
        %v5183 = vsel %vm1623, %v5165, %v5182
        %5188 = vst [vmem:[#allocation3 + $0x100] sm:$0xff] %v5177
        %5189 = vst [vmem:[#allocation3 + $0x108] sm:$0xff] %v5179
        %5190 = vst [vmem:[#allocation3 + $0x110] sm:$0xff] %v5181
        %5191 = vst [vmem:[#allocation3 + $0x118] sm:$0xff] %v5183
        %v5192 = vld [vmem:[#allocation26] sm:$0xff]
        %v5193 = vld [vmem:[#allocation26 + $0x8] sm:$0xf]
        %v5194 = vld [vmem:[#allocation26 + $0xc] sm:$0xff]
        %v5195 = vld [vmem:[#allocation26 + $0x14] sm:$0xf]
        %v5196 = vld [vmem:[#allocation26 + $0x18] sm:$0xff]
        %v5197 = vld [vmem:[#allocation26 + $0x20] sm:$0xf]
        %v5198 = vld [vmem:[#allocation26 + $0x24] sm:$0xff]
        %v5199 = vld [vmem:[#allocation26 + $0x2c] sm:$0xf]
        %v5200 = vld [vmem:[#allocation3] sm:$0xff]
        %v5201 = vld [vmem:[#allocation3 + $0x8] sm:$0xff]
        %v5202 = vld [vmem:[#allocation3 + $0x10] sm:$0xff]
        %v5203 = vld [vmem:[#allocation3 + $0x18] sm:$0xff]
        %v5204 = vld [vmem:[#allocation3 + $0x20] sm:$0xff]
        %v5205 = vld [vmem:[#allocation3 + $0x28] sm:$0xff]
        %v5206 = vld [vmem:[#allocation3 + $0x30] sm:$0xff]
        %v5207 = vld [vmem:[#allocation3 + $0x38] sm:$0xff]
        %v5208 = vld [vmem:[#allocation3 + $0x40] sm:$0xff]
        %v5209 = vld [vmem:[#allocation3 + $0x48] sm:$0xff]
        %v5210 = vld [vmem:[#allocation3 + $0x50] sm:$0xff]
        %v5211 = vld [vmem:[#allocation3 + $0x58] sm:$0xff]
        %v5212 = vld [vmem:[#allocation3 + $0x60] sm:$0xff]
        %v5213 = vld [vmem:[#allocation3 + $0x68] sm:$0xff]
        %v5214 = vld [vmem:[#allocation3 + $0x70] sm:$0xff]
        %v5215 = vld [vmem:[#allocation3 + $0x78] sm:$0xff]
        %v5216 = vld [vmem:[#allocation3 + $0x80] sm:$0xff]
        %v5217 = vld [vmem:[#allocation3 + $0x88] sm:$0xff]
        %v5218 = vld [vmem:[#allocation3 + $0x90] sm:$0xff]
        %v5219 = vld [vmem:[#allocation3 + $0x98] sm:$0xff]
        %v5220 = vld [vmem:[#allocation3 + $0xa0] sm:$0xff]
        %v5221 = vld [vmem:[#allocation3 + $0xa8] sm:$0xff]
        %v5222 = vld [vmem:[#allocation3 + $0xb0] sm:$0xff]
        %v5223 = vld [vmem:[#allocation3 + $0xb8] sm:$0xff]
        %v5224 = vld [vmem:[#allocation3 + $0xc0] sm:$0xff]
        %v5225 = vld [vmem:[#allocation3 + $0xc8] sm:$0xff]
        %v5226 = vld [vmem:[#allocation3 + $0xd0] sm:$0xff]
        %v5227 = vld [vmem:[#allocation3 + $0xd8] sm:$0xff]
        %v5228 = vld [vmem:[#allocation3 + $0xe0] sm:$0xff]
        %v5229 = vld [vmem:[#allocation3 + $0xe8] sm:$0xff]
        %v5230 = vld [vmem:[#allocation3 + $0xf0] sm:$0xff]
        %v5231 = vld [vmem:[#allocation3 + $0xf8] sm:$0xff]
        %v5232 = vld [vmem:[#allocation3 + $0x100] sm:$0xff]
        %v5233 = vld [vmem:[#allocation3 + $0x108] sm:$0xff]
        %v5234 = vld [vmem:[#allocation3 + $0x110] sm:$0xff]
        %v5235 = vld [vmem:[#allocation3 + $0x118] sm:$0xff]
        %v5236 = vld [vmem:[#allocation28] sm:$0xff]
        %v5237 = vld [vmem:[#allocation28 + $0x8] sm:$0xff]
        %v5238 = vld [vmem:[#allocation28 + $0x10] sm:$0xff]
        %v5239 = vld [vmem:[#allocation28 + $0x18] sm:$0xff]
        %5241 = vset.pattern.permute.xlu0 0
        %5242 = vperm.xlu0 %5241, %v5236
        %v5243 = vpop.permute.xlu0 %5242
        %5246 = vset.pattern.permute.xlu0 0
        %5247 = vperm.xlu0 %5246, %v5237
        %v5248 = vpop.permute.xlu0 %5247
        %5251 = vset.pattern.permute.xlu0 0
        %5252 = vperm.xlu0 %5251, %v5238
        %v5253 = vpop.permute.xlu0 %5252
        %5256 = vset.pattern.permute.xlu0 0
        %5257 = vperm.xlu0 %5256, %v5239
        %v5258 = vpop.permute.xlu0 %5257
        %v5268 = vunpack.c.l.b16 %v5192
        %v5269 = vunpack.c.h.b16 %v5192
        %v5270 = vunpack.c.l.b16 %v5193
        %v5271 = vunpack.c.l.b16 %v5194
        %v5272 = vunpack.c.h.b16 %v5194
        %v5273 = vunpack.c.l.b16 %v5195
        %v5274 = vunpack.c.l.b16 %v5196
        %v5275 = vunpack.c.h.b16 %v5196
        %v5276 = vunpack.c.l.b16 %v5197
        %v5277 = vunpack.c.l.b16 %v5198
        %v5278 = vunpack.c.h.b16 %v5198
        %v5279 = vunpack.c.l.b16 %v5199
        %v5280 = vpack.c.b16 %v5271, %v5268
        %v5281 = vpack.c.b16 %v5272, %v5269
        %v5282 = vpack.c.b16 %v5273, %v5270
        %v5283 = vpack.c.b16 %v5277, %v5274
        %v5284 = vpack.c.b16 %v5278, %v5275
        %v5285 = vpack.c.b16 %v5279, %v5276
        %v5326 = vunpack.c.l.b16 %v5200
        %v5327 = vunpack.c.h.b16 %v5200
        %v5328 = vunpack.c.l.b16 %v5201
        %v5329 = vunpack.c.h.b16 %v5201
        %v5330 = vunpack.c.l.b16 %v5202
        %v5331 = vunpack.c.h.b16 %v5202
        %v5332 = vunpack.c.l.b16 %v5203
        %v5333 = vunpack.c.h.b16 %v5203
        %v5334 = vunpack.c.l.b16 %v5204
        %v5335 = vunpack.c.h.b16 %v5204
        %v5336 = vunpack.c.l.b16 %v5205
        %v5337 = vunpack.c.h.b16 %v5205
        %v5338 = vunpack.c.l.b16 %v5206
        %v5339 = vunpack.c.h.b16 %v5206
        %v5340 = vunpack.c.l.b16 %v5207
        %v5341 = vunpack.c.h.b16 %v5207
        %v5342 = vunpack.c.l.b16 %v5208
        %v5343 = vunpack.c.h.b16 %v5208
        %v5344 = vunpack.c.l.b16 %v5209
        %v5345 = vunpack.c.h.b16 %v5209
        %v5346 = vunpack.c.l.b16 %v5210
        %v5347 = vunpack.c.h.b16 %v5210
        %v5348 = vunpack.c.l.b16 %v5211
        %v5349 = vunpack.c.h.b16 %v5211
        %v5350 = vunpack.c.l.b16 %v5212
        %v5351 = vunpack.c.h.b16 %v5212
        %v5352 = vunpack.c.l.b16 %v5213
        %v5353 = vunpack.c.h.b16 %v5213
        %v5354 = vunpack.c.l.b16 %v5214
        %v5355 = vunpack.c.h.b16 %v5214
        %v5356 = vunpack.c.l.b16 %v5215
        %v5357 = vunpack.c.h.b16 %v5215
        %v5358 = vunpack.c.l.b16 %v5216
        %v5359 = vunpack.c.h.b16 %v5216
        %v5360 = vunpack.c.l.b16 %v5217
        %v5361 = vunpack.c.h.b16 %v5217
        %v5362 = vunpack.c.l.b16 %v5218
        %v5363 = vunpack.c.h.b16 %v5218
        %v5364 = vunpack.c.l.b16 %v5219
        %v5365 = vunpack.c.h.b16 %v5219
        %v5366 = vunpack.c.l.b16 %v5220
        %v5367 = vunpack.c.h.b16 %v5220
        %v5368 = vunpack.c.l.b16 %v5221
        %v5369 = vunpack.c.h.b16 %v5221
        %v5370 = vunpack.c.l.b16 %v5222
        %v5371 = vunpack.c.h.b16 %v5222
        %v5372 = vunpack.c.l.b16 %v5223
        %v5373 = vunpack.c.h.b16 %v5223
        %v5374 = vunpack.c.l.b16 %v5224
        %v5375 = vunpack.c.h.b16 %v5224
        %v5376 = vunpack.c.l.b16 %v5225
        %v5377 = vunpack.c.h.b16 %v5225
        %v5378 = vunpack.c.l.b16 %v5226
        %v5379 = vunpack.c.h.b16 %v5226
        %v5380 = vunpack.c.l.b16 %v5227
        %v5381 = vunpack.c.h.b16 %v5227
        %v5382 = vunpack.c.l.b16 %v5228
        %v5383 = vunpack.c.h.b16 %v5228
        %v5384 = vunpack.c.l.b16 %v5229
        %v5385 = vunpack.c.h.b16 %v5229
        %v5386 = vunpack.c.l.b16 %v5230
        %v5387 = vunpack.c.h.b16 %v5230
        %v5388 = vunpack.c.l.b16 %v5231
        %v5389 = vunpack.c.h.b16 %v5231
        %v5390 = vunpack.c.l.b16 %v5232
        %v5391 = vunpack.c.h.b16 %v5232
        %v5392 = vunpack.c.l.b16 %v5233
        %v5393 = vunpack.c.h.b16 %v5233
        %v5394 = vunpack.c.l.b16 %v5234
        %v5395 = vunpack.c.h.b16 %v5234
        %v5396 = vunpack.c.l.b16 %v5235
        %v5397 = vunpack.c.h.b16 %v5235
        %v5398 = vpack.c.b16 %v5328, %v5326
        %v5399 = vpack.c.b16 %v5329, %v5327
        %v5400 = vpack.c.b16 %v5332, %v5330
        %v5401 = vpack.c.b16 %v5333, %v5331
        %v5402 = vpack.c.b16 %v5336, %v5334
        %v5403 = vpack.c.b16 %v5337, %v5335
        %v5404 = vpack.c.b16 %v5340, %v5338
        %v5405 = vpack.c.b16 %v5341, %v5339
        %v5406 = vpack.c.b16 %v5344, %v5342
        %v5407 = vpack.c.b16 %v5345, %v5343
        %v5408 = vpack.c.b16 %v5348, %v5346
        %v5409 = vpack.c.b16 %v5349, %v5347
        %v5410 = vpack.c.b16 %v5352, %v5350
        %v5411 = vpack.c.b16 %v5353, %v5351
        %v5412 = vpack.c.b16 %v5356, %v5354
        %v5413 = vpack.c.b16 %v5357, %v5355
        %v5414 = vpack.c.b16 %v5360, %v5358
        %v5415 = vpack.c.b16 %v5361, %v5359
        %v5416 = vpack.c.b16 %v5364, %v5362
        %v5417 = vpack.c.b16 %v5365, %v5363
        %v5418 = vpack.c.b16 %v5368, %v5366
        %v5419 = vpack.c.b16 %v5369, %v5367
        %v5420 = vpack.c.b16 %v5372, %v5370
        %v5421 = vpack.c.b16 %v5373, %v5371
        %v5422 = vpack.c.b16 %v5376, %v5374
        %v5423 = vpack.c.b16 %v5377, %v5375
        %v5424 = vpack.c.b16 %v5380, %v5378
        %v5425 = vpack.c.b16 %v5381, %v5379
        %v5426 = vpack.c.b16 %v5384, %v5382
        %v5427 = vpack.c.b16 %v5385, %v5383
        %v5428 = vpack.c.b16 %v5388, %v5386
        %v5429 = vpack.c.b16 %v5389, %v5387
        %v5430 = vpack.c.b16 %v5392, %v5390
        %v5431 = vpack.c.b16 %v5393, %v5391
        %v5432 = vpack.c.b16 %v5396, %v5394
        %v5433 = vpack.c.b16 %v5397, %v5395
        %v5471 = vsel %vm1917, %v5282, 0
        %v5474 = vsel %vm1917, %v5285, 0
        %5476 = vmatpush.bf16.msra.mxu0 %v5412
        %5477 = vmatpush.bf16.msra.mxu0 %v5410
        %5478 = vmatpush.bf16.msra.mxu0 %v5408
        %5479 = vmatpush.bf16.msra.mxu0 %v5406
        %5480 = vmatpush.bf16.msra.mxu0 %v5404
        %5481 = vmatpush.bf16.msra.mxu0 %v5402
        %5482 = vmatpush.bf16.msra.mxu0 %v5400
        %5483 = vmatpush.bf16.msra.mxu0 %v5398
        %5484 = vmatmul.bf16.gmra.mxu0 %v5280
        %v5485 = vpop.f32.mrf.mxu0
        %v5486 = vadd.f32 %v5243, %v5485
        %v5487 = vpop.f32.mrf.mxu0
        %v5488 = vadd.f32 %v5248, %v5487
        %5489 = vmatmul.bf16.gmra.mxu0 %v5283
        %v5490 = vpop.f32.mrf.mxu0
        %v5491 = vadd.f32 %v5253, %v5490
        %v5492 = vpop.f32.mrf.mxu0
        %v5493 = vadd.f32 %v5258, %v5492
        %5494 = vdwg.mxu0
        %5495 = vmatpush.bf16.msra.mxu0 %v5428
        %5496 = vmatpush.bf16.msra.mxu0 %v5426
        %5497 = vmatpush.bf16.msra.mxu0 %v5424
        %5498 = vmatpush.bf16.msra.mxu0 %v5422
        %5499 = vmatpush.bf16.msra.mxu0 %v5420
        %5500 = vmatpush.bf16.msra.mxu0 %v5418
        %5501 = vmatpush.bf16.msra.mxu0 %v5416
        %5502 = vmatpush.bf16.msra.mxu0 %v5414
        %5503 = vmatmul.bf16.gmra.mxu0 %v5281
        %v5504 = vpop.f32.mrf.mxu0
        %v5505 = vadd.f32 %v5486, %v5504
        %v5506 = vpop.f32.mrf.mxu0
        %v5507 = vadd.f32 %v5488, %v5506
        %5508 = vmatmul.bf16.gmra.mxu0 %v5284
        %v5509 = vpop.f32.mrf.mxu0
        %v5510 = vadd.f32 %v5491, %v5509
        %v5511 = vpop.f32.mrf.mxu0
        %v5512 = vadd.f32 %v5493, %v5511
        %5513 = vdwg.mxu0
        %5514 = vmatpush.bf16.msra.mxu0 0
        %5515 = vmatpush.bf16.msra.mxu0 0
        %5516 = vmatpush.bf16.msra.mxu0 0
        %5517 = vmatpush.bf16.msra.mxu0 0
        %5518 = vmatpush.bf16.msra.mxu0 0
        %5519 = vmatpush.bf16.msra.mxu0 0
        %5520 = vmatpush.bf16.msra.mxu0 %v5432
        %5521 = vmatpush.bf16.msra.mxu0 %v5430
        %5522 = vmatmul.bf16.gmra.mxu0 %v5471
        %v5523 = vpop.f32.mrf.mxu0
        %v5524 = vadd.f32 %v5505, %v5523
        %v5525 = vpop.f32.mrf.mxu0
        %v5526 = vadd.f32 %v5507, %v5525
        %5527 = vmatmul.bf16.gmra.mxu0 %v5474
        %v5528 = vpop.f32.mrf.mxu0
        %v5529 = vadd.f32 %v5510, %v5528
        %v5530 = vpop.f32.mrf.mxu0
        %v5531 = vadd.f32 %v5512, %v5530
        %5532 = vdwg.mxu0
        %5533 = vmatpush.bf16.msra.mxu0 %v5413
        %5534 = vmatpush.bf16.msra.mxu0 %v5411
        %5535 = vmatpush.bf16.msra.mxu0 %v5409
        %5536 = vmatpush.bf16.msra.mxu0 %v5407
        %5537 = vmatpush.bf16.msra.mxu0 %v5405
        %5538 = vmatpush.bf16.msra.mxu0 %v5403
        %5539 = vmatpush.bf16.msra.mxu0 %v5401
        %5540 = vmatpush.bf16.msra.mxu0 %v5399
        %5541 = vmatmul.bf16.gmra.mxu0 %v5280
        %v5542 = vpop.f32.mrf.mxu0
        %v5543 = vadd.f32 %v5243, %v5542
        %v5544 = vpop.f32.mrf.mxu0
        %v5545 = vadd.f32 %v5248, %v5544
        %5546 = vmatmul.bf16.gmra.mxu0 %v5283
        %v5547 = vpop.f32.mrf.mxu0
        %v5548 = vadd.f32 %v5253, %v5547
        %v5549 = vpop.f32.mrf.mxu0
        %v5550 = vadd.f32 %v5258, %v5549
        %5551 = vdwg.mxu0
        %5552 = vmatpush.bf16.msra.mxu0 %v5429
        %5553 = vmatpush.bf16.msra.mxu0 %v5427
        %5554 = vmatpush.bf16.msra.mxu0 %v5425
        %5555 = vmatpush.bf16.msra.mxu0 %v5423
        %5556 = vmatpush.bf16.msra.mxu0 %v5421
        %5557 = vmatpush.bf16.msra.mxu0 %v5419
        %5558 = vmatpush.bf16.msra.mxu0 %v5417
        %5559 = vmatpush.bf16.msra.mxu0 %v5415
        %5560 = vmatmul.bf16.gmra.mxu0 %v5281
        %v5561 = vpop.f32.mrf.mxu0
        %v5562 = vadd.f32 %v5543, %v5561
        %v5563 = vpop.f32.mrf.mxu0
        %v5564 = vadd.f32 %v5545, %v5563
        %5565 = vmatmul.bf16.gmra.mxu0 %v5284
        %v5566 = vpop.f32.mrf.mxu0
        %v5567 = vadd.f32 %v5548, %v5566
        %v5568 = vpop.f32.mrf.mxu0
        %v5569 = vadd.f32 %v5550, %v5568
        %5570 = vdwg.mxu0
        %5571 = vmatpush.bf16.msra.mxu0 0
        %5572 = vmatpush.bf16.msra.mxu0 0
        %5573 = vmatpush.bf16.msra.mxu0 0
        %5574 = vmatpush.bf16.msra.mxu0 0
        %5575 = vmatpush.bf16.msra.mxu0 0
        %5576 = vmatpush.bf16.msra.mxu0 0
        %5577 = vmatpush.bf16.msra.mxu0 %v5433
        %5578 = vmatpush.bf16.msra.mxu0 %v5431
        %5579 = vmatmul.bf16.gmra.mxu0 %v5471
        %v5580 = vpop.f32.mrf.mxu0
        %v5581 = vadd.f32 %v5562, %v5580
        %v5582 = vpop.f32.mrf.mxu0
        %v5583 = vadd.f32 %v5564, %v5582
        %5584 = vmatmul.bf16.gmra.mxu0 %v5474
        %v5585 = vpop.f32.mrf.mxu0
        %v5586 = vadd.f32 %v5567, %v5585
        %v5587 = vpop.f32.mrf.mxu0
        %v5588 = vadd.f32 %v5569, %v5587
        %5589 = vdwg.mxu0
        %v5590 = vld [vmem:[%s875] sm:$0xff]
        %v5591 = vld [vmem:[%s875 + $0x8] sm:$0xff]
        %v5592 = vld [vmem:[%s875 + $0x10] sm:$0xff]
        %v5593 = vld [vmem:[%s875 + $0x18] sm:$0xff]
        %v5594 = vld [vmem:[%s875 + $0x20] sm:$0xff]
        %v5595 = vld [vmem:[%s875 + $0x28] sm:$0xff]
        %v5596 = vld [vmem:[%s875 + $0x30] sm:$0xff]
        %v5597 = vld [vmem:[%s875 + $0x38] sm:$0xff]
        %v5598 = vadd.f32 %v5524, %v5590
        %v5599 = vadd.f32 %v5581, %v5591
        %v5600 = vadd.f32 %v5526, %v5592
        %v5601 = vadd.f32 %v5583, %v5593
        %v5602 = vadd.f32 %v5529, %v5594
        %v5603 = vadd.f32 %v5586, %v5595
        %v5604 = vadd.f32 %v5531, %v5596
        %v5605 = vadd.f32 %v5588, %v5597
        %5606 = vst [vmem:[%s880] sm:$0xff] %v5598
        %5607 = vst [vmem:[%s880 + $0x8] sm:$0xff] %v5599
        %5608 = vst [vmem:[%s880 + $0x10] sm:$0xff] %v5600
        %5609 = vst [vmem:[%s880 + $0x18] sm:$0xff] %v5601
        %5610 = vst [vmem:[%s880 + $0x20] sm:$0xff] %v5602
        %5611 = vst [vmem:[%s880 + $0x28] sm:$0xff] %v5603
        %5612 = vst [vmem:[%s880 + $0x30] sm:$0xff] %v5604
        %5613 = vst [vmem:[%s880 + $0x38] sm:$0xff] %v5605
        %p5614 = scmp.lt.s32.totalorder %s39, 1
        %s5615 = scalar_select %p5614, %s39, 1
        %s5616 = smul.addr %s5615, 8
        %s5617 = smul.addr %s5616, 8
        %s5618 = scalar_lea.vmem %s19, %s5617
        // Predicated region
        $region161: #{_lambda_.4} parent=95 // pred_check
          %p5619 = pneg %p466
        $region162: #{_lambda_.4} parent=95 // pred_check_branch
          %5621 = sbr.rel (%p5619) target = $region164
        $region163: #{_lambda_.4} parent=95 // pred_region
          _
        $region164: #{_lambda_.4} parent=95 // pred_fallthru
          _
      $region96: #{_lambda_.4} parent=5 // pred_fallthru
        _
      %p5622 = scmp.le.s32.totalorder 2, %s34
      // Predicated region
      $region165: #{_lambda_.4} parent=5 // pred_check
        %p5623 = pneg %p5622
      $region166: #{_lambda_.4} parent=5 // pred_check_branch
        %5625 = sbr.rel (%p5623) target = $region168
      $region167: #{_lambda_.4} parent=5 // pred_region
        %s5626 = ssub.s32 %s34, 2
        // Predicated region
        $region169: #{_lambda_.4} parent=167 // pred_check
          %p5627 = pneg %p472
        $region170: #{_lambda_.4} parent=167 // pred_check_branch
          %5629 = sbr.rel (%p5627) target = $region172
        $region171: #{_lambda_.4} parent=167 // pred_region
          %p5630 = scmp.lt.s32.totalorder %s40, 1
          %s5631 = scalar_select %p5630, %s40, 1
          %s5632 = smul.addr %s5631, 8
          %s5633 = smul.addr %s5632, 8
          %s5634 = scalar_lea.vmem %s19, %s5633
        $region172: #{_lambda_.4} parent=167 // pred_fallthru
          _
      $region168: #{_lambda_.4} parent=5 // pred_fallthru
        _
    $region6: #{_lambda_.4} parent=1 // loop_footer
      %s38 = sadd.s32 1, %s34
    $region7: #{_lambda_.4} parent=1 // loop_footer_branch
      %33 = sbr.rel target = $region3
    $region8: #{_lambda_.4} parent=1 // loop_exit
      _
    %5635 = vsyncpa [#allocation5], 1
    %s5636 = scalar_lea.sflag [#allocation5], 1
    %5637 = vsyncpa %s5636, 1
    %5638 = vsyncpa [#allocation9], 1
    %5639 = vsyncpa [#allocation12], 1
    %5640 = vsyncpa [#allocation15], 1
    %5641 = vsyncpa [#allocation18], 1
    %5642 = vsyncpa [#allocation21], 1
    %5643 = vsyncpa [#allocation24], 1
    %5644 = vsyncpa [#allocation27], 1
    %5645 = vsyncpa [#allocation6], 1
    %s5646 = scalar_lea.sflag [#allocation6], 1
    %5647 = vsyncpa %s5646, 1

</llo_original>
